<compile_context>
chip_gen: v5e
topology: v5e:2x2
jax: 0.10.0
libtpu: 0.0.40
codegen_flags: <defaults>
</compile_context>

<pallas_src>
import numpy as np

import jax
import jax.numpy as jnp
from jax.experimental import pallas as pl
from jax.experimental.pallas import tpu as pltpu


_H = 24            # GRU hidden size
_W2 = 2 * _H       # fused fwd|bwd width (48) == slab width


# ----------------------------------------------------------------------------
# Parameter slab layout (shared by the packer and the kernel).
# Every block starts at a multiple of 8 rows (aligned sublane loads).
# ----------------------------------------------------------------------------
def _build_layout():
    layout = {}
    off = 0

    def add(name, rows):
        nonlocal off
        layout[name] = (off, rows)
        off += -(-rows // 8) * 8

    add('lin0_w', 8);  add('lin0_b', 1)        # (6,36) embedded in (8,48)
    add('lin1_w', 48); add('lin1_b', 1)        # (36,36) embedded in (48,48)
    add('lin2_w', 48); add('lin2_b', 1)        # (36,8)  embedded in (48,48)
    for l in range(3):
        for nm in ('wx_r', 'wx_z', 'wx_n', 'wh_r', 'wh_z', 'wh_n'):
            add(f'g{l}_{nm}', 48)
        add(f'g{l}_bias', 4)                   # rows: bx_r, bx_z, bx_n, bh_n
    add('fc_w', 48); add('fc_b', 1)            # (48,3) embedded in (48,48)
    return layout, -(-off // 8) * 8


_LAYOUT, _SLAB_ROWS = _build_layout()


# ----------------------------------------------------------------------------
# In-kernel helpers
# ----------------------------------------------------------------------------
def _selu(x):
    alpha = 1.6732632423543772
    scale = 1.0507009873554805
    return scale * jnp.where(x > 0, x, alpha * (jnp.exp(jnp.minimum(x, 0.0)) - 1.0))


# ----------------------------------------------------------------------------
# Fused kernel: linStack -> 3x bidirectional GRU -> fc -> loss
# Everything is time-major: rows are (t * B + b).
# ----------------------------------------------------------------------------
def fused_model1_kernel(x_ref, tgt_ref, cw_ref, slab_ref,
                        logits_ref, losses_ref, sfwd_ref, sbwd_ref):
    T, B, W2 = sfwd_ref.shape           # (T, B, 2H)
    H = W2 // 2
    N = x_ref.shape[0]                  # T * B
    C = cw_ref.shape[1]

    def p(name):                        # static slab carve (free view + load)
        off, rows = _LAYOUT[name]
        return slab_ref[off:off + rows, :]

    # ---- linStack: 3 x (Linear + SELU); padded cols flow exact zeros -------
    h = _selu(jnp.dot(x_ref[...], p('lin0_w'), preferred_element_type=jnp.float32) + p('lin0_b'))
    h = _selu(jnp.dot(h, p('lin1_w'), preferred_element_type=jnp.float32) + p('lin1_b'))
    seq = _selu(jnp.dot(h, p('lin2_w'), preferred_element_type=jnp.float32) + p('lin2_b'))  # (N, 48)

    # lane mask: lanes [0,H) = forward direction, [H,2H) = backward
    lane = jax.lax.broadcasted_iota(jnp.int32, (B, W2), 1)
    fwd_mask = lane < H

    # ---- 3 bidirectional GRU layers (directions fused in the same vregs) ---
    for l in range(3):
        wh_r, wh_z, wh_n = p(f'g{l}_wh_r'), p(f'g{l}_wh_z'), p(f'g{l}_wh_n')
        bias = p(f'g{l}_bias')                       # (4, 2H)
        bx_r, bx_z, bx_n, bh_n = bias[0:1], bias[1:2], bias[2:3], bias[3:4]

        # Hoisted input projections for ALL timesteps, both directions,
        # with b_ih (+ b_hr / b_hz for r,z) already folded in.
        gr = (jnp.dot(seq, p(f'g{l}_wx_r'), preferred_element_type=jnp.float32) + bx_r).reshape(T, B, W2)
        gz = (jnp.dot(seq, p(f'g{l}_wx_z'), preferred_element_type=jnp.float32) + bx_z).reshape(T, B, W2)
        gn = (jnp.dot(seq, p(f'g{l}_wx_n'), preferred_element_type=jnp.float32) + bx_n).reshape(T, B, W2)

        bhn_b = jnp.broadcast_to(bh_n, (B, W2))      # hoisted out of the loop
        hstate = jnp.zeros((B, W2), jnp.float32)     # [h_fwd | h_bwd]

        for s in range(T):                           # fully unrolled (T static)
            s2 = T - 1 - s                           # backward time index
            gxr = jnp.where(fwd_mask, gr[s], gr[s2])
            gxz = jnp.where(fwd_mask, gz[s], gz[s2])
            gxn = jnp.where(fwd_mask, gn[s], gn[s2])
            r = jax.nn.sigmoid(gxr + jnp.dot(hstate, wh_r, preferred_element_type=jnp.float32))
            z = jax.nn.sigmoid(gxz + jnp.dot(hstate, wh_z, preferred_element_type=jnp.float32))
            n = jnp.tanh(gxn + r * (jnp.dot(hstate, wh_n, preferred_element_type=jnp.float32) + bhn_b))
            hstate = n + z * (hstate - n)            # == (1-z)*n + z*h
            sfwd_ref[s] = hstate                     # fwd half valid at time s
            sbwd_ref[s2] = hstate                    # bwd half valid at time s2

        # combine halves: out[t] = [h_fwd(t) | h_bwd(t)]
        seq = jnp.where(fwd_mask, sfwd_ref[...], sbwd_ref[...]).reshape(N, W2)

    # ---- fc + 1e-5 ----------------------------------------------------------
    logits48 = jnp.dot(seq, p('fc_w'), preferred_element_type=jnp.float32) + p('fc_b')
    logits = logits48[:, :C] + 1e-5                  # (N, 3)
    logits_ref[...] = logits

    # ---- loss_giw: weighted CE (ignore_index=-1) + generalized Dice --------
    tgt = tgt_ref[...]                               # (N, 1) int32
    cw = cw_ref[...]                                 # (1, C)

    valid = (tgt != -1)
    validf = valid.astype(jnp.float32)
    t_safe = jnp.where(valid, tgt, 0)
    class_ids = jax.lax.broadcasted_iota(jnp.int32, (N, C), 1)
    onehot = (class_ids == t_safe).astype(jnp.float32)

    m = jnp.max(logits, axis=-1, keepdims=True)
    e = jnp.exp(logits - m)
    ssum = jnp.sum(e, axis=-1, keepdims=True)
    logp = logits - m - jnp.log(ssum)
    probs = e / ssum

    # loss1: weighted cross-entropy, ignore_index=-1, torch 'mean' reduction
    nll = -jnp.sum(onehot * logp, axis=-1, keepdims=True)
    w_per = jnp.sum(onehot * cw, axis=-1, keepdims=True)
    num = jnp.sum(validf * w_per * nll, axis=0, keepdims=True)
    den = jnp.maximum(jnp.sum(validf * w_per, axis=0, keepdims=True), 1e-12)
    loss1 = num / den                                # (1, 1)

    # loss2: generalized Dice over valid positions
    pm = probs * validf
    ym = onehot * validf
    inter = jnp.sum(pm * ym, axis=0, keepdims=True)
    card = jnp.sum(pm, axis=0, keepdims=True) + jnp.sum(ym, axis=0, keepdims=True)
    dice = (2.0 * inter + 1e-6) / (card + 1e-6)
    loss2 = 1.0 - jnp.mean(dice, axis=-1, keepdims=True)   # (1, 1)

    total = loss1 + loss2
    li = jax.lax.broadcasted_iota(jnp.int32, (1, 4), 1)
    losses_ref[...] = (jnp.where(li == 0, total, 0.0)
                       + jnp.where(li == 1, loss1, 0.0)
                       + jnp.where(li == 2, loss2, 0.0))


# ----------------------------------------------------------------------------
# Parameter initialization (deterministic, torch-style uniform)
# ----------------------------------------------------------------------------
def _uniform(key, shape, fan):
    bound = 1.0 / np.sqrt(fan)
    return jax.random.uniform(key, shape, jnp.float32, -bound, bound)


def _init_linear(key, fan_in, fan_out):
    k1, k2 = jax.random.split(key)
    return _uniform(k1, (fan_in, fan_out), fan_in), _uniform(k2, (1, fan_out), fan_in)


def _init_gru_layer(key, in_dim, hidden):
    # direction 0 = forward, 1 = backward; gate order [r | z | n]
    k1, k2, k3, k4 = jax.random.split(key, 4)
    return dict(
        wih=_uniform(k1, (2, in_dim, 3 * hidden), hidden),
        whh=_uniform(k2, (2, hidden, 3 * hidden), hidden),
        bih=_uniform(k3, (2, 1, 3 * hidden), hidden),
        bhh=_uniform(k4, (2, 1, 3 * hidden), hidden),
    )


def init_params(key):
    keys = jax.random.split(key, 7)
    params = {}
    params['lin0_w'], params['lin0_b'] = _init_linear(keys[0], 6, 36)
    params['lin1_w'], params['lin1_b'] = _init_linear(keys[1], 36, 36)
    params['lin2_w'], params['lin2_b'] = _init_linear(keys[2], 36, 8)
    params['gru'] = [
        _init_gru_layer(keys[3], 8, _H),
        _init_gru_layer(keys[4], _W2, _H),
        _init_gru_layer(keys[5], _W2, _H),
    ]
    params['fc_w'], params['fc_b'] = _init_linear(keys[6], _W2, 3)
    return params


# ----------------------------------------------------------------------------
# Pack all parameters into one (SLAB_ROWS, 48) f32 slab (runs once, host side)
# ----------------------------------------------------------------------------
def pack_params(params):
    H, W2 = _H, _W2
    slab = jnp.zeros((_SLAB_ROWS, W2), jnp.float32)

    def put(slab, name, mat):
        off, _ = _LAYOUT[name]
        r, c = mat.shape
        return slab.at[off:off + r, 0:c].set(mat.astype(jnp.float32))

    slab = put(slab, 'lin0_w', params['lin0_w']); slab = put(slab, 'lin0_b', params['lin0_b'])
    slab = put(slab, 'lin1_w', params['lin1_w']); slab = put(slab, 'lin1_b', params['lin1_b'])
    slab = put(slab, 'lin2_w', params['lin2_w']); slab = put(slab, 'lin2_b', params['lin2_b'])

    for l, layer in enumerate(params['gru']):
        wih, whh, bih, bhh = layer['wih'], layer['whh'], layer['bih'], layer['bhh']
        for g, gname in enumerate(('r', 'z', 'n')):
            sl = slice(g * H, (g + 1) * H)
            # input weights: [fwd | bwd] along columns
            wx = jnp.concatenate([wih[0][:, sl], wih[1][:, sl]], axis=1)      # (D, 2H)
            slab = put(slab, f'g{l}_wx_{gname}', wx)
            # recurrent weights: block-diagonal over directions
            wh = jnp.zeros((W2, W2), jnp.float32)
            wh = wh.at[0:H, 0:H].set(whh[0][:, sl])
            wh = wh.at[H:W2, H:W2].set(whh[1][:, sl])
            slab = put(slab, f'g{l}_wh_{gname}', wh)
        r_sl, z_sl, n_sl = slice(0, H), slice(H, 2 * H), slice(2 * H, 3 * H)
        bx_r = jnp.concatenate([bih[0][0, r_sl] + bhh[0][0, r_sl],
                                bih[1][0, r_sl] + bhh[1][0, r_sl]])
        bx_z = jnp.concatenate([bih[0][0, z_sl] + bhh[0][0, z_sl],
                                bih[1][0, z_sl] + bhh[1][0, z_sl]])
        bx_n = jnp.concatenate([bih[0][0, n_sl], bih[1][0, n_sl]])
        bh_n = jnp.concatenate([bhh[0][0, n_sl], bhh[1][0, n_sl]])
        slab = put(slab, f'g{l}_bias', jnp.stack([bx_r, bx_z, bx_n, bh_n], axis=0))

    slab = put(slab, 'fc_w', params['fc_w']); slab = put(slab, 'fc_b', params['fc_b'])
    return slab


# ----------------------------------------------------------------------------
# Forward pass: ONE grid-less pallas_call, everything VMEM resident
# ----------------------------------------------------------------------------
@jax.jit
def model_1_forward(slab, x, target, weight):
    B, T, _ = x.shape
    N = B * T

    # wrapper-side layout plumbing (time-major rows = t*B + b)
    xf = jnp.transpose(x[:, :, :6].astype(jnp.float32), (1, 0, 2)).reshape(N, 6)
    x_in = jnp.pad(xf, ((0, 0), (0, 2)))                                   # (N, 8)
    tgt = jnp.transpose(target, (1, 0)).reshape(N, 1).astype(jnp.int32)
    cw = weight.reshape(1, 3).astype(jnp.float32)

    vmem = pl.BlockSpec(memory_space=pltpu.MemorySpace.VMEM)
    logits_flat, losses = pl.pallas_call(
        fused_model1_kernel,
        out_shape=(jax.ShapeDtypeStruct((N, 3), jnp.float32),
                   jax.ShapeDtypeStruct((1, 4), jnp.float32)),
        in_specs=[vmem, vmem, vmem, vmem],
        out_specs=(vmem, vmem),
        scratch_shapes=[pltpu.VMEM((T, B, _W2), jnp.float32),
                        pltpu.VMEM((T, B, _W2), jnp.float32)],
    )(x_in, tgt, cw, slab)

    logits = jnp.transpose(logits_flat.reshape(T, B, 3), (1, 0, 2))        # (B, T, 3)
    return logits, losses[0, 0], losses[0, 1], losses[0, 2]


# ----------------------------------------------------------------------------
# Main
# ----------------------------------------------------------------------------
if __name__ == "__main__":
    key = jax.random.PRNGKey(0)
    kp, kx, kt = jax.random.split(key, 3)

    params = init_params(kp)
    slab = pack_params(params)

    B, T, F = 2, 8, 10
    x = jax.random.normal(kx, (B, T, F), dtype=jnp.float32)
    target = jax.random.randint(kt, (B, T), 0, 3, dtype=jnp.int32)
    target = target.at[0, 0].set(-1)                      # exercise ignore_index=-1
    weight = jnp.array([1.0, 2.0, 0.5], dtype=jnp.float32)

    # NaN/Inf input checks from the torch forward (host-side glue)
    assert bool(jnp.all(jnp.isfinite(x))), "NaN or Inf found in input"
    assert bool(jnp.all(jnp.isfinite(target.astype(jnp.float32)))), "NaN or Inf found in target"
    assert bool(jnp.all(jnp.isfinite(weight))), "NaN or Inf found in weight"

    logits, loss, loss1, loss2 = model_1_forward(slab, x, target, weight)
    jax.block_until_ready((logits, loss, loss1, loss2))

    assert logits.shape == (B, T, 3)
    assert bool(jnp.isfinite(loss)) and bool(jnp.isfinite(loss1)) and bool(jnp.isfinite(loss2))
    print("KERNEL_OK")
</pallas_src>

<mosaic_0001>
module attributes {stable_mosaic.version = 11 : i64} {
  func.func @fused_model1_kernel(%arg0: memref<16x8xf32, #tpu.memory_space<vmem>>, %arg1: memref<16x1xi32, #tpu.memory_space<vmem>>, %arg2: memref<1x3xf32, #tpu.memory_space<vmem>>, %arg3: memref<1072x48xf32, #tpu.memory_space<vmem>>, %arg4: memref<16x3xf32, #tpu.memory_space<vmem>>, %arg5: memref<1x4xf32, #tpu.memory_space<vmem>>, %arg6: memref<8x2x48xf32, #tpu.memory_space<vmem>>, %arg7: memref<8x2x48xf32, #tpu.memory_space<vmem>>) attributes {dimension_semantics = [], scalar_prefetch = 0 : i64, scratch_operands = 2 : i64, tpu.core_type = #tpu.core_type<tc>} {
    %c0 = arith.constant 0 : index
    %c0_0 = arith.constant 0 : index
    %0 = vector.load %arg0[%c0, %c0_0] : memref<16x8xf32, #tpu.memory_space<vmem>>, vector<16x8xf32>
    %c0_1 = arith.constant 0 : index
    %c0_2 = arith.constant 0 : index
    %1 = vector.load %arg3[%c0_1, %c0_2] : memref<1072x48xf32, #tpu.memory_space<vmem>>, vector<8x48xf32>
    %cst = arith.constant dense<0.000000e+00> : vector<16x48xf32>
    %2 = tpu.matmul %0, %1, %cst {dimension_numbers = #tpu.dot_dimension_numbers<[1], [0], [0], [1], [0, 0, 1, 1], [], []>} : vector<16x8xf32>, vector<8x48xf32>, vector<16x48xf32> -> vector<16x48xf32>
    %c8 = arith.constant 8 : index
    %c0_3 = arith.constant 0 : index
    %3 = vector.load %arg3[%c8, %c0_3] : memref<1072x48xf32, #tpu.memory_space<vmem>>, vector<1x48xf32>
    %4 = vector.broadcast %3 : vector<1x48xf32> to vector<16x48xf32>
    %5 = arith.addf %2, %4 : vector<16x48xf32>
    %cst_4 = arith.constant 0.000000e+00 : f32
    %6 = vector.broadcast %cst_4 : f32 to vector<16x48xf32>
    %7 = arith.cmpf ogt, %5, %6 : vector<16x48xf32>
    %cst_5 = arith.constant 0.000000e+00 : f32
    %8 = vector.broadcast %cst_5 : f32 to vector<16x48xf32>
    %9 = arith.minimumf %5, %8 : vector<16x48xf32>
    %10 = math.exp %9 : vector<16x48xf32>
    %cst_6 = arith.constant 1.000000e+00 : f32
    %11 = vector.broadcast %cst_6 : f32 to vector<16x48xf32>
    %12 = arith.subf %10, %11 : vector<16x48xf32>
    %cst_7 = arith.constant 1.67326319 : f32
    %13 = vector.broadcast %cst_7 : f32 to vector<16x48xf32>
    %14 = arith.mulf %13, %12 : vector<16x48xf32>
    %15 = arith.select %7, %5, %14 : vector<16x48xi1>, vector<16x48xf32>
    %cst_8 = arith.constant 1.05070102 : f32
    %16 = vector.broadcast %cst_8 : f32 to vector<16x48xf32>
    %17 = arith.mulf %16, %15 : vector<16x48xf32>
    %c16 = arith.constant 16 : index
    %c0_9 = arith.constant 0 : index
    %18 = vector.load %arg3[%c16, %c0_9] : memref<1072x48xf32, #tpu.memory_space<vmem>>, vector<48x48xf32>
    %cst_10 = arith.constant dense<0.000000e+00> : vector<16x48xf32>
    %19 = tpu.matmul %17, %18, %cst_10 {dimension_numbers = #tpu.dot_dimension_numbers<[1], [0], [0], [1], [0, 0, 1, 1], [], []>} : vector<16x48xf32>, vector<48x48xf32>, vector<16x48xf32> -> vector<16x48xf32>
    %c64 = arith.constant 64 : index
    %c0_11 = arith.constant 0 : index
    %20 = vector.load %arg3[%c64, %c0_11] : memref<1072x48xf32, #tpu.memory_space<vmem>>, vector<1x48xf32>
    %21 = vector.broadcast %20 : vector<1x48xf32> to vector<16x48xf32>
    %22 = arith.addf %19, %21 : vector<16x48xf32>
    %cst_12 = arith.constant 0.000000e+00 : f32
    %23 = vector.broadcast %cst_12 : f32 to vector<16x48xf32>
    %24 = arith.cmpf ogt, %22, %23 : vector<16x48xf32>
    %cst_13 = arith.constant 0.000000e+00 : f32
    %25 = vector.broadcast %cst_13 : f32 to vector<16x48xf32>
    %26 = arith.minimumf %22, %25 : vector<16x48xf32>
    %27 = math.exp %26 : vector<16x48xf32>
    %cst_14 = arith.constant 1.000000e+00 : f32
    %28 = vector.broadcast %cst_14 : f32 to vector<16x48xf32>
    %29 = arith.subf %27, %28 : vector<16x48xf32>
    %cst_15 = arith.constant 1.67326319 : f32
    %30 = vector.broadcast %cst_15 : f32 to vector<16x48xf32>
    %31 = arith.mulf %30, %29 : vector<16x48xf32>
    %32 = arith.select %24, %22, %31 : vector<16x48xi1>, vector<16x48xf32>
    %cst_16 = arith.constant 1.05070102 : f32
    %33 = vector.broadcast %cst_16 : f32 to vector<16x48xf32>
    %34 = arith.mulf %33, %32 : vector<16x48xf32>
    %c72 = arith.constant 72 : index
    %c0_17 = arith.constant 0 : index
    %35 = vector.load %arg3[%c72, %c0_17] : memref<1072x48xf32, #tpu.memory_space<vmem>>, vector<48x48xf32>
    %cst_18 = arith.constant dense<0.000000e+00> : vector<16x48xf32>
    %36 = tpu.matmul %34, %35, %cst_18 {dimension_numbers = #tpu.dot_dimension_numbers<[1], [0], [0], [1], [0, 0, 1, 1], [], []>} : vector<16x48xf32>, vector<48x48xf32>, vector<16x48xf32> -> vector<16x48xf32>
    %c120 = arith.constant 120 : index
    %c0_19 = arith.constant 0 : index
    %37 = vector.load %arg3[%c120, %c0_19] : memref<1072x48xf32, #tpu.memory_space<vmem>>, vector<1x48xf32>
    %38 = vector.broadcast %37 : vector<1x48xf32> to vector<16x48xf32>
    %39 = arith.addf %36, %38 : vector<16x48xf32>
    %cst_20 = arith.constant 0.000000e+00 : f32
    %40 = vector.broadcast %cst_20 : f32 to vector<16x48xf32>
    %41 = arith.cmpf ogt, %39, %40 : vector<16x48xf32>
    %cst_21 = arith.constant 0.000000e+00 : f32
    %42 = vector.broadcast %cst_21 : f32 to vector<16x48xf32>
    %43 = arith.minimumf %39, %42 : vector<16x48xf32>
    %44 = math.exp %43 : vector<16x48xf32>
    %cst_22 = arith.constant 1.000000e+00 : f32
    %45 = vector.broadcast %cst_22 : f32 to vector<16x48xf32>
    %46 = arith.subf %44, %45 : vector<16x48xf32>
    %cst_23 = arith.constant 1.67326319 : f32
    %47 = vector.broadcast %cst_23 : f32 to vector<16x48xf32>
    %48 = arith.mulf %47, %46 : vector<16x48xf32>
    %49 = arith.select %41, %39, %48 : vector<16x48xi1>, vector<16x48xf32>
    %cst_24 = arith.constant 1.05070102 : f32
    %50 = vector.broadcast %cst_24 : f32 to vector<16x48xf32>
    %51 = arith.mulf %50, %49 : vector<16x48xf32>
    %52 = tpu.iota {dimensions = array<i32: 1>} : vector<2x48xi32>
    %c24_i32 = arith.constant 24 : i32
    %53 = vector.broadcast %c24_i32 : i32 to vector<2x48xi32>
    %54 = arith.cmpi slt, %52, %53 : vector<2x48xi32>
    %c272 = arith.constant 272 : index
    %c0_25 = arith.constant 0 : index
    %55 = vector.load %arg3[%c272, %c0_25] : memref<1072x48xf32, #tpu.memory_space<vmem>>, vector<48x48xf32>
    %c320 = arith.constant 320 : index
    %c0_26 = arith.constant 0 : index
    %56 = vector.load %arg3[%c320, %c0_26] : memref<1072x48xf32, #tpu.memory_space<vmem>>, vector<48x48xf32>
    %c368 = arith.constant 368 : index
    %c0_27 = arith.constant 0 : index
    %57 = vector.load %arg3[%c368, %c0_27] : memref<1072x48xf32, #tpu.memory_space<vmem>>, vector<48x48xf32>
    %c416 = arith.constant 416 : index
    %c0_28 = arith.constant 0 : index
    %58 = vector.load %arg3[%c416, %c0_28] : memref<1072x48xf32, #tpu.memory_space<vmem>>, vector<4x48xf32>
    %59 = vector.extract_strided_slice %58 {offsets = [0, 0], sizes = [1, 48], strides = [1, 1]} : vector<4x48xf32> to vector<1x48xf32>
    %60 = vector.extract_strided_slice %58 {offsets = [1, 0], sizes = [1, 48], strides = [1, 1]} : vector<4x48xf32> to vector<1x48xf32>
    %61 = vector.extract_strided_slice %58 {offsets = [2, 0], sizes = [1, 48], strides = [1, 1]} : vector<4x48xf32> to vector<1x48xf32>
    %62 = vector.extract_strided_slice %58 {offsets = [3, 0], sizes = [1, 48], strides = [1, 1]} : vector<4x48xf32> to vector<1x48xf32>
    %c128 = arith.constant 128 : index
    %c0_29 = arith.constant 0 : index
    %63 = vector.load %arg3[%c128, %c0_29] : memref<1072x48xf32, #tpu.memory_space<vmem>>, vector<48x48xf32>
    %cst_30 = arith.constant dense<0.000000e+00> : vector<16x48xf32>
    %64 = tpu.matmul %51, %63, %cst_30 {dimension_numbers = #tpu.dot_dimension_numbers<[1], [0], [0], [1], [0, 0, 1, 1], [], []>} : vector<16x48xf32>, vector<48x48xf32>, vector<16x48xf32> -> vector<16x48xf32>
    %65 = vector.broadcast %59 : vector<1x48xf32> to vector<16x48xf32>
    %66 = arith.addf %64, %65 : vector<16x48xf32>
    %67 = vector.shape_cast %66 : vector<16x48xf32> to vector<8x2x48xf32>
    %c176 = arith.constant 176 : index
    %c0_31 = arith.constant 0 : index
    %68 = vector.load %arg3[%c176, %c0_31] : memref<1072x48xf32, #tpu.memory_space<vmem>>, vector<48x48xf32>
    %cst_32 = arith.constant dense<0.000000e+00> : vector<16x48xf32>
    %69 = tpu.matmul %51, %68, %cst_32 {dimension_numbers = #tpu.dot_dimension_numbers<[1], [0], [0], [1], [0, 0, 1, 1], [], []>} : vector<16x48xf32>, vector<48x48xf32>, vector<16x48xf32> -> vector<16x48xf32>
    %70 = vector.broadcast %60 : vector<1x48xf32> to vector<16x48xf32>
    %71 = arith.addf %69, %70 : vector<16x48xf32>
    %72 = vector.shape_cast %71 : vector<16x48xf32> to vector<8x2x48xf32>
    %c224 = arith.constant 224 : index
    %c0_33 = arith.constant 0 : index
    %73 = vector.load %arg3[%c224, %c0_33] : memref<1072x48xf32, #tpu.memory_space<vmem>>, vector<48x48xf32>
    %cst_34 = arith.constant dense<0.000000e+00> : vector<16x48xf32>
    %74 = tpu.matmul %51, %73, %cst_34 {dimension_numbers = #tpu.dot_dimension_numbers<[1], [0], [0], [1], [0, 0, 1, 1], [], []>} : vector<16x48xf32>, vector<48x48xf32>, vector<16x48xf32> -> vector<16x48xf32>
    %75 = vector.broadcast %61 : vector<1x48xf32> to vector<16x48xf32>
    %76 = arith.addf %74, %75 : vector<16x48xf32>
    %77 = vector.shape_cast %76 : vector<16x48xf32> to vector<8x2x48xf32>
    %78 = vector.shape_cast %62 : vector<1x48xf32> to vector<1x48xf32>
    %79 = vector.broadcast %78 : vector<1x48xf32> to vector<2x48xf32>
    %cst_35 = arith.constant 0.000000e+00 : f32
    %80 = vector.broadcast %cst_35 : f32 to vector<2x48xf32>
    %81 = vector.extract_strided_slice %67 {offsets = [0, 0, 0], sizes = [1, 2, 48], strides = [1, 1, 1]} : vector<8x2x48xf32> to vector<1x2x48xf32>
    %82 = vector.shape_cast %81 : vector<1x2x48xf32> to vector<2x48xf32>
    %83 = vector.extract_strided_slice %67 {offsets = [7, 0, 0], sizes = [1, 2, 48], strides = [1, 1, 1]} : vector<8x2x48xf32> to vector<1x2x48xf32>
    %84 = vector.shape_cast %83 : vector<1x2x48xf32> to vector<2x48xf32>
    %85 = arith.select %54, %82, %84 : vector<2x48xi1>, vector<2x48xf32>
    %86 = vector.extract_strided_slice %72 {offsets = [0, 0, 0], sizes = [1, 2, 48], strides = [1, 1, 1]} : vector<8x2x48xf32> to vector<1x2x48xf32>
    %87 = vector.shape_cast %86 : vector<1x2x48xf32> to vector<2x48xf32>
    %88 = vector.extract_strided_slice %72 {offsets = [7, 0, 0], sizes = [1, 2, 48], strides = [1, 1, 1]} : vector<8x2x48xf32> to vector<1x2x48xf32>
    %89 = vector.shape_cast %88 : vector<1x2x48xf32> to vector<2x48xf32>
    %90 = arith.select %54, %87, %89 : vector<2x48xi1>, vector<2x48xf32>
    %91 = vector.extract_strided_slice %77 {offsets = [0, 0, 0], sizes = [1, 2, 48], strides = [1, 1, 1]} : vector<8x2x48xf32> to vector<1x2x48xf32>
    %92 = vector.shape_cast %91 : vector<1x2x48xf32> to vector<2x48xf32>
    %93 = vector.extract_strided_slice %77 {offsets = [7, 0, 0], sizes = [1, 2, 48], strides = [1, 1, 1]} : vector<8x2x48xf32> to vector<1x2x48xf32>
    %94 = vector.shape_cast %93 : vector<1x2x48xf32> to vector<2x48xf32>
    %95 = arith.select %54, %92, %94 : vector<2x48xi1>, vector<2x48xf32>
    %cst_36 = arith.constant dense<0.000000e+00> : vector<2x48xf32>
    %96 = tpu.matmul %80, %55, %cst_36 {dimension_numbers = #tpu.dot_dimension_numbers<[1], [0], [0], [1], [0, 0, 1, 1], [], []>} : vector<2x48xf32>, vector<48x48xf32>, vector<2x48xf32> -> vector<2x48xf32>
    %97 = arith.addf %85, %96 : vector<2x48xf32>
    %98 = arith.negf %97 : vector<2x48xf32>
    %99 = math.exp %98 : vector<2x48xf32>
    %cst_37 = arith.constant 1.000000e+00 : f32
    %100 = vector.broadcast %cst_37 : f32 to vector<2x48xf32>
    %101 = arith.addf %100, %99 : vector<2x48xf32>
    %102 = arith.divf %100, %101 : vector<2x48xf32>
    %cst_38 = arith.constant dense<0.000000e+00> : vector<2x48xf32>
    %103 = tpu.matmul %80, %56, %cst_38 {dimension_numbers = #tpu.dot_dimension_numbers<[1], [0], [0], [1], [0, 0, 1, 1], [], []>} : vector<2x48xf32>, vector<48x48xf32>, vector<2x48xf32> -> vector<2x48xf32>
    %104 = arith.addf %90, %103 : vector<2x48xf32>
    %105 = arith.negf %104 : vector<2x48xf32>
    %106 = math.exp %105 : vector<2x48xf32>
    %cst_39 = arith.constant 1.000000e+00 : f32
    %107 = vector.broadcast %cst_39 : f32 to vector<2x48xf32>
    %108 = arith.addf %107, %106 : vector<2x48xf32>
    %109 = arith.divf %107, %108 : vector<2x48xf32>
    %cst_40 = arith.constant dense<0.000000e+00> : vector<2x48xf32>
    %110 = tpu.matmul %80, %57, %cst_40 {dimension_numbers = #tpu.dot_dimension_numbers<[1], [0], [0], [1], [0, 0, 1, 1], [], []>} : vector<2x48xf32>, vector<48x48xf32>, vector<2x48xf32> -> vector<2x48xf32>
    %111 = arith.addf %110, %79 : vector<2x48xf32>
    %112 = arith.mulf %102, %111 : vector<2x48xf32>
    %113 = arith.addf %95, %112 : vector<2x48xf32>
    %114 = math.tanh %113 : vector<2x48xf32>
    %115 = arith.subf %80, %114 : vector<2x48xf32>
    %116 = arith.mulf %109, %115 : vector<2x48xf32>
    %117 = arith.addf %114, %116 : vector<2x48xf32>
    %c0_41 = arith.constant 0 : index
    %c0_42 = arith.constant 0 : index
    %c0_43 = arith.constant 0 : index
    %118 = vector.load %arg6[%c0_41, %c0_42, %c0_43] : memref<8x2x48xf32, #tpu.memory_space<vmem>>, vector<1x2x48xf32>
    %119 = vector.shape_cast %118 : vector<1x2x48xf32> to vector<2x48xf32>
    %120 = vector.shape_cast %117 : vector<2x48xf32> to vector<1x2x48xf32>
    tpu.vector_store %arg6[%c0_41, %c0_42, %c0_43], %120 {strides = array<i32>} : memref<8x2x48xf32, #tpu.memory_space<vmem>>, vector<1x2x48xf32>,
    %c7 = arith.constant 7 : index
    %c0_44 = arith.constant 0 : index
    %c0_45 = arith.constant 0 : index
    %121 = vector.load %arg7[%c7, %c0_44, %c0_45] : memref<8x2x48xf32, #tpu.memory_space<vmem>>, vector<1x2x48xf32>
    %122 = vector.shape_cast %121 : vector<1x2x48xf32> to vector<2x48xf32>
    %123 = vector.shape_cast %117 : vector<2x48xf32> to vector<1x2x48xf32>
    tpu.vector_store %arg7[%c7, %c0_44, %c0_45], %123 {strides = array<i32>} : memref<8x2x48xf32, #tpu.memory_space<vmem>>, vector<1x2x48xf32>,
    %124 = vector.extract_strided_slice %67 {offsets = [1, 0, 0], sizes = [1, 2, 48], strides = [1, 1, 1]} : vector<8x2x48xf32> to vector<1x2x48xf32>
    %125 = vector.shape_cast %124 : vector<1x2x48xf32> to vector<2x48xf32>
    %126 = vector.extract_strided_slice %67 {offsets = [6, 0, 0], sizes = [1, 2, 48], strides = [1, 1, 1]} : vector<8x2x48xf32> to vector<1x2x48xf32>
    %127 = vector.shape_cast %126 : vector<1x2x48xf32> to vector<2x48xf32>
    %128 = arith.select %54, %125, %127 : vector<2x48xi1>, vector<2x48xf32>
    %129 = vector.extract_strided_slice %72 {offsets = [1, 0, 0], sizes = [1, 2, 48], strides = [1, 1, 1]} : vector<8x2x48xf32> to vector<1x2x48xf32>
    %130 = vector.shape_cast %129 : vector<1x2x48xf32> to vector<2x48xf32>
    %131 = vector.extract_strided_slice %72 {offsets = [6, 0, 0], sizes = [1, 2, 48], strides = [1, 1, 1]} : vector<8x2x48xf32> to vector<1x2x48xf32>
    %132 = vector.shape_cast %131 : vector<1x2x48xf32> to vector<2x48xf32>
    %133 = arith.select %54, %130, %132 : vector<2x48xi1>, vector<2x48xf32>
    %134 = vector.extract_strided_slice %77 {offsets = [1, 0, 0], sizes = [1, 2, 48], strides = [1, 1, 1]} : vector<8x2x48xf32> to vector<1x2x48xf32>
    %135 = vector.shape_cast %134 : vector<1x2x48xf32> to vector<2x48xf32>
    %136 = vector.extract_strided_slice %77 {offsets = [6, 0, 0], sizes = [1, 2, 48], strides = [1, 1, 1]} : vector<8x2x48xf32> to vector<1x2x48xf32>
    %137 = vector.shape_cast %136 : vector<1x2x48xf32> to vector<2x48xf32>
    %138 = arith.select %54, %135, %137 : vector<2x48xi1>, vector<2x48xf32>
    %cst_46 = arith.constant dense<0.000000e+00> : vector<2x48xf32>
    %139 = tpu.matmul %117, %55, %cst_46 {dimension_numbers = #tpu.dot_dimension_numbers<[1], [0], [0], [1], [0, 0, 1, 1], [], []>} : vector<2x48xf32>, vector<48x48xf32>, vector<2x48xf32> -> vector<2x48xf32>
    %140 = arith.addf %128, %139 : vector<2x48xf32>
    %141 = arith.negf %140 : vector<2x48xf32>
    %142 = math.exp %141 : vector<2x48xf32>
    %cst_47 = arith.constant 1.000000e+00 : f32
    %143 = vector.broadcast %cst_47 : f32 to vector<2x48xf32>
    %144 = arith.addf %143, %142 : vector<2x48xf32>
    %145 = arith.divf %143, %144 : vector<2x48xf32>
    %cst_48 = arith.constant dense<0.000000e+00> : vector<2x48xf32>
    %146 = tpu.matmul %117, %56, %cst_48 {dimension_numbers = #tpu.dot_dimension_numbers<[1], [0], [0], [1], [0, 0, 1, 1], [], []>} : vector<2x48xf32>, vector<48x48xf32>, vector<2x48xf32> -> vector<2x48xf32>
    %147 = arith.addf %133, %146 : vector<2x48xf32>
    %148 = arith.negf %147 : vector<2x48xf32>
    %149 = math.exp %148 : vector<2x48xf32>
    %cst_49 = arith.constant 1.000000e+00 : f32
    %150 = vector.broadcast %cst_49 : f32 to vector<2x48xf32>
    %151 = arith.addf %150, %149 : vector<2x48xf32>
    %152 = arith.divf %150, %151 : vector<2x48xf32>
    %cst_50 = arith.constant dense<0.000000e+00> : vector<2x48xf32>
    %153 = tpu.matmul %117, %57, %cst_50 {dimension_numbers = #tpu.dot_dimension_numbers<[1], [0], [0], [1], [0, 0, 1, 1], [], []>} : vector<2x48xf32>, vector<48x48xf32>, vector<2x48xf32> -> vector<2x48xf32>
    %154 = arith.addf %153, %79 : vector<2x48xf32>
    %155 = arith.mulf %145, %154 : vector<2x48xf32>
    %156 = arith.addf %138, %155 : vector<2x48xf32>
    %157 = math.tanh %156 : vector<2x48xf32>
    %158 = arith.subf %117, %157 : vector<2x48xf32>
    %159 = arith.mulf %152, %158 : vector<2x48xf32>
    %160 = arith.addf %157, %159 : vector<2x48xf32>
    %c1 = arith.constant 1 : index
    %c0_51 = arith.constant 0 : index
    %c0_52 = arith.constant 0 : index
    %161 = vector.load %arg6[%c1, %c0_51, %c0_52] : memref<8x2x48xf32, #tpu.memory_space<vmem>>, vector<1x2x48xf32>
    %162 = vector.shape_cast %161 : vector<1x2x48xf32> to vector<2x48xf32>
    %163 = vector.shape_cast %160 : vector<2x48xf32> to vector<1x2x48xf32>
    tpu.vector_store %arg6[%c1, %c0_51, %c0_52], %163 {strides = array<i32>} : memref<8x2x48xf32, #tpu.memory_space<vmem>>, vector<1x2x48xf32>,
    %c6 = arith.constant 6 : index
    %c0_53 = arith.constant 0 : index
    %c0_54 = arith.constant 0 : index
    %164 = vector.load %arg7[%c6, %c0_53, %c0_54] : memref<8x2x48xf32, #tpu.memory_space<vmem>>, vector<1x2x48xf32>
    %165 = vector.shape_cast %164 : vector<1x2x48xf32> to vector<2x48xf32>
    %166 = vector.shape_cast %160 : vector<2x48xf32> to vector<1x2x48xf32>
    tpu.vector_store %arg7[%c6, %c0_53, %c0_54], %166 {strides = array<i32>} : memref<8x2x48xf32, #tpu.memory_space<vmem>>, vector<1x2x48xf32>,
    %167 = vector.extract_strided_slice %67 {offsets = [2, 0, 0], sizes = [1, 2, 48], strides = [1, 1, 1]} : vector<8x2x48xf32> to vector<1x2x48xf32>
    %168 = vector.shape_cast %167 : vector<1x2x48xf32> to vector<2x48xf32>
    %169 = vector.extract_strided_slice %67 {offsets = [5, 0, 0], sizes = [1, 2, 48], strides = [1, 1, 1]} : vector<8x2x48xf32> to vector<1x2x48xf32>
    %170 = vector.shape_cast %169 : vector<1x2x48xf32> to vector<2x48xf32>
    %171 = arith.select %54, %168, %170 : vector<2x48xi1>, vector<2x48xf32>
    %172 = vector.extract_strided_slice %72 {offsets = [2, 0, 0], sizes = [1, 2, 48], strides = [1, 1, 1]} : vector<8x2x48xf32> to vector<1x2x48xf32>
    %173 = vector.shape_cast %172 : vector<1x2x48xf32> to vector<2x48xf32>
    %174 = vector.extract_strided_slice %72 {offsets = [5, 0, 0], sizes = [1, 2, 48], strides = [1, 1, 1]} : vector<8x2x48xf32> to vector<1x2x48xf32>
    %175 = vector.shape_cast %174 : vector<1x2x48xf32> to vector<2x48xf32>
    %176 = arith.select %54, %173, %175 : vector<2x48xi1>, vector<2x48xf32>
    %177 = vector.extract_strided_slice %77 {offsets = [2, 0, 0], sizes = [1, 2, 48], strides = [1, 1, 1]} : vector<8x2x48xf32> to vector<1x2x48xf32>
    %178 = vector.shape_cast %177 : vector<1x2x48xf32> to vector<2x48xf32>
    %179 = vector.extract_strided_slice %77 {offsets = [5, 0, 0], sizes = [1, 2, 48], strides = [1, 1, 1]} : vector<8x2x48xf32> to vector<1x2x48xf32>
    %180 = vector.shape_cast %179 : vector<1x2x48xf32> to vector<2x48xf32>
    %181 = arith.select %54, %178, %180 : vector<2x48xi1>, vector<2x48xf32>
    %cst_55 = arith.constant dense<0.000000e+00> : vector<2x48xf32>
    %182 = tpu.matmul %160, %55, %cst_55 {dimension_numbers = #tpu.dot_dimension_numbers<[1], [0], [0], [1], [0, 0, 1, 1], [], []>} : vector<2x48xf32>, vector<48x48xf32>, vector<2x48xf32> -> vector<2x48xf32>
    %183 = arith.addf %171, %182 : vector<2x48xf32>
    %184 = arith.negf %183 : vector<2x48xf32>
    %185 = math.exp %184 : vector<2x48xf32>
    %cst_56 = arith.constant 1.000000e+00 : f32
    %186 = vector.broadcast %cst_56 : f32 to vector<2x48xf32>
    %187 = arith.addf %186, %185 : vector<2x48xf32>
    %188 = arith.divf %186, %187 : vector<2x48xf32>
    %cst_57 = arith.constant dense<0.000000e+00> : vector<2x48xf32>
    %189 = tpu.matmul %160, %56, %cst_57 {dimension_numbers = #tpu.dot_dimension_numbers<[1], [0], [0], [1], [0, 0, 1, 1], [], []>} : vector<2x48xf32>, vector<48x48xf32>, vector<2x48xf32> -> vector<2x48xf32>
    %190 = arith.addf %176, %189 : vector<2x48xf32>
    %191 = arith.negf %190 : vector<2x48xf32>
    %192 = math.exp %191 : vector<2x48xf32>
    %cst_58 = arith.constant 1.000000e+00 : f32
    %193 = vector.broadcast %cst_58 : f32 to vector<2x48xf32>
    %194 = arith.addf %193, %192 : vector<2x48xf32>
    %195 = arith.divf %193, %194 : vector<2x48xf32>
    %cst_59 = arith.constant dense<0.000000e+00> : vector<2x48xf32>
    %196 = tpu.matmul %160, %57, %cst_59 {dimension_numbers = #tpu.dot_dimension_numbers<[1], [0], [0], [1], [0, 0, 1, 1], [], []>} : vector<2x48xf32>, vector<48x48xf32>, vector<2x48xf32> -> vector<2x48xf32>
    %197 = arith.addf %196, %79 : vector<2x48xf32>
    %198 = arith.mulf %188, %197 : vector<2x48xf32>
    %199 = arith.addf %181, %198 : vector<2x48xf32>
    %200 = math.tanh %199 : vector<2x48xf32>
    %201 = arith.subf %160, %200 : vector<2x48xf32>
    %202 = arith.mulf %195, %201 : vector<2x48xf32>
    %203 = arith.addf %200, %202 : vector<2x48xf32>
    %c2 = arith.constant 2 : index
    %c0_60 = arith.constant 0 : index
    %c0_61 = arith.constant 0 : index
    %204 = vector.load %arg6[%c2, %c0_60, %c0_61] : memref<8x2x48xf32, #tpu.memory_space<vmem>>, vector<1x2x48xf32>
    %205 = vector.shape_cast %204 : vector<1x2x48xf32> to vector<2x48xf32>
    %206 = vector.shape_cast %203 : vector<2x48xf32> to vector<1x2x48xf32>
    tpu.vector_store %arg6[%c2, %c0_60, %c0_61], %206 {strides = array<i32>} : memref<8x2x48xf32, #tpu.memory_space<vmem>>, vector<1x2x48xf32>,
    %c5 = arith.constant 5 : index
    %c0_62 = arith.constant 0 : index
    %c0_63 = arith.constant 0 : index
    %207 = vector.load %arg7[%c5, %c0_62, %c0_63] : memref<8x2x48xf32, #tpu.memory_space<vmem>>, vector<1x2x48xf32>
    %208 = vector.shape_cast %207 : vector<1x2x48xf32> to vector<2x48xf32>
    %209 = vector.shape_cast %203 : vector<2x48xf32> to vector<1x2x48xf32>
    tpu.vector_store %arg7[%c5, %c0_62, %c0_63], %209 {strides = array<i32>} : memref<8x2x48xf32, #tpu.memory_space<vmem>>, vector<1x2x48xf32>,
    %210 = vector.extract_strided_slice %67 {offsets = [3, 0, 0], sizes = [1, 2, 48], strides = [1, 1, 1]} : vector<8x2x48xf32> to vector<1x2x48xf32>
    %211 = vector.shape_cast %210 : vector<1x2x48xf32> to vector<2x48xf32>
    %212 = vector.extract_strided_slice %67 {offsets = [4, 0, 0], sizes = [1, 2, 48], strides = [1, 1, 1]} : vector<8x2x48xf32> to vector<1x2x48xf32>
    %213 = vector.shape_cast %212 : vector<1x2x48xf32> to vector<2x48xf32>
    %214 = arith.select %54, %211, %213 : vector<2x48xi1>, vector<2x48xf32>
    %215 = vector.extract_strided_slice %72 {offsets = [3, 0, 0], sizes = [1, 2, 48], strides = [1, 1, 1]} : vector<8x2x48xf32> to vector<1x2x48xf32>
    %216 = vector.shape_cast %215 : vector<1x2x48xf32> to vector<2x48xf32>
    %217 = vector.extract_strided_slice %72 {offsets = [4, 0, 0], sizes = [1, 2, 48], strides = [1, 1, 1]} : vector<8x2x48xf32> to vector<1x2x48xf32>
    %218 = vector.shape_cast %217 : vector<1x2x48xf32> to vector<2x48xf32>
    %219 = arith.select %54, %216, %218 : vector<2x48xi1>, vector<2x48xf32>
    %220 = vector.extract_strided_slice %77 {offsets = [3, 0, 0], sizes = [1, 2, 48], strides = [1, 1, 1]} : vector<8x2x48xf32> to vector<1x2x48xf32>
    %221 = vector.shape_cast %220 : vector<1x2x48xf32> to vector<2x48xf32>
    %222 = vector.extract_strided_slice %77 {offsets = [4, 0, 0], sizes = [1, 2, 48], strides = [1, 1, 1]} : vector<8x2x48xf32> to vector<1x2x48xf32>
    %223 = vector.shape_cast %222 : vector<1x2x48xf32> to vector<2x48xf32>
    %224 = arith.select %54, %221, %223 : vector<2x48xi1>, vector<2x48xf32>
    %cst_64 = arith.constant dense<0.000000e+00> : vector<2x48xf32>
    %225 = tpu.matmul %203, %55, %cst_64 {dimension_numbers = #tpu.dot_dimension_numbers<[1], [0], [0], [1], [0, 0, 1, 1], [], []>} : vector<2x48xf32>, vector<48x48xf32>, vector<2x48xf32> -> vector<2x48xf32>
    %226 = arith.addf %214, %225 : vector<2x48xf32>
    %227 = arith.negf %226 : vector<2x48xf32>
    %228 = math.exp %227 : vector<2x48xf32>
    %cst_65 = arith.constant 1.000000e+00 : f32
    %229 = vector.broadcast %cst_65 : f32 to vector<2x48xf32>
    %230 = arith.addf %229, %228 : vector<2x48xf32>
    %231 = arith.divf %229, %230 : vector<2x48xf32>
    %cst_66 = arith.constant dense<0.000000e+00> : vector<2x48xf32>
    %232 = tpu.matmul %203, %56, %cst_66 {dimension_numbers = #tpu.dot_dimension_numbers<[1], [0], [0], [1], [0, 0, 1, 1], [], []>} : vector<2x48xf32>, vector<48x48xf32>, vector<2x48xf32> -> vector<2x48xf32>
    %233 = arith.addf %219, %232 : vector<2x48xf32>
    %234 = arith.negf %233 : vector<2x48xf32>
    %235 = math.exp %234 : vector<2x48xf32>
    %cst_67 = arith.constant 1.000000e+00 : f32
    %236 = vector.broadcast %cst_67 : f32 to vector<2x48xf32>
    %237 = arith.addf %236, %235 : vector<2x48xf32>
    %238 = arith.divf %236, %237 : vector<2x48xf32>
    %cst_68 = arith.constant dense<0.000000e+00> : vector<2x48xf32>
    %239 = tpu.matmul %203, %57, %cst_68 {dimension_numbers = #tpu.dot_dimension_numbers<[1], [0], [0], [1], [0, 0, 1, 1], [], []>} : vector<2x48xf32>, vector<48x48xf32>, vector<2x48xf32> -> vector<2x48xf32>
    %240 = arith.addf %239, %79 : vector<2x48xf32>
    %241 = arith.mulf %231, %240 : vector<2x48xf32>
    %242 = arith.addf %224, %241 : vector<2x48xf32>
    %243 = math.tanh %242 : vector<2x48xf32>
    %244 = arith.subf %203, %243 : vector<2x48xf32>
    %245 = arith.mulf %238, %244 : vector<2x48xf32>
    %246 = arith.addf %243, %245 : vector<2x48xf32>
    %c3 = arith.constant 3 : index
    %c0_69 = arith.constant 0 : index
    %c0_70 = arith.constant 0 : index
    %247 = vector.load %arg6[%c3, %c0_69, %c0_70] : memref<8x2x48xf32, #tpu.memory_space<vmem>>, vector<1x2x48xf32>
    %248 = vector.shape_cast %247 : vector<1x2x48xf32> to vector<2x48xf32>
    %249 = vector.shape_cast %246 : vector<2x48xf32> to vector<1x2x48xf32>
    tpu.vector_store %arg6[%c3, %c0_69, %c0_70], %249 {strides = array<i32>} : memref<8x2x48xf32, #tpu.memory_space<vmem>>, vector<1x2x48xf32>,
    %c4 = arith.constant 4 : index
    %c0_71 = arith.constant 0 : index
    %c0_72 = arith.constant 0 : index
    %250 = vector.load %arg7[%c4, %c0_71, %c0_72] : memref<8x2x48xf32, #tpu.memory_space<vmem>>, vector<1x2x48xf32>
    %251 = vector.shape_cast %250 : vector<1x2x48xf32> to vector<2x48xf32>
    %252 = vector.shape_cast %246 : vector<2x48xf32> to vector<1x2x48xf32>
    tpu.vector_store %arg7[%c4, %c0_71, %c0_72], %252 {strides = array<i32>} : memref<8x2x48xf32, #tpu.memory_space<vmem>>, vector<1x2x48xf32>,
    %253 = vector.extract_strided_slice %67 {offsets = [4, 0, 0], sizes = [1, 2, 48], strides = [1, 1, 1]} : vector<8x2x48xf32> to vector<1x2x48xf32>
    %254 = vector.shape_cast %253 : vector<1x2x48xf32> to vector<2x48xf32>
    %255 = vector.extract_strided_slice %67 {offsets = [3, 0, 0], sizes = [1, 2, 48], strides = [1, 1, 1]} : vector<8x2x48xf32> to vector<1x2x48xf32>
    %256 = vector.shape_cast %255 : vector<1x2x48xf32> to vector<2x48xf32>
    %257 = arith.select %54, %254, %256 : vector<2x48xi1>, vector<2x48xf32>
    %258 = vector.extract_strided_slice %72 {offsets = [4, 0, 0], sizes = [1, 2, 48], strides = [1, 1, 1]} : vector<8x2x48xf32> to vector<1x2x48xf32>
    %259 = vector.shape_cast %258 : vector<1x2x48xf32> to vector<2x48xf32>
    %260 = vector.extract_strided_slice %72 {offsets = [3, 0, 0], sizes = [1, 2, 48], strides = [1, 1, 1]} : vector<8x2x48xf32> to vector<1x2x48xf32>
    %261 = vector.shape_cast %260 : vector<1x2x48xf32> to vector<2x48xf32>
    %262 = arith.select %54, %259, %261 : vector<2x48xi1>, vector<2x48xf32>
    %263 = vector.extract_strided_slice %77 {offsets = [4, 0, 0], sizes = [1, 2, 48], strides = [1, 1, 1]} : vector<8x2x48xf32> to vector<1x2x48xf32>
    %264 = vector.shape_cast %263 : vector<1x2x48xf32> to vector<2x48xf32>
    %265 = vector.extract_strided_slice %77 {offsets = [3, 0, 0], sizes = [1, 2, 48], strides = [1, 1, 1]} : vector<8x2x48xf32> to vector<1x2x48xf32>
    %266 = vector.shape_cast %265 : vector<1x2x48xf32> to vector<2x48xf32>
    %267 = arith.select %54, %264, %266 : vector<2x48xi1>, vector<2x48xf32>
    %cst_73 = arith.constant dense<0.000000e+00> : vector<2x48xf32>
    %268 = tpu.matmul %246, %55, %cst_73 {dimension_numbers = #tpu.dot_dimension_numbers<[1], [0], [0], [1], [0, 0, 1, 1], [], []>} : vector<2x48xf32>, vector<48x48xf32>, vector<2x48xf32> -> vector<2x48xf32>
    %269 = arith.addf %257, %268 : vector<2x48xf32>
    %270 = arith.negf %269 : vector<2x48xf32>
    %271 = math.exp %270 : vector<2x48xf32>
    %cst_74 = arith.constant 1.000000e+00 : f32
    %272 = vector.broadcast %cst_74 : f32 to vector<2x48xf32>
    %273 = arith.addf %272, %271 : vector<2x48xf32>
    %274 = arith.divf %272, %273 : vector<2x48xf32>
    %cst_75 = arith.constant dense<0.000000e+00> : vector<2x48xf32>
    %275 = tpu.matmul %246, %56, %cst_75 {dimension_numbers = #tpu.dot_dimension_numbers<[1], [0], [0], [1], [0, 0, 1, 1], [], []>} : vector<2x48xf32>, vector<48x48xf32>, vector<2x48xf32> -> vector<2x48xf32>
    %276 = arith.addf %262, %275 : vector<2x48xf32>
    %277 = arith.negf %276 : vector<2x48xf32>
    %278 = math.exp %277 : vector<2x48xf32>
    %cst_76 = arith.constant 1.000000e+00 : f32
    %279 = vector.broadcast %cst_76 : f32 to vector<2x48xf32>
    %280 = arith.addf %279, %278 : vector<2x48xf32>
    %281 = arith.divf %279, %280 : vector<2x48xf32>
    %cst_77 = arith.constant dense<0.000000e+00> : vector<2x48xf32>
    %282 = tpu.matmul %246, %57, %cst_77 {dimension_numbers = #tpu.dot_dimension_numbers<[1], [0], [0], [1], [0, 0, 1, 1], [], []>} : vector<2x48xf32>, vector<48x48xf32>, vector<2x48xf32> -> vector<2x48xf32>
    %283 = arith.addf %282, %79 : vector<2x48xf32>
    %284 = arith.mulf %274, %283 : vector<2x48xf32>
    %285 = arith.addf %267, %284 : vector<2x48xf32>
    %286 = math.tanh %285 : vector<2x48xf32>
    %287 = arith.subf %246, %286 : vector<2x48xf32>
    %288 = arith.mulf %281, %287 : vector<2x48xf32>
    %289 = arith.addf %286, %288 : vector<2x48xf32>
    %c4_78 = arith.constant 4 : index
    %c0_79 = arith.constant 0 : index
    %c0_80 = arith.constant 0 : index
    %290 = vector.load %arg6[%c4_78, %c0_79, %c0_80] : memref<8x2x48xf32, #tpu.memory_space<vmem>>, vector<1x2x48xf32>
    %291 = vector.shape_cast %290 : vector<1x2x48xf32> to vector<2x48xf32>
    %292 = vector.shape_cast %289 : vector<2x48xf32> to vector<1x2x48xf32>
    tpu.vector_store %arg6[%c4_78, %c0_79, %c0_80], %292 {strides = array<i32>} : memref<8x2x48xf32, #tpu.memory_space<vmem>>, vector<1x2x48xf32>,
    %c3_81 = arith.constant 3 : index
    %c0_82 = arith.constant 0 : index
    %c0_83 = arith.constant 0 : index
    %293 = vector.load %arg7[%c3_81, %c0_82, %c0_83] : memref<8x2x48xf32, #tpu.memory_space<vmem>>, vector<1x2x48xf32>
    %294 = vector.shape_cast %293 : vector<1x2x48xf32> to vector<2x48xf32>
    %295 = vector.shape_cast %289 : vector<2x48xf32> to vector<1x2x48xf32>
    tpu.vector_store %arg7[%c3_81, %c0_82, %c0_83], %295 {strides = array<i32>} : memref<8x2x48xf32, #tpu.memory_space<vmem>>, vector<1x2x48xf32>,
    %296 = vector.extract_strided_slice %67 {offsets = [5, 0, 0], sizes = [1, 2, 48], strides = [1, 1, 1]} : vector<8x2x48xf32> to vector<1x2x48xf32>
    %297 = vector.shape_cast %296 : vector<1x2x48xf32> to vector<2x48xf32>
    %298 = vector.extract_strided_slice %67 {offsets = [2, 0, 0], sizes = [1, 2, 48], strides = [1, 1, 1]} : vector<8x2x48xf32> to vector<1x2x48xf32>
    %299 = vector.shape_cast %298 : vector<1x2x48xf32> to vector<2x48xf32>
    %300 = arith.select %54, %297, %299 : vector<2x48xi1>, vector<2x48xf32>
    %301 = vector.extract_strided_slice %72 {offsets = [5, 0, 0], sizes = [1, 2, 48], strides = [1, 1, 1]} : vector<8x2x48xf32> to vector<1x2x48xf32>
    %302 = vector.shape_cast %301 : vector<1x2x48xf32> to vector<2x48xf32>
    %303 = vector.extract_strided_slice %72 {offsets = [2, 0, 0], sizes = [1, 2, 48], strides = [1, 1, 1]} : vector<8x2x48xf32> to vector<1x2x48xf32>
    %304 = vector.shape_cast %303 : vector<1x2x48xf32> to vector<2x48xf32>
    %305 = arith.select %54, %302, %304 : vector<2x48xi1>, vector<2x48xf32>
    %306 = vector.extract_strided_slice %77 {offsets = [5, 0, 0], sizes = [1, 2, 48], strides = [1, 1, 1]} : vector<8x2x48xf32> to vector<1x2x48xf32>
    %307 = vector.shape_cast %306 : vector<1x2x48xf32> to vector<2x48xf32>
    %308 = vector.extract_strided_slice %77 {offsets = [2, 0, 0], sizes = [1, 2, 48], strides = [1, 1, 1]} : vector<8x2x48xf32> to vector<1x2x48xf32>
    %309 = vector.shape_cast %308 : vector<1x2x48xf32> to vector<2x48xf32>
    %310 = arith.select %54, %307, %309 : vector<2x48xi1>, vector<2x48xf32>
    %cst_84 = arith.constant dense<0.000000e+00> : vector<2x48xf32>
    %311 = tpu.matmul %289, %55, %cst_84 {dimension_numbers = #tpu.dot_dimension_numbers<[1], [0], [0], [1], [0, 0, 1, 1], [], []>} : vector<2x48xf32>, vector<48x48xf32>, vector<2x48xf32> -> vector<2x48xf32>
    %312 = arith.addf %300, %311 : vector<2x48xf32>
    %313 = arith.negf %312 : vector<2x48xf32>
    %314 = math.exp %313 : vector<2x48xf32>
    %cst_85 = arith.constant 1.000000e+00 : f32
    %315 = vector.broadcast %cst_85 : f32 to vector<2x48xf32>
    %316 = arith.addf %315, %314 : vector<2x48xf32>
    %317 = arith.divf %315, %316 : vector<2x48xf32>
    %cst_86 = arith.constant dense<0.000000e+00> : vector<2x48xf32>
    %318 = tpu.matmul %289, %56, %cst_86 {dimension_numbers = #tpu.dot_dimension_numbers<[1], [0], [0], [1], [0, 0, 1, 1], [], []>} : vector<2x48xf32>, vector<48x48xf32>, vector<2x48xf32> -> vector<2x48xf32>
    %319 = arith.addf %305, %318 : vector<2x48xf32>
    %320 = arith.negf %319 : vector<2x48xf32>
    %321 = math.exp %320 : vector<2x48xf32>
    %cst_87 = arith.constant 1.000000e+00 : f32
    %322 = vector.broadcast %cst_87 : f32 to vector<2x48xf32>
    %323 = arith.addf %322, %321 : vector<2x48xf32>
    %324 = arith.divf %322, %323 : vector<2x48xf32>
    %cst_88 = arith.constant dense<0.000000e+00> : vector<2x48xf32>
    %325 = tpu.matmul %289, %57, %cst_88 {dimension_numbers = #tpu.dot_dimension_numbers<[1], [0], [0], [1], [0, 0, 1, 1], [], []>} : vector<2x48xf32>, vector<48x48xf32>, vector<2x48xf32> -> vector<2x48xf32>
    %326 = arith.addf %325, %79 : vector<2x48xf32>
    %327 = arith.mulf %317, %326 : vector<2x48xf32>
    %328 = arith.addf %310, %327 : vector<2x48xf32>
    %329 = math.tanh %328 : vector<2x48xf32>
    %330 = arith.subf %289, %329 : vector<2x48xf32>
    %331 = arith.mulf %324, %330 : vector<2x48xf32>
    %332 = arith.addf %329, %331 : vector<2x48xf32>
    %c5_89 = arith.constant 5 : index
    %c0_90 = arith.constant 0 : index
    %c0_91 = arith.constant 0 : index
    %333 = vector.load %arg6[%c5_89, %c0_90, %c0_91] : memref<8x2x48xf32, #tpu.memory_space<vmem>>, vector<1x2x48xf32>
    %334 = vector.shape_cast %333 : vector<1x2x48xf32> to vector<2x48xf32>
    %335 = vector.shape_cast %332 : vector<2x48xf32> to vector<1x2x48xf32>
    tpu.vector_store %arg6[%c5_89, %c0_90, %c0_91], %335 {strides = array<i32>} : memref<8x2x48xf32, #tpu.memory_space<vmem>>, vector<1x2x48xf32>,
    %c2_92 = arith.constant 2 : index
    %c0_93 = arith.constant 0 : index
    %c0_94 = arith.constant 0 : index
    %336 = vector.load %arg7[%c2_92, %c0_93, %c0_94] : memref<8x2x48xf32, #tpu.memory_space<vmem>>, vector<1x2x48xf32>
    %337 = vector.shape_cast %336 : vector<1x2x48xf32> to vector<2x48xf32>
    %338 = vector.shape_cast %332 : vector<2x48xf32> to vector<1x2x48xf32>
    tpu.vector_store %arg7[%c2_92, %c0_93, %c0_94], %338 {strides = array<i32>} : memref<8x2x48xf32, #tpu.memory_space<vmem>>, vector<1x2x48xf32>,
    %339 = vector.extract_strided_slice %67 {offsets = [6, 0, 0], sizes = [1, 2, 48], strides = [1, 1, 1]} : vector<8x2x48xf32> to vector<1x2x48xf32>
    %340 = vector.shape_cast %339 : vector<1x2x48xf32> to vector<2x48xf32>
    %341 = vector.extract_strided_slice %67 {offsets = [1, 0, 0], sizes = [1, 2, 48], strides = [1, 1, 1]} : vector<8x2x48xf32> to vector<1x2x48xf32>
    %342 = vector.shape_cast %341 : vector<1x2x48xf32> to vector<2x48xf32>
    %343 = arith.select %54, %340, %342 : vector<2x48xi1>, vector<2x48xf32>
    %344 = vector.extract_strided_slice %72 {offsets = [6, 0, 0], sizes = [1, 2, 48], strides = [1, 1, 1]} : vector<8x2x48xf32> to vector<1x2x48xf32>
    %345 = vector.shape_cast %344 : vector<1x2x48xf32> to vector<2x48xf32>
    %346 = vector.extract_strided_slice %72 {offsets = [1, 0, 0], sizes = [1, 2, 48], strides = [1, 1, 1]} : vector<8x2x48xf32> to vector<1x2x48xf32>
    %347 = vector.shape_cast %346 : vector<1x2x48xf32> to vector<2x48xf32>
    %348 = arith.select %54, %345, %347 : vector<2x48xi1>, vector<2x48xf32>
    %349 = vector.extract_strided_slice %77 {offsets = [6, 0, 0], sizes = [1, 2, 48], strides = [1, 1, 1]} : vector<8x2x48xf32> to vector<1x2x48xf32>
    %350 = vector.shape_cast %349 : vector<1x2x48xf32> to vector<2x48xf32>
    %351 = vector.extract_strided_slice %77 {offsets = [1, 0, 0], sizes = [1, 2, 48], strides = [1, 1, 1]} : vector<8x2x48xf32> to vector<1x2x48xf32>
    %352 = vector.shape_cast %351 : vector<1x2x48xf32> to vector<2x48xf32>
    %353 = arith.select %54, %350, %352 : vector<2x48xi1>, vector<2x48xf32>
    %cst_95 = arith.constant dense<0.000000e+00> : vector<2x48xf32>
    %354 = tpu.matmul %332, %55, %cst_95 {dimension_numbers = #tpu.dot_dimension_numbers<[1], [0], [0], [1], [0, 0, 1, 1], [], []>} : vector<2x48xf32>, vector<48x48xf32>, vector<2x48xf32> -> vector<2x48xf32>
    %355 = arith.addf %343, %354 : vector<2x48xf32>
    %356 = arith.negf %355 : vector<2x48xf32>
    %357 = math.exp %356 : vector<2x48xf32>
    %cst_96 = arith.constant 1.000000e+00 : f32
    %358 = vector.broadcast %cst_96 : f32 to vector<2x48xf32>
    %359 = arith.addf %358, %357 : vector<2x48xf32>
    %360 = arith.divf %358, %359 : vector<2x48xf32>
    %cst_97 = arith.constant dense<0.000000e+00> : vector<2x48xf32>
    %361 = tpu.matmul %332, %56, %cst_97 {dimension_numbers = #tpu.dot_dimension_numbers<[1], [0], [0], [1], [0, 0, 1, 1], [], []>} : vector<2x48xf32>, vector<48x48xf32>, vector<2x48xf32> -> vector<2x48xf32>
    %362 = arith.addf %348, %361 : vector<2x48xf32>
    %363 = arith.negf %362 : vector<2x48xf32>
    %364 = math.exp %363 : vector<2x48xf32>
    %cst_98 = arith.constant 1.000000e+00 : f32
    %365 = vector.broadcast %cst_98 : f32 to vector<2x48xf32>
    %366 = arith.addf %365, %364 : vector<2x48xf32>
    %367 = arith.divf %365, %366 : vector<2x48xf32>
    %cst_99 = arith.constant dense<0.000000e+00> : vector<2x48xf32>
    %368 = tpu.matmul %332, %57, %cst_99 {dimension_numbers = #tpu.dot_dimension_numbers<[1], [0], [0], [1], [0, 0, 1, 1], [], []>} : vector<2x48xf32>, vector<48x48xf32>, vector<2x48xf32> -> vector<2x48xf32>
    %369 = arith.addf %368, %79 : vector<2x48xf32>
    %370 = arith.mulf %360, %369 : vector<2x48xf32>
    %371 = arith.addf %353, %370 : vector<2x48xf32>
    %372 = math.tanh %371 : vector<2x48xf32>
    %373 = arith.subf %332, %372 : vector<2x48xf32>
    %374 = arith.mulf %367, %373 : vector<2x48xf32>
    %375 = arith.addf %372, %374 : vector<2x48xf32>
    %c6_100 = arith.constant 6 : index
    %c0_101 = arith.constant 0 : index
    %c0_102 = arith.constant 0 : index
    %376 = vector.load %arg6[%c6_100, %c0_101, %c0_102] : memref<8x2x48xf32, #tpu.memory_space<vmem>>, vector<1x2x48xf32>
    %377 = vector.shape_cast %376 : vector<1x2x48xf32> to vector<2x48xf32>
    %378 = vector.shape_cast %375 : vector<2x48xf32> to vector<1x2x48xf32>
    tpu.vector_store %arg6[%c6_100, %c0_101, %c0_102], %378 {strides = array<i32>} : memref<8x2x48xf32, #tpu.memory_space<vmem>>, vector<1x2x48xf32>,
    %c1_103 = arith.constant 1 : index
    %c0_104 = arith.constant 0 : index
    %c0_105 = arith.constant 0 : index
    %379 = vector.load %arg7[%c1_103, %c0_104, %c0_105] : memref<8x2x48xf32, #tpu.memory_space<vmem>>, vector<1x2x48xf32>
    %380 = vector.shape_cast %379 : vector<1x2x48xf32> to vector<2x48xf32>
    %381 = vector.shape_cast %375 : vector<2x48xf32> to vector<1x2x48xf32>
    tpu.vector_store %arg7[%c1_103, %c0_104, %c0_105], %381 {strides = array<i32>} : memref<8x2x48xf32, #tpu.memory_space<vmem>>, vector<1x2x48xf32>,
    %382 = vector.extract_strided_slice %67 {offsets = [7, 0, 0], sizes = [1, 2, 48], strides = [1, 1, 1]} : vector<8x2x48xf32> to vector<1x2x48xf32>
    %383 = vector.shape_cast %382 : vector<1x2x48xf32> to vector<2x48xf32>
    %384 = vector.extract_strided_slice %67 {offsets = [0, 0, 0], sizes = [1, 2, 48], strides = [1, 1, 1]} : vector<8x2x48xf32> to vector<1x2x48xf32>
    %385 = vector.shape_cast %384 : vector<1x2x48xf32> to vector<2x48xf32>
    %386 = arith.select %54, %383, %385 : vector<2x48xi1>, vector<2x48xf32>
    %387 = vector.extract_strided_slice %72 {offsets = [7, 0, 0], sizes = [1, 2, 48], strides = [1, 1, 1]} : vector<8x2x48xf32> to vector<1x2x48xf32>
    %388 = vector.shape_cast %387 : vector<1x2x48xf32> to vector<2x48xf32>
    %389 = vector.extract_strided_slice %72 {offsets = [0, 0, 0], sizes = [1, 2, 48], strides = [1, 1, 1]} : vector<8x2x48xf32> to vector<1x2x48xf32>
    %390 = vector.shape_cast %389 : vector<1x2x48xf32> to vector<2x48xf32>
    %391 = arith.select %54, %388, %390 : vector<2x48xi1>, vector<2x48xf32>
    %392 = vector.extract_strided_slice %77 {offsets = [7, 0, 0], sizes = [1, 2, 48], strides = [1, 1, 1]} : vector<8x2x48xf32> to vector<1x2x48xf32>
    %393 = vector.shape_cast %392 : vector<1x2x48xf32> to vector<2x48xf32>
    %394 = vector.extract_strided_slice %77 {offsets = [0, 0, 0], sizes = [1, 2, 48], strides = [1, 1, 1]} : vector<8x2x48xf32> to vector<1x2x48xf32>
    %395 = vector.shape_cast %394 : vector<1x2x48xf32> to vector<2x48xf32>
    %396 = arith.select %54, %393, %395 : vector<2x48xi1>, vector<2x48xf32>
    %cst_106 = arith.constant dense<0.000000e+00> : vector<2x48xf32>
    %397 = tpu.matmul %375, %55, %cst_106 {dimension_numbers = #tpu.dot_dimension_numbers<[1], [0], [0], [1], [0, 0, 1, 1], [], []>} : vector<2x48xf32>, vector<48x48xf32>, vector<2x48xf32> -> vector<2x48xf32>
    %398 = arith.addf %386, %397 : vector<2x48xf32>
    %399 = arith.negf %398 : vector<2x48xf32>
    %400 = math.exp %399 : vector<2x48xf32>
    %cst_107 = arith.constant 1.000000e+00 : f32
    %401 = vector.broadcast %cst_107 : f32 to vector<2x48xf32>
    %402 = arith.addf %401, %400 : vector<2x48xf32>
    %403 = arith.divf %401, %402 : vector<2x48xf32>
    %cst_108 = arith.constant dense<0.000000e+00> : vector<2x48xf32>
    %404 = tpu.matmul %375, %56, %cst_108 {dimension_numbers = #tpu.dot_dimension_numbers<[1], [0], [0], [1], [0, 0, 1, 1], [], []>} : vector<2x48xf32>, vector<48x48xf32>, vector<2x48xf32> -> vector<2x48xf32>
    %405 = arith.addf %391, %404 : vector<2x48xf32>
    %406 = arith.negf %405 : vector<2x48xf32>
    %407 = math.exp %406 : vector<2x48xf32>
    %cst_109 = arith.constant 1.000000e+00 : f32
    %408 = vector.broadcast %cst_109 : f32 to vector<2x48xf32>
    %409 = arith.addf %408, %407 : vector<2x48xf32>
    %410 = arith.divf %408, %409 : vector<2x48xf32>
    %cst_110 = arith.constant dense<0.000000e+00> : vector<2x48xf32>
    %411 = tpu.matmul %375, %57, %cst_110 {dimension_numbers = #tpu.dot_dimension_numbers<[1], [0], [0], [1], [0, 0, 1, 1], [], []>} : vector<2x48xf32>, vector<48x48xf32>, vector<2x48xf32> -> vector<2x48xf32>
    %412 = arith.addf %411, %79 : vector<2x48xf32>
    %413 = arith.mulf %403, %412 : vector<2x48xf32>
    %414 = arith.addf %396, %413 : vector<2x48xf32>
    %415 = math.tanh %414 : vector<2x48xf32>
    %416 = arith.subf %375, %415 : vector<2x48xf32>
    %417 = arith.mulf %410, %416 : vector<2x48xf32>
    %418 = arith.addf %415, %417 : vector<2x48xf32>
    %c7_111 = arith.constant 7 : index
    %c0_112 = arith.constant 0 : index
    %c0_113 = arith.constant 0 : index
    %419 = vector.load %arg6[%c7_111, %c0_112, %c0_113] : memref<8x2x48xf32, #tpu.memory_space<vmem>>, vector<1x2x48xf32>
    %420 = vector.shape_cast %419 : vector<1x2x48xf32> to vector<2x48xf32>
    %421 = vector.shape_cast %418 : vector<2x48xf32> to vector<1x2x48xf32>
    tpu.vector_store %arg6[%c7_111, %c0_112, %c0_113], %421 {strides = array<i32>} : memref<8x2x48xf32, #tpu.memory_space<vmem>>, vector<1x2x48xf32>,
    %c0_114 = arith.constant 0 : index
    %c0_115 = arith.constant 0 : index
    %c0_116 = arith.constant 0 : index
    %422 = vector.load %arg7[%c0_114, %c0_115, %c0_116] : memref<8x2x48xf32, #tpu.memory_space<vmem>>, vector<1x2x48xf32>
    %423 = vector.shape_cast %422 : vector<1x2x48xf32> to vector<2x48xf32>
    %424 = vector.shape_cast %418 : vector<2x48xf32> to vector<1x2x48xf32>
    tpu.vector_store %arg7[%c0_114, %c0_115, %c0_116], %424 {strides = array<i32>} : memref<8x2x48xf32, #tpu.memory_space<vmem>>, vector<1x2x48xf32>,
    %c0_117 = arith.constant 0 : index
    %c0_118 = arith.constant 0 : index
    %c0_119 = arith.constant 0 : index
    %425 = vector.load %arg6[%c0_117, %c0_118, %c0_119] : memref<8x2x48xf32, #tpu.memory_space<vmem>>, vector<8x2x48xf32>
    %c0_120 = arith.constant 0 : index
    %c0_121 = arith.constant 0 : index
    %c0_122 = arith.constant 0 : index
    %426 = vector.load %arg7[%c0_120, %c0_121, %c0_122] : memref<8x2x48xf32, #tpu.memory_space<vmem>>, vector<8x2x48xf32>
    %427 = vector.shape_cast %54 : vector<2x48xi1> to vector<1x2x48xi1>
    %428 = vector.broadcast %427 : vector<1x2x48xi1> to vector<8x2x48xi1>
    %429 = arith.select %428, %425, %426 : vector<8x2x48xi1>, vector<8x2x48xf32>
    %430 = vector.shape_cast %429 : vector<8x2x48xf32> to vector<16x48xf32>
    %c568 = arith.constant 568 : index
    %c0_123 = arith.constant 0 : index
    %431 = vector.load %arg3[%c568, %c0_123] : memref<1072x48xf32, #tpu.memory_space<vmem>>, vector<48x48xf32>
    %c616 = arith.constant 616 : index
    %c0_124 = arith.constant 0 : index
    %432 = vector.load %arg3[%c616, %c0_124] : memref<1072x48xf32, #tpu.memory_space<vmem>>, vector<48x48xf32>
    %c664 = arith.constant 664 : index
    %c0_125 = arith.constant 0 : index
    %433 = vector.load %arg3[%c664, %c0_125] : memref<1072x48xf32, #tpu.memory_space<vmem>>, vector<48x48xf32>
    %c712 = arith.constant 712 : index
    %c0_126 = arith.constant 0 : index
    %434 = vector.load %arg3[%c712, %c0_126] : memref<1072x48xf32, #tpu.memory_space<vmem>>, vector<4x48xf32>
    %435 = vector.extract_strided_slice %434 {offsets = [0, 0], sizes = [1, 48], strides = [1, 1]} : vector<4x48xf32> to vector<1x48xf32>
    %436 = vector.extract_strided_slice %434 {offsets = [1, 0], sizes = [1, 48], strides = [1, 1]} : vector<4x48xf32> to vector<1x48xf32>
    %437 = vector.extract_strided_slice %434 {offsets = [2, 0], sizes = [1, 48], strides = [1, 1]} : vector<4x48xf32> to vector<1x48xf32>
    %438 = vector.extract_strided_slice %434 {offsets = [3, 0], sizes = [1, 48], strides = [1, 1]} : vector<4x48xf32> to vector<1x48xf32>
    %c424 = arith.constant 424 : index
    %c0_127 = arith.constant 0 : index
    %439 = vector.load %arg3[%c424, %c0_127] : memref<1072x48xf32, #tpu.memory_space<vmem>>, vector<48x48xf32>
    %cst_128 = arith.constant dense<0.000000e+00> : vector<16x48xf32>
    %440 = tpu.matmul %430, %439, %cst_128 {dimension_numbers = #tpu.dot_dimension_numbers<[1], [0], [0], [1], [0, 0, 1, 1], [], []>} : vector<16x48xf32>, vector<48x48xf32>, vector<16x48xf32> -> vector<16x48xf32>
    %441 = vector.broadcast %435 : vector<1x48xf32> to vector<16x48xf32>
    %442 = arith.addf %440, %441 : vector<16x48xf32>
    %443 = vector.shape_cast %442 : vector<16x48xf32> to vector<8x2x48xf32>
    %c472 = arith.constant 472 : index
    %c0_129 = arith.constant 0 : index
    %444 = vector.load %arg3[%c472, %c0_129] : memref<1072x48xf32, #tpu.memory_space<vmem>>, vector<48x48xf32>
    %cst_130 = arith.constant dense<0.000000e+00> : vector<16x48xf32>
    %445 = tpu.matmul %430, %444, %cst_130 {dimension_numbers = #tpu.dot_dimension_numbers<[1], [0], [0], [1], [0, 0, 1, 1], [], []>} : vector<16x48xf32>, vector<48x48xf32>, vector<16x48xf32> -> vector<16x48xf32>
    %446 = vector.broadcast %436 : vector<1x48xf32> to vector<16x48xf32>
    %447 = arith.addf %445, %446 : vector<16x48xf32>
    %448 = vector.shape_cast %447 : vector<16x48xf32> to vector<8x2x48xf32>
    %c520 = arith.constant 520 : index
    %c0_131 = arith.constant 0 : index
    %449 = vector.load %arg3[%c520, %c0_131] : memref<1072x48xf32, #tpu.memory_space<vmem>>, vector<48x48xf32>
    %cst_132 = arith.constant dense<0.000000e+00> : vector<16x48xf32>
    %450 = tpu.matmul %430, %449, %cst_132 {dimension_numbers = #tpu.dot_dimension_numbers<[1], [0], [0], [1], [0, 0, 1, 1], [], []>} : vector<16x48xf32>, vector<48x48xf32>, vector<16x48xf32> -> vector<16x48xf32>
    %451 = vector.broadcast %437 : vector<1x48xf32> to vector<16x48xf32>
    %452 = arith.addf %450, %451 : vector<16x48xf32>
    %453 = vector.shape_cast %452 : vector<16x48xf32> to vector<8x2x48xf32>
    %454 = vector.shape_cast %438 : vector<1x48xf32> to vector<1x48xf32>
    %455 = vector.broadcast %454 : vector<1x48xf32> to vector<2x48xf32>
    %cst_133 = arith.constant 0.000000e+00 : f32
    %456 = vector.broadcast %cst_133 : f32 to vector<2x48xf32>
    %457 = vector.extract_strided_slice %443 {offsets = [0, 0, 0], sizes = [1, 2, 48], strides = [1, 1, 1]} : vector<8x2x48xf32> to vector<1x2x48xf32>
    %458 = vector.shape_cast %457 : vector<1x2x48xf32> to vector<2x48xf32>
    %459 = vector.extract_strided_slice %443 {offsets = [7, 0, 0], sizes = [1, 2, 48], strides = [1, 1, 1]} : vector<8x2x48xf32> to vector<1x2x48xf32>
    %460 = vector.shape_cast %459 : vector<1x2x48xf32> to vector<2x48xf32>
    %461 = arith.select %54, %458, %460 : vector<2x48xi1>, vector<2x48xf32>
    %462 = vector.extract_strided_slice %448 {offsets = [0, 0, 0], sizes = [1, 2, 48], strides = [1, 1, 1]} : vector<8x2x48xf32> to vector<1x2x48xf32>
    %463 = vector.shape_cast %462 : vector<1x2x48xf32> to vector<2x48xf32>
    %464 = vector.extract_strided_slice %448 {offsets = [7, 0, 0], sizes = [1, 2, 48], strides = [1, 1, 1]} : vector<8x2x48xf32> to vector<1x2x48xf32>
    %465 = vector.shape_cast %464 : vector<1x2x48xf32> to vector<2x48xf32>
    %466 = arith.select %54, %463, %465 : vector<2x48xi1>, vector<2x48xf32>
    %467 = vector.extract_strided_slice %453 {offsets = [0, 0, 0], sizes = [1, 2, 48], strides = [1, 1, 1]} : vector<8x2x48xf32> to vector<1x2x48xf32>
    %468 = vector.shape_cast %467 : vector<1x2x48xf32> to vector<2x48xf32>
    %469 = vector.extract_strided_slice %453 {offsets = [7, 0, 0], sizes = [1, 2, 48], strides = [1, 1, 1]} : vector<8x2x48xf32> to vector<1x2x48xf32>
    %470 = vector.shape_cast %469 : vector<1x2x48xf32> to vector<2x48xf32>
    %471 = arith.select %54, %468, %470 : vector<2x48xi1>, vector<2x48xf32>
    %cst_134 = arith.constant dense<0.000000e+00> : vector<2x48xf32>
    %472 = tpu.matmul %456, %431, %cst_134 {dimension_numbers = #tpu.dot_dimension_numbers<[1], [0], [0], [1], [0, 0, 1, 1], [], []>} : vector<2x48xf32>, vector<48x48xf32>, vector<2x48xf32> -> vector<2x48xf32>
    %473 = arith.addf %461, %472 : vector<2x48xf32>
    %474 = arith.negf %473 : vector<2x48xf32>
    %475 = math.exp %474 : vector<2x48xf32>
    %cst_135 = arith.constant 1.000000e+00 : f32
    %476 = vector.broadcast %cst_135 : f32 to vector<2x48xf32>
    %477 = arith.addf %476, %475 : vector<2x48xf32>
    %478 = arith.divf %476, %477 : vector<2x48xf32>
    %cst_136 = arith.constant dense<0.000000e+00> : vector<2x48xf32>
    %479 = tpu.matmul %456, %432, %cst_136 {dimension_numbers = #tpu.dot_dimension_numbers<[1], [0], [0], [1], [0, 0, 1, 1], [], []>} : vector<2x48xf32>, vector<48x48xf32>, vector<2x48xf32> -> vector<2x48xf32>
    %480 = arith.addf %466, %479 : vector<2x48xf32>
    %481 = arith.negf %480 : vector<2x48xf32>
    %482 = math.exp %481 : vector<2x48xf32>
    %cst_137 = arith.constant 1.000000e+00 : f32
    %483 = vector.broadcast %cst_137 : f32 to vector<2x48xf32>
    %484 = arith.addf %483, %482 : vector<2x48xf32>
    %485 = arith.divf %483, %484 : vector<2x48xf32>
    %cst_138 = arith.constant dense<0.000000e+00> : vector<2x48xf32>
    %486 = tpu.matmul %456, %433, %cst_138 {dimension_numbers = #tpu.dot_dimension_numbers<[1], [0], [0], [1], [0, 0, 1, 1], [], []>} : vector<2x48xf32>, vector<48x48xf32>, vector<2x48xf32> -> vector<2x48xf32>
    %487 = arith.addf %486, %455 : vector<2x48xf32>
    %488 = arith.mulf %478, %487 : vector<2x48xf32>
    %489 = arith.addf %471, %488 : vector<2x48xf32>
    %490 = math.tanh %489 : vector<2x48xf32>
    %491 = arith.subf %456, %490 : vector<2x48xf32>
    %492 = arith.mulf %485, %491 : vector<2x48xf32>
    %493 = arith.addf %490, %492 : vector<2x48xf32>
    %c0_139 = arith.constant 0 : index
    %c0_140 = arith.constant 0 : index
    %c0_141 = arith.constant 0 : index
    %494 = vector.load %arg6[%c0_139, %c0_140, %c0_141] : memref<8x2x48xf32, #tpu.memory_space<vmem>>, vector<1x2x48xf32>
    %495 = vector.shape_cast %494 : vector<1x2x48xf32> to vector<2x48xf32>
    %496 = vector.shape_cast %493 : vector<2x48xf32> to vector<1x2x48xf32>
    tpu.vector_store %arg6[%c0_139, %c0_140, %c0_141], %496 {strides = array<i32>} : memref<8x2x48xf32, #tpu.memory_space<vmem>>, vector<1x2x48xf32>,
    %c7_142 = arith.constant 7 : index
    %c0_143 = arith.constant 0 : index
    %c0_144 = arith.constant 0 : index
    %497 = vector.load %arg7[%c7_142, %c0_143, %c0_144] : memref<8x2x48xf32, #tpu.memory_space<vmem>>, vector<1x2x48xf32>
    %498 = vector.shape_cast %497 : vector<1x2x48xf32> to vector<2x48xf32>
    %499 = vector.shape_cast %493 : vector<2x48xf32> to vector<1x2x48xf32>
    tpu.vector_store %arg7[%c7_142, %c0_143, %c0_144], %499 {strides = array<i32>} : memref<8x2x48xf32, #tpu.memory_space<vmem>>, vector<1x2x48xf32>,
    %500 = vector.extract_strided_slice %443 {offsets = [1, 0, 0], sizes = [1, 2, 48], strides = [1, 1, 1]} : vector<8x2x48xf32> to vector<1x2x48xf32>
    %501 = vector.shape_cast %500 : vector<1x2x48xf32> to vector<2x48xf32>
    %502 = vector.extract_strided_slice %443 {offsets = [6, 0, 0], sizes = [1, 2, 48], strides = [1, 1, 1]} : vector<8x2x48xf32> to vector<1x2x48xf32>
    %503 = vector.shape_cast %502 : vector<1x2x48xf32> to vector<2x48xf32>
    %504 = arith.select %54, %501, %503 : vector<2x48xi1>, vector<2x48xf32>
    %505 = vector.extract_strided_slice %448 {offsets = [1, 0, 0], sizes = [1, 2, 48], strides = [1, 1, 1]} : vector<8x2x48xf32> to vector<1x2x48xf32>
    %506 = vector.shape_cast %505 : vector<1x2x48xf32> to vector<2x48xf32>
    %507 = vector.extract_strided_slice %448 {offsets = [6, 0, 0], sizes = [1, 2, 48], strides = [1, 1, 1]} : vector<8x2x48xf32> to vector<1x2x48xf32>
    %508 = vector.shape_cast %507 : vector<1x2x48xf32> to vector<2x48xf32>
    %509 = arith.select %54, %506, %508 : vector<2x48xi1>, vector<2x48xf32>
    %510 = vector.extract_strided_slice %453 {offsets = [1, 0, 0], sizes = [1, 2, 48], strides = [1, 1, 1]} : vector<8x2x48xf32> to vector<1x2x48xf32>
    %511 = vector.shape_cast %510 : vector<1x2x48xf32> to vector<2x48xf32>
    %512 = vector.extract_strided_slice %453 {offsets = [6, 0, 0], sizes = [1, 2, 48], strides = [1, 1, 1]} : vector<8x2x48xf32> to vector<1x2x48xf32>
    %513 = vector.shape_cast %512 : vector<1x2x48xf32> to vector<2x48xf32>
    %514 = arith.select %54, %511, %513 : vector<2x48xi1>, vector<2x48xf32>
    %cst_145 = arith.constant dense<0.000000e+00> : vector<2x48xf32>
    %515 = tpu.matmul %493, %431, %cst_145 {dimension_numbers = #tpu.dot_dimension_numbers<[1], [0], [0], [1], [0, 0, 1, 1], [], []>} : vector<2x48xf32>, vector<48x48xf32>, vector<2x48xf32> -> vector<2x48xf32>
    %516 = arith.addf %504, %515 : vector<2x48xf32>
    %517 = arith.negf %516 : vector<2x48xf32>
    %518 = math.exp %517 : vector<2x48xf32>
    %cst_146 = arith.constant 1.000000e+00 : f32
    %519 = vector.broadcast %cst_146 : f32 to vector<2x48xf32>
    %520 = arith.addf %519, %518 : vector<2x48xf32>
    %521 = arith.divf %519, %520 : vector<2x48xf32>
    %cst_147 = arith.constant dense<0.000000e+00> : vector<2x48xf32>
    %522 = tpu.matmul %493, %432, %cst_147 {dimension_numbers = #tpu.dot_dimension_numbers<[1], [0], [0], [1], [0, 0, 1, 1], [], []>} : vector<2x48xf32>, vector<48x48xf32>, vector<2x48xf32> -> vector<2x48xf32>
    %523 = arith.addf %509, %522 : vector<2x48xf32>
    %524 = arith.negf %523 : vector<2x48xf32>
    %525 = math.exp %524 : vector<2x48xf32>
    %cst_148 = arith.constant 1.000000e+00 : f32
    %526 = vector.broadcast %cst_148 : f32 to vector<2x48xf32>
    %527 = arith.addf %526, %525 : vector<2x48xf32>
    %528 = arith.divf %526, %527 : vector<2x48xf32>
    %cst_149 = arith.constant dense<0.000000e+00> : vector<2x48xf32>
    %529 = tpu.matmul %493, %433, %cst_149 {dimension_numbers = #tpu.dot_dimension_numbers<[1], [0], [0], [1], [0, 0, 1, 1], [], []>} : vector<2x48xf32>, vector<48x48xf32>, vector<2x48xf32> -> vector<2x48xf32>
    %530 = arith.addf %529, %455 : vector<2x48xf32>
    %531 = arith.mulf %521, %530 : vector<2x48xf32>
    %532 = arith.addf %514, %531 : vector<2x48xf32>
    %533 = math.tanh %532 : vector<2x48xf32>
    %534 = arith.subf %493, %533 : vector<2x48xf32>
    %535 = arith.mulf %528, %534 : vector<2x48xf32>
    %536 = arith.addf %533, %535 : vector<2x48xf32>
    %c1_150 = arith.constant 1 : index
    %c0_151 = arith.constant 0 : index
    %c0_152 = arith.constant 0 : index
    %537 = vector.load %arg6[%c1_150, %c0_151, %c0_152] : memref<8x2x48xf32, #tpu.memory_space<vmem>>, vector<1x2x48xf32>
    %538 = vector.shape_cast %537 : vector<1x2x48xf32> to vector<2x48xf32>
    %539 = vector.shape_cast %536 : vector<2x48xf32> to vector<1x2x48xf32>
    tpu.vector_store %arg6[%c1_150, %c0_151, %c0_152], %539 {strides = array<i32>} : memref<8x2x48xf32, #tpu.memory_space<vmem>>, vector<1x2x48xf32>,
    %c6_153 = arith.constant 6 : index
    %c0_154 = arith.constant 0 : index
    %c0_155 = arith.constant 0 : index
    %540 = vector.load %arg7[%c6_153, %c0_154, %c0_155] : memref<8x2x48xf32, #tpu.memory_space<vmem>>, vector<1x2x48xf32>
    %541 = vector.shape_cast %540 : vector<1x2x48xf32> to vector<2x48xf32>
    %542 = vector.shape_cast %536 : vector<2x48xf32> to vector<1x2x48xf32>
    tpu.vector_store %arg7[%c6_153, %c0_154, %c0_155], %542 {strides = array<i32>} : memref<8x2x48xf32, #tpu.memory_space<vmem>>, vector<1x2x48xf32>,
    %543 = vector.extract_strided_slice %443 {offsets = [2, 0, 0], sizes = [1, 2, 48], strides = [1, 1, 1]} : vector<8x2x48xf32> to vector<1x2x48xf32>
    %544 = vector.shape_cast %543 : vector<1x2x48xf32> to vector<2x48xf32>
    %545 = vector.extract_strided_slice %443 {offsets = [5, 0, 0], sizes = [1, 2, 48], strides = [1, 1, 1]} : vector<8x2x48xf32> to vector<1x2x48xf32>
    %546 = vector.shape_cast %545 : vector<1x2x48xf32> to vector<2x48xf32>
    %547 = arith.select %54, %544, %546 : vector<2x48xi1>, vector<2x48xf32>
    %548 = vector.extract_strided_slice %448 {offsets = [2, 0, 0], sizes = [1, 2, 48], strides = [1, 1, 1]} : vector<8x2x48xf32> to vector<1x2x48xf32>
    %549 = vector.shape_cast %548 : vector<1x2x48xf32> to vector<2x48xf32>
    %550 = vector.extract_strided_slice %448 {offsets = [5, 0, 0], sizes = [1, 2, 48], strides = [1, 1, 1]} : vector<8x2x48xf32> to vector<1x2x48xf32>
    %551 = vector.shape_cast %550 : vector<1x2x48xf32> to vector<2x48xf32>
    %552 = arith.select %54, %549, %551 : vector<2x48xi1>, vector<2x48xf32>
    %553 = vector.extract_strided_slice %453 {offsets = [2, 0, 0], sizes = [1, 2, 48], strides = [1, 1, 1]} : vector<8x2x48xf32> to vector<1x2x48xf32>
    %554 = vector.shape_cast %553 : vector<1x2x48xf32> to vector<2x48xf32>
    %555 = vector.extract_strided_slice %453 {offsets = [5, 0, 0], sizes = [1, 2, 48], strides = [1, 1, 1]} : vector<8x2x48xf32> to vector<1x2x48xf32>
    %556 = vector.shape_cast %555 : vector<1x2x48xf32> to vector<2x48xf32>
    %557 = arith.select %54, %554, %556 : vector<2x48xi1>, vector<2x48xf32>
    %cst_156 = arith.constant dense<0.000000e+00> : vector<2x48xf32>
    %558 = tpu.matmul %536, %431, %cst_156 {dimension_numbers = #tpu.dot_dimension_numbers<[1], [0], [0], [1], [0, 0, 1, 1], [], []>} : vector<2x48xf32>, vector<48x48xf32>, vector<2x48xf32> -> vector<2x48xf32>
    %559 = arith.addf %547, %558 : vector<2x48xf32>
    %560 = arith.negf %559 : vector<2x48xf32>
    %561 = math.exp %560 : vector<2x48xf32>
    %cst_157 = arith.constant 1.000000e+00 : f32
    %562 = vector.broadcast %cst_157 : f32 to vector<2x48xf32>
    %563 = arith.addf %562, %561 : vector<2x48xf32>
    %564 = arith.divf %562, %563 : vector<2x48xf32>
    %cst_158 = arith.constant dense<0.000000e+00> : vector<2x48xf32>
    %565 = tpu.matmul %536, %432, %cst_158 {dimension_numbers = #tpu.dot_dimension_numbers<[1], [0], [0], [1], [0, 0, 1, 1], [], []>} : vector<2x48xf32>, vector<48x48xf32>, vector<2x48xf32> -> vector<2x48xf32>
    %566 = arith.addf %552, %565 : vector<2x48xf32>
    %567 = arith.negf %566 : vector<2x48xf32>
    %568 = math.exp %567 : vector<2x48xf32>
    %cst_159 = arith.constant 1.000000e+00 : f32
    %569 = vector.broadcast %cst_159 : f32 to vector<2x48xf32>
    %570 = arith.addf %569, %568 : vector<2x48xf32>
    %571 = arith.divf %569, %570 : vector<2x48xf32>
    %cst_160 = arith.constant dense<0.000000e+00> : vector<2x48xf32>
    %572 = tpu.matmul %536, %433, %cst_160 {dimension_numbers = #tpu.dot_dimension_numbers<[1], [0], [0], [1], [0, 0, 1, 1], [], []>} : vector<2x48xf32>, vector<48x48xf32>, vector<2x48xf32> -> vector<2x48xf32>
    %573 = arith.addf %572, %455 : vector<2x48xf32>
    %574 = arith.mulf %564, %573 : vector<2x48xf32>
    %575 = arith.addf %557, %574 : vector<2x48xf32>
    %576 = math.tanh %575 : vector<2x48xf32>
    %577 = arith.subf %536, %576 : vector<2x48xf32>
    %578 = arith.mulf %571, %577 : vector<2x48xf32>
    %579 = arith.addf %576, %578 : vector<2x48xf32>
    %c2_161 = arith.constant 2 : index
    %c0_162 = arith.constant 0 : index
    %c0_163 = arith.constant 0 : index
    %580 = vector.load %arg6[%c2_161, %c0_162, %c0_163] : memref<8x2x48xf32, #tpu.memory_space<vmem>>, vector<1x2x48xf32>
    %581 = vector.shape_cast %580 : vector<1x2x48xf32> to vector<2x48xf32>
    %582 = vector.shape_cast %579 : vector<2x48xf32> to vector<1x2x48xf32>
    tpu.vector_store %arg6[%c2_161, %c0_162, %c0_163], %582 {strides = array<i32>} : memref<8x2x48xf32, #tpu.memory_space<vmem>>, vector<1x2x48xf32>,
    %c5_164 = arith.constant 5 : index
    %c0_165 = arith.constant 0 : index
    %c0_166 = arith.constant 0 : index
    %583 = vector.load %arg7[%c5_164, %c0_165, %c0_166] : memref<8x2x48xf32, #tpu.memory_space<vmem>>, vector<1x2x48xf32>
    %584 = vector.shape_cast %583 : vector<1x2x48xf32> to vector<2x48xf32>
    %585 = vector.shape_cast %579 : vector<2x48xf32> to vector<1x2x48xf32>
    tpu.vector_store %arg7[%c5_164, %c0_165, %c0_166], %585 {strides = array<i32>} : memref<8x2x48xf32, #tpu.memory_space<vmem>>, vector<1x2x48xf32>,
    %586 = vector.extract_strided_slice %443 {offsets = [3, 0, 0], sizes = [1, 2, 48], strides = [1, 1, 1]} : vector<8x2x48xf32> to vector<1x2x48xf32>
    %587 = vector.shape_cast %586 : vector<1x2x48xf32> to vector<2x48xf32>
    %588 = vector.extract_strided_slice %443 {offsets = [4, 0, 0], sizes = [1, 2, 48], strides = [1, 1, 1]} : vector<8x2x48xf32> to vector<1x2x48xf32>
    %589 = vector.shape_cast %588 : vector<1x2x48xf32> to vector<2x48xf32>
    %590 = arith.select %54, %587, %589 : vector<2x48xi1>, vector<2x48xf32>
    %591 = vector.extract_strided_slice %448 {offsets = [3, 0, 0], sizes = [1, 2, 48], strides = [1, 1, 1]} : vector<8x2x48xf32> to vector<1x2x48xf32>
    %592 = vector.shape_cast %591 : vector<1x2x48xf32> to vector<2x48xf32>
    %593 = vector.extract_strided_slice %448 {offsets = [4, 0, 0], sizes = [1, 2, 48], strides = [1, 1, 1]} : vector<8x2x48xf32> to vector<1x2x48xf32>
    %594 = vector.shape_cast %593 : vector<1x2x48xf32> to vector<2x48xf32>
    %595 = arith.select %54, %592, %594 : vector<2x48xi1>, vector<2x48xf32>
    %596 = vector.extract_strided_slice %453 {offsets = [3, 0, 0], sizes = [1, 2, 48], strides = [1, 1, 1]} : vector<8x2x48xf32> to vector<1x2x48xf32>
    %597 = vector.shape_cast %596 : vector<1x2x48xf32> to vector<2x48xf32>
    %598 = vector.extract_strided_slice %453 {offsets = [4, 0, 0], sizes = [1, 2, 48], strides = [1, 1, 1]} : vector<8x2x48xf32> to vector<1x2x48xf32>
    %599 = vector.shape_cast %598 : vector<1x2x48xf32> to vector<2x48xf32>
    %600 = arith.select %54, %597, %599 : vector<2x48xi1>, vector<2x48xf32>
    %cst_167 = arith.constant dense<0.000000e+00> : vector<2x48xf32>
    %601 = tpu.matmul %579, %431, %cst_167 {dimension_numbers = #tpu.dot_dimension_numbers<[1], [0], [0], [1], [0, 0, 1, 1], [], []>} : vector<2x48xf32>, vector<48x48xf32>, vector<2x48xf32> -> vector<2x48xf32>
    %602 = arith.addf %590, %601 : vector<2x48xf32>
    %603 = arith.negf %602 : vector<2x48xf32>
    %604 = math.exp %603 : vector<2x48xf32>
    %cst_168 = arith.constant 1.000000e+00 : f32
    %605 = vector.broadcast %cst_168 : f32 to vector<2x48xf32>
    %606 = arith.addf %605, %604 : vector<2x48xf32>
    %607 = arith.divf %605, %606 : vector<2x48xf32>
    %cst_169 = arith.constant dense<0.000000e+00> : vector<2x48xf32>
    %608 = tpu.matmul %579, %432, %cst_169 {dimension_numbers = #tpu.dot_dimension_numbers<[1], [0], [0], [1], [0, 0, 1, 1], [], []>} : vector<2x48xf32>, vector<48x48xf32>, vector<2x48xf32> -> vector<2x48xf32>
    %609 = arith.addf %595, %608 : vector<2x48xf32>
    %610 = arith.negf %609 : vector<2x48xf32>
    %611 = math.exp %610 : vector<2x48xf32>
    %cst_170 = arith.constant 1.000000e+00 : f32
    %612 = vector.broadcast %cst_170 : f32 to vector<2x48xf32>
    %613 = arith.addf %612, %611 : vector<2x48xf32>
    %614 = arith.divf %612, %613 : vector<2x48xf32>
    %cst_171 = arith.constant dense<0.000000e+00> : vector<2x48xf32>
    %615 = tpu.matmul %579, %433, %cst_171 {dimension_numbers = #tpu.dot_dimension_numbers<[1], [0], [0], [1], [0, 0, 1, 1], [], []>} : vector<2x48xf32>, vector<48x48xf32>, vector<2x48xf32> -> vector<2x48xf32>
    %616 = arith.addf %615, %455 : vector<2x48xf32>
    %617 = arith.mulf %607, %616 : vector<2x48xf32>
    %618 = arith.addf %600, %617 : vector<2x48xf32>
    %619 = math.tanh %618 : vector<2x48xf32>
    %620 = arith.subf %579, %619 : vector<2x48xf32>
    %621 = arith.mulf %614, %620 : vector<2x48xf32>
    %622 = arith.addf %619, %621 : vector<2x48xf32>
    %c3_172 = arith.constant 3 : index
    %c0_173 = arith.constant 0 : index
    %c0_174 = arith.constant 0 : index
    %623 = vector.load %arg6[%c3_172, %c0_173, %c0_174] : memref<8x2x48xf32, #tpu.memory_space<vmem>>, vector<1x2x48xf32>
    %624 = vector.shape_cast %623 : vector<1x2x48xf32> to vector<2x48xf32>
    %625 = vector.shape_cast %622 : vector<2x48xf32> to vector<1x2x48xf32>
    tpu.vector_store %arg6[%c3_172, %c0_173, %c0_174], %625 {strides = array<i32>} : memref<8x2x48xf32, #tpu.memory_space<vmem>>, vector<1x2x48xf32>,
    %c4_175 = arith.constant 4 : index
    %c0_176 = arith.constant 0 : index
    %c0_177 = arith.constant 0 : index
    %626 = vector.load %arg7[%c4_175, %c0_176, %c0_177] : memref<8x2x48xf32, #tpu.memory_space<vmem>>, vector<1x2x48xf32>
    %627 = vector.shape_cast %626 : vector<1x2x48xf32> to vector<2x48xf32>
    %628 = vector.shape_cast %622 : vector<2x48xf32> to vector<1x2x48xf32>
    tpu.vector_store %arg7[%c4_175, %c0_176, %c0_177], %628 {strides = array<i32>} : memref<8x2x48xf32, #tpu.memory_space<vmem>>, vector<1x2x48xf32>,
    %629 = vector.extract_strided_slice %443 {offsets = [4, 0, 0], sizes = [1, 2, 48], strides = [1, 1, 1]} : vector<8x2x48xf32> to vector<1x2x48xf32>
    %630 = vector.shape_cast %629 : vector<1x2x48xf32> to vector<2x48xf32>
    %631 = vector.extract_strided_slice %443 {offsets = [3, 0, 0], sizes = [1, 2, 48], strides = [1, 1, 1]} : vector<8x2x48xf32> to vector<1x2x48xf32>
    %632 = vector.shape_cast %631 : vector<1x2x48xf32> to vector<2x48xf32>
    %633 = arith.select %54, %630, %632 : vector<2x48xi1>, vector<2x48xf32>
    %634 = vector.extract_strided_slice %448 {offsets = [4, 0, 0], sizes = [1, 2, 48], strides = [1, 1, 1]} : vector<8x2x48xf32> to vector<1x2x48xf32>
    %635 = vector.shape_cast %634 : vector<1x2x48xf32> to vector<2x48xf32>
    %636 = vector.extract_strided_slice %448 {offsets = [3, 0, 0], sizes = [1, 2, 48], strides = [1, 1, 1]} : vector<8x2x48xf32> to vector<1x2x48xf32>
    %637 = vector.shape_cast %636 : vector<1x2x48xf32> to vector<2x48xf32>
    %638 = arith.select %54, %635, %637 : vector<2x48xi1>, vector<2x48xf32>
    %639 = vector.extract_strided_slice %453 {offsets = [4, 0, 0], sizes = [1, 2, 48], strides = [1, 1, 1]} : vector<8x2x48xf32> to vector<1x2x48xf32>
    %640 = vector.shape_cast %639 : vector<1x2x48xf32> to vector<2x48xf32>
    %641 = vector.extract_strided_slice %453 {offsets = [3, 0, 0], sizes = [1, 2, 48], strides = [1, 1, 1]} : vector<8x2x48xf32> to vector<1x2x48xf32>
    %642 = vector.shape_cast %641 : vector<1x2x48xf32> to vector<2x48xf32>
    %643 = arith.select %54, %640, %642 : vector<2x48xi1>, vector<2x48xf32>
    %cst_178 = arith.constant dense<0.000000e+00> : vector<2x48xf32>
    %644 = tpu.matmul %622, %431, %cst_178 {dimension_numbers = #tpu.dot_dimension_numbers<[1], [0], [0], [1], [0, 0, 1, 1], [], []>} : vector<2x48xf32>, vector<48x48xf32>, vector<2x48xf32> -> vector<2x48xf32>
    %645 = arith.addf %633, %644 : vector<2x48xf32>
    %646 = arith.negf %645 : vector<2x48xf32>
    %647 = math.exp %646 : vector<2x48xf32>
    %cst_179 = arith.constant 1.000000e+00 : f32
    %648 = vector.broadcast %cst_179 : f32 to vector<2x48xf32>
    %649 = arith.addf %648, %647 : vector<2x48xf32>
    %650 = arith.divf %648, %649 : vector<2x48xf32>
    %cst_180 = arith.constant dense<0.000000e+00> : vector<2x48xf32>
    %651 = tpu.matmul %622, %432, %cst_180 {dimension_numbers = #tpu.dot_dimension_numbers<[1], [0], [0], [1], [0, 0, 1, 1], [], []>} : vector<2x48xf32>, vector<48x48xf32>, vector<2x48xf32> -> vector<2x48xf32>
    %652 = arith.addf %638, %651 : vector<2x48xf32>
    %653 = arith.negf %652 : vector<2x48xf32>
    %654 = math.exp %653 : vector<2x48xf32>
    %cst_181 = arith.constant 1.000000e+00 : f32
    %655 = vector.broadcast %cst_181 : f32 to vector<2x48xf32>
    %656 = arith.addf %655, %654 : vector<2x48xf32>
    %657 = arith.divf %655, %656 : vector<2x48xf32>
    %cst_182 = arith.constant dense<0.000000e+00> : vector<2x48xf32>
    %658 = tpu.matmul %622, %433, %cst_182 {dimension_numbers = #tpu.dot_dimension_numbers<[1], [0], [0], [1], [0, 0, 1, 1], [], []>} : vector<2x48xf32>, vector<48x48xf32>, vector<2x48xf32> -> vector<2x48xf32>
    %659 = arith.addf %658, %455 : vector<2x48xf32>
    %660 = arith.mulf %650, %659 : vector<2x48xf32>
    %661 = arith.addf %643, %660 : vector<2x48xf32>
    %662 = math.tanh %661 : vector<2x48xf32>
    %663 = arith.subf %622, %662 : vector<2x48xf32>
    %664 = arith.mulf %657, %663 : vector<2x48xf32>
    %665 = arith.addf %662, %664 : vector<2x48xf32>
    %c4_183 = arith.constant 4 : index
    %c0_184 = arith.constant 0 : index
    %c0_185 = arith.constant 0 : index
    %666 = vector.load %arg6[%c4_183, %c0_184, %c0_185] : memref<8x2x48xf32, #tpu.memory_space<vmem>>, vector<1x2x48xf32>
    %667 = vector.shape_cast %666 : vector<1x2x48xf32> to vector<2x48xf32>
    %668 = vector.shape_cast %665 : vector<2x48xf32> to vector<1x2x48xf32>
    tpu.vector_store %arg6[%c4_183, %c0_184, %c0_185], %668 {strides = array<i32>} : memref<8x2x48xf32, #tpu.memory_space<vmem>>, vector<1x2x48xf32>,
    %c3_186 = arith.constant 3 : index
    %c0_187 = arith.constant 0 : index
    %c0_188 = arith.constant 0 : index
    %669 = vector.load %arg7[%c3_186, %c0_187, %c0_188] : memref<8x2x48xf32, #tpu.memory_space<vmem>>, vector<1x2x48xf32>
    %670 = vector.shape_cast %669 : vector<1x2x48xf32> to vector<2x48xf32>
    %671 = vector.shape_cast %665 : vector<2x48xf32> to vector<1x2x48xf32>
    tpu.vector_store %arg7[%c3_186, %c0_187, %c0_188], %671 {strides = array<i32>} : memref<8x2x48xf32, #tpu.memory_space<vmem>>, vector<1x2x48xf32>,
    %672 = vector.extract_strided_slice %443 {offsets = [5, 0, 0], sizes = [1, 2, 48], strides = [1, 1, 1]} : vector<8x2x48xf32> to vector<1x2x48xf32>
    %673 = vector.shape_cast %672 : vector<1x2x48xf32> to vector<2x48xf32>
    %674 = vector.extract_strided_slice %443 {offsets = [2, 0, 0], sizes = [1, 2, 48], strides = [1, 1, 1]} : vector<8x2x48xf32> to vector<1x2x48xf32>
    %675 = vector.shape_cast %674 : vector<1x2x48xf32> to vector<2x48xf32>
    %676 = arith.select %54, %673, %675 : vector<2x48xi1>, vector<2x48xf32>
    %677 = vector.extract_strided_slice %448 {offsets = [5, 0, 0], sizes = [1, 2, 48], strides = [1, 1, 1]} : vector<8x2x48xf32> to vector<1x2x48xf32>
    %678 = vector.shape_cast %677 : vector<1x2x48xf32> to vector<2x48xf32>
    %679 = vector.extract_strided_slice %448 {offsets = [2, 0, 0], sizes = [1, 2, 48], strides = [1, 1, 1]} : vector<8x2x48xf32> to vector<1x2x48xf32>
    %680 = vector.shape_cast %679 : vector<1x2x48xf32> to vector<2x48xf32>
    %681 = arith.select %54, %678, %680 : vector<2x48xi1>, vector<2x48xf32>
    %682 = vector.extract_strided_slice %453 {offsets = [5, 0, 0], sizes = [1, 2, 48], strides = [1, 1, 1]} : vector<8x2x48xf32> to vector<1x2x48xf32>
    %683 = vector.shape_cast %682 : vector<1x2x48xf32> to vector<2x48xf32>
    %684 = vector.extract_strided_slice %453 {offsets = [2, 0, 0], sizes = [1, 2, 48], strides = [1, 1, 1]} : vector<8x2x48xf32> to vector<1x2x48xf32>
    %685 = vector.shape_cast %684 : vector<1x2x48xf32> to vector<2x48xf32>
    %686 = arith.select %54, %683, %685 : vector<2x48xi1>, vector<2x48xf32>
    %cst_189 = arith.constant dense<0.000000e+00> : vector<2x48xf32>
    %687 = tpu.matmul %665, %431, %cst_189 {dimension_numbers = #tpu.dot_dimension_numbers<[1], [0], [0], [1], [0, 0, 1, 1], [], []>} : vector<2x48xf32>, vector<48x48xf32>, vector<2x48xf32> -> vector<2x48xf32>
    %688 = arith.addf %676, %687 : vector<2x48xf32>
    %689 = arith.negf %688 : vector<2x48xf32>
    %690 = math.exp %689 : vector<2x48xf32>
    %cst_190 = arith.constant 1.000000e+00 : f32
    %691 = vector.broadcast %cst_190 : f32 to vector<2x48xf32>
    %692 = arith.addf %691, %690 : vector<2x48xf32>
    %693 = arith.divf %691, %692 : vector<2x48xf32>
    %cst_191 = arith.constant dense<0.000000e+00> : vector<2x48xf32>
    %694 = tpu.matmul %665, %432, %cst_191 {dimension_numbers = #tpu.dot_dimension_numbers<[1], [0], [0], [1], [0, 0, 1, 1], [], []>} : vector<2x48xf32>, vector<48x48xf32>, vector<2x48xf32> -> vector<2x48xf32>
    %695 = arith.addf %681, %694 : vector<2x48xf32>
    %696 = arith.negf %695 : vector<2x48xf32>
    %697 = math.exp %696 : vector<2x48xf32>
    %cst_192 = arith.constant 1.000000e+00 : f32
    %698 = vector.broadcast %cst_192 : f32 to vector<2x48xf32>
    %699 = arith.addf %698, %697 : vector<2x48xf32>
    %700 = arith.divf %698, %699 : vector<2x48xf32>
    %cst_193 = arith.constant dense<0.000000e+00> : vector<2x48xf32>
    %701 = tpu.matmul %665, %433, %cst_193 {dimension_numbers = #tpu.dot_dimension_numbers<[1], [0], [0], [1], [0, 0, 1, 1], [], []>} : vector<2x48xf32>, vector<48x48xf32>, vector<2x48xf32> -> vector<2x48xf32>
    %702 = arith.addf %701, %455 : vector<2x48xf32>
    %703 = arith.mulf %693, %702 : vector<2x48xf32>
    %704 = arith.addf %686, %703 : vector<2x48xf32>
    %705 = math.tanh %704 : vector<2x48xf32>
    %706 = arith.subf %665, %705 : vector<2x48xf32>
    %707 = arith.mulf %700, %706 : vector<2x48xf32>
    %708 = arith.addf %705, %707 : vector<2x48xf32>
    %c5_194 = arith.constant 5 : index
    %c0_195 = arith.constant 0 : index
    %c0_196 = arith.constant 0 : index
    %709 = vector.load %arg6[%c5_194, %c0_195, %c0_196] : memref<8x2x48xf32, #tpu.memory_space<vmem>>, vector<1x2x48xf32>
    %710 = vector.shape_cast %709 : vector<1x2x48xf32> to vector<2x48xf32>
    %711 = vector.shape_cast %708 : vector<2x48xf32> to vector<1x2x48xf32>
    tpu.vector_store %arg6[%c5_194, %c0_195, %c0_196], %711 {strides = array<i32>} : memref<8x2x48xf32, #tpu.memory_space<vmem>>, vector<1x2x48xf32>,
    %c2_197 = arith.constant 2 : index
    %c0_198 = arith.constant 0 : index
    %c0_199 = arith.constant 0 : index
    %712 = vector.load %arg7[%c2_197, %c0_198, %c0_199] : memref<8x2x48xf32, #tpu.memory_space<vmem>>, vector<1x2x48xf32>
    %713 = vector.shape_cast %712 : vector<1x2x48xf32> to vector<2x48xf32>
    %714 = vector.shape_cast %708 : vector<2x48xf32> to vector<1x2x48xf32>
    tpu.vector_store %arg7[%c2_197, %c0_198, %c0_199], %714 {strides = array<i32>} : memref<8x2x48xf32, #tpu.memory_space<vmem>>, vector<1x2x48xf32>,
    %715 = vector.extract_strided_slice %443 {offsets = [6, 0, 0], sizes = [1, 2, 48], strides = [1, 1, 1]} : vector<8x2x48xf32> to vector<1x2x48xf32>
    %716 = vector.shape_cast %715 : vector<1x2x48xf32> to vector<2x48xf32>
    %717 = vector.extract_strided_slice %443 {offsets = [1, 0, 0], sizes = [1, 2, 48], strides = [1, 1, 1]} : vector<8x2x48xf32> to vector<1x2x48xf32>
    %718 = vector.shape_cast %717 : vector<1x2x48xf32> to vector<2x48xf32>
    %719 = arith.select %54, %716, %718 : vector<2x48xi1>, vector<2x48xf32>
    %720 = vector.extract_strided_slice %448 {offsets = [6, 0, 0], sizes = [1, 2, 48], strides = [1, 1, 1]} : vector<8x2x48xf32> to vector<1x2x48xf32>
    %721 = vector.shape_cast %720 : vector<1x2x48xf32> to vector<2x48xf32>
    %722 = vector.extract_strided_slice %448 {offsets = [1, 0, 0], sizes = [1, 2, 48], strides = [1, 1, 1]} : vector<8x2x48xf32> to vector<1x2x48xf32>
    %723 = vector.shape_cast %722 : vector<1x2x48xf32> to vector<2x48xf32>
    %724 = arith.select %54, %721, %723 : vector<2x48xi1>, vector<2x48xf32>
    %725 = vector.extract_strided_slice %453 {offsets = [6, 0, 0], sizes = [1, 2, 48], strides = [1, 1, 1]} : vector<8x2x48xf32> to vector<1x2x48xf32>
    %726 = vector.shape_cast %725 : vector<1x2x48xf32> to vector<2x48xf32>
    %727 = vector.extract_strided_slice %453 {offsets = [1, 0, 0], sizes = [1, 2, 48], strides = [1, 1, 1]} : vector<8x2x48xf32> to vector<1x2x48xf32>
    %728 = vector.shape_cast %727 : vector<1x2x48xf32> to vector<2x48xf32>
    %729 = arith.select %54, %726, %728 : vector<2x48xi1>, vector<2x48xf32>
    %cst_200 = arith.constant dense<0.000000e+00> : vector<2x48xf32>
    %730 = tpu.matmul %708, %431, %cst_200 {dimension_numbers = #tpu.dot_dimension_numbers<[1], [0], [0], [1], [0, 0, 1, 1], [], []>} : vector<2x48xf32>, vector<48x48xf32>, vector<2x48xf32> -> vector<2x48xf32>
    %731 = arith.addf %719, %730 : vector<2x48xf32>
    %732 = arith.negf %731 : vector<2x48xf32>
    %733 = math.exp %732 : vector<2x48xf32>
    %cst_201 = arith.constant 1.000000e+00 : f32
    %734 = vector.broadcast %cst_201 : f32 to vector<2x48xf32>
    %735 = arith.addf %734, %733 : vector<2x48xf32>
    %736 = arith.divf %734, %735 : vector<2x48xf32>
    %cst_202 = arith.constant dense<0.000000e+00> : vector<2x48xf32>
    %737 = tpu.matmul %708, %432, %cst_202 {dimension_numbers = #tpu.dot_dimension_numbers<[1], [0], [0], [1], [0, 0, 1, 1], [], []>} : vector<2x48xf32>, vector<48x48xf32>, vector<2x48xf32> -> vector<2x48xf32>
    %738 = arith.addf %724, %737 : vector<2x48xf32>
    %739 = arith.negf %738 : vector<2x48xf32>
    %740 = math.exp %739 : vector<2x48xf32>
    %cst_203 = arith.constant 1.000000e+00 : f32
    %741 = vector.broadcast %cst_203 : f32 to vector<2x48xf32>
    %742 = arith.addf %741, %740 : vector<2x48xf32>
    %743 = arith.divf %741, %742 : vector<2x48xf32>
    %cst_204 = arith.constant dense<0.000000e+00> : vector<2x48xf32>
    %744 = tpu.matmul %708, %433, %cst_204 {dimension_numbers = #tpu.dot_dimension_numbers<[1], [0], [0], [1], [0, 0, 1, 1], [], []>} : vector<2x48xf32>, vector<48x48xf32>, vector<2x48xf32> -> vector<2x48xf32>
    %745 = arith.addf %744, %455 : vector<2x48xf32>
    %746 = arith.mulf %736, %745 : vector<2x48xf32>
    %747 = arith.addf %729, %746 : vector<2x48xf32>
    %748 = math.tanh %747 : vector<2x48xf32>
    %749 = arith.subf %708, %748 : vector<2x48xf32>
    %750 = arith.mulf %743, %749 : vector<2x48xf32>
    %751 = arith.addf %748, %750 : vector<2x48xf32>
    %c6_205 = arith.constant 6 : index
    %c0_206 = arith.constant 0 : index
    %c0_207 = arith.constant 0 : index
    %752 = vector.load %arg6[%c6_205, %c0_206, %c0_207] : memref<8x2x48xf32, #tpu.memory_space<vmem>>, vector<1x2x48xf32>
    %753 = vector.shape_cast %752 : vector<1x2x48xf32> to vector<2x48xf32>
    %754 = vector.shape_cast %751 : vector<2x48xf32> to vector<1x2x48xf32>
    tpu.vector_store %arg6[%c6_205, %c0_206, %c0_207], %754 {strides = array<i32>} : memref<8x2x48xf32, #tpu.memory_space<vmem>>, vector<1x2x48xf32>,
    %c1_208 = arith.constant 1 : index
    %c0_209 = arith.constant 0 : index
    %c0_210 = arith.constant 0 : index
    %755 = vector.load %arg7[%c1_208, %c0_209, %c0_210] : memref<8x2x48xf32, #tpu.memory_space<vmem>>, vector<1x2x48xf32>
    %756 = vector.shape_cast %755 : vector<1x2x48xf32> to vector<2x48xf32>
    %757 = vector.shape_cast %751 : vector<2x48xf32> to vector<1x2x48xf32>
    tpu.vector_store %arg7[%c1_208, %c0_209, %c0_210], %757 {strides = array<i32>} : memref<8x2x48xf32, #tpu.memory_space<vmem>>, vector<1x2x48xf32>,
    %758 = vector.extract_strided_slice %443 {offsets = [7, 0, 0], sizes = [1, 2, 48], strides = [1, 1, 1]} : vector<8x2x48xf32> to vector<1x2x48xf32>
    %759 = vector.shape_cast %758 : vector<1x2x48xf32> to vector<2x48xf32>
    %760 = vector.extract_strided_slice %443 {offsets = [0, 0, 0], sizes = [1, 2, 48], strides = [1, 1, 1]} : vector<8x2x48xf32> to vector<1x2x48xf32>
    %761 = vector.shape_cast %760 : vector<1x2x48xf32> to vector<2x48xf32>
    %762 = arith.select %54, %759, %761 : vector<2x48xi1>, vector<2x48xf32>
    %763 = vector.extract_strided_slice %448 {offsets = [7, 0, 0], sizes = [1, 2, 48], strides = [1, 1, 1]} : vector<8x2x48xf32> to vector<1x2x48xf32>
    %764 = vector.shape_cast %763 : vector<1x2x48xf32> to vector<2x48xf32>
    %765 = vector.extract_strided_slice %448 {offsets = [0, 0, 0], sizes = [1, 2, 48], strides = [1, 1, 1]} : vector<8x2x48xf32> to vector<1x2x48xf32>
    %766 = vector.shape_cast %765 : vector<1x2x48xf32> to vector<2x48xf32>
    %767 = arith.select %54, %764, %766 : vector<2x48xi1>, vector<2x48xf32>
    %768 = vector.extract_strided_slice %453 {offsets = [7, 0, 0], sizes = [1, 2, 48], strides = [1, 1, 1]} : vector<8x2x48xf32> to vector<1x2x48xf32>
    %769 = vector.shape_cast %768 : vector<1x2x48xf32> to vector<2x48xf32>
    %770 = vector.extract_strided_slice %453 {offsets = [0, 0, 0], sizes = [1, 2, 48], strides = [1, 1, 1]} : vector<8x2x48xf32> to vector<1x2x48xf32>
    %771 = vector.shape_cast %770 : vector<1x2x48xf32> to vector<2x48xf32>
    %772 = arith.select %54, %769, %771 : vector<2x48xi1>, vector<2x48xf32>
    %cst_211 = arith.constant dense<0.000000e+00> : vector<2x48xf32>
    %773 = tpu.matmul %751, %431, %cst_211 {dimension_numbers = #tpu.dot_dimension_numbers<[1], [0], [0], [1], [0, 0, 1, 1], [], []>} : vector<2x48xf32>, vector<48x48xf32>, vector<2x48xf32> -> vector<2x48xf32>
    %774 = arith.addf %762, %773 : vector<2x48xf32>
    %775 = arith.negf %774 : vector<2x48xf32>
    %776 = math.exp %775 : vector<2x48xf32>
    %cst_212 = arith.constant 1.000000e+00 : f32
    %777 = vector.broadcast %cst_212 : f32 to vector<2x48xf32>
    %778 = arith.addf %777, %776 : vector<2x48xf32>
    %779 = arith.divf %777, %778 : vector<2x48xf32>
    %cst_213 = arith.constant dense<0.000000e+00> : vector<2x48xf32>
    %780 = tpu.matmul %751, %432, %cst_213 {dimension_numbers = #tpu.dot_dimension_numbers<[1], [0], [0], [1], [0, 0, 1, 1], [], []>} : vector<2x48xf32>, vector<48x48xf32>, vector<2x48xf32> -> vector<2x48xf32>
    %781 = arith.addf %767, %780 : vector<2x48xf32>
    %782 = arith.negf %781 : vector<2x48xf32>
    %783 = math.exp %782 : vector<2x48xf32>
    %cst_214 = arith.constant 1.000000e+00 : f32
    %784 = vector.broadcast %cst_214 : f32 to vector<2x48xf32>
    %785 = arith.addf %784, %783 : vector<2x48xf32>
    %786 = arith.divf %784, %785 : vector<2x48xf32>
    %cst_215 = arith.constant dense<0.000000e+00> : vector<2x48xf32>
    %787 = tpu.matmul %751, %433, %cst_215 {dimension_numbers = #tpu.dot_dimension_numbers<[1], [0], [0], [1], [0, 0, 1, 1], [], []>} : vector<2x48xf32>, vector<48x48xf32>, vector<2x48xf32> -> vector<2x48xf32>
    %788 = arith.addf %787, %455 : vector<2x48xf32>
    %789 = arith.mulf %779, %788 : vector<2x48xf32>
    %790 = arith.addf %772, %789 : vector<2x48xf32>
    %791 = math.tanh %790 : vector<2x48xf32>
    %792 = arith.subf %751, %791 : vector<2x48xf32>
    %793 = arith.mulf %786, %792 : vector<2x48xf32>
    %794 = arith.addf %791, %793 : vector<2x48xf32>
    %c7_216 = arith.constant 7 : index
    %c0_217 = arith.constant 0 : index
    %c0_218 = arith.constant 0 : index
    %795 = vector.load %arg6[%c7_216, %c0_217, %c0_218] : memref<8x2x48xf32, #tpu.memory_space<vmem>>, vector<1x2x48xf32>
    %796 = vector.shape_cast %795 : vector<1x2x48xf32> to vector<2x48xf32>
    %797 = vector.shape_cast %794 : vector<2x48xf32> to vector<1x2x48xf32>
    tpu.vector_store %arg6[%c7_216, %c0_217, %c0_218], %797 {strides = array<i32>} : memref<8x2x48xf32, #tpu.memory_space<vmem>>, vector<1x2x48xf32>,
    %c0_219 = arith.constant 0 : index
    %c0_220 = arith.constant 0 : index
    %c0_221 = arith.constant 0 : index
    %798 = vector.load %arg7[%c0_219, %c0_220, %c0_221] : memref<8x2x48xf32, #tpu.memory_space<vmem>>, vector<1x2x48xf32>
    %799 = vector.shape_cast %798 : vector<1x2x48xf32> to vector<2x48xf32>
    %800 = vector.shape_cast %794 : vector<2x48xf32> to vector<1x2x48xf32>
    tpu.vector_store %arg7[%c0_219, %c0_220, %c0_221], %800 {strides = array<i32>} : memref<8x2x48xf32, #tpu.memory_space<vmem>>, vector<1x2x48xf32>,
    %c0_222 = arith.constant 0 : index
    %c0_223 = arith.constant 0 : index
    %c0_224 = arith.constant 0 : index
    %801 = vector.load %arg6[%c0_222, %c0_223, %c0_224] : memref<8x2x48xf32, #tpu.memory_space<vmem>>, vector<8x2x48xf32>
    %c0_225 = arith.constant 0 : index
    %c0_226 = arith.constant 0 : index
    %c0_227 = arith.constant 0 : index
    %802 = vector.load %arg7[%c0_225, %c0_226, %c0_227] : memref<8x2x48xf32, #tpu.memory_space<vmem>>, vector<8x2x48xf32>
    %803 = vector.shape_cast %54 : vector<2x48xi1> to vector<1x2x48xi1>
    %804 = vector.broadcast %803 : vector<1x2x48xi1> to vector<8x2x48xi1>
    %805 = arith.select %804, %801, %802 : vector<8x2x48xi1>, vector<8x2x48xf32>
    %806 = vector.shape_cast %805 : vector<8x2x48xf32> to vector<16x48xf32>
    %c864 = arith.constant 864 : index
    %c0_228 = arith.constant 0 : index
    %807 = vector.load %arg3[%c864, %c0_228] : memref<1072x48xf32, #tpu.memory_space<vmem>>, vector<48x48xf32>
    %c912 = arith.constant 912 : index
    %c0_229 = arith.constant 0 : index
    %808 = vector.load %arg3[%c912, %c0_229] : memref<1072x48xf32, #tpu.memory_space<vmem>>, vector<48x48xf32>
    %c960 = arith.constant 960 : index
    %c0_230 = arith.constant 0 : index
    %809 = vector.load %arg3[%c960, %c0_230] : memref<1072x48xf32, #tpu.memory_space<vmem>>, vector<48x48xf32>
    %c1008 = arith.constant 1008 : index
    %c0_231 = arith.constant 0 : index
    %810 = vector.load %arg3[%c1008, %c0_231] : memref<1072x48xf32, #tpu.memory_space<vmem>>, vector<4x48xf32>
    %811 = vector.extract_strided_slice %810 {offsets = [0, 0], sizes = [1, 48], strides = [1, 1]} : vector<4x48xf32> to vector<1x48xf32>
    %812 = vector.extract_strided_slice %810 {offsets = [1, 0], sizes = [1, 48], strides = [1, 1]} : vector<4x48xf32> to vector<1x48xf32>
    %813 = vector.extract_strided_slice %810 {offsets = [2, 0], sizes = [1, 48], strides = [1, 1]} : vector<4x48xf32> to vector<1x48xf32>
    %814 = vector.extract_strided_slice %810 {offsets = [3, 0], sizes = [1, 48], strides = [1, 1]} : vector<4x48xf32> to vector<1x48xf32>
    %c720 = arith.constant 720 : index
    %c0_232 = arith.constant 0 : index
    %815 = vector.load %arg3[%c720, %c0_232] : memref<1072x48xf32, #tpu.memory_space<vmem>>, vector<48x48xf32>
    %cst_233 = arith.constant dense<0.000000e+00> : vector<16x48xf32>
    %816 = tpu.matmul %806, %815, %cst_233 {dimension_numbers = #tpu.dot_dimension_numbers<[1], [0], [0], [1], [0, 0, 1, 1], [], []>} : vector<16x48xf32>, vector<48x48xf32>, vector<16x48xf32> -> vector<16x48xf32>
    %817 = vector.broadcast %811 : vector<1x48xf32> to vector<16x48xf32>
    %818 = arith.addf %816, %817 : vector<16x48xf32>
    %819 = vector.shape_cast %818 : vector<16x48xf32> to vector<8x2x48xf32>
    %c768 = arith.constant 768 : index
    %c0_234 = arith.constant 0 : index
    %820 = vector.load %arg3[%c768, %c0_234] : memref<1072x48xf32, #tpu.memory_space<vmem>>, vector<48x48xf32>
    %cst_235 = arith.constant dense<0.000000e+00> : vector<16x48xf32>
    %821 = tpu.matmul %806, %820, %cst_235 {dimension_numbers = #tpu.dot_dimension_numbers<[1], [0], [0], [1], [0, 0, 1, 1], [], []>} : vector<16x48xf32>, vector<48x48xf32>, vector<16x48xf32> -> vector<16x48xf32>
    %822 = vector.broadcast %812 : vector<1x48xf32> to vector<16x48xf32>
    %823 = arith.addf %821, %822 : vector<16x48xf32>
    %824 = vector.shape_cast %823 : vector<16x48xf32> to vector<8x2x48xf32>
    %c816 = arith.constant 816 : index
    %c0_236 = arith.constant 0 : index
    %825 = vector.load %arg3[%c816, %c0_236] : memref<1072x48xf32, #tpu.memory_space<vmem>>, vector<48x48xf32>
    %cst_237 = arith.constant dense<0.000000e+00> : vector<16x48xf32>
    %826 = tpu.matmul %806, %825, %cst_237 {dimension_numbers = #tpu.dot_dimension_numbers<[1], [0], [0], [1], [0, 0, 1, 1], [], []>} : vector<16x48xf32>, vector<48x48xf32>, vector<16x48xf32> -> vector<16x48xf32>
    %827 = vector.broadcast %813 : vector<1x48xf32> to vector<16x48xf32>
    %828 = arith.addf %826, %827 : vector<16x48xf32>
    %829 = vector.shape_cast %828 : vector<16x48xf32> to vector<8x2x48xf32>
    %830 = vector.shape_cast %814 : vector<1x48xf32> to vector<1x48xf32>
    %831 = vector.broadcast %830 : vector<1x48xf32> to vector<2x48xf32>
    %cst_238 = arith.constant 0.000000e+00 : f32
    %832 = vector.broadcast %cst_238 : f32 to vector<2x48xf32>
    %833 = vector.extract_strided_slice %819 {offsets = [0, 0, 0], sizes = [1, 2, 48], strides = [1, 1, 1]} : vector<8x2x48xf32> to vector<1x2x48xf32>
    %834 = vector.shape_cast %833 : vector<1x2x48xf32> to vector<2x48xf32>
    %835 = vector.extract_strided_slice %819 {offsets = [7, 0, 0], sizes = [1, 2, 48], strides = [1, 1, 1]} : vector<8x2x48xf32> to vector<1x2x48xf32>
    %836 = vector.shape_cast %835 : vector<1x2x48xf32> to vector<2x48xf32>
    %837 = arith.select %54, %834, %836 : vector<2x48xi1>, vector<2x48xf32>
    %838 = vector.extract_strided_slice %824 {offsets = [0, 0, 0], sizes = [1, 2, 48], strides = [1, 1, 1]} : vector<8x2x48xf32> to vector<1x2x48xf32>
    %839 = vector.shape_cast %838 : vector<1x2x48xf32> to vector<2x48xf32>
    %840 = vector.extract_strided_slice %824 {offsets = [7, 0, 0], sizes = [1, 2, 48], strides = [1, 1, 1]} : vector<8x2x48xf32> to vector<1x2x48xf32>
    %841 = vector.shape_cast %840 : vector<1x2x48xf32> to vector<2x48xf32>
    %842 = arith.select %54, %839, %841 : vector<2x48xi1>, vector<2x48xf32>
    %843 = vector.extract_strided_slice %829 {offsets = [0, 0, 0], sizes = [1, 2, 48], strides = [1, 1, 1]} : vector<8x2x48xf32> to vector<1x2x48xf32>
    %844 = vector.shape_cast %843 : vector<1x2x48xf32> to vector<2x48xf32>
    %845 = vector.extract_strided_slice %829 {offsets = [7, 0, 0], sizes = [1, 2, 48], strides = [1, 1, 1]} : vector<8x2x48xf32> to vector<1x2x48xf32>
    %846 = vector.shape_cast %845 : vector<1x2x48xf32> to vector<2x48xf32>
    %847 = arith.select %54, %844, %846 : vector<2x48xi1>, vector<2x48xf32>
    %cst_239 = arith.constant dense<0.000000e+00> : vector<2x48xf32>
    %848 = tpu.matmul %832, %807, %cst_239 {dimension_numbers = #tpu.dot_dimension_numbers<[1], [0], [0], [1], [0, 0, 1, 1], [], []>} : vector<2x48xf32>, vector<48x48xf32>, vector<2x48xf32> -> vector<2x48xf32>
    %849 = arith.addf %837, %848 : vector<2x48xf32>
    %850 = arith.negf %849 : vector<2x48xf32>
    %851 = math.exp %850 : vector<2x48xf32>
    %cst_240 = arith.constant 1.000000e+00 : f32
    %852 = vector.broadcast %cst_240 : f32 to vector<2x48xf32>
    %853 = arith.addf %852, %851 : vector<2x48xf32>
    %854 = arith.divf %852, %853 : vector<2x48xf32>
    %cst_241 = arith.constant dense<0.000000e+00> : vector<2x48xf32>
    %855 = tpu.matmul %832, %808, %cst_241 {dimension_numbers = #tpu.dot_dimension_numbers<[1], [0], [0], [1], [0, 0, 1, 1], [], []>} : vector<2x48xf32>, vector<48x48xf32>, vector<2x48xf32> -> vector<2x48xf32>
    %856 = arith.addf %842, %855 : vector<2x48xf32>
    %857 = arith.negf %856 : vector<2x48xf32>
    %858 = math.exp %857 : vector<2x48xf32>
    %cst_242 = arith.constant 1.000000e+00 : f32
    %859 = vector.broadcast %cst_242 : f32 to vector<2x48xf32>
    %860 = arith.addf %859, %858 : vector<2x48xf32>
    %861 = arith.divf %859, %860 : vector<2x48xf32>
    %cst_243 = arith.constant dense<0.000000e+00> : vector<2x48xf32>
    %862 = tpu.matmul %832, %809, %cst_243 {dimension_numbers = #tpu.dot_dimension_numbers<[1], [0], [0], [1], [0, 0, 1, 1], [], []>} : vector<2x48xf32>, vector<48x48xf32>, vector<2x48xf32> -> vector<2x48xf32>
    %863 = arith.addf %862, %831 : vector<2x48xf32>
    %864 = arith.mulf %854, %863 : vector<2x48xf32>
    %865 = arith.addf %847, %864 : vector<2x48xf32>
    %866 = math.tanh %865 : vector<2x48xf32>
    %867 = arith.subf %832, %866 : vector<2x48xf32>
    %868 = arith.mulf %861, %867 : vector<2x48xf32>
    %869 = arith.addf %866, %868 : vector<2x48xf32>
    %c0_244 = arith.constant 0 : index
    %c0_245 = arith.constant 0 : index
    %c0_246 = arith.constant 0 : index
    %870 = vector.load %arg6[%c0_244, %c0_245, %c0_246] : memref<8x2x48xf32, #tpu.memory_space<vmem>>, vector<1x2x48xf32>
    %871 = vector.shape_cast %870 : vector<1x2x48xf32> to vector<2x48xf32>
    %872 = vector.shape_cast %869 : vector<2x48xf32> to vector<1x2x48xf32>
    tpu.vector_store %arg6[%c0_244, %c0_245, %c0_246], %872 {strides = array<i32>} : memref<8x2x48xf32, #tpu.memory_space<vmem>>, vector<1x2x48xf32>,
    %c7_247 = arith.constant 7 : index
    %c0_248 = arith.constant 0 : index
    %c0_249 = arith.constant 0 : index
    %873 = vector.load %arg7[%c7_247, %c0_248, %c0_249] : memref<8x2x48xf32, #tpu.memory_space<vmem>>, vector<1x2x48xf32>
    %874 = vector.shape_cast %873 : vector<1x2x48xf32> to vector<2x48xf32>
    %875 = vector.shape_cast %869 : vector<2x48xf32> to vector<1x2x48xf32>
    tpu.vector_store %arg7[%c7_247, %c0_248, %c0_249], %875 {strides = array<i32>} : memref<8x2x48xf32, #tpu.memory_space<vmem>>, vector<1x2x48xf32>,
    %876 = vector.extract_strided_slice %819 {offsets = [1, 0, 0], sizes = [1, 2, 48], strides = [1, 1, 1]} : vector<8x2x48xf32> to vector<1x2x48xf32>
    %877 = vector.shape_cast %876 : vector<1x2x48xf32> to vector<2x48xf32>
    %878 = vector.extract_strided_slice %819 {offsets = [6, 0, 0], sizes = [1, 2, 48], strides = [1, 1, 1]} : vector<8x2x48xf32> to vector<1x2x48xf32>
    %879 = vector.shape_cast %878 : vector<1x2x48xf32> to vector<2x48xf32>
    %880 = arith.select %54, %877, %879 : vector<2x48xi1>, vector<2x48xf32>
    %881 = vector.extract_strided_slice %824 {offsets = [1, 0, 0], sizes = [1, 2, 48], strides = [1, 1, 1]} : vector<8x2x48xf32> to vector<1x2x48xf32>
    %882 = vector.shape_cast %881 : vector<1x2x48xf32> to vector<2x48xf32>
    %883 = vector.extract_strided_slice %824 {offsets = [6, 0, 0], sizes = [1, 2, 48], strides = [1, 1, 1]} : vector<8x2x48xf32> to vector<1x2x48xf32>
    %884 = vector.shape_cast %883 : vector<1x2x48xf32> to vector<2x48xf32>
    %885 = arith.select %54, %882, %884 : vector<2x48xi1>, vector<2x48xf32>
    %886 = vector.extract_strided_slice %829 {offsets = [1, 0, 0], sizes = [1, 2, 48], strides = [1, 1, 1]} : vector<8x2x48xf32> to vector<1x2x48xf32>
    %887 = vector.shape_cast %886 : vector<1x2x48xf32> to vector<2x48xf32>
    %888 = vector.extract_strided_slice %829 {offsets = [6, 0, 0], sizes = [1, 2, 48], strides = [1, 1, 1]} : vector<8x2x48xf32> to vector<1x2x48xf32>
    %889 = vector.shape_cast %888 : vector<1x2x48xf32> to vector<2x48xf32>
    %890 = arith.select %54, %887, %889 : vector<2x48xi1>, vector<2x48xf32>
    %cst_250 = arith.constant dense<0.000000e+00> : vector<2x48xf32>
    %891 = tpu.matmul %869, %807, %cst_250 {dimension_numbers = #tpu.dot_dimension_numbers<[1], [0], [0], [1], [0, 0, 1, 1], [], []>} : vector<2x48xf32>, vector<48x48xf32>, vector<2x48xf32> -> vector<2x48xf32>
    %892 = arith.addf %880, %891 : vector<2x48xf32>
    %893 = arith.negf %892 : vector<2x48xf32>
    %894 = math.exp %893 : vector<2x48xf32>
    %cst_251 = arith.constant 1.000000e+00 : f32
    %895 = vector.broadcast %cst_251 : f32 to vector<2x48xf32>
    %896 = arith.addf %895, %894 : vector<2x48xf32>
    %897 = arith.divf %895, %896 : vector<2x48xf32>
    %cst_252 = arith.constant dense<0.000000e+00> : vector<2x48xf32>
    %898 = tpu.matmul %869, %808, %cst_252 {dimension_numbers = #tpu.dot_dimension_numbers<[1], [0], [0], [1], [0, 0, 1, 1], [], []>} : vector<2x48xf32>, vector<48x48xf32>, vector<2x48xf32> -> vector<2x48xf32>
    %899 = arith.addf %885, %898 : vector<2x48xf32>
    %900 = arith.negf %899 : vector<2x48xf32>
    %901 = math.exp %900 : vector<2x48xf32>
    %cst_253 = arith.constant 1.000000e+00 : f32
    %902 = vector.broadcast %cst_253 : f32 to vector<2x48xf32>
    %903 = arith.addf %902, %901 : vector<2x48xf32>
    %904 = arith.divf %902, %903 : vector<2x48xf32>
    %cst_254 = arith.constant dense<0.000000e+00> : vector<2x48xf32>
    %905 = tpu.matmul %869, %809, %cst_254 {dimension_numbers = #tpu.dot_dimension_numbers<[1], [0], [0], [1], [0, 0, 1, 1], [], []>} : vector<2x48xf32>, vector<48x48xf32>, vector<2x48xf32> -> vector<2x48xf32>
    %906 = arith.addf %905, %831 : vector<2x48xf32>
    %907 = arith.mulf %897, %906 : vector<2x48xf32>
    %908 = arith.addf %890, %907 : vector<2x48xf32>
    %909 = math.tanh %908 : vector<2x48xf32>
    %910 = arith.subf %869, %909 : vector<2x48xf32>
    %911 = arith.mulf %904, %910 : vector<2x48xf32>
    %912 = arith.addf %909, %911 : vector<2x48xf32>
    %c1_255 = arith.constant 1 : index
    %c0_256 = arith.constant 0 : index
    %c0_257 = arith.constant 0 : index
    %913 = vector.load %arg6[%c1_255, %c0_256, %c0_257] : memref<8x2x48xf32, #tpu.memory_space<vmem>>, vector<1x2x48xf32>
    %914 = vector.shape_cast %913 : vector<1x2x48xf32> to vector<2x48xf32>
    %915 = vector.shape_cast %912 : vector<2x48xf32> to vector<1x2x48xf32>
    tpu.vector_store %arg6[%c1_255, %c0_256, %c0_257], %915 {strides = array<i32>} : memref<8x2x48xf32, #tpu.memory_space<vmem>>, vector<1x2x48xf32>,
    %c6_258 = arith.constant 6 : index
    %c0_259 = arith.constant 0 : index
    %c0_260 = arith.constant 0 : index
    %916 = vector.load %arg7[%c6_258, %c0_259, %c0_260] : memref<8x2x48xf32, #tpu.memory_space<vmem>>, vector<1x2x48xf32>
    %917 = vector.shape_cast %916 : vector<1x2x48xf32> to vector<2x48xf32>
    %918 = vector.shape_cast %912 : vector<2x48xf32> to vector<1x2x48xf32>
    tpu.vector_store %arg7[%c6_258, %c0_259, %c0_260], %918 {strides = array<i32>} : memref<8x2x48xf32, #tpu.memory_space<vmem>>, vector<1x2x48xf32>,
    %919 = vector.extract_strided_slice %819 {offsets = [2, 0, 0], sizes = [1, 2, 48], strides = [1, 1, 1]} : vector<8x2x48xf32> to vector<1x2x48xf32>
    %920 = vector.shape_cast %919 : vector<1x2x48xf32> to vector<2x48xf32>
    %921 = vector.extract_strided_slice %819 {offsets = [5, 0, 0], sizes = [1, 2, 48], strides = [1, 1, 1]} : vector<8x2x48xf32> to vector<1x2x48xf32>
    %922 = vector.shape_cast %921 : vector<1x2x48xf32> to vector<2x48xf32>
    %923 = arith.select %54, %920, %922 : vector<2x48xi1>, vector<2x48xf32>
    %924 = vector.extract_strided_slice %824 {offsets = [2, 0, 0], sizes = [1, 2, 48], strides = [1, 1, 1]} : vector<8x2x48xf32> to vector<1x2x48xf32>
    %925 = vector.shape_cast %924 : vector<1x2x48xf32> to vector<2x48xf32>
    %926 = vector.extract_strided_slice %824 {offsets = [5, 0, 0], sizes = [1, 2, 48], strides = [1, 1, 1]} : vector<8x2x48xf32> to vector<1x2x48xf32>
    %927 = vector.shape_cast %926 : vector<1x2x48xf32> to vector<2x48xf32>
    %928 = arith.select %54, %925, %927 : vector<2x48xi1>, vector<2x48xf32>
    %929 = vector.extract_strided_slice %829 {offsets = [2, 0, 0], sizes = [1, 2, 48], strides = [1, 1, 1]} : vector<8x2x48xf32> to vector<1x2x48xf32>
    %930 = vector.shape_cast %929 : vector<1x2x48xf32> to vector<2x48xf32>
    %931 = vector.extract_strided_slice %829 {offsets = [5, 0, 0], sizes = [1, 2, 48], strides = [1, 1, 1]} : vector<8x2x48xf32> to vector<1x2x48xf32>
    %932 = vector.shape_cast %931 : vector<1x2x48xf32> to vector<2x48xf32>
    %933 = arith.select %54, %930, %932 : vector<2x48xi1>, vector<2x48xf32>
    %cst_261 = arith.constant dense<0.000000e+00> : vector<2x48xf32>
    %934 = tpu.matmul %912, %807, %cst_261 {dimension_numbers = #tpu.dot_dimension_numbers<[1], [0], [0], [1], [0, 0, 1, 1], [], []>} : vector<2x48xf32>, vector<48x48xf32>, vector<2x48xf32> -> vector<2x48xf32>
    %935 = arith.addf %923, %934 : vector<2x48xf32>
    %936 = arith.negf %935 : vector<2x48xf32>
    %937 = math.exp %936 : vector<2x48xf32>
    %cst_262 = arith.constant 1.000000e+00 : f32
    %938 = vector.broadcast %cst_262 : f32 to vector<2x48xf32>
    %939 = arith.addf %938, %937 : vector<2x48xf32>
    %940 = arith.divf %938, %939 : vector<2x48xf32>
    %cst_263 = arith.constant dense<0.000000e+00> : vector<2x48xf32>
    %941 = tpu.matmul %912, %808, %cst_263 {dimension_numbers = #tpu.dot_dimension_numbers<[1], [0], [0], [1], [0, 0, 1, 1], [], []>} : vector<2x48xf32>, vector<48x48xf32>, vector<2x48xf32> -> vector<2x48xf32>
    %942 = arith.addf %928, %941 : vector<2x48xf32>
    %943 = arith.negf %942 : vector<2x48xf32>
    %944 = math.exp %943 : vector<2x48xf32>
    %cst_264 = arith.constant 1.000000e+00 : f32
    %945 = vector.broadcast %cst_264 : f32 to vector<2x48xf32>
    %946 = arith.addf %945, %944 : vector<2x48xf32>
    %947 = arith.divf %945, %946 : vector<2x48xf32>
    %cst_265 = arith.constant dense<0.000000e+00> : vector<2x48xf32>
    %948 = tpu.matmul %912, %809, %cst_265 {dimension_numbers = #tpu.dot_dimension_numbers<[1], [0], [0], [1], [0, 0, 1, 1], [], []>} : vector<2x48xf32>, vector<48x48xf32>, vector<2x48xf32> -> vector<2x48xf32>
    %949 = arith.addf %948, %831 : vector<2x48xf32>
    %950 = arith.mulf %940, %949 : vector<2x48xf32>
    %951 = arith.addf %933, %950 : vector<2x48xf32>
    %952 = math.tanh %951 : vector<2x48xf32>
    %953 = arith.subf %912, %952 : vector<2x48xf32>
    %954 = arith.mulf %947, %953 : vector<2x48xf32>
    %955 = arith.addf %952, %954 : vector<2x48xf32>
    %c2_266 = arith.constant 2 : index
    %c0_267 = arith.constant 0 : index
    %c0_268 = arith.constant 0 : index
    %956 = vector.load %arg6[%c2_266, %c0_267, %c0_268] : memref<8x2x48xf32, #tpu.memory_space<vmem>>, vector<1x2x48xf32>
    %957 = vector.shape_cast %956 : vector<1x2x48xf32> to vector<2x48xf32>
    %958 = vector.shape_cast %955 : vector<2x48xf32> to vector<1x2x48xf32>
    tpu.vector_store %arg6[%c2_266, %c0_267, %c0_268], %958 {strides = array<i32>} : memref<8x2x48xf32, #tpu.memory_space<vmem>>, vector<1x2x48xf32>,
    %c5_269 = arith.constant 5 : index
    %c0_270 = arith.constant 0 : index
    %c0_271 = arith.constant 0 : index
    %959 = vector.load %arg7[%c5_269, %c0_270, %c0_271] : memref<8x2x48xf32, #tpu.memory_space<vmem>>, vector<1x2x48xf32>
    %960 = vector.shape_cast %959 : vector<1x2x48xf32> to vector<2x48xf32>
    %961 = vector.shape_cast %955 : vector<2x48xf32> to vector<1x2x48xf32>
    tpu.vector_store %arg7[%c5_269, %c0_270, %c0_271], %961 {strides = array<i32>} : memref<8x2x48xf32, #tpu.memory_space<vmem>>, vector<1x2x48xf32>,
    %962 = vector.extract_strided_slice %819 {offsets = [3, 0, 0], sizes = [1, 2, 48], strides = [1, 1, 1]} : vector<8x2x48xf32> to vector<1x2x48xf32>
    %963 = vector.shape_cast %962 : vector<1x2x48xf32> to vector<2x48xf32>
    %964 = vector.extract_strided_slice %819 {offsets = [4, 0, 0], sizes = [1, 2, 48], strides = [1, 1, 1]} : vector<8x2x48xf32> to vector<1x2x48xf32>
    %965 = vector.shape_cast %964 : vector<1x2x48xf32> to vector<2x48xf32>
    %966 = arith.select %54, %963, %965 : vector<2x48xi1>, vector<2x48xf32>
    %967 = vector.extract_strided_slice %824 {offsets = [3, 0, 0], sizes = [1, 2, 48], strides = [1, 1, 1]} : vector<8x2x48xf32> to vector<1x2x48xf32>
    %968 = vector.shape_cast %967 : vector<1x2x48xf32> to vector<2x48xf32>
    %969 = vector.extract_strided_slice %824 {offsets = [4, 0, 0], sizes = [1, 2, 48], strides = [1, 1, 1]} : vector<8x2x48xf32> to vector<1x2x48xf32>
    %970 = vector.shape_cast %969 : vector<1x2x48xf32> to vector<2x48xf32>
    %971 = arith.select %54, %968, %970 : vector<2x48xi1>, vector<2x48xf32>
    %972 = vector.extract_strided_slice %829 {offsets = [3, 0, 0], sizes = [1, 2, 48], strides = [1, 1, 1]} : vector<8x2x48xf32> to vector<1x2x48xf32>
    %973 = vector.shape_cast %972 : vector<1x2x48xf32> to vector<2x48xf32>
    %974 = vector.extract_strided_slice %829 {offsets = [4, 0, 0], sizes = [1, 2, 48], strides = [1, 1, 1]} : vector<8x2x48xf32> to vector<1x2x48xf32>
    %975 = vector.shape_cast %974 : vector<1x2x48xf32> to vector<2x48xf32>
    %976 = arith.select %54, %973, %975 : vector<2x48xi1>, vector<2x48xf32>
    %cst_272 = arith.constant dense<0.000000e+00> : vector<2x48xf32>
    %977 = tpu.matmul %955, %807, %cst_272 {dimension_numbers = #tpu.dot_dimension_numbers<[1], [0], [0], [1], [0, 0, 1, 1], [], []>} : vector<2x48xf32>, vector<48x48xf32>, vector<2x48xf32> -> vector<2x48xf32>
    %978 = arith.addf %966, %977 : vector<2x48xf32>
    %979 = arith.negf %978 : vector<2x48xf32>
    %980 = math.exp %979 : vector<2x48xf32>
    %cst_273 = arith.constant 1.000000e+00 : f32
    %981 = vector.broadcast %cst_273 : f32 to vector<2x48xf32>
    %982 = arith.addf %981, %980 : vector<2x48xf32>
    %983 = arith.divf %981, %982 : vector<2x48xf32>
    %cst_274 = arith.constant dense<0.000000e+00> : vector<2x48xf32>
    %984 = tpu.matmul %955, %808, %cst_274 {dimension_numbers = #tpu.dot_dimension_numbers<[1], [0], [0], [1], [0, 0, 1, 1], [], []>} : vector<2x48xf32>, vector<48x48xf32>, vector<2x48xf32> -> vector<2x48xf32>
    %985 = arith.addf %971, %984 : vector<2x48xf32>
    %986 = arith.negf %985 : vector<2x48xf32>
    %987 = math.exp %986 : vector<2x48xf32>
    %cst_275 = arith.constant 1.000000e+00 : f32
    %988 = vector.broadcast %cst_275 : f32 to vector<2x48xf32>
    %989 = arith.addf %988, %987 : vector<2x48xf32>
    %990 = arith.divf %988, %989 : vector<2x48xf32>
    %cst_276 = arith.constant dense<0.000000e+00> : vector<2x48xf32>
    %991 = tpu.matmul %955, %809, %cst_276 {dimension_numbers = #tpu.dot_dimension_numbers<[1], [0], [0], [1], [0, 0, 1, 1], [], []>} : vector<2x48xf32>, vector<48x48xf32>, vector<2x48xf32> -> vector<2x48xf32>
    %992 = arith.addf %991, %831 : vector<2x48xf32>
    %993 = arith.mulf %983, %992 : vector<2x48xf32>
    %994 = arith.addf %976, %993 : vector<2x48xf32>
    %995 = math.tanh %994 : vector<2x48xf32>
    %996 = arith.subf %955, %995 : vector<2x48xf32>
    %997 = arith.mulf %990, %996 : vector<2x48xf32>
    %998 = arith.addf %995, %997 : vector<2x48xf32>
    %c3_277 = arith.constant 3 : index
    %c0_278 = arith.constant 0 : index
    %c0_279 = arith.constant 0 : index
    %999 = vector.load %arg6[%c3_277, %c0_278, %c0_279] : memref<8x2x48xf32, #tpu.memory_space<vmem>>, vector<1x2x48xf32>
    %1000 = vector.shape_cast %999 : vector<1x2x48xf32> to vector<2x48xf32>
    %1001 = vector.shape_cast %998 : vector<2x48xf32> to vector<1x2x48xf32>
    tpu.vector_store %arg6[%c3_277, %c0_278, %c0_279], %1001 {strides = array<i32>} : memref<8x2x48xf32, #tpu.memory_space<vmem>>, vector<1x2x48xf32>,
    %c4_280 = arith.constant 4 : index
    %c0_281 = arith.constant 0 : index
    %c0_282 = arith.constant 0 : index
    %1002 = vector.load %arg7[%c4_280, %c0_281, %c0_282] : memref<8x2x48xf32, #tpu.memory_space<vmem>>, vector<1x2x48xf32>
    %1003 = vector.shape_cast %1002 : vector<1x2x48xf32> to vector<2x48xf32>
    %1004 = vector.shape_cast %998 : vector<2x48xf32> to vector<1x2x48xf32>
    tpu.vector_store %arg7[%c4_280, %c0_281, %c0_282], %1004 {strides = array<i32>} : memref<8x2x48xf32, #tpu.memory_space<vmem>>, vector<1x2x48xf32>,
    %1005 = vector.extract_strided_slice %819 {offsets = [4, 0, 0], sizes = [1, 2, 48], strides = [1, 1, 1]} : vector<8x2x48xf32> to vector<1x2x48xf32>
    %1006 = vector.shape_cast %1005 : vector<1x2x48xf32> to vector<2x48xf32>
    %1007 = vector.extract_strided_slice %819 {offsets = [3, 0, 0], sizes = [1, 2, 48], strides = [1, 1, 1]} : vector<8x2x48xf32> to vector<1x2x48xf32>
    %1008 = vector.shape_cast %1007 : vector<1x2x48xf32> to vector<2x48xf32>
    %1009 = arith.select %54, %1006, %1008 : vector<2x48xi1>, vector<2x48xf32>
    %1010 = vector.extract_strided_slice %824 {offsets = [4, 0, 0], sizes = [1, 2, 48], strides = [1, 1, 1]} : vector<8x2x48xf32> to vector<1x2x48xf32>
    %1011 = vector.shape_cast %1010 : vector<1x2x48xf32> to vector<2x48xf32>
    %1012 = vector.extract_strided_slice %824 {offsets = [3, 0, 0], sizes = [1, 2, 48], strides = [1, 1, 1]} : vector<8x2x48xf32> to vector<1x2x48xf32>
    %1013 = vector.shape_cast %1012 : vector<1x2x48xf32> to vector<2x48xf32>
    %1014 = arith.select %54, %1011, %1013 : vector<2x48xi1>, vector<2x48xf32>
    %1015 = vector.extract_strided_slice %829 {offsets = [4, 0, 0], sizes = [1, 2, 48], strides = [1, 1, 1]} : vector<8x2x48xf32> to vector<1x2x48xf32>
    %1016 = vector.shape_cast %1015 : vector<1x2x48xf32> to vector<2x48xf32>
    %1017 = vector.extract_strided_slice %829 {offsets = [3, 0, 0], sizes = [1, 2, 48], strides = [1, 1, 1]} : vector<8x2x48xf32> to vector<1x2x48xf32>
    %1018 = vector.shape_cast %1017 : vector<1x2x48xf32> to vector<2x48xf32>
    %1019 = arith.select %54, %1016, %1018 : vector<2x48xi1>, vector<2x48xf32>
    %cst_283 = arith.constant dense<0.000000e+00> : vector<2x48xf32>
    %1020 = tpu.matmul %998, %807, %cst_283 {dimension_numbers = #tpu.dot_dimension_numbers<[1], [0], [0], [1], [0, 0, 1, 1], [], []>} : vector<2x48xf32>, vector<48x48xf32>, vector<2x48xf32> -> vector<2x48xf32>
    %1021 = arith.addf %1009, %1020 : vector<2x48xf32>
    %1022 = arith.negf %1021 : vector<2x48xf32>
    %1023 = math.exp %1022 : vector<2x48xf32>
    %cst_284 = arith.constant 1.000000e+00 : f32
    %1024 = vector.broadcast %cst_284 : f32 to vector<2x48xf32>
    %1025 = arith.addf %1024, %1023 : vector<2x48xf32>
    %1026 = arith.divf %1024, %1025 : vector<2x48xf32>
    %cst_285 = arith.constant dense<0.000000e+00> : vector<2x48xf32>
    %1027 = tpu.matmul %998, %808, %cst_285 {dimension_numbers = #tpu.dot_dimension_numbers<[1], [0], [0], [1], [0, 0, 1, 1], [], []>} : vector<2x48xf32>, vector<48x48xf32>, vector<2x48xf32> -> vector<2x48xf32>
    %1028 = arith.addf %1014, %1027 : vector<2x48xf32>
    %1029 = arith.negf %1028 : vector<2x48xf32>
    %1030 = math.exp %1029 : vector<2x48xf32>
    %cst_286 = arith.constant 1.000000e+00 : f32
    %1031 = vector.broadcast %cst_286 : f32 to vector<2x48xf32>
    %1032 = arith.addf %1031, %1030 : vector<2x48xf32>
    %1033 = arith.divf %1031, %1032 : vector<2x48xf32>
    %cst_287 = arith.constant dense<0.000000e+00> : vector<2x48xf32>
    %1034 = tpu.matmul %998, %809, %cst_287 {dimension_numbers = #tpu.dot_dimension_numbers<[1], [0], [0], [1], [0, 0, 1, 1], [], []>} : vector<2x48xf32>, vector<48x48xf32>, vector<2x48xf32> -> vector<2x48xf32>
    %1035 = arith.addf %1034, %831 : vector<2x48xf32>
    %1036 = arith.mulf %1026, %1035 : vector<2x48xf32>
    %1037 = arith.addf %1019, %1036 : vector<2x48xf32>
    %1038 = math.tanh %1037 : vector<2x48xf32>
    %1039 = arith.subf %998, %1038 : vector<2x48xf32>
    %1040 = arith.mulf %1033, %1039 : vector<2x48xf32>
    %1041 = arith.addf %1038, %1040 : vector<2x48xf32>
    %c4_288 = arith.constant 4 : index
    %c0_289 = arith.constant 0 : index
    %c0_290 = arith.constant 0 : index
    %1042 = vector.load %arg6[%c4_288, %c0_289, %c0_290] : memref<8x2x48xf32, #tpu.memory_space<vmem>>, vector<1x2x48xf32>
    %1043 = vector.shape_cast %1042 : vector<1x2x48xf32> to vector<2x48xf32>
    %1044 = vector.shape_cast %1041 : vector<2x48xf32> to vector<1x2x48xf32>
    tpu.vector_store %arg6[%c4_288, %c0_289, %c0_290], %1044 {strides = array<i32>} : memref<8x2x48xf32, #tpu.memory_space<vmem>>, vector<1x2x48xf32>,
    %c3_291 = arith.constant 3 : index
    %c0_292 = arith.constant 0 : index
    %c0_293 = arith.constant 0 : index
    %1045 = vector.load %arg7[%c3_291, %c0_292, %c0_293] : memref<8x2x48xf32, #tpu.memory_space<vmem>>, vector<1x2x48xf32>
    %1046 = vector.shape_cast %1045 : vector<1x2x48xf32> to vector<2x48xf32>
    %1047 = vector.shape_cast %1041 : vector<2x48xf32> to vector<1x2x48xf32>
    tpu.vector_store %arg7[%c3_291, %c0_292, %c0_293], %1047 {strides = array<i32>} : memref<8x2x48xf32, #tpu.memory_space<vmem>>, vector<1x2x48xf32>,
    %1048 = vector.extract_strided_slice %819 {offsets = [5, 0, 0], sizes = [1, 2, 48], strides = [1, 1, 1]} : vector<8x2x48xf32> to vector<1x2x48xf32>
    %1049 = vector.shape_cast %1048 : vector<1x2x48xf32> to vector<2x48xf32>
    %1050 = vector.extract_strided_slice %819 {offsets = [2, 0, 0], sizes = [1, 2, 48], strides = [1, 1, 1]} : vector<8x2x48xf32> to vector<1x2x48xf32>
    %1051 = vector.shape_cast %1050 : vector<1x2x48xf32> to vector<2x48xf32>
    %1052 = arith.select %54, %1049, %1051 : vector<2x48xi1>, vector<2x48xf32>
    %1053 = vector.extract_strided_slice %824 {offsets = [5, 0, 0], sizes = [1, 2, 48], strides = [1, 1, 1]} : vector<8x2x48xf32> to vector<1x2x48xf32>
    %1054 = vector.shape_cast %1053 : vector<1x2x48xf32> to vector<2x48xf32>
    %1055 = vector.extract_strided_slice %824 {offsets = [2, 0, 0], sizes = [1, 2, 48], strides = [1, 1, 1]} : vector<8x2x48xf32> to vector<1x2x48xf32>
    %1056 = vector.shape_cast %1055 : vector<1x2x48xf32> to vector<2x48xf32>
    %1057 = arith.select %54, %1054, %1056 : vector<2x48xi1>, vector<2x48xf32>
    %1058 = vector.extract_strided_slice %829 {offsets = [5, 0, 0], sizes = [1, 2, 48], strides = [1, 1, 1]} : vector<8x2x48xf32> to vector<1x2x48xf32>
    %1059 = vector.shape_cast %1058 : vector<1x2x48xf32> to vector<2x48xf32>
    %1060 = vector.extract_strided_slice %829 {offsets = [2, 0, 0], sizes = [1, 2, 48], strides = [1, 1, 1]} : vector<8x2x48xf32> to vector<1x2x48xf32>
    %1061 = vector.shape_cast %1060 : vector<1x2x48xf32> to vector<2x48xf32>
    %1062 = arith.select %54, %1059, %1061 : vector<2x48xi1>, vector<2x48xf32>
    %cst_294 = arith.constant dense<0.000000e+00> : vector<2x48xf32>
    %1063 = tpu.matmul %1041, %807, %cst_294 {dimension_numbers = #tpu.dot_dimension_numbers<[1], [0], [0], [1], [0, 0, 1, 1], [], []>} : vector<2x48xf32>, vector<48x48xf32>, vector<2x48xf32> -> vector<2x48xf32>
    %1064 = arith.addf %1052, %1063 : vector<2x48xf32>
    %1065 = arith.negf %1064 : vector<2x48xf32>
    %1066 = math.exp %1065 : vector<2x48xf32>
    %cst_295 = arith.constant 1.000000e+00 : f32
    %1067 = vector.broadcast %cst_295 : f32 to vector<2x48xf32>
    %1068 = arith.addf %1067, %1066 : vector<2x48xf32>
    %1069 = arith.divf %1067, %1068 : vector<2x48xf32>
    %cst_296 = arith.constant dense<0.000000e+00> : vector<2x48xf32>
    %1070 = tpu.matmul %1041, %808, %cst_296 {dimension_numbers = #tpu.dot_dimension_numbers<[1], [0], [0], [1], [0, 0, 1, 1], [], []>} : vector<2x48xf32>, vector<48x48xf32>, vector<2x48xf32> -> vector<2x48xf32>
    %1071 = arith.addf %1057, %1070 : vector<2x48xf32>
    %1072 = arith.negf %1071 : vector<2x48xf32>
    %1073 = math.exp %1072 : vector<2x48xf32>
    %cst_297 = arith.constant 1.000000e+00 : f32
    %1074 = vector.broadcast %cst_297 : f32 to vector<2x48xf32>
    %1075 = arith.addf %1074, %1073 : vector<2x48xf32>
    %1076 = arith.divf %1074, %1075 : vector<2x48xf32>
    %cst_298 = arith.constant dense<0.000000e+00> : vector<2x48xf32>
    %1077 = tpu.matmul %1041, %809, %cst_298 {dimension_numbers = #tpu.dot_dimension_numbers<[1], [0], [0], [1], [0, 0, 1, 1], [], []>} : vector<2x48xf32>, vector<48x48xf32>, vector<2x48xf32> -> vector<2x48xf32>
    %1078 = arith.addf %1077, %831 : vector<2x48xf32>
    %1079 = arith.mulf %1069, %1078 : vector<2x48xf32>
    %1080 = arith.addf %1062, %1079 : vector<2x48xf32>
    %1081 = math.tanh %1080 : vector<2x48xf32>
    %1082 = arith.subf %1041, %1081 : vector<2x48xf32>
    %1083 = arith.mulf %1076, %1082 : vector<2x48xf32>
    %1084 = arith.addf %1081, %1083 : vector<2x48xf32>
    %c5_299 = arith.constant 5 : index
    %c0_300 = arith.constant 0 : index
    %c0_301 = arith.constant 0 : index
    %1085 = vector.load %arg6[%c5_299, %c0_300, %c0_301] : memref<8x2x48xf32, #tpu.memory_space<vmem>>, vector<1x2x48xf32>
    %1086 = vector.shape_cast %1085 : vector<1x2x48xf32> to vector<2x48xf32>
    %1087 = vector.shape_cast %1084 : vector<2x48xf32> to vector<1x2x48xf32>
    tpu.vector_store %arg6[%c5_299, %c0_300, %c0_301], %1087 {strides = array<i32>} : memref<8x2x48xf32, #tpu.memory_space<vmem>>, vector<1x2x48xf32>,
    %c2_302 = arith.constant 2 : index
    %c0_303 = arith.constant 0 : index
    %c0_304 = arith.constant 0 : index
    %1088 = vector.load %arg7[%c2_302, %c0_303, %c0_304] : memref<8x2x48xf32, #tpu.memory_space<vmem>>, vector<1x2x48xf32>
    %1089 = vector.shape_cast %1088 : vector<1x2x48xf32> to vector<2x48xf32>
    %1090 = vector.shape_cast %1084 : vector<2x48xf32> to vector<1x2x48xf32>
    tpu.vector_store %arg7[%c2_302, %c0_303, %c0_304], %1090 {strides = array<i32>} : memref<8x2x48xf32, #tpu.memory_space<vmem>>, vector<1x2x48xf32>,
    %1091 = vector.extract_strided_slice %819 {offsets = [6, 0, 0], sizes = [1, 2, 48], strides = [1, 1, 1]} : vector<8x2x48xf32> to vector<1x2x48xf32>
    %1092 = vector.shape_cast %1091 : vector<1x2x48xf32> to vector<2x48xf32>
    %1093 = vector.extract_strided_slice %819 {offsets = [1, 0, 0], sizes = [1, 2, 48], strides = [1, 1, 1]} : vector<8x2x48xf32> to vector<1x2x48xf32>
    %1094 = vector.shape_cast %1093 : vector<1x2x48xf32> to vector<2x48xf32>
    %1095 = arith.select %54, %1092, %1094 : vector<2x48xi1>, vector<2x48xf32>
    %1096 = vector.extract_strided_slice %824 {offsets = [6, 0, 0], sizes = [1, 2, 48], strides = [1, 1, 1]} : vector<8x2x48xf32> to vector<1x2x48xf32>
    %1097 = vector.shape_cast %1096 : vector<1x2x48xf32> to vector<2x48xf32>
    %1098 = vector.extract_strided_slice %824 {offsets = [1, 0, 0], sizes = [1, 2, 48], strides = [1, 1, 1]} : vector<8x2x48xf32> to vector<1x2x48xf32>
    %1099 = vector.shape_cast %1098 : vector<1x2x48xf32> to vector<2x48xf32>
    %1100 = arith.select %54, %1097, %1099 : vector<2x48xi1>, vector<2x48xf32>
    %1101 = vector.extract_strided_slice %829 {offsets = [6, 0, 0], sizes = [1, 2, 48], strides = [1, 1, 1]} : vector<8x2x48xf32> to vector<1x2x48xf32>
    %1102 = vector.shape_cast %1101 : vector<1x2x48xf32> to vector<2x48xf32>
    %1103 = vector.extract_strided_slice %829 {offsets = [1, 0, 0], sizes = [1, 2, 48], strides = [1, 1, 1]} : vector<8x2x48xf32> to vector<1x2x48xf32>
    %1104 = vector.shape_cast %1103 : vector<1x2x48xf32> to vector<2x48xf32>
    %1105 = arith.select %54, %1102, %1104 : vector<2x48xi1>, vector<2x48xf32>
    %cst_305 = arith.constant dense<0.000000e+00> : vector<2x48xf32>
    %1106 = tpu.matmul %1084, %807, %cst_305 {dimension_numbers = #tpu.dot_dimension_numbers<[1], [0], [0], [1], [0, 0, 1, 1], [], []>} : vector<2x48xf32>, vector<48x48xf32>, vector<2x48xf32> -> vector<2x48xf32>
    %1107 = arith.addf %1095, %1106 : vector<2x48xf32>
    %1108 = arith.negf %1107 : vector<2x48xf32>
    %1109 = math.exp %1108 : vector<2x48xf32>
    %cst_306 = arith.constant 1.000000e+00 : f32
    %1110 = vector.broadcast %cst_306 : f32 to vector<2x48xf32>
    %1111 = arith.addf %1110, %1109 : vector<2x48xf32>
    %1112 = arith.divf %1110, %1111 : vector<2x48xf32>
    %cst_307 = arith.constant dense<0.000000e+00> : vector<2x48xf32>
    %1113 = tpu.matmul %1084, %808, %cst_307 {dimension_numbers = #tpu.dot_dimension_numbers<[1], [0], [0], [1], [0, 0, 1, 1], [], []>} : vector<2x48xf32>, vector<48x48xf32>, vector<2x48xf32> -> vector<2x48xf32>
    %1114 = arith.addf %1100, %1113 : vector<2x48xf32>
    %1115 = arith.negf %1114 : vector<2x48xf32>
    %1116 = math.exp %1115 : vector<2x48xf32>
    %cst_308 = arith.constant 1.000000e+00 : f32
    %1117 = vector.broadcast %cst_308 : f32 to vector<2x48xf32>
    %1118 = arith.addf %1117, %1116 : vector<2x48xf32>
    %1119 = arith.divf %1117, %1118 : vector<2x48xf32>
    %cst_309 = arith.constant dense<0.000000e+00> : vector<2x48xf32>
    %1120 = tpu.matmul %1084, %809, %cst_309 {dimension_numbers = #tpu.dot_dimension_numbers<[1], [0], [0], [1], [0, 0, 1, 1], [], []>} : vector<2x48xf32>, vector<48x48xf32>, vector<2x48xf32> -> vector<2x48xf32>
    %1121 = arith.addf %1120, %831 : vector<2x48xf32>
    %1122 = arith.mulf %1112, %1121 : vector<2x48xf32>
    %1123 = arith.addf %1105, %1122 : vector<2x48xf32>
    %1124 = math.tanh %1123 : vector<2x48xf32>
    %1125 = arith.subf %1084, %1124 : vector<2x48xf32>
    %1126 = arith.mulf %1119, %1125 : vector<2x48xf32>
    %1127 = arith.addf %1124, %1126 : vector<2x48xf32>
    %c6_310 = arith.constant 6 : index
    %c0_311 = arith.constant 0 : index
    %c0_312 = arith.constant 0 : index
    %1128 = vector.load %arg6[%c6_310, %c0_311, %c0_312] : memref<8x2x48xf32, #tpu.memory_space<vmem>>, vector<1x2x48xf32>
    %1129 = vector.shape_cast %1128 : vector<1x2x48xf32> to vector<2x48xf32>
    %1130 = vector.shape_cast %1127 : vector<2x48xf32> to vector<1x2x48xf32>
    tpu.vector_store %arg6[%c6_310, %c0_311, %c0_312], %1130 {strides = array<i32>} : memref<8x2x48xf32, #tpu.memory_space<vmem>>, vector<1x2x48xf32>,
    %c1_313 = arith.constant 1 : index
    %c0_314 = arith.constant 0 : index
    %c0_315 = arith.constant 0 : index
    %1131 = vector.load %arg7[%c1_313, %c0_314, %c0_315] : memref<8x2x48xf32, #tpu.memory_space<vmem>>, vector<1x2x48xf32>
    %1132 = vector.shape_cast %1131 : vector<1x2x48xf32> to vector<2x48xf32>
    %1133 = vector.shape_cast %1127 : vector<2x48xf32> to vector<1x2x48xf32>
    tpu.vector_store %arg7[%c1_313, %c0_314, %c0_315], %1133 {strides = array<i32>} : memref<8x2x48xf32, #tpu.memory_space<vmem>>, vector<1x2x48xf32>,
    %1134 = vector.extract_strided_slice %819 {offsets = [7, 0, 0], sizes = [1, 2, 48], strides = [1, 1, 1]} : vector<8x2x48xf32> to vector<1x2x48xf32>
    %1135 = vector.shape_cast %1134 : vector<1x2x48xf32> to vector<2x48xf32>
    %1136 = vector.extract_strided_slice %819 {offsets = [0, 0, 0], sizes = [1, 2, 48], strides = [1, 1, 1]} : vector<8x2x48xf32> to vector<1x2x48xf32>
    %1137 = vector.shape_cast %1136 : vector<1x2x48xf32> to vector<2x48xf32>
    %1138 = arith.select %54, %1135, %1137 : vector<2x48xi1>, vector<2x48xf32>
    %1139 = vector.extract_strided_slice %824 {offsets = [7, 0, 0], sizes = [1, 2, 48], strides = [1, 1, 1]} : vector<8x2x48xf32> to vector<1x2x48xf32>
    %1140 = vector.shape_cast %1139 : vector<1x2x48xf32> to vector<2x48xf32>
    %1141 = vector.extract_strided_slice %824 {offsets = [0, 0, 0], sizes = [1, 2, 48], strides = [1, 1, 1]} : vector<8x2x48xf32> to vector<1x2x48xf32>
    %1142 = vector.shape_cast %1141 : vector<1x2x48xf32> to vector<2x48xf32>
    %1143 = arith.select %54, %1140, %1142 : vector<2x48xi1>, vector<2x48xf32>
    %1144 = vector.extract_strided_slice %829 {offsets = [7, 0, 0], sizes = [1, 2, 48], strides = [1, 1, 1]} : vector<8x2x48xf32> to vector<1x2x48xf32>
    %1145 = vector.shape_cast %1144 : vector<1x2x48xf32> to vector<2x48xf32>
    %1146 = vector.extract_strided_slice %829 {offsets = [0, 0, 0], sizes = [1, 2, 48], strides = [1, 1, 1]} : vector<8x2x48xf32> to vector<1x2x48xf32>
    %1147 = vector.shape_cast %1146 : vector<1x2x48xf32> to vector<2x48xf32>
    %1148 = arith.select %54, %1145, %1147 : vector<2x48xi1>, vector<2x48xf32>
    %cst_316 = arith.constant dense<0.000000e+00> : vector<2x48xf32>
    %1149 = tpu.matmul %1127, %807, %cst_316 {dimension_numbers = #tpu.dot_dimension_numbers<[1], [0], [0], [1], [0, 0, 1, 1], [], []>} : vector<2x48xf32>, vector<48x48xf32>, vector<2x48xf32> -> vector<2x48xf32>
    %1150 = arith.addf %1138, %1149 : vector<2x48xf32>
    %1151 = arith.negf %1150 : vector<2x48xf32>
    %1152 = math.exp %1151 : vector<2x48xf32>
    %cst_317 = arith.constant 1.000000e+00 : f32
    %1153 = vector.broadcast %cst_317 : f32 to vector<2x48xf32>
    %1154 = arith.addf %1153, %1152 : vector<2x48xf32>
    %1155 = arith.divf %1153, %1154 : vector<2x48xf32>
    %cst_318 = arith.constant dense<0.000000e+00> : vector<2x48xf32>
    %1156 = tpu.matmul %1127, %808, %cst_318 {dimension_numbers = #tpu.dot_dimension_numbers<[1], [0], [0], [1], [0, 0, 1, 1], [], []>} : vector<2x48xf32>, vector<48x48xf32>, vector<2x48xf32> -> vector<2x48xf32>
    %1157 = arith.addf %1143, %1156 : vector<2x48xf32>
    %1158 = arith.negf %1157 : vector<2x48xf32>
    %1159 = math.exp %1158 : vector<2x48xf32>
    %cst_319 = arith.constant 1.000000e+00 : f32
    %1160 = vector.broadcast %cst_319 : f32 to vector<2x48xf32>
    %1161 = arith.addf %1160, %1159 : vector<2x48xf32>
    %1162 = arith.divf %1160, %1161 : vector<2x48xf32>
    %cst_320 = arith.constant dense<0.000000e+00> : vector<2x48xf32>
    %1163 = tpu.matmul %1127, %809, %cst_320 {dimension_numbers = #tpu.dot_dimension_numbers<[1], [0], [0], [1], [0, 0, 1, 1], [], []>} : vector<2x48xf32>, vector<48x48xf32>, vector<2x48xf32> -> vector<2x48xf32>
    %1164 = arith.addf %1163, %831 : vector<2x48xf32>
    %1165 = arith.mulf %1155, %1164 : vector<2x48xf32>
    %1166 = arith.addf %1148, %1165 : vector<2x48xf32>
    %1167 = math.tanh %1166 : vector<2x48xf32>
    %1168 = arith.subf %1127, %1167 : vector<2x48xf32>
    %1169 = arith.mulf %1162, %1168 : vector<2x48xf32>
    %1170 = arith.addf %1167, %1169 : vector<2x48xf32>
    %c7_321 = arith.constant 7 : index
    %c0_322 = arith.constant 0 : index
    %c0_323 = arith.constant 0 : index
    %1171 = vector.load %arg6[%c7_321, %c0_322, %c0_323] : memref<8x2x48xf32, #tpu.memory_space<vmem>>, vector<1x2x48xf32>
    %1172 = vector.shape_cast %1171 : vector<1x2x48xf32> to vector<2x48xf32>
    %1173 = vector.shape_cast %1170 : vector<2x48xf32> to vector<1x2x48xf32>
    tpu.vector_store %arg6[%c7_321, %c0_322, %c0_323], %1173 {strides = array<i32>} : memref<8x2x48xf32, #tpu.memory_space<vmem>>, vector<1x2x48xf32>,
    %c0_324 = arith.constant 0 : index
    %c0_325 = arith.constant 0 : index
    %c0_326 = arith.constant 0 : index
    %1174 = vector.load %arg7[%c0_324, %c0_325, %c0_326] : memref<8x2x48xf32, #tpu.memory_space<vmem>>, vector<1x2x48xf32>
    %1175 = vector.shape_cast %1174 : vector<1x2x48xf32> to vector<2x48xf32>
    %1176 = vector.shape_cast %1170 : vector<2x48xf32> to vector<1x2x48xf32>
    tpu.vector_store %arg7[%c0_324, %c0_325, %c0_326], %1176 {strides = array<i32>} : memref<8x2x48xf32, #tpu.memory_space<vmem>>, vector<1x2x48xf32>,
    %c0_327 = arith.constant 0 : index
    %c0_328 = arith.constant 0 : index
    %c0_329 = arith.constant 0 : index
    %1177 = vector.load %arg6[%c0_327, %c0_328, %c0_329] : memref<8x2x48xf32, #tpu.memory_space<vmem>>, vector<8x2x48xf32>
    %c0_330 = arith.constant 0 : index
    %c0_331 = arith.constant 0 : index
    %c0_332 = arith.constant 0 : index
    %1178 = vector.load %arg7[%c0_330, %c0_331, %c0_332] : memref<8x2x48xf32, #tpu.memory_space<vmem>>, vector<8x2x48xf32>
    %1179 = vector.shape_cast %54 : vector<2x48xi1> to vector<1x2x48xi1>
    %1180 = vector.broadcast %1179 : vector<1x2x48xi1> to vector<8x2x48xi1>
    %1181 = arith.select %1180, %1177, %1178 : vector<8x2x48xi1>, vector<8x2x48xf32>
    %1182 = vector.shape_cast %1181 : vector<8x2x48xf32> to vector<16x48xf32>
    %c1016 = arith.constant 1016 : index
    %c0_333 = arith.constant 0 : index
    %1183 = vector.load %arg3[%c1016, %c0_333] : memref<1072x48xf32, #tpu.memory_space<vmem>>, vector<48x48xf32>
    %cst_334 = arith.constant dense<0.000000e+00> : vector<16x48xf32>
    %1184 = tpu.matmul %1182, %1183, %cst_334 {dimension_numbers = #tpu.dot_dimension_numbers<[1], [0], [0], [1], [0, 0, 1, 1], [], []>} : vector<16x48xf32>, vector<48x48xf32>, vector<16x48xf32> -> vector<16x48xf32>
    %c1064 = arith.constant 1064 : index
    %c0_335 = arith.constant 0 : index
    %1185 = vector.load %arg3[%c1064, %c0_335] : memref<1072x48xf32, #tpu.memory_space<vmem>>, vector<1x48xf32>
    %1186 = vector.broadcast %1185 : vector<1x48xf32> to vector<16x48xf32>
    %1187 = arith.addf %1184, %1186 : vector<16x48xf32>
    %1188 = vector.extract_strided_slice %1187 {offsets = [0, 0], sizes = [16, 3], strides = [1, 1]} : vector<16x48xf32> to vector<16x3xf32>
    %cst_336 = arith.constant 9.99999974E-6 : f32
    %1189 = vector.broadcast %cst_336 : f32 to vector<16x3xf32>
    %1190 = arith.addf %1188, %1189 : vector<16x3xf32>
    %c0_337 = arith.constant 0 : index
    %c0_338 = arith.constant 0 : index
    %1191 = vector.load %arg4[%c0_337, %c0_338] : memref<16x3xf32, #tpu.memory_space<vmem>>, vector<16x3xf32>
    tpu.vector_store %arg4[%c0_337, %c0_338], %1190 {strides = array<i32>} : memref<16x3xf32, #tpu.memory_space<vmem>>, vector<16x3xf32>,
    %c0_339 = arith.constant 0 : index
    %c0_340 = arith.constant 0 : index
    %1192 = vector.load %arg1[%c0_339, %c0_340] : memref<16x1xi32, #tpu.memory_space<vmem>>, vector<16x1xi32>
    %c0_341 = arith.constant 0 : index
    %c0_342 = arith.constant 0 : index
    %1193 = vector.load %arg2[%c0_341, %c0_342] : memref<1x3xf32, #tpu.memory_space<vmem>>, vector<1x3xf32>
    %c-1_i32 = arith.constant -1 : i32
    %1194 = vector.broadcast %c-1_i32 : i32 to vector<16x1xi32>
    %1195 = arith.cmpi ne, %1192, %1194 : vector<16x1xi32>
    %1196 = arith.extui %1195 : vector<16x1xi1> to vector<16x1xi32>
    %1197 = arith.sitofp %1196 : vector<16x1xi32> to vector<16x1xf32>
    %c0_i32 = arith.constant 0 : i32
    %1198 = vector.broadcast %c0_i32 : i32 to vector<16x1xi32>
    %1199 = arith.select %1195, %1192, %1198 : vector<16x1xi1>, vector<16x1xi32>
    %1200 = tpu.iota {dimensions = array<i32: 1>} : vector<16x3xi32>
    %1201 = vector.broadcast %1199 : vector<16x1xi32> to vector<16x3xi32>
    %1202 = arith.cmpi eq, %1200, %1201 : vector<16x3xi32>
    %1203 = arith.extui %1202 : vector<16x3xi1> to vector<16x3xi32>
    %1204 = arith.sitofp %1203 : vector<16x3xi32> to vector<16x3xf32>
    %cst_343 = arith.constant dense<0xFF800000> : vector<16xf32>
    %1205 = vector.multi_reduction <maximumf>, %1190, %cst_343 [1] : vector<16x3xf32> to vector<16xf32>
    %1206 = vector.shape_cast %1205 : vector<16xf32> to vector<16x1xf32>
    %1207 = vector.broadcast %1206 : vector<16x1xf32> to vector<16x3xf32>
    %1208 = arith.subf %1190, %1207 : vector<16x3xf32>
    %1209 = math.exp %1208 : vector<16x3xf32>
    %cst_344 = arith.constant dense<0.000000e+00> : vector<16xf32>
    %1210 = vector.multi_reduction <add>, %1209, %cst_344 [1] : vector<16x3xf32> to vector<16xf32>
    %1211 = vector.shape_cast %1210 : vector<16xf32> to vector<16x1xf32>
    %1212 = vector.broadcast %1206 : vector<16x1xf32> to vector<16x3xf32>
    %1213 = arith.subf %1190, %1212 : vector<16x3xf32>
    %1214 = math.log %1211 : vector<16x1xf32>
    %1215 = vector.broadcast %1214 : vector<16x1xf32> to vector<16x3xf32>
    %1216 = arith.subf %1213, %1215 : vector<16x3xf32>
    %1217 = vector.broadcast %1211 : vector<16x1xf32> to vector<16x3xf32>
    %1218 = arith.divf %1209, %1217 : vector<16x3xf32>
    %1219 = arith.mulf %1204, %1216 : vector<16x3xf32>
    %cst_345 = arith.constant dense<0.000000e+00> : vector<16xf32>
    %1220 = vector.multi_reduction <add>, %1219, %cst_345 [1] : vector<16x3xf32> to vector<16xf32>
    %1221 = vector.shape_cast %1220 : vector<16xf32> to vector<16x1xf32>
    %cst_346 = arith.constant 0.000000e+00 : f32
    %1222 = vector.broadcast %cst_346 : f32 to vector<16x1xf32>
    %1223 = arith.subf %1222, %1221 : vector<16x1xf32>
    %1224 = vector.broadcast %1193 : vector<1x3xf32> to vector<16x3xf32>
    %1225 = arith.mulf %1204, %1224 : vector<16x3xf32>
    %cst_347 = arith.constant dense<0.000000e+00> : vector<16xf32>
    %1226 = vector.multi_reduction <add>, %1225, %cst_347 [1] : vector<16x3xf32> to vector<16xf32>
    %1227 = vector.shape_cast %1226 : vector<16xf32> to vector<16x1xf32>
    %1228 = arith.mulf %1197, %1227 : vector<16x1xf32>
    %1229 = arith.mulf %1228, %1223 : vector<16x1xf32>
    %cst_348 = arith.constant dense<0.000000e+00> : vector<1xf32>
    %1230 = vector.multi_reduction <add>, %1229, %cst_348 [0] : vector<16x1xf32> to vector<1xf32>
    %1231 = vector.shape_cast %1230 : vector<1xf32> to vector<1x1xf32>
    %1232 = arith.mulf %1197, %1227 : vector<16x1xf32>
    %cst_349 = arith.constant dense<0.000000e+00> : vector<1xf32>
    %1233 = vector.multi_reduction <add>, %1232, %cst_349 [0] : vector<16x1xf32> to vector<1xf32>
    %1234 = vector.shape_cast %1233 : vector<1xf32> to vector<1x1xf32>
    %cst_350 = arith.constant 9.99999996E-13 : f32
    %1235 = vector.broadcast %cst_350 : f32 to vector<1x1xf32>
    %1236 = arith.maximumf %1234, %1235 : vector<1x1xf32>
    %1237 = arith.divf %1231, %1236 : vector<1x1xf32>
    %1238 = vector.broadcast %1197 : vector<16x1xf32> to vector<16x3xf32>
    %1239 = arith.mulf %1218, %1238 : vector<16x3xf32>
    %1240 = vector.broadcast %1197 : vector<16x1xf32> to vector<16x3xf32>
    %1241 = arith.mulf %1204, %1240 : vector<16x3xf32>
    %1242 = arith.mulf %1239, %1241 : vector<16x3xf32>
    %cst_351 = arith.constant dense<0.000000e+00> : vector<3xf32>
    %1243 = vector.multi_reduction <add>, %1242, %cst_351 [0] : vector<16x3xf32> to vector<3xf32>
    %1244 = vector.shape_cast %1243 : vector<3xf32> to vector<1x3xf32>
    %cst_352 = arith.constant dense<0.000000e+00> : vector<3xf32>
    %1245 = vector.multi_reduction <add>, %1239, %cst_352 [0] : vector<16x3xf32> to vector<3xf32>
    %1246 = vector.shape_cast %1245 : vector<3xf32> to vector<1x3xf32>
    %cst_353 = arith.constant dense<0.000000e+00> : vector<3xf32>
    %1247 = vector.multi_reduction <add>, %1241, %cst_353 [0] : vector<16x3xf32> to vector<3xf32>
    %1248 = vector.shape_cast %1247 : vector<3xf32> to vector<1x3xf32>
    %1249 = arith.addf %1246, %1248 : vector<1x3xf32>
    %cst_354 = arith.constant 2.000000e+00 : f32
    %1250 = vector.broadcast %cst_354 : f32 to vector<1x3xf32>
    %1251 = arith.mulf %1250, %1244 : vector<1x3xf32>
    %cst_355 = arith.constant 9.99999997E-7 : f32
    %1252 = vector.broadcast %cst_355 : f32 to vector<1x3xf32>
    %1253 = arith.addf %1251, %1252 : vector<1x3xf32>
    %cst_356 = arith.constant 9.99999997E-7 : f32
    %1254 = vector.broadcast %cst_356 : f32 to vector<1x3xf32>
    %1255 = arith.addf %1249, %1254 : vector<1x3xf32>
    %1256 = arith.divf %1253, %1255 : vector<1x3xf32>
    %cst_357 = arith.constant dense<0.000000e+00> : vector<1xf32>
    %1257 = vector.multi_reduction <add>, %1256, %cst_357 [1] : vector<1x3xf32> to vector<1xf32>
    %1258 = vector.shape_cast %1257 : vector<1xf32> to vector<1x1xf32>
    %cst_358 = arith.constant 3.000000e+00 : f32
    %1259 = vector.broadcast %cst_358 : f32 to vector<1x1xf32>
    %1260 = arith.divf %1258, %1259 : vector<1x1xf32>
    %cst_359 = arith.constant 1.000000e+00 : f32
    %1261 = vector.broadcast %cst_359 : f32 to vector<1x1xf32>
    %1262 = arith.subf %1261, %1260 : vector<1x1xf32>
    %1263 = arith.addf %1237, %1262 : vector<1x1xf32>
    %1264 = tpu.iota {dimensions = array<i32: 1>} : vector<1x4xi32>
    %c0_i32_360 = arith.constant 0 : i32
    %1265 = vector.broadcast %c0_i32_360 : i32 to vector<1x4xi32>
    %1266 = arith.cmpi eq, %1264, %1265 : vector<1x4xi32>
    %cst_361 = arith.constant 0.000000e+00 : f32
    %1267 = vector.shape_cast %1263 : vector<1x1xf32> to vector<1x1xf32>
    %1268 = vector.broadcast %1267 : vector<1x1xf32> to vector<1x4xf32>
    %1269 = vector.broadcast %cst_361 : f32 to vector<1x4xf32>
    %1270 = arith.select %1266, %1268, %1269 : vector<1x4xi1>, vector<1x4xf32>
    %c1_i32 = arith.constant 1 : i32
    %1271 = vector.broadcast %c1_i32 : i32 to vector<1x4xi32>
    %1272 = arith.cmpi eq, %1264, %1271 : vector<1x4xi32>
    %cst_362 = arith.constant 0.000000e+00 : f32
    %1273 = vector.shape_cast %1237 : vector<1x1xf32> to vector<1x1xf32>
    %1274 = vector.broadcast %1273 : vector<1x1xf32> to vector<1x4xf32>
    %1275 = vector.broadcast %cst_362 : f32 to vector<1x4xf32>
    %1276 = arith.select %1272, %1274, %1275 : vector<1x4xi1>, vector<1x4xf32>
    %1277 = arith.addf %1270, %1276 : vector<1x4xf32>
    %c2_i32 = arith.constant 2 : i32
    %1278 = vector.broadcast %c2_i32 : i32 to vector<1x4xi32>
    %1279 = arith.cmpi eq, %1264, %1278 : vector<1x4xi32>
    %cst_363 = arith.constant 0.000000e+00 : f32
    %1280 = vector.shape_cast %1262 : vector<1x1xf32> to vector<1x1xf32>
    %1281 = vector.broadcast %1280 : vector<1x1xf32> to vector<1x4xf32>
    %1282 = vector.broadcast %cst_363 : f32 to vector<1x4xf32>
    %1283 = arith.select %1279, %1281, %1282 : vector<1x4xi1>, vector<1x4xf32>
    %1284 = arith.addf %1277, %1283 : vector<1x4xf32>
    %c0_364 = arith.constant 0 : index
    %c0_365 = arith.constant 0 : index
    %1285 = vector.load %arg5[%c0_364, %c0_365] : memref<1x4xf32, #tpu.memory_space<vmem>>, vector<1x4xf32>
    tpu.vector_store %arg5[%c0_364, %c0_365], %1284 {strides = array<i32>} : memref<1x4xf32, #tpu.memory_space<vmem>>, vector<1x4xf32>,
    return
  }
}

</mosaic_0001>

<llo_original>
// kernel: model_1_forward.1
$region0: #{model_1_forward.1}
  #allocation0 [shape = 'u32[]', space=smem, size = 0x4, offset = 0x4, fixed_abs, tag = 'smem constant byte address 0x4 - core index']
  #allocation1 [shape = 'u32[72,128]{1,0:T(1,128)}', space=vmem, size = 0x9000, scoped, tag = 'internal scratch']
  #allocation2 [shape = 'f32[8,2,48]{2,1,0:T(2,128)}', space=vmem, size = 0x2000, scoped, tag = 'scratch operand']
  #allocation3 [shape = 'f32[8,2,48]{2,1,0:T(2,128)}', space=vmem, size = 0x2000, scoped, tag = 'scratch operand']
  %s0 = inlined_call_operand.vmem [shape: f32[16,8], index: 0, kind: input, shape index: {}]
  %s1 = inlined_call_operand.vmem [shape: s32[16,1], index: 1, kind: input, shape index: {}]
  %s2 = inlined_call_operand.vmem [shape: f32[1,3], index: 2, kind: input, shape index: {}]
  %s3 = inlined_call_operand.vmem [shape: f32[1072,48], index: 3, kind: input, shape index: {}]
  %s4 = inlined_call_operand.vmem [shape: f32[16,3], index: 4, kind: output, shape index: {0}]
  %s5 = inlined_call_operand.vmem [shape: f32[1,4], index: 5, kind: output, shape index: {1}]
  %6 = xla_tuple %s4, %s5
  %s7 = sld [smem:[#allocation0]]
  $region34: #{model_1_forward.1} parent=0
    _
  %s9 = ssub.s32 1, %s7
  %s10 = scalar_select 0, %s9, %s7
  // Predicated region
  $region2: #{model_1_forward.1} parent=0 // pred_check
    _
  $region3: #{model_1_forward.1} parent=0 // pred_check_branch
    %12 = sbr.rel (0) target = $region5
  $region4: #{model_1_forward.1} parent=0 // pred_region
    _
  $region5: #{model_1_forward.1} parent=0 // pred_fallthru
    _
  // Predicated region
  $region6: #{model_1_forward.1} parent=0 // pred_check
    _
  $region7: #{model_1_forward.1} parent=0 // pred_check_branch
    %14 = sbr.rel (0) target = $region9
  $region8: #{model_1_forward.1} parent=0 // pred_region
    _
  $region9: #{model_1_forward.1} parent=0 // pred_fallthru
    _
  // Predicated region
  $region10: #{model_1_forward.1} parent=0 // pred_check
    _
  $region11: #{model_1_forward.1} parent=0 // pred_check_branch
    %16 = sbr.rel (0) target = $region13
  $region12: #{model_1_forward.1} parent=0 // pred_region
    _
  $region13: #{model_1_forward.1} parent=0 // pred_fallthru
    _
  // Predicated region
  $region14: #{model_1_forward.1} parent=0 // pred_check
    _
  $region15: #{model_1_forward.1} parent=0 // pred_check_branch
    %18 = sbr.rel (0) target = $region17
  $region16: #{model_1_forward.1} parent=0 // pred_region
    _
  $region17: #{model_1_forward.1} parent=0 // pred_fallthru
    _
  %v19 = vld [vmem:[%s0] sm:$0xff]
  %v20 = vld [vmem:[%s0 + $0x8] sm:$0xff]
  %v21 = vld [vmem:[%s3] sm:$0xff]
  %v22 = vld [vmem:[%s3 + $0x8] sm:$0x1]
  %v23 = vperm.slane %v22, 0
  %vm24 = vcmask 64512
  %v26 = vsel %vm24, %v19, 0
  %v29 = vsel %vm24, %v20, 0
  %31 = vmatpush.msra.mxu0 0.0
  %32 = vmatpush.msra.mxu0 0.0
  %33 = vmatpush.msra.mxu0 0.0
  %34 = vmatpush.msra.mxu0 0.0
  %35 = vmatpush.msra.mxu0 0.0
  %36 = vmatpush.msra.mxu0 0.0
  %37 = vmatpush.msra.mxu0 0.0
  %38 = vmatpush.msra.mxu0 0.0
  %39 = vmatpush.msra.mxu0 0.0
  %40 = vmatpush.msra.mxu0 0.0
  %41 = vmatpush.msra.mxu0 0.0
  %42 = vmatpush.msra.mxu0 0.0
  %43 = vmatpush.msra.mxu0 0.0
  %44 = vmatpush.msra.mxu0 0.0
  %45 = vmatpush.msra.mxu0 0.0
  %46 = vmatpush.msra.mxu0 %v21
  %47 = vmatmul.f32.gmra.mxu0 %v26
  %v48 = vpop.f32.mrf.mxu0
  %v49 = vadd.f32 %v23, %v48
  %50 = vmatmul.f32.gmra.mxu0 %v29
  %v51 = vpop.f32.mrf.mxu0
  %v52 = vadd.f32 %v23, %v51
  %53 = vdwg.mxu0
  %vm54 = vcmp.gt.f32.partialorder %v49, 0.0
  %vm55 = vcmp.gt.f32.partialorder %v52, 0.0
  %v56 = vmin.f32 %v49, 0.0
  %v57 = vmin.f32 %v52, 0.0
  %v58 = vmul.f32 %v56, 1.442695
  %v59 = vpow.pop %v58
  %v60 = vmul.f32 %v57, 1.442695
  %v61 = vpow.pop %v60
  %v62 = vsub.f32 %v59, 1.0
  %v63 = vsub.f32 %v61, 1.0
  %v64 = vmul.f32 %v62, 1.6732632
  %v65 = vmul.f32 %v63, 1.6732632
  %v66 = vsel %vm54, %v49, %v64
  %v67 = vsel %vm55, %v52, %v65
  %v68 = vmul.f32 %v66, 1.050701
  %v69 = vmul.f32 %v67, 1.050701
  %v70 = vld [vmem:[%s3 + $0x10] sm:$0xff]
  %v71 = vld [vmem:[%s3 + $0x18] sm:$0xff]
  %v72 = vld [vmem:[%s3 + $0x20] sm:$0xff]
  %v73 = vld [vmem:[%s3 + $0x28] sm:$0xff]
  %v74 = vld [vmem:[%s3 + $0x30] sm:$0xff]
  %v75 = vld [vmem:[%s3 + $0x38] sm:$0xff]
  %v76 = vld [vmem:[%s3 + $0x40] sm:$0x1]
  %v77 = vperm.slane %v76, 0
  %vm78 = vcmask 392192
  %v80 = vsel %vm78, %v68, 0
  %v83 = vsel %vm78, %v69, 0
  %85 = vmatpush.msra.mxu0 0.0
  %86 = vmatpush.msra.mxu0 0.0
  %87 = vmatpush.msra.mxu0 0.0
  %88 = vmatpush.msra.mxu0 0.0
  %89 = vmatpush.msra.mxu0 0.0
  %90 = vmatpush.msra.mxu0 0.0
  %91 = vmatpush.msra.mxu0 0.0
  %92 = vmatpush.msra.mxu0 0.0
  %93 = vmatpush.msra.mxu0 0.0
  %94 = vmatpush.msra.mxu0 0.0
  %95 = vmatpush.msra.mxu0 %v75
  %96 = vmatpush.msra.mxu0 %v74
  %97 = vmatpush.msra.mxu0 %v73
  %98 = vmatpush.msra.mxu0 %v72
  %99 = vmatpush.msra.mxu0 %v71
  %100 = vmatpush.msra.mxu0 %v70
  %101 = vmatmul.f32.gmra.mxu0 %v80
  %v102 = vpop.f32.mrf.mxu0
  %v103 = vadd.f32 %v77, %v102
  %104 = vmatmul.f32.gmra.mxu0 %v83
  %v105 = vpop.f32.mrf.mxu0
  %v106 = vadd.f32 %v77, %v105
  %107 = vdwg.mxu0
  %vm108 = vcmp.gt.f32.partialorder %v103, 0.0
  %vm109 = vcmp.gt.f32.partialorder %v106, 0.0
  %v110 = vmin.f32 %v103, 0.0
  %v111 = vmin.f32 %v106, 0.0
  %v112 = vmul.f32 %v110, 1.442695
  %v113 = vpow.pop %v112
  %v114 = vmul.f32 %v111, 1.442695
  %v115 = vpow.pop %v114
  %v116 = vsub.f32 %v113, 1.0
  %v117 = vsub.f32 %v115, 1.0
  %v118 = vmul.f32 %v116, 1.6732632
  %v119 = vmul.f32 %v117, 1.6732632
  %v120 = vsel %vm108, %v103, %v118
  %v121 = vsel %vm109, %v106, %v119
  %v122 = vmul.f32 %v120, 1.050701
  %v123 = vmul.f32 %v121, 1.050701
  %v124 = vld [vmem:[%s3 + $0x48] sm:$0xff]
  %v125 = vld [vmem:[%s3 + $0x50] sm:$0xff]
  %v126 = vld [vmem:[%s3 + $0x58] sm:$0xff]
  %v127 = vld [vmem:[%s3 + $0x60] sm:$0xff]
  %v128 = vld [vmem:[%s3 + $0x68] sm:$0xff]
  %v129 = vld [vmem:[%s3 + $0x70] sm:$0xff]
  %v130 = vld [vmem:[%s3 + $0x78] sm:$0x1]
  %v131 = vperm.slane %v130, 0
  %v133 = vsel %vm78, %v122, 0
  %v136 = vsel %vm78, %v123, 0
  %138 = vmatpush.msra.mxu0 0.0
  %139 = vmatpush.msra.mxu0 0.0
  %140 = vmatpush.msra.mxu0 0.0
  %141 = vmatpush.msra.mxu0 0.0
  %142 = vmatpush.msra.mxu0 0.0
  %143 = vmatpush.msra.mxu0 0.0
  %144 = vmatpush.msra.mxu0 0.0
  %145 = vmatpush.msra.mxu0 0.0
  %146 = vmatpush.msra.mxu0 0.0
  %147 = vmatpush.msra.mxu0 0.0
  %148 = vmatpush.msra.mxu0 %v129
  %149 = vmatpush.msra.mxu0 %v128
  %150 = vmatpush.msra.mxu0 %v127
  %151 = vmatpush.msra.mxu0 %v126
  %152 = vmatpush.msra.mxu0 %v125
  %153 = vmatpush.msra.mxu0 %v124
  %154 = vmatmul.f32.gmra.mxu0 %v133
  %v155 = vpop.f32.mrf.mxu0
  %v156 = vadd.f32 %v131, %v155
  %157 = vmatmul.f32.gmra.mxu0 %v136
  %v158 = vpop.f32.mrf.mxu0
  %v159 = vadd.f32 %v131, %v158
  %160 = vdwg.mxu0
  %vm161 = vcmp.gt.f32.partialorder %v156, 0.0
  %vm162 = vcmp.gt.f32.partialorder %v159, 0.0
  %v163 = vmin.f32 %v156, 0.0
  %v164 = vmin.f32 %v159, 0.0
  %v165 = vmul.f32 %v163, 1.442695
  %v166 = vpow.pop %v165
  %v167 = vmul.f32 %v164, 1.442695
  %v168 = vpow.pop %v167
  %v169 = vsub.f32 %v166, 1.0
  %v170 = vsub.f32 %v168, 1.0
  %v171 = vmul.f32 %v169, 1.6732632
  %v172 = vmul.f32 %v170, 1.6732632
  %v173 = vsel %vm161, %v156, %v171
  %v174 = vsel %vm162, %v159, %v172
  %v175 = vmul.f32 %v173, 1.050701
  %v176 = vmul.f32 %v174, 1.050701
  %v177 = vlaneseq
  %v178 = vand.u32 %v177, 127
  %vm179 = vcmp.lt.s32.totalorder %v178, 24
  %v180 = vld [vmem:[%s3 + $0x110] sm:$0xff]
  %v181 = vld [vmem:[%s3 + $0x118] sm:$0xff]
  %v182 = vld [vmem:[%s3 + $0x120] sm:$0xff]
  %v183 = vld [vmem:[%s3 + $0x128] sm:$0xff]
  %v184 = vld [vmem:[%s3 + $0x130] sm:$0xff]
  %v185 = vld [vmem:[%s3 + $0x138] sm:$0xff]
  %v186 = vld [vmem:[%s3 + $0x140] sm:$0xff]
  %v187 = vld [vmem:[%s3 + $0x148] sm:$0xff]
  %v188 = vld [vmem:[%s3 + $0x150] sm:$0xff]
  %v189 = vld [vmem:[%s3 + $0x158] sm:$0xff]
  %v190 = vld [vmem:[%s3 + $0x160] sm:$0xff]
  %v191 = vld [vmem:[%s3 + $0x168] sm:$0xff]
  %v192 = vld [vmem:[%s3 + $0x170] sm:$0xff]
  %v193 = vld [vmem:[%s3 + $0x178] sm:$0xff]
  %v194 = vld [vmem:[%s3 + $0x180] sm:$0xff]
  %v195 = vld [vmem:[%s3 + $0x188] sm:$0xff]
  %v196 = vld [vmem:[%s3 + $0x190] sm:$0xff]
  %v197 = vld [vmem:[%s3 + $0x198] sm:$0xff]
  %v198 = vld [vmem:[%s3 + $0x1a0] sm:$0xf]
  %v199 = vld [vmem:[%s3 + $0x80] sm:$0xff]
  %v200 = vld [vmem:[%s3 + $0x88] sm:$0xff]
  %v201 = vld [vmem:[%s3 + $0x90] sm:$0xff]
  %v202 = vld [vmem:[%s3 + $0x98] sm:$0xff]
  %v203 = vld [vmem:[%s3 + $0xa0] sm:$0xff]
  %v204 = vld [vmem:[%s3 + $0xa8] sm:$0xff]
  %v205 = vperm.slane %v198, 0
  %v207 = vsel %vm78, %v175, 0
  %v210 = vsel %vm78, %v176, 0
  %212 = vmatpush.msra.mxu0 0.0
  %213 = vmatpush.msra.mxu0 0.0
  %214 = vmatpush.msra.mxu0 0.0
  %215 = vmatpush.msra.mxu0 0.0
  %216 = vmatpush.msra.mxu0 0.0
  %217 = vmatpush.msra.mxu0 0.0
  %218 = vmatpush.msra.mxu0 0.0
  %219 = vmatpush.msra.mxu0 0.0
  %220 = vmatpush.msra.mxu0 0.0
  %221 = vmatpush.msra.mxu0 0.0
  %222 = vmatpush.msra.mxu0 %v204
  %223 = vmatpush.msra.mxu0 %v203
  %224 = vmatpush.msra.mxu0 %v202
  %225 = vmatpush.msra.mxu0 %v201
  %226 = vmatpush.msra.mxu0 %v200
  %227 = vmatpush.msra.mxu0 %v199
  %228 = vmatmul.f32.gmra.mxu0 %v207
  %v229 = vpop.f32.mrf.mxu0
  %v230 = vadd.f32 %v205, %v229
  %231 = vmatmul.f32.gmra.mxu0 %v210
  %v232 = vpop.f32.mrf.mxu0
  %v233 = vadd.f32 %v205, %v232
  %234 = vdwg.mxu0
  %v237 = vrot.slane %v230, 2
  %v238 = vrot.slane %v230, 4
  %v239 = vrot.slane %v230, 6
  %v240 = vrot.slane %v233, 2
  %v241 = vrot.slane %v233, 4
  %v242 = vrot.slane %v233, 6
  %v249 = vld [vmem:[%s3 + $0xb0] sm:$0xff]
  %v250 = vld [vmem:[%s3 + $0xb8] sm:$0xff]
  %v251 = vld [vmem:[%s3 + $0xc0] sm:$0xff]
  %v252 = vld [vmem:[%s3 + $0xc8] sm:$0xff]
  %v253 = vld [vmem:[%s3 + $0xd0] sm:$0xff]
  %v254 = vld [vmem:[%s3 + $0xd8] sm:$0xff]
  %v255 = vperm.slane %v198, 1
  %256 = vmatpush.msra.mxu0 0.0
  %257 = vmatpush.msra.mxu0 0.0
  %258 = vmatpush.msra.mxu0 0.0
  %259 = vmatpush.msra.mxu0 0.0
  %260 = vmatpush.msra.mxu0 0.0
  %261 = vmatpush.msra.mxu0 0.0
  %262 = vmatpush.msra.mxu0 0.0
  %263 = vmatpush.msra.mxu0 0.0
  %264 = vmatpush.msra.mxu0 0.0
  %265 = vmatpush.msra.mxu0 0.0
  %266 = vmatpush.msra.mxu0 %v254
  %267 = vmatpush.msra.mxu0 %v253
  %268 = vmatpush.msra.mxu0 %v252
  %269 = vmatpush.msra.mxu0 %v251
  %270 = vmatpush.msra.mxu0 %v250
  %271 = vmatpush.msra.mxu0 %v249
  %272 = vmatmul.f32.gmra.mxu0 %v207
  %v273 = vpop.f32.mrf.mxu0
  %v274 = vadd.f32 %v255, %v273
  %275 = vmatmul.f32.gmra.mxu0 %v210
  %v276 = vpop.f32.mrf.mxu0
  %v277 = vadd.f32 %v255, %v276
  %278 = vdwg.mxu0
  %v281 = vrot.slane %v274, 2
  %v282 = vrot.slane %v274, 4
  %v283 = vrot.slane %v274, 6
  %v284 = vrot.slane %v277, 2
  %v285 = vrot.slane %v277, 4
  %v286 = vrot.slane %v277, 6
  %v293 = vld [vmem:[%s3 + $0xe0] sm:$0xff]
  %v294 = vld [vmem:[%s3 + $0xe8] sm:$0xff]
  %v295 = vld [vmem:[%s3 + $0xf0] sm:$0xff]
  %v296 = vld [vmem:[%s3 + $0xf8] sm:$0xff]
  %v297 = vld [vmem:[%s3 + $0x100] sm:$0xff]
  %v298 = vld [vmem:[%s3 + $0x108] sm:$0xff]
  %v299 = vperm.slane %v198, 2
  %300 = vmatpush.msra.mxu0 0.0
  %301 = vmatpush.msra.mxu0 0.0
  %302 = vmatpush.msra.mxu0 0.0
  %303 = vmatpush.msra.mxu0 0.0
  %304 = vmatpush.msra.mxu0 0.0
  %305 = vmatpush.msra.mxu0 0.0
  %306 = vmatpush.msra.mxu0 0.0
  %307 = vmatpush.msra.mxu0 0.0
  %308 = vmatpush.msra.mxu0 0.0
  %309 = vmatpush.msra.mxu0 0.0
  %310 = vmatpush.msra.mxu0 %v298
  %311 = vmatpush.msra.mxu0 %v297
  %312 = vmatpush.msra.mxu0 %v296
  %313 = vmatpush.msra.mxu0 %v295
  %314 = vmatpush.msra.mxu0 %v294
  %315 = vmatpush.msra.mxu0 %v293
  %316 = vmatmul.f32.gmra.mxu0 %v207
  %v317 = vpop.f32.mrf.mxu0
  %v318 = vadd.f32 %v299, %v317
  %319 = vmatmul.f32.gmra.mxu0 %v210
  %v320 = vpop.f32.mrf.mxu0
  %v321 = vadd.f32 %v299, %v320
  %322 = vdwg.mxu0
  %v325 = vrot.slane %v318, 2
  %v326 = vrot.slane %v318, 4
  %v327 = vrot.slane %v318, 6
  %v328 = vrot.slane %v321, 2
  %v329 = vrot.slane %v321, 4
  %v330 = vrot.slane %v321, 6
  %v337 = vperm.slane %v198, 3
  %v338 = vsel %vm179, %v230, %v242
  %v339 = vsel %vm179, %v274, %v286
  %v340 = vsel %vm179, %v318, %v330
  %v342 = vsel %vm78, 0.0, 0
  %344 = vmatpush.msra.mxu0 0.0
  %345 = vmatpush.msra.mxu0 0.0
  %346 = vmatpush.msra.mxu0 0.0
  %347 = vmatpush.msra.mxu0 0.0
  %348 = vmatpush.msra.mxu0 0.0
  %349 = vmatpush.msra.mxu0 0.0
  %350 = vmatpush.msra.mxu0 0.0
  %351 = vmatpush.msra.mxu0 0.0
  %352 = vmatpush.msra.mxu0 0.0
  %353 = vmatpush.msra.mxu0 0.0
  %354 = vmatpush.msra.mxu0 %v185
  %355 = vmatpush.msra.mxu0 %v184
  %356 = vmatpush.msra.mxu0 %v183
  %357 = vmatpush.msra.mxu0 %v182
  %358 = vmatpush.msra.mxu0 %v181
  %359 = vmatpush.msra.mxu0 %v180
  %360 = vmatmul.f32.gmra.mxu0 %v342
  %v361 = vpop.f32.mrf.mxu0
  %v362 = vadd.f32 0.0, %v361
  %363 = vdwg.mxu0
  %v364 = vadd.f32 %v338, %v362
  %v365 = vxor.u32 %v364, 2147483648
  %v366 = vmul.f32 %v365, 1.442695
  %v367 = vpow.pop %v366
  %v368 = vadd.f32 %v367, 1.0
  %v369 = vrcp.pop %v368
  %v370 = vmul.f32 %v368, %v369
  %v371 = vsub.f32 1.0, %v370
  %v372 = vmul.f32 %v369, %v371
  %v373 = vadd.f32 %v369, %v372
  %vm374 = vweird.f32 %v368
  %vm375 = vweird.f32 %v369
  %vm376 = vmor %vm374, %vm375
  %v377 = vsel %vm376, %v369, %v373
  %v378 = vand.u32 2147483647, %v368
  %vm379 = vcmp.eq.f32.partialorder %v378, 8.507059e+37
  %v380 = vand.u32 %v368, 2147483648
  %v381 = vor.u32 1.1754944e-38, %v380
  %v382 = vsel %vm379, %v381, %v377
  %v383 = vmul.f32 1.0, %v382
  %384 = vmatpush.msra.mxu0 0.0
  %385 = vmatpush.msra.mxu0 0.0
  %386 = vmatpush.msra.mxu0 0.0
  %387 = vmatpush.msra.mxu0 0.0
  %388 = vmatpush.msra.mxu0 0.0
  %389 = vmatpush.msra.mxu0 0.0
  %390 = vmatpush.msra.mxu0 0.0
  %391 = vmatpush.msra.mxu0 0.0
  %392 = vmatpush.msra.mxu0 0.0
  %393 = vmatpush.msra.mxu0 0.0
  %394 = vmatpush.msra.mxu0 %v191
  %395 = vmatpush.msra.mxu0 %v190
  %396 = vmatpush.msra.mxu0 %v189
  %397 = vmatpush.msra.mxu0 %v188
  %398 = vmatpush.msra.mxu0 %v187
  %399 = vmatpush.msra.mxu0 %v186
  %400 = vmatmul.f32.gmra.mxu0 %v342
  %v401 = vpop.f32.mrf.mxu0
  %v402 = vadd.f32 0.0, %v401
  %403 = vdwg.mxu0
  %v404 = vadd.f32 %v339, %v402
  %v405 = vxor.u32 %v404, 2147483648
  %v406 = vmul.f32 %v405, 1.442695
  %v407 = vpow.pop %v406
  %v408 = vadd.f32 %v407, 1.0
  %v409 = vrcp.pop %v408
  %v410 = vmul.f32 %v408, %v409
  %v411 = vsub.f32 1.0, %v410
  %v412 = vmul.f32 %v409, %v411
  %v413 = vadd.f32 %v409, %v412
  %vm414 = vweird.f32 %v408
  %vm415 = vweird.f32 %v409
  %vm416 = vmor %vm414, %vm415
  %v417 = vsel %vm416, %v409, %v413
  %v418 = vand.u32 2147483647, %v408
  %vm419 = vcmp.eq.f32.partialorder %v418, 8.507059e+37
  %v420 = vand.u32 %v408, 2147483648
  %v421 = vor.u32 1.1754944e-38, %v420
  %v422 = vsel %vm419, %v421, %v417
  %v423 = vmul.f32 1.0, %v422
  %424 = vmatpush.msra.mxu0 0.0
  %425 = vmatpush.msra.mxu0 0.0
  %426 = vmatpush.msra.mxu0 0.0
  %427 = vmatpush.msra.mxu0 0.0
  %428 = vmatpush.msra.mxu0 0.0
  %429 = vmatpush.msra.mxu0 0.0
  %430 = vmatpush.msra.mxu0 0.0
  %431 = vmatpush.msra.mxu0 0.0
  %432 = vmatpush.msra.mxu0 0.0
  %433 = vmatpush.msra.mxu0 0.0
  %434 = vmatpush.msra.mxu0 %v197
  %435 = vmatpush.msra.mxu0 %v196
  %436 = vmatpush.msra.mxu0 %v195
  %437 = vmatpush.msra.mxu0 %v194
  %438 = vmatpush.msra.mxu0 %v193
  %439 = vmatpush.msra.mxu0 %v192
  %440 = vmatmul.f32.gmra.mxu0 %v342
  %v441 = vpop.f32.mrf.mxu0
  %v442 = vadd.f32 %v337, %v441
  %443 = vdwg.mxu0
  %v444 = vmul.f32 %v383, %v442
  %v445 = vadd.f32 %v340, %v444
  %v446 = vtanh.pop %v445
  %v447 = vsub.f32 0.0, %v446
  %v448 = vmul.f32 %v423, %v447
  %v449 = vadd.f32 %v446, %v448
  %vm450 = vcmask 386048
  %451 = vst.msk [vmem:[#allocation2] sm:$0x3] %vm450, %v449
  %s452 = scalar_lea.vmem [#allocation3], 14
  %453 = vst.msk [vmem:[%s452] sm:$0x3] %vm450, %v449
  %v454 = vsel %vm179, %v237, %v241
  %v455 = vsel %vm179, %v281, %v285
  %v456 = vsel %vm179, %v325, %v329
  %v458 = vsel %vm78, %v449, 0
  %460 = vmatpush.msra.mxu0 0.0
  %461 = vmatpush.msra.mxu0 0.0
  %462 = vmatpush.msra.mxu0 0.0
  %463 = vmatpush.msra.mxu0 0.0
  %464 = vmatpush.msra.mxu0 0.0
  %465 = vmatpush.msra.mxu0 0.0
  %466 = vmatpush.msra.mxu0 0.0
  %467 = vmatpush.msra.mxu0 0.0
  %468 = vmatpush.msra.mxu0 0.0
  %469 = vmatpush.msra.mxu0 0.0
  %470 = vmatpush.msra.mxu0 %v185
  %471 = vmatpush.msra.mxu0 %v184
  %472 = vmatpush.msra.mxu0 %v183
  %473 = vmatpush.msra.mxu0 %v182
  %474 = vmatpush.msra.mxu0 %v181
  %475 = vmatpush.msra.mxu0 %v180
  %476 = vmatmul.f32.gmra.mxu0 %v458
  %v477 = vpop.f32.mrf.mxu0
  %v478 = vadd.f32 0.0, %v477
  %479 = vdwg.mxu0
  %v480 = vadd.f32 %v454, %v478
  %v481 = vxor.u32 %v480, 2147483648
  %v482 = vmul.f32 %v481, 1.442695
  %v483 = vpow.pop %v482
  %v484 = vadd.f32 %v483, 1.0
  %v485 = vrcp.pop %v484
  %v486 = vmul.f32 %v484, %v485
  %v487 = vsub.f32 1.0, %v486
  %v488 = vmul.f32 %v485, %v487
  %v489 = vadd.f32 %v485, %v488
  %vm490 = vweird.f32 %v484
  %vm491 = vweird.f32 %v485
  %vm492 = vmor %vm490, %vm491
  %v493 = vsel %vm492, %v485, %v489
  %v494 = vand.u32 2147483647, %v484
  %vm495 = vcmp.eq.f32.partialorder %v494, 8.507059e+37
  %v496 = vand.u32 %v484, 2147483648
  %v497 = vor.u32 1.1754944e-38, %v496
  %v498 = vsel %vm495, %v497, %v493
  %v499 = vmul.f32 1.0, %v498
  %500 = vmatpush.msra.mxu0 0.0
  %501 = vmatpush.msra.mxu0 0.0
  %502 = vmatpush.msra.mxu0 0.0
  %503 = vmatpush.msra.mxu0 0.0
  %504 = vmatpush.msra.mxu0 0.0
  %505 = vmatpush.msra.mxu0 0.0
  %506 = vmatpush.msra.mxu0 0.0
  %507 = vmatpush.msra.mxu0 0.0
  %508 = vmatpush.msra.mxu0 0.0
  %509 = vmatpush.msra.mxu0 0.0
  %510 = vmatpush.msra.mxu0 %v191
  %511 = vmatpush.msra.mxu0 %v190
  %512 = vmatpush.msra.mxu0 %v189
  %513 = vmatpush.msra.mxu0 %v188
  %514 = vmatpush.msra.mxu0 %v187
  %515 = vmatpush.msra.mxu0 %v186
  %516 = vmatmul.f32.gmra.mxu0 %v458
  %v517 = vpop.f32.mrf.mxu0
  %v518 = vadd.f32 0.0, %v517
  %519 = vdwg.mxu0
  %v520 = vadd.f32 %v455, %v518
  %v521 = vxor.u32 %v520, 2147483648
  %v522 = vmul.f32 %v521, 1.442695
  %v523 = vpow.pop %v522
  %v524 = vadd.f32 %v523, 1.0
  %v525 = vrcp.pop %v524
  %v526 = vmul.f32 %v524, %v525
  %v527 = vsub.f32 1.0, %v526
  %v528 = vmul.f32 %v525, %v527
  %v529 = vadd.f32 %v525, %v528
  %vm530 = vweird.f32 %v524
  %vm531 = vweird.f32 %v525
  %vm532 = vmor %vm530, %vm531
  %v533 = vsel %vm532, %v525, %v529
  %v534 = vand.u32 2147483647, %v524
  %vm535 = vcmp.eq.f32.partialorder %v534, 8.507059e+37
  %v536 = vand.u32 %v524, 2147483648
  %v537 = vor.u32 1.1754944e-38, %v536
  %v538 = vsel %vm535, %v537, %v533
  %v539 = vmul.f32 1.0, %v538
  %540 = vmatpush.msra.mxu0 0.0
  %541 = vmatpush.msra.mxu0 0.0
  %542 = vmatpush.msra.mxu0 0.0
  %543 = vmatpush.msra.mxu0 0.0
  %544 = vmatpush.msra.mxu0 0.0
  %545 = vmatpush.msra.mxu0 0.0
  %546 = vmatpush.msra.mxu0 0.0
  %547 = vmatpush.msra.mxu0 0.0
  %548 = vmatpush.msra.mxu0 0.0
  %549 = vmatpush.msra.mxu0 0.0
  %550 = vmatpush.msra.mxu0 %v197
  %551 = vmatpush.msra.mxu0 %v196
  %552 = vmatpush.msra.mxu0 %v195
  %553 = vmatpush.msra.mxu0 %v194
  %554 = vmatpush.msra.mxu0 %v193
  %555 = vmatpush.msra.mxu0 %v192
  %556 = vmatmul.f32.gmra.mxu0 %v458
  %v557 = vpop.f32.mrf.mxu0
  %v558 = vadd.f32 %v337, %v557
  %559 = vdwg.mxu0
  %v560 = vmul.f32 %v499, %v558
  %v561 = vadd.f32 %v456, %v560
  %v562 = vtanh.pop %v561
  %v563 = vsub.f32 %v449, %v562
  %v564 = vmul.f32 %v539, %v563
  %v565 = vadd.f32 %v562, %v564
  %s566 = scalar_lea.vmem [#allocation2], 2
  %567 = vst.msk [vmem:[%s566] sm:$0x3] %vm450, %v565
  %s568 = scalar_lea.vmem [#allocation3], 12
  %569 = vst.msk [vmem:[%s568] sm:$0x3] %vm450, %v565
  %v570 = vsel %vm179, %v238, %v240
  %v571 = vsel %vm179, %v282, %v284
  %v572 = vsel %vm179, %v326, %v328
  %v574 = vsel %vm78, %v565, 0
  %576 = vmatpush.msra.mxu0 0.0
  %577 = vmatpush.msra.mxu0 0.0
  %578 = vmatpush.msra.mxu0 0.0
  %579 = vmatpush.msra.mxu0 0.0
  %580 = vmatpush.msra.mxu0 0.0
  %581 = vmatpush.msra.mxu0 0.0
  %582 = vmatpush.msra.mxu0 0.0
  %583 = vmatpush.msra.mxu0 0.0
  %584 = vmatpush.msra.mxu0 0.0
  %585 = vmatpush.msra.mxu0 0.0
  %586 = vmatpush.msra.mxu0 %v185
  %587 = vmatpush.msra.mxu0 %v184
  %588 = vmatpush.msra.mxu0 %v183
  %589 = vmatpush.msra.mxu0 %v182
  %590 = vmatpush.msra.mxu0 %v181
  %591 = vmatpush.msra.mxu0 %v180
  %592 = vmatmul.f32.gmra.mxu0 %v574
  %v593 = vpop.f32.mrf.mxu0
  %v594 = vadd.f32 0.0, %v593
  %595 = vdwg.mxu0
  %v596 = vadd.f32 %v570, %v594
  %v597 = vxor.u32 %v596, 2147483648
  %v598 = vmul.f32 %v597, 1.442695
  %v599 = vpow.pop %v598
  %v600 = vadd.f32 %v599, 1.0
  %v601 = vrcp.pop %v600
  %v602 = vmul.f32 %v600, %v601
  %v603 = vsub.f32 1.0, %v602
  %v604 = vmul.f32 %v601, %v603
  %v605 = vadd.f32 %v601, %v604
  %vm606 = vweird.f32 %v600
  %vm607 = vweird.f32 %v601
  %vm608 = vmor %vm606, %vm607
  %v609 = vsel %vm608, %v601, %v605
  %v610 = vand.u32 2147483647, %v600
  %vm611 = vcmp.eq.f32.partialorder %v610, 8.507059e+37
  %v612 = vand.u32 %v600, 2147483648
  %v613 = vor.u32 1.1754944e-38, %v612
  %v614 = vsel %vm611, %v613, %v609
  %v615 = vmul.f32 1.0, %v614
  %616 = vmatpush.msra.mxu0 0.0
  %617 = vmatpush.msra.mxu0 0.0
  %618 = vmatpush.msra.mxu0 0.0
  %619 = vmatpush.msra.mxu0 0.0
  %620 = vmatpush.msra.mxu0 0.0
  %621 = vmatpush.msra.mxu0 0.0
  %622 = vmatpush.msra.mxu0 0.0
  %623 = vmatpush.msra.mxu0 0.0
  %624 = vmatpush.msra.mxu0 0.0
  %625 = vmatpush.msra.mxu0 0.0
  %626 = vmatpush.msra.mxu0 %v191
  %627 = vmatpush.msra.mxu0 %v190
  %628 = vmatpush.msra.mxu0 %v189
  %629 = vmatpush.msra.mxu0 %v188
  %630 = vmatpush.msra.mxu0 %v187
  %631 = vmatpush.msra.mxu0 %v186
  %632 = vmatmul.f32.gmra.mxu0 %v574
  %v633 = vpop.f32.mrf.mxu0
  %v634 = vadd.f32 0.0, %v633
  %635 = vdwg.mxu0
  %v636 = vadd.f32 %v571, %v634
  %v637 = vxor.u32 %v636, 2147483648
  %v638 = vmul.f32 %v637, 1.442695
  %v639 = vpow.pop %v638
  %v640 = vadd.f32 %v639, 1.0
  %v641 = vrcp.pop %v640
  %v642 = vmul.f32 %v640, %v641
  %v643 = vsub.f32 1.0, %v642
  %v644 = vmul.f32 %v641, %v643
  %v645 = vadd.f32 %v641, %v644
  %vm646 = vweird.f32 %v640
  %vm647 = vweird.f32 %v641
  %vm648 = vmor %vm646, %vm647
  %v649 = vsel %vm648, %v641, %v645
  %v650 = vand.u32 2147483647, %v640
  %vm651 = vcmp.eq.f32.partialorder %v650, 8.507059e+37
  %v652 = vand.u32 %v640, 2147483648
  %v653 = vor.u32 1.1754944e-38, %v652
  %v654 = vsel %vm651, %v653, %v649
  %v655 = vmul.f32 1.0, %v654
  %656 = vmatpush.msra.mxu0 0.0
  %657 = vmatpush.msra.mxu0 0.0
  %658 = vmatpush.msra.mxu0 0.0
  %659 = vmatpush.msra.mxu0 0.0
  %660 = vmatpush.msra.mxu0 0.0
  %661 = vmatpush.msra.mxu0 0.0
  %662 = vmatpush.msra.mxu0 0.0
  %663 = vmatpush.msra.mxu0 0.0
  %664 = vmatpush.msra.mxu0 0.0
  %665 = vmatpush.msra.mxu0 0.0
  %666 = vmatpush.msra.mxu0 %v197
  %667 = vmatpush.msra.mxu0 %v196
  %668 = vmatpush.msra.mxu0 %v195
  %669 = vmatpush.msra.mxu0 %v194
  %670 = vmatpush.msra.mxu0 %v193
  %671 = vmatpush.msra.mxu0 %v192
  %672 = vmatmul.f32.gmra.mxu0 %v574
  %v673 = vpop.f32.mrf.mxu0
  %v674 = vadd.f32 %v337, %v673
  %675 = vdwg.mxu0
  %v676 = vmul.f32 %v615, %v674
  %v677 = vadd.f32 %v572, %v676
  %v678 = vtanh.pop %v677
  %v679 = vsub.f32 %v565, %v678
  %v680 = vmul.f32 %v655, %v679
  %v681 = vadd.f32 %v678, %v680
  %s682 = scalar_lea.vmem [#allocation2], 4
  %683 = vst.msk [vmem:[%s682] sm:$0x3] %vm450, %v681
  %s684 = scalar_lea.vmem [#allocation3], 10
  %685 = vst.msk [vmem:[%s684] sm:$0x3] %vm450, %v681
  %v686 = vsel %vm179, %v239, %v233
  %v687 = vsel %vm179, %v283, %v277
  %v688 = vsel %vm179, %v327, %v321
  %v690 = vsel %vm78, %v681, 0
  %692 = vmatpush.msra.mxu0 0.0
  %693 = vmatpush.msra.mxu0 0.0
  %694 = vmatpush.msra.mxu0 0.0
  %695 = vmatpush.msra.mxu0 0.0
  %696 = vmatpush.msra.mxu0 0.0
  %697 = vmatpush.msra.mxu0 0.0
  %698 = vmatpush.msra.mxu0 0.0
  %699 = vmatpush.msra.mxu0 0.0
  %700 = vmatpush.msra.mxu0 0.0
  %701 = vmatpush.msra.mxu0 0.0
  %702 = vmatpush.msra.mxu0 %v185
  %703 = vmatpush.msra.mxu0 %v184
  %704 = vmatpush.msra.mxu0 %v183
  %705 = vmatpush.msra.mxu0 %v182
  %706 = vmatpush.msra.mxu0 %v181
  %707 = vmatpush.msra.mxu0 %v180
  %708 = vmatmul.f32.gmra.mxu0 %v690
  %v709 = vpop.f32.mrf.mxu0
  %v710 = vadd.f32 0.0, %v709
  %711 = vdwg.mxu0
  %v712 = vadd.f32 %v686, %v710
  %v713 = vxor.u32 %v712, 2147483648
  %v714 = vmul.f32 %v713, 1.442695
  %v715 = vpow.pop %v714
  %v716 = vadd.f32 %v715, 1.0
  %v717 = vrcp.pop %v716
  %v718 = vmul.f32 %v716, %v717
  %v719 = vsub.f32 1.0, %v718
  %v720 = vmul.f32 %v717, %v719
  %v721 = vadd.f32 %v717, %v720
  %vm722 = vweird.f32 %v716
  %vm723 = vweird.f32 %v717
  %vm724 = vmor %vm722, %vm723
  %v725 = vsel %vm724, %v717, %v721
  %v726 = vand.u32 2147483647, %v716
  %vm727 = vcmp.eq.f32.partialorder %v726, 8.507059e+37
  %v728 = vand.u32 %v716, 2147483648
  %v729 = vor.u32 1.1754944e-38, %v728
  %v730 = vsel %vm727, %v729, %v725
  %v731 = vmul.f32 1.0, %v730
  %732 = vmatpush.msra.mxu0 0.0
  %733 = vmatpush.msra.mxu0 0.0
  %734 = vmatpush.msra.mxu0 0.0
  %735 = vmatpush.msra.mxu0 0.0
  %736 = vmatpush.msra.mxu0 0.0
  %737 = vmatpush.msra.mxu0 0.0
  %738 = vmatpush.msra.mxu0 0.0
  %739 = vmatpush.msra.mxu0 0.0
  %740 = vmatpush.msra.mxu0 0.0
  %741 = vmatpush.msra.mxu0 0.0
  %742 = vmatpush.msra.mxu0 %v191
  %743 = vmatpush.msra.mxu0 %v190
  %744 = vmatpush.msra.mxu0 %v189
  %745 = vmatpush.msra.mxu0 %v188
  %746 = vmatpush.msra.mxu0 %v187
  %747 = vmatpush.msra.mxu0 %v186
  %748 = vmatmul.f32.gmra.mxu0 %v690
  %v749 = vpop.f32.mrf.mxu0
  %v750 = vadd.f32 0.0, %v749
  %751 = vdwg.mxu0
  %v752 = vadd.f32 %v687, %v750
  %v753 = vxor.u32 %v752, 2147483648
  %v754 = vmul.f32 %v753, 1.442695
  %v755 = vpow.pop %v754
  %v756 = vadd.f32 %v755, 1.0
  %v757 = vrcp.pop %v756
  %v758 = vmul.f32 %v756, %v757
  %v759 = vsub.f32 1.0, %v758
  %v760 = vmul.f32 %v757, %v759
  %v761 = vadd.f32 %v757, %v760
  %vm762 = vweird.f32 %v756
  %vm763 = vweird.f32 %v757
  %vm764 = vmor %vm762, %vm763
  %v765 = vsel %vm764, %v757, %v761
  %v766 = vand.u32 2147483647, %v756
  %vm767 = vcmp.eq.f32.partialorder %v766, 8.507059e+37
  %v768 = vand.u32 %v756, 2147483648
  %v769 = vor.u32 1.1754944e-38, %v768
  %v770 = vsel %vm767, %v769, %v765
  %v771 = vmul.f32 1.0, %v770
  %772 = vmatpush.msra.mxu0 0.0
  %773 = vmatpush.msra.mxu0 0.0
  %774 = vmatpush.msra.mxu0 0.0
  %775 = vmatpush.msra.mxu0 0.0
  %776 = vmatpush.msra.mxu0 0.0
  %777 = vmatpush.msra.mxu0 0.0
  %778 = vmatpush.msra.mxu0 0.0
  %779 = vmatpush.msra.mxu0 0.0
  %780 = vmatpush.msra.mxu0 0.0
  %781 = vmatpush.msra.mxu0 0.0
  %782 = vmatpush.msra.mxu0 %v197
  %783 = vmatpush.msra.mxu0 %v196
  %784 = vmatpush.msra.mxu0 %v195
  %785 = vmatpush.msra.mxu0 %v194
  %786 = vmatpush.msra.mxu0 %v193
  %787 = vmatpush.msra.mxu0 %v192
  %788 = vmatmul.f32.gmra.mxu0 %v690
  %v789 = vpop.f32.mrf.mxu0
  %v790 = vadd.f32 %v337, %v789
  %791 = vdwg.mxu0
  %v792 = vmul.f32 %v731, %v790
  %v793 = vadd.f32 %v688, %v792
  %v794 = vtanh.pop %v793
  %v795 = vsub.f32 %v681, %v794
  %v796 = vmul.f32 %v771, %v795
  %v797 = vadd.f32 %v794, %v796
  %s798 = scalar_lea.vmem [#allocation2], 6
  %799 = vst.msk [vmem:[%s798] sm:$0x3] %vm450, %v797
  %s800 = scalar_lea.vmem [#allocation3], 8
  %801 = vst.msk [vmem:[%s800] sm:$0x3] %vm450, %v797
  %v802 = vsel %vm179, %v233, %v239
  %v803 = vsel %vm179, %v277, %v283
  %v804 = vsel %vm179, %v321, %v327
  %v806 = vsel %vm78, %v797, 0
  %808 = vmatpush.msra.mxu0 0.0
  %809 = vmatpush.msra.mxu0 0.0
  %810 = vmatpush.msra.mxu0 0.0
  %811 = vmatpush.msra.mxu0 0.0
  %812 = vmatpush.msra.mxu0 0.0
  %813 = vmatpush.msra.mxu0 0.0
  %814 = vmatpush.msra.mxu0 0.0
  %815 = vmatpush.msra.mxu0 0.0
  %816 = vmatpush.msra.mxu0 0.0
  %817 = vmatpush.msra.mxu0 0.0
  %818 = vmatpush.msra.mxu0 %v185
  %819 = vmatpush.msra.mxu0 %v184
  %820 = vmatpush.msra.mxu0 %v183
  %821 = vmatpush.msra.mxu0 %v182
  %822 = vmatpush.msra.mxu0 %v181
  %823 = vmatpush.msra.mxu0 %v180
  %824 = vmatmul.f32.gmra.mxu0 %v806
  %v825 = vpop.f32.mrf.mxu0
  %v826 = vadd.f32 0.0, %v825
  %827 = vdwg.mxu0
  %v828 = vadd.f32 %v802, %v826
  %v829 = vxor.u32 %v828, 2147483648
  %v830 = vmul.f32 %v829, 1.442695
  %v831 = vpow.pop %v830
  %v832 = vadd.f32 %v831, 1.0
  %v833 = vrcp.pop %v832
  %v834 = vmul.f32 %v832, %v833
  %v835 = vsub.f32 1.0, %v834
  %v836 = vmul.f32 %v833, %v835
  %v837 = vadd.f32 %v833, %v836
  %vm838 = vweird.f32 %v832
  %vm839 = vweird.f32 %v833
  %vm840 = vmor %vm838, %vm839
  %v841 = vsel %vm840, %v833, %v837
  %v842 = vand.u32 2147483647, %v832
  %vm843 = vcmp.eq.f32.partialorder %v842, 8.507059e+37
  %v844 = vand.u32 %v832, 2147483648
  %v845 = vor.u32 1.1754944e-38, %v844
  %v846 = vsel %vm843, %v845, %v841
  %v847 = vmul.f32 1.0, %v846
  %848 = vmatpush.msra.mxu0 0.0
  %849 = vmatpush.msra.mxu0 0.0
  %850 = vmatpush.msra.mxu0 0.0
  %851 = vmatpush.msra.mxu0 0.0
  %852 = vmatpush.msra.mxu0 0.0
  %853 = vmatpush.msra.mxu0 0.0
  %854 = vmatpush.msra.mxu0 0.0
  %855 = vmatpush.msra.mxu0 0.0
  %856 = vmatpush.msra.mxu0 0.0
  %857 = vmatpush.msra.mxu0 0.0
  %858 = vmatpush.msra.mxu0 %v191
  %859 = vmatpush.msra.mxu0 %v190
  %860 = vmatpush.msra.mxu0 %v189
  %861 = vmatpush.msra.mxu0 %v188
  %862 = vmatpush.msra.mxu0 %v187
  %863 = vmatpush.msra.mxu0 %v186
  %864 = vmatmul.f32.gmra.mxu0 %v806
  %v865 = vpop.f32.mrf.mxu0
  %v866 = vadd.f32 0.0, %v865
  %867 = vdwg.mxu0
  %v868 = vadd.f32 %v803, %v866
  %v869 = vxor.u32 %v868, 2147483648
  %v870 = vmul.f32 %v869, 1.442695
  %v871 = vpow.pop %v870
  %v872 = vadd.f32 %v871, 1.0
  %v873 = vrcp.pop %v872
  %v874 = vmul.f32 %v872, %v873
  %v875 = vsub.f32 1.0, %v874
  %v876 = vmul.f32 %v873, %v875
  %v877 = vadd.f32 %v873, %v876
  %vm878 = vweird.f32 %v872
  %vm879 = vweird.f32 %v873
  %vm880 = vmor %vm878, %vm879
  %v881 = vsel %vm880, %v873, %v877
  %v882 = vand.u32 2147483647, %v872
  %vm883 = vcmp.eq.f32.partialorder %v882, 8.507059e+37
  %v884 = vand.u32 %v872, 2147483648
  %v885 = vor.u32 1.1754944e-38, %v884
  %v886 = vsel %vm883, %v885, %v881
  %v887 = vmul.f32 1.0, %v886
  %888 = vmatpush.msra.mxu0 0.0
  %889 = vmatpush.msra.mxu0 0.0
  %890 = vmatpush.msra.mxu0 0.0
  %891 = vmatpush.msra.mxu0 0.0
  %892 = vmatpush.msra.mxu0 0.0
  %893 = vmatpush.msra.mxu0 0.0
  %894 = vmatpush.msra.mxu0 0.0
  %895 = vmatpush.msra.mxu0 0.0
  %896 = vmatpush.msra.mxu0 0.0
  %897 = vmatpush.msra.mxu0 0.0
  %898 = vmatpush.msra.mxu0 %v197
  %899 = vmatpush.msra.mxu0 %v196
  %900 = vmatpush.msra.mxu0 %v195
  %901 = vmatpush.msra.mxu0 %v194
  %902 = vmatpush.msra.mxu0 %v193
  %903 = vmatpush.msra.mxu0 %v192
  %904 = vmatmul.f32.gmra.mxu0 %v806
  %v905 = vpop.f32.mrf.mxu0
  %v906 = vadd.f32 %v337, %v905
  %907 = vdwg.mxu0
  %v908 = vmul.f32 %v847, %v906
  %v909 = vadd.f32 %v804, %v908
  %v910 = vtanh.pop %v909
  %v911 = vsub.f32 %v797, %v910
  %v912 = vmul.f32 %v887, %v911
  %v913 = vadd.f32 %v910, %v912
  %s914 = scalar_lea.vmem [#allocation2], 8
  %915 = vst.msk [vmem:[%s914] sm:$0x3] %vm450, %v913
  %s916 = scalar_lea.vmem [#allocation3], 6
  %917 = vst.msk [vmem:[%s916] sm:$0x3] %vm450, %v913
  %v918 = vsel %vm179, %v240, %v238
  %v919 = vsel %vm179, %v284, %v282
  %v920 = vsel %vm179, %v328, %v326
  %v922 = vsel %vm78, %v913, 0
  %924 = vmatpush.msra.mxu0 0.0
  %925 = vmatpush.msra.mxu0 0.0
  %926 = vmatpush.msra.mxu0 0.0
  %927 = vmatpush.msra.mxu0 0.0
  %928 = vmatpush.msra.mxu0 0.0
  %929 = vmatpush.msra.mxu0 0.0
  %930 = vmatpush.msra.mxu0 0.0
  %931 = vmatpush.msra.mxu0 0.0
  %932 = vmatpush.msra.mxu0 0.0
  %933 = vmatpush.msra.mxu0 0.0
  %934 = vmatpush.msra.mxu0 %v185
  %935 = vmatpush.msra.mxu0 %v184
  %936 = vmatpush.msra.mxu0 %v183
  %937 = vmatpush.msra.mxu0 %v182
  %938 = vmatpush.msra.mxu0 %v181
  %939 = vmatpush.msra.mxu0 %v180
  %940 = vmatmul.f32.gmra.mxu0 %v922
  %v941 = vpop.f32.mrf.mxu0
  %v942 = vadd.f32 0.0, %v941
  %943 = vdwg.mxu0
  %v944 = vadd.f32 %v918, %v942
  %v945 = vxor.u32 %v944, 2147483648
  %v946 = vmul.f32 %v945, 1.442695
  %v947 = vpow.pop %v946
  %v948 = vadd.f32 %v947, 1.0
  %v949 = vrcp.pop %v948
  %v950 = vmul.f32 %v948, %v949
  %v951 = vsub.f32 1.0, %v950
  %v952 = vmul.f32 %v949, %v951
  %v953 = vadd.f32 %v949, %v952
  %vm954 = vweird.f32 %v948
  %vm955 = vweird.f32 %v949
  %vm956 = vmor %vm954, %vm955
  %v957 = vsel %vm956, %v949, %v953
  %v958 = vand.u32 2147483647, %v948
  %vm959 = vcmp.eq.f32.partialorder %v958, 8.507059e+37
  %v960 = vand.u32 %v948, 2147483648
  %v961 = vor.u32 1.1754944e-38, %v960
  %v962 = vsel %vm959, %v961, %v957
  %v963 = vmul.f32 1.0, %v962
  %964 = vmatpush.msra.mxu0 0.0
  %965 = vmatpush.msra.mxu0 0.0
  %966 = vmatpush.msra.mxu0 0.0
  %967 = vmatpush.msra.mxu0 0.0
  %968 = vmatpush.msra.mxu0 0.0
  %969 = vmatpush.msra.mxu0 0.0
  %970 = vmatpush.msra.mxu0 0.0
  %971 = vmatpush.msra.mxu0 0.0
  %972 = vmatpush.msra.mxu0 0.0
  %973 = vmatpush.msra.mxu0 0.0
  %974 = vmatpush.msra.mxu0 %v191
  %975 = vmatpush.msra.mxu0 %v190
  %976 = vmatpush.msra.mxu0 %v189
  %977 = vmatpush.msra.mxu0 %v188
  %978 = vmatpush.msra.mxu0 %v187
  %979 = vmatpush.msra.mxu0 %v186
  %980 = vmatmul.f32.gmra.mxu0 %v922
  %v981 = vpop.f32.mrf.mxu0
  %v982 = vadd.f32 0.0, %v981
  %983 = vdwg.mxu0
  %v984 = vadd.f32 %v919, %v982
  %v985 = vxor.u32 %v984, 2147483648
  %v986 = vmul.f32 %v985, 1.442695
  %v987 = vpow.pop %v986
  %v988 = vadd.f32 %v987, 1.0
  %v989 = vrcp.pop %v988
  %v990 = vmul.f32 %v988, %v989
  %v991 = vsub.f32 1.0, %v990
  %v992 = vmul.f32 %v989, %v991
  %v993 = vadd.f32 %v989, %v992
  %vm994 = vweird.f32 %v988
  %vm995 = vweird.f32 %v989
  %vm996 = vmor %vm994, %vm995
  %v997 = vsel %vm996, %v989, %v993
  %v998 = vand.u32 2147483647, %v988
  %vm999 = vcmp.eq.f32.partialorder %v998, 8.507059e+37
  %v1000 = vand.u32 %v988, 2147483648
  %v1001 = vor.u32 1.1754944e-38, %v1000
  %v1002 = vsel %vm999, %v1001, %v997
  %v1003 = vmul.f32 1.0, %v1002
  %1004 = vmatpush.msra.mxu0 0.0
  %1005 = vmatpush.msra.mxu0 0.0
  %1006 = vmatpush.msra.mxu0 0.0
  %1007 = vmatpush.msra.mxu0 0.0
  %1008 = vmatpush.msra.mxu0 0.0
  %1009 = vmatpush.msra.mxu0 0.0
  %1010 = vmatpush.msra.mxu0 0.0
  %1011 = vmatpush.msra.mxu0 0.0
  %1012 = vmatpush.msra.mxu0 0.0
  %1013 = vmatpush.msra.mxu0 0.0
  %1014 = vmatpush.msra.mxu0 %v197
  %1015 = vmatpush.msra.mxu0 %v196
  %1016 = vmatpush.msra.mxu0 %v195
  %1017 = vmatpush.msra.mxu0 %v194
  %1018 = vmatpush.msra.mxu0 %v193
  %1019 = vmatpush.msra.mxu0 %v192
  %1020 = vmatmul.f32.gmra.mxu0 %v922
  %v1021 = vpop.f32.mrf.mxu0
  %v1022 = vadd.f32 %v337, %v1021
  %1023 = vdwg.mxu0
  %v1024 = vmul.f32 %v963, %v1022
  %v1025 = vadd.f32 %v920, %v1024
  %v1026 = vtanh.pop %v1025
  %v1027 = vsub.f32 %v913, %v1026
  %v1028 = vmul.f32 %v1003, %v1027
  %v1029 = vadd.f32 %v1026, %v1028
  %s1030 = scalar_lea.vmem [#allocation2], 10
  %1031 = vst.msk [vmem:[%s1030] sm:$0x3] %vm450, %v1029
  %s1032 = scalar_lea.vmem [#allocation3], 4
  %1033 = vst.msk [vmem:[%s1032] sm:$0x3] %vm450, %v1029
  %v1034 = vsel %vm179, %v241, %v237
  %v1035 = vsel %vm179, %v285, %v281
  %v1036 = vsel %vm179, %v329, %v325
  %v1038 = vsel %vm78, %v1029, 0
  %1040 = vmatpush.msra.mxu0 0.0
  %1041 = vmatpush.msra.mxu0 0.0
  %1042 = vmatpush.msra.mxu0 0.0
  %1043 = vmatpush.msra.mxu0 0.0
  %1044 = vmatpush.msra.mxu0 0.0
  %1045 = vmatpush.msra.mxu0 0.0
  %1046 = vmatpush.msra.mxu0 0.0
  %1047 = vmatpush.msra.mxu0 0.0
  %1048 = vmatpush.msra.mxu0 0.0
  %1049 = vmatpush.msra.mxu0 0.0
  %1050 = vmatpush.msra.mxu0 %v185
  %1051 = vmatpush.msra.mxu0 %v184
  %1052 = vmatpush.msra.mxu0 %v183
  %1053 = vmatpush.msra.mxu0 %v182
  %1054 = vmatpush.msra.mxu0 %v181
  %1055 = vmatpush.msra.mxu0 %v180
  %1056 = vmatmul.f32.gmra.mxu0 %v1038
  %v1057 = vpop.f32.mrf.mxu0
  %v1058 = vadd.f32 0.0, %v1057
  %1059 = vdwg.mxu0
  %v1060 = vadd.f32 %v1034, %v1058
  %v1061 = vxor.u32 %v1060, 2147483648
  %v1062 = vmul.f32 %v1061, 1.442695
  %v1063 = vpow.pop %v1062
  %v1064 = vadd.f32 %v1063, 1.0
  %v1065 = vrcp.pop %v1064
  %v1066 = vmul.f32 %v1064, %v1065
  %v1067 = vsub.f32 1.0, %v1066
  %v1068 = vmul.f32 %v1065, %v1067
  %v1069 = vadd.f32 %v1065, %v1068
  %vm1070 = vweird.f32 %v1064
  %vm1071 = vweird.f32 %v1065
  %vm1072 = vmor %vm1070, %vm1071
  %v1073 = vsel %vm1072, %v1065, %v1069
  %v1074 = vand.u32 2147483647, %v1064
  %vm1075 = vcmp.eq.f32.partialorder %v1074, 8.507059e+37
  %v1076 = vand.u32 %v1064, 2147483648
  %v1077 = vor.u32 1.1754944e-38, %v1076
  %v1078 = vsel %vm1075, %v1077, %v1073
  %v1079 = vmul.f32 1.0, %v1078
  %1080 = vmatpush.msra.mxu0 0.0
  %1081 = vmatpush.msra.mxu0 0.0
  %1082 = vmatpush.msra.mxu0 0.0
  %1083 = vmatpush.msra.mxu0 0.0
  %1084 = vmatpush.msra.mxu0 0.0
  %1085 = vmatpush.msra.mxu0 0.0
  %1086 = vmatpush.msra.mxu0 0.0
  %1087 = vmatpush.msra.mxu0 0.0
  %1088 = vmatpush.msra.mxu0 0.0
  %1089 = vmatpush.msra.mxu0 0.0
  %1090 = vmatpush.msra.mxu0 %v191
  %1091 = vmatpush.msra.mxu0 %v190
  %1092 = vmatpush.msra.mxu0 %v189
  %1093 = vmatpush.msra.mxu0 %v188
  %1094 = vmatpush.msra.mxu0 %v187
  %1095 = vmatpush.msra.mxu0 %v186
  %1096 = vmatmul.f32.gmra.mxu0 %v1038
  %v1097 = vpop.f32.mrf.mxu0
  %v1098 = vadd.f32 0.0, %v1097
  %1099 = vdwg.mxu0
  %v1100 = vadd.f32 %v1035, %v1098
  %v1101 = vxor.u32 %v1100, 2147483648
  %v1102 = vmul.f32 %v1101, 1.442695
  %v1103 = vpow.pop %v1102
  %v1104 = vadd.f32 %v1103, 1.0
  %v1105 = vrcp.pop %v1104
  %v1106 = vmul.f32 %v1104, %v1105
  %v1107 = vsub.f32 1.0, %v1106
  %v1108 = vmul.f32 %v1105, %v1107
  %v1109 = vadd.f32 %v1105, %v1108
  %vm1110 = vweird.f32 %v1104
  %vm1111 = vweird.f32 %v1105
  %vm1112 = vmor %vm1110, %vm1111
  %v1113 = vsel %vm1112, %v1105, %v1109
  %v1114 = vand.u32 2147483647, %v1104
  %vm1115 = vcmp.eq.f32.partialorder %v1114, 8.507059e+37
  %v1116 = vand.u32 %v1104, 2147483648
  %v1117 = vor.u32 1.1754944e-38, %v1116
  %v1118 = vsel %vm1115, %v1117, %v1113
  %v1119 = vmul.f32 1.0, %v1118
  %1120 = vmatpush.msra.mxu0 0.0
  %1121 = vmatpush.msra.mxu0 0.0
  %1122 = vmatpush.msra.mxu0 0.0
  %1123 = vmatpush.msra.mxu0 0.0
  %1124 = vmatpush.msra.mxu0 0.0
  %1125 = vmatpush.msra.mxu0 0.0
  %1126 = vmatpush.msra.mxu0 0.0
  %1127 = vmatpush.msra.mxu0 0.0
  %1128 = vmatpush.msra.mxu0 0.0
  %1129 = vmatpush.msra.mxu0 0.0
  %1130 = vmatpush.msra.mxu0 %v197
  %1131 = vmatpush.msra.mxu0 %v196
  %1132 = vmatpush.msra.mxu0 %v195
  %1133 = vmatpush.msra.mxu0 %v194
  %1134 = vmatpush.msra.mxu0 %v193
  %1135 = vmatpush.msra.mxu0 %v192
  %1136 = vmatmul.f32.gmra.mxu0 %v1038
  %v1137 = vpop.f32.mrf.mxu0
  %v1138 = vadd.f32 %v337, %v1137
  %1139 = vdwg.mxu0
  %v1140 = vmul.f32 %v1079, %v1138
  %v1141 = vadd.f32 %v1036, %v1140
  %v1142 = vtanh.pop %v1141
  %v1143 = vsub.f32 %v1029, %v1142
  %v1144 = vmul.f32 %v1119, %v1143
  %v1145 = vadd.f32 %v1142, %v1144
  %s1146 = scalar_lea.vmem [#allocation2], 12
  %1147 = vst.msk [vmem:[%s1146] sm:$0x3] %vm450, %v1145
  %s1148 = scalar_lea.vmem [#allocation3], 2
  %1149 = vst.msk [vmem:[%s1148] sm:$0x3] %vm450, %v1145
  %v1150 = vsel %vm179, %v242, %v230
  %v1151 = vsel %vm179, %v286, %v274
  %v1152 = vsel %vm179, %v330, %v318
  %v1154 = vsel %vm78, %v1145, 0
  %1156 = vmatpush.msra.mxu0 0.0
  %1157 = vmatpush.msra.mxu0 0.0
  %1158 = vmatpush.msra.mxu0 0.0
  %1159 = vmatpush.msra.mxu0 0.0
  %1160 = vmatpush.msra.mxu0 0.0
  %1161 = vmatpush.msra.mxu0 0.0
  %1162 = vmatpush.msra.mxu0 0.0
  %1163 = vmatpush.msra.mxu0 0.0
  %1164 = vmatpush.msra.mxu0 0.0
  %1165 = vmatpush.msra.mxu0 0.0
  %1166 = vmatpush.msra.mxu0 %v185
  %1167 = vmatpush.msra.mxu0 %v184
  %1168 = vmatpush.msra.mxu0 %v183
  %1169 = vmatpush.msra.mxu0 %v182
  %1170 = vmatpush.msra.mxu0 %v181
  %1171 = vmatpush.msra.mxu0 %v180
  %1172 = vmatmul.f32.gmra.mxu0 %v1154
  %v1173 = vpop.f32.mrf.mxu0
  %v1174 = vadd.f32 0.0, %v1173
  %1175 = vdwg.mxu0
  %v1176 = vadd.f32 %v1150, %v1174
  %v1177 = vxor.u32 %v1176, 2147483648
  %v1178 = vmul.f32 %v1177, 1.442695
  %v1179 = vpow.pop %v1178
  %v1180 = vadd.f32 %v1179, 1.0
  %v1181 = vrcp.pop %v1180
  %v1182 = vmul.f32 %v1180, %v1181
  %v1183 = vsub.f32 1.0, %v1182
  %v1184 = vmul.f32 %v1181, %v1183
  %v1185 = vadd.f32 %v1181, %v1184
  %vm1186 = vweird.f32 %v1180
  %vm1187 = vweird.f32 %v1181
  %vm1188 = vmor %vm1186, %vm1187
  %v1189 = vsel %vm1188, %v1181, %v1185
  %v1190 = vand.u32 2147483647, %v1180
  %vm1191 = vcmp.eq.f32.partialorder %v1190, 8.507059e+37
  %v1192 = vand.u32 %v1180, 2147483648
  %v1193 = vor.u32 1.1754944e-38, %v1192
  %v1194 = vsel %vm1191, %v1193, %v1189
  %v1195 = vmul.f32 1.0, %v1194
  %1196 = vmatpush.msra.mxu0 0.0
  %1197 = vmatpush.msra.mxu0 0.0
  %1198 = vmatpush.msra.mxu0 0.0
  %1199 = vmatpush.msra.mxu0 0.0
  %1200 = vmatpush.msra.mxu0 0.0
  %1201 = vmatpush.msra.mxu0 0.0
  %1202 = vmatpush.msra.mxu0 0.0
  %1203 = vmatpush.msra.mxu0 0.0
  %1204 = vmatpush.msra.mxu0 0.0
  %1205 = vmatpush.msra.mxu0 0.0
  %1206 = vmatpush.msra.mxu0 %v191
  %1207 = vmatpush.msra.mxu0 %v190
  %1208 = vmatpush.msra.mxu0 %v189
  %1209 = vmatpush.msra.mxu0 %v188
  %1210 = vmatpush.msra.mxu0 %v187
  %1211 = vmatpush.msra.mxu0 %v186
  %1212 = vmatmul.f32.gmra.mxu0 %v1154
  %v1213 = vpop.f32.mrf.mxu0
  %v1214 = vadd.f32 0.0, %v1213
  %1215 = vdwg.mxu0
  %v1216 = vadd.f32 %v1151, %v1214
  %v1217 = vxor.u32 %v1216, 2147483648
  %v1218 = vmul.f32 %v1217, 1.442695
  %v1219 = vpow.pop %v1218
  %v1220 = vadd.f32 %v1219, 1.0
  %v1221 = vrcp.pop %v1220
  %v1222 = vmul.f32 %v1220, %v1221
  %v1223 = vsub.f32 1.0, %v1222
  %v1224 = vmul.f32 %v1221, %v1223
  %v1225 = vadd.f32 %v1221, %v1224
  %vm1226 = vweird.f32 %v1220
  %vm1227 = vweird.f32 %v1221
  %vm1228 = vmor %vm1226, %vm1227
  %v1229 = vsel %vm1228, %v1221, %v1225
  %v1230 = vand.u32 2147483647, %v1220
  %vm1231 = vcmp.eq.f32.partialorder %v1230, 8.507059e+37
  %v1232 = vand.u32 %v1220, 2147483648
  %v1233 = vor.u32 1.1754944e-38, %v1232
  %v1234 = vsel %vm1231, %v1233, %v1229
  %v1235 = vmul.f32 1.0, %v1234
  %1236 = vmatpush.msra.mxu0 0.0
  %1237 = vmatpush.msra.mxu0 0.0
  %1238 = vmatpush.msra.mxu0 0.0
  %1239 = vmatpush.msra.mxu0 0.0
  %1240 = vmatpush.msra.mxu0 0.0
  %1241 = vmatpush.msra.mxu0 0.0
  %1242 = vmatpush.msra.mxu0 0.0
  %1243 = vmatpush.msra.mxu0 0.0
  %1244 = vmatpush.msra.mxu0 0.0
  %1245 = vmatpush.msra.mxu0 0.0
  %1246 = vmatpush.msra.mxu0 %v197
  %1247 = vmatpush.msra.mxu0 %v196
  %1248 = vmatpush.msra.mxu0 %v195
  %1249 = vmatpush.msra.mxu0 %v194
  %1250 = vmatpush.msra.mxu0 %v193
  %1251 = vmatpush.msra.mxu0 %v192
  %1252 = vmatmul.f32.gmra.mxu0 %v1154
  %v1253 = vpop.f32.mrf.mxu0
  %v1254 = vadd.f32 %v337, %v1253
  %1255 = vdwg.mxu0
  %v1256 = vmul.f32 %v1195, %v1254
  %v1257 = vadd.f32 %v1152, %v1256
  %v1258 = vtanh.pop %v1257
  %v1259 = vsub.f32 %v1145, %v1258
  %v1260 = vmul.f32 %v1235, %v1259
  %v1261 = vadd.f32 %v1258, %v1260
  %s1262 = scalar_lea.vmem [#allocation2], 14
  %1263 = vst.msk [vmem:[%s1262] sm:$0x3] %vm450, %v1261
  %1264 = vst.msk [vmem:[#allocation3] sm:$0x3] %vm450, %v1261
  %v1265 = vld [vmem:[#allocation2] sm:$0x3]
  %v1266 = vld [vmem:[#allocation2 + $0x2] sm:$0x3]
  %v1267 = vld [vmem:[#allocation2 + $0x4] sm:$0x3]
  %v1268 = vld [vmem:[#allocation2 + $0x6] sm:$0x3]
  %v1269 = vld [vmem:[#allocation2 + $0x8] sm:$0x3]
  %v1270 = vld [vmem:[#allocation2 + $0xa] sm:$0x3]
  %v1271 = vld [vmem:[#allocation2 + $0xc] sm:$0x3]
  %v1272 = vld [vmem:[#allocation2 + $0xe] sm:$0x3]
  %v1273 = vld [vmem:[#allocation3] sm:$0x3]
  %v1274 = vld [vmem:[#allocation3 + $0x2] sm:$0x3]
  %v1275 = vld [vmem:[#allocation3 + $0x4] sm:$0x3]
  %v1276 = vld [vmem:[#allocation3 + $0x6] sm:$0x3]
  %v1277 = vld [vmem:[#allocation3 + $0x8] sm:$0x3]
  %v1278 = vld [vmem:[#allocation3 + $0xa] sm:$0x3]
  %v1279 = vld [vmem:[#allocation3 + $0xc] sm:$0x3]
  %v1280 = vld [vmem:[#allocation3 + $0xe] sm:$0x3]
  %v1281 = vsel %vm179, 1, 0
  %vm1282 = vcmp.eq.s32.totalorder %v1281, 1
  %v1283 = vsel %vm1282, %v1265, %v1273
  %v1284 = vsel %vm1282, %v1266, %v1274
  %v1285 = vsel %vm1282, %v1267, %v1275
  %v1286 = vsel %vm1282, %v1268, %v1276
  %v1287 = vsel %vm1282, %v1269, %v1277
  %v1288 = vsel %vm1282, %v1270, %v1278
  %v1289 = vsel %vm1282, %v1271, %v1279
  %v1290 = vsel %vm1282, %v1272, %v1280
  %v1291 = vld [vmem:[%s3 + $0x238] sm:$0xff]
  %v1292 = vld [vmem:[%s3 + $0x240] sm:$0xff]
  %v1293 = vld [vmem:[%s3 + $0x248] sm:$0xff]
  %v1294 = vld [vmem:[%s3 + $0x250] sm:$0xff]
  %v1295 = vld [vmem:[%s3 + $0x258] sm:$0xff]
  %v1296 = vld [vmem:[%s3 + $0x260] sm:$0xff]
  %v1297 = vld [vmem:[%s3 + $0x268] sm:$0xff]
  %v1298 = vld [vmem:[%s3 + $0x270] sm:$0xff]
  %v1299 = vld [vmem:[%s3 + $0x278] sm:$0xff]
  %v1300 = vld [vmem:[%s3 + $0x280] sm:$0xff]
  %v1301 = vld [vmem:[%s3 + $0x288] sm:$0xff]
  %v1302 = vld [vmem:[%s3 + $0x290] sm:$0xff]
  %v1303 = vld [vmem:[%s3 + $0x298] sm:$0xff]
  %v1304 = vld [vmem:[%s3 + $0x2a0] sm:$0xff]
  %v1305 = vld [vmem:[%s3 + $0x2a8] sm:$0xff]
  %v1306 = vld [vmem:[%s3 + $0x2b0] sm:$0xff]
  %v1307 = vld [vmem:[%s3 + $0x2b8] sm:$0xff]
  %v1308 = vld [vmem:[%s3 + $0x2c0] sm:$0xff]
  %v1309 = vld [vmem:[%s3 + $0x2c8] sm:$0xf]
  %v1310 = vld [vmem:[%s3 + $0x1a8] sm:$0xff]
  %v1311 = vld [vmem:[%s3 + $0x1b0] sm:$0xff]
  %v1312 = vld [vmem:[%s3 + $0x1b8] sm:$0xff]
  %v1313 = vld [vmem:[%s3 + $0x1c0] sm:$0xff]
  %v1314 = vld [vmem:[%s3 + $0x1c8] sm:$0xff]
  %v1315 = vld [vmem:[%s3 + $0x1d0] sm:$0xff]
  %v1316 = vperm.slane %v1309, 0
  %1325 = vst [vmem:[#allocation1] ss:$4 sm:$0xff] %v1283
  %s1326 = scalar_lea.vmem [#allocation1], 1
  %1327 = vst [vmem:[%s1326] ss:$4 sm:$0xff] %v1284
  %s1328 = scalar_lea.vmem [#allocation1], 2
  %1329 = vst [vmem:[%s1328] ss:$4 sm:$0xff] %v1285
  %s1330 = scalar_lea.vmem [#allocation1], 3
  %1331 = vst [vmem:[%s1330] ss:$4 sm:$0xff] %v1286
  %s1332 = scalar_lea.vmem [#allocation1], 32
  %1333 = vst [vmem:[%s1332] ss:$4 sm:$0xff] %v1287
  %s1334 = scalar_lea.vmem [#allocation1], 33
  %1335 = vst [vmem:[%s1334] ss:$4 sm:$0xff] %v1288
  %s1336 = scalar_lea.vmem [#allocation1], 34
  %1337 = vst [vmem:[%s1336] ss:$4 sm:$0xff] %v1289
  %s1338 = scalar_lea.vmem [#allocation1], 35
  %1339 = vst [vmem:[%s1338] ss:$4 sm:$0xff] %v1290
  %v1340 = vld.sshfl [vmem:[#allocation1] sm:$0xff pattern:$0x73625140]
  %v1341 = vld.sshfl [vmem:[#allocation1 + $0x20] sm:$0xff pattern:$0x73625140]
  %v1342 = vsel %vm78, %v1340, 0
  %v1344 = vsel %vm78, %v1341, 0
  %1346 = vmatpush.msra.mxu0 0.0
  %1347 = vmatpush.msra.mxu0 0.0
  %1348 = vmatpush.msra.mxu0 0.0
  %1349 = vmatpush.msra.mxu0 0.0
  %1350 = vmatpush.msra.mxu0 0.0
  %1351 = vmatpush.msra.mxu0 0.0
  %1352 = vmatpush.msra.mxu0 0.0
  %1353 = vmatpush.msra.mxu0 0.0
  %1354 = vmatpush.msra.mxu0 0.0
  %1355 = vmatpush.msra.mxu0 0.0
  %1356 = vmatpush.msra.mxu0 %v1315
  %1357 = vmatpush.msra.mxu0 %v1314
  %1358 = vmatpush.msra.mxu0 %v1313
  %1359 = vmatpush.msra.mxu0 %v1312
  %1360 = vmatpush.msra.mxu0 %v1311
  %1361 = vmatpush.msra.mxu0 %v1310
  %1362 = vmatmul.f32.gmra.mxu0 %v1342
  %v1363 = vpop.f32.mrf.mxu0
  %v1364 = vadd.f32 %v1316, %v1363
  %1365 = vmatmul.f32.gmra.mxu0 %v1344
  %v1366 = vpop.f32.mrf.mxu0
  %v1367 = vadd.f32 %v1316, %v1366
  %1368 = vdwg.mxu0
  %v1371 = vrot.slane %v1364, 2
  %v1372 = vrot.slane %v1364, 4
  %v1373 = vrot.slane %v1364, 6
  %v1374 = vrot.slane %v1367, 2
  %v1375 = vrot.slane %v1367, 4
  %v1376 = vrot.slane %v1367, 6
  %v1383 = vld [vmem:[%s3 + $0x1d8] sm:$0xff]
  %v1384 = vld [vmem:[%s3 + $0x1e0] sm:$0xff]
  %v1385 = vld [vmem:[%s3 + $0x1e8] sm:$0xff]
  %v1386 = vld [vmem:[%s3 + $0x1f0] sm:$0xff]
  %v1387 = vld [vmem:[%s3 + $0x1f8] sm:$0xff]
  %v1388 = vld [vmem:[%s3 + $0x200] sm:$0xff]
  %v1389 = vperm.slane %v1309, 1
  %1390 = vst [vmem:[#allocation1] ss:$4 sm:$0xff] %v1283
  %s1391 = scalar_lea.vmem [#allocation1], 1
  %1392 = vst [vmem:[%s1391] ss:$4 sm:$0xff] %v1284
  %s1393 = scalar_lea.vmem [#allocation1], 2
  %1394 = vst [vmem:[%s1393] ss:$4 sm:$0xff] %v1285
  %s1395 = scalar_lea.vmem [#allocation1], 3
  %1396 = vst [vmem:[%s1395] ss:$4 sm:$0xff] %v1286
  %s1397 = scalar_lea.vmem [#allocation1], 32
  %1398 = vst [vmem:[%s1397] ss:$4 sm:$0xff] %v1287
  %s1399 = scalar_lea.vmem [#allocation1], 33
  %1400 = vst [vmem:[%s1399] ss:$4 sm:$0xff] %v1288
  %s1401 = scalar_lea.vmem [#allocation1], 34
  %1402 = vst [vmem:[%s1401] ss:$4 sm:$0xff] %v1289
  %s1403 = scalar_lea.vmem [#allocation1], 35
  %1404 = vst [vmem:[%s1403] ss:$4 sm:$0xff] %v1290
  %v1405 = vld.sshfl [vmem:[#allocation1] sm:$0xff pattern:$0x73625140]
  %v1406 = vld.sshfl [vmem:[#allocation1 + $0x20] sm:$0xff pattern:$0x73625140]
  %v1407 = vsel %vm78, %v1405, 0
  %v1409 = vsel %vm78, %v1406, 0
  %1411 = vmatpush.msra.mxu0 0.0
  %1412 = vmatpush.msra.mxu0 0.0
  %1413 = vmatpush.msra.mxu0 0.0
  %1414 = vmatpush.msra.mxu0 0.0
  %1415 = vmatpush.msra.mxu0 0.0
  %1416 = vmatpush.msra.mxu0 0.0
  %1417 = vmatpush.msra.mxu0 0.0
  %1418 = vmatpush.msra.mxu0 0.0
  %1419 = vmatpush.msra.mxu0 0.0
  %1420 = vmatpush.msra.mxu0 0.0
  %1421 = vmatpush.msra.mxu0 %v1388
  %1422 = vmatpush.msra.mxu0 %v1387
  %1423 = vmatpush.msra.mxu0 %v1386
  %1424 = vmatpush.msra.mxu0 %v1385
  %1425 = vmatpush.msra.mxu0 %v1384
  %1426 = vmatpush.msra.mxu0 %v1383
  %1427 = vmatmul.f32.gmra.mxu0 %v1407
  %v1428 = vpop.f32.mrf.mxu0
  %v1429 = vadd.f32 %v1389, %v1428
  %1430 = vmatmul.f32.gmra.mxu0 %v1409
  %v1431 = vpop.f32.mrf.mxu0
  %v1432 = vadd.f32 %v1389, %v1431
  %1433 = vdwg.mxu0
  %v1436 = vrot.slane %v1429, 2
  %v1437 = vrot.slane %v1429, 4
  %v1438 = vrot.slane %v1429, 6
  %v1439 = vrot.slane %v1432, 2
  %v1440 = vrot.slane %v1432, 4
  %v1441 = vrot.slane %v1432, 6
  %v1448 = vld [vmem:[%s3 + $0x208] sm:$0xff]
  %v1449 = vld [vmem:[%s3 + $0x210] sm:$0xff]
  %v1450 = vld [vmem:[%s3 + $0x218] sm:$0xff]
  %v1451 = vld [vmem:[%s3 + $0x220] sm:$0xff]
  %v1452 = vld [vmem:[%s3 + $0x228] sm:$0xff]
  %v1453 = vld [vmem:[%s3 + $0x230] sm:$0xff]
  %v1454 = vperm.slane %v1309, 2
  %1455 = vst [vmem:[#allocation1] ss:$4 sm:$0xff] %v1283
  %s1456 = scalar_lea.vmem [#allocation1], 1
  %1457 = vst [vmem:[%s1456] ss:$4 sm:$0xff] %v1284
  %s1458 = scalar_lea.vmem [#allocation1], 2
  %1459 = vst [vmem:[%s1458] ss:$4 sm:$0xff] %v1285
  %s1460 = scalar_lea.vmem [#allocation1], 3
  %1461 = vst [vmem:[%s1460] ss:$4 sm:$0xff] %v1286
  %s1462 = scalar_lea.vmem [#allocation1], 32
  %1463 = vst [vmem:[%s1462] ss:$4 sm:$0xff] %v1287
  %s1464 = scalar_lea.vmem [#allocation1], 33
  %1465 = vst [vmem:[%s1464] ss:$4 sm:$0xff] %v1288
  %s1466 = scalar_lea.vmem [#allocation1], 34
  %1467 = vst [vmem:[%s1466] ss:$4 sm:$0xff] %v1289
  %s1468 = scalar_lea.vmem [#allocation1], 35
  %1469 = vst [vmem:[%s1468] ss:$4 sm:$0xff] %v1290
  %v1470 = vld.sshfl [vmem:[#allocation1] sm:$0xff pattern:$0x73625140]
  %v1471 = vld.sshfl [vmem:[#allocation1 + $0x20] sm:$0xff pattern:$0x73625140]
  %v1472 = vsel %vm78, %v1470, 0
  %v1474 = vsel %vm78, %v1471, 0
  %1476 = vmatpush.msra.mxu0 0.0
  %1477 = vmatpush.msra.mxu0 0.0
  %1478 = vmatpush.msra.mxu0 0.0
  %1479 = vmatpush.msra.mxu0 0.0
  %1480 = vmatpush.msra.mxu0 0.0
  %1481 = vmatpush.msra.mxu0 0.0
  %1482 = vmatpush.msra.mxu0 0.0
  %1483 = vmatpush.msra.mxu0 0.0
  %1484 = vmatpush.msra.mxu0 0.0
  %1485 = vmatpush.msra.mxu0 0.0
  %1486 = vmatpush.msra.mxu0 %v1453
  %1487 = vmatpush.msra.mxu0 %v1452
  %1488 = vmatpush.msra.mxu0 %v1451
  %1489 = vmatpush.msra.mxu0 %v1450
  %1490 = vmatpush.msra.mxu0 %v1449
  %1491 = vmatpush.msra.mxu0 %v1448
  %1492 = vmatmul.f32.gmra.mxu0 %v1472
  %v1493 = vpop.f32.mrf.mxu0
  %v1494 = vadd.f32 %v1454, %v1493
  %1495 = vmatmul.f32.gmra.mxu0 %v1474
  %v1496 = vpop.f32.mrf.mxu0
  %v1497 = vadd.f32 %v1454, %v1496
  %1498 = vdwg.mxu0
  %v1501 = vrot.slane %v1494, 2
  %v1502 = vrot.slane %v1494, 4
  %v1503 = vrot.slane %v1494, 6
  %v1504 = vrot.slane %v1497, 2
  %v1505 = vrot.slane %v1497, 4
  %v1506 = vrot.slane %v1497, 6
  %v1513 = vperm.slane %v1309, 3
  %v1514 = vsel %vm179, %v1364, %v1376
  %v1515 = vsel %vm179, %v1429, %v1441
  %v1516 = vsel %vm179, %v1494, %v1506
  %1517 = vmatpush.msra.mxu0 0.0
  %1518 = vmatpush.msra.mxu0 0.0
  %1519 = vmatpush.msra.mxu0 0.0
  %1520 = vmatpush.msra.mxu0 0.0
  %1521 = vmatpush.msra.mxu0 0.0
  %1522 = vmatpush.msra.mxu0 0.0
  %1523 = vmatpush.msra.mxu0 0.0
  %1524 = vmatpush.msra.mxu0 0.0
  %1525 = vmatpush.msra.mxu0 0.0
  %1526 = vmatpush.msra.mxu0 0.0
  %1527 = vmatpush.msra.mxu0 %v1296
  %1528 = vmatpush.msra.mxu0 %v1295
  %1529 = vmatpush.msra.mxu0 %v1294
  %1530 = vmatpush.msra.mxu0 %v1293
  %1531 = vmatpush.msra.mxu0 %v1292
  %1532 = vmatpush.msra.mxu0 %v1291
  %1533 = vmatmul.f32.gmra.mxu0 %v342
  %v1534 = vpop.f32.mrf.mxu0
  %v1535 = vadd.f32 0.0, %v1534
  %1536 = vdwg.mxu0
  %v1537 = vadd.f32 %v1514, %v1535
  %v1538 = vxor.u32 %v1537, 2147483648
  %v1539 = vmul.f32 %v1538, 1.442695
  %v1540 = vpow.pop %v1539
  %v1541 = vadd.f32 %v1540, 1.0
  %v1542 = vrcp.pop %v1541
  %v1543 = vmul.f32 %v1541, %v1542
  %v1544 = vsub.f32 1.0, %v1543
  %v1545 = vmul.f32 %v1542, %v1544
  %v1546 = vadd.f32 %v1542, %v1545
  %vm1547 = vweird.f32 %v1541
  %vm1548 = vweird.f32 %v1542
  %vm1549 = vmor %vm1547, %vm1548
  %v1550 = vsel %vm1549, %v1542, %v1546
  %v1551 = vand.u32 2147483647, %v1541
  %vm1552 = vcmp.eq.f32.partialorder %v1551, 8.507059e+37
  %v1553 = vand.u32 %v1541, 2147483648
  %v1554 = vor.u32 1.1754944e-38, %v1553
  %v1555 = vsel %vm1552, %v1554, %v1550
  %v1556 = vmul.f32 1.0, %v1555
  %1557 = vmatpush.msra.mxu0 0.0
  %1558 = vmatpush.msra.mxu0 0.0
  %1559 = vmatpush.msra.mxu0 0.0
  %1560 = vmatpush.msra.mxu0 0.0
  %1561 = vmatpush.msra.mxu0 0.0
  %1562 = vmatpush.msra.mxu0 0.0
  %1563 = vmatpush.msra.mxu0 0.0
  %1564 = vmatpush.msra.mxu0 0.0
  %1565 = vmatpush.msra.mxu0 0.0
  %1566 = vmatpush.msra.mxu0 0.0
  %1567 = vmatpush.msra.mxu0 %v1302
  %1568 = vmatpush.msra.mxu0 %v1301
  %1569 = vmatpush.msra.mxu0 %v1300
  %1570 = vmatpush.msra.mxu0 %v1299
  %1571 = vmatpush.msra.mxu0 %v1298
  %1572 = vmatpush.msra.mxu0 %v1297
  %1573 = vmatmul.f32.gmra.mxu0 %v342
  %v1574 = vpop.f32.mrf.mxu0
  %v1575 = vadd.f32 0.0, %v1574
  %1576 = vdwg.mxu0
  %v1577 = vadd.f32 %v1515, %v1575
  %v1578 = vxor.u32 %v1577, 2147483648
  %v1579 = vmul.f32 %v1578, 1.442695
  %v1580 = vpow.pop %v1579
  %v1581 = vadd.f32 %v1580, 1.0
  %v1582 = vrcp.pop %v1581
  %v1583 = vmul.f32 %v1581, %v1582
  %v1584 = vsub.f32 1.0, %v1583
  %v1585 = vmul.f32 %v1582, %v1584
  %v1586 = vadd.f32 %v1582, %v1585
  %vm1587 = vweird.f32 %v1581
  %vm1588 = vweird.f32 %v1582
  %vm1589 = vmor %vm1587, %vm1588
  %v1590 = vsel %vm1589, %v1582, %v1586
  %v1591 = vand.u32 2147483647, %v1581
  %vm1592 = vcmp.eq.f32.partialorder %v1591, 8.507059e+37
  %v1593 = vand.u32 %v1581, 2147483648
  %v1594 = vor.u32 1.1754944e-38, %v1593
  %v1595 = vsel %vm1592, %v1594, %v1590
  %v1596 = vmul.f32 1.0, %v1595
  %1597 = vmatpush.msra.mxu0 0.0
  %1598 = vmatpush.msra.mxu0 0.0
  %1599 = vmatpush.msra.mxu0 0.0
  %1600 = vmatpush.msra.mxu0 0.0
  %1601 = vmatpush.msra.mxu0 0.0
  %1602 = vmatpush.msra.mxu0 0.0
  %1603 = vmatpush.msra.mxu0 0.0
  %1604 = vmatpush.msra.mxu0 0.0
  %1605 = vmatpush.msra.mxu0 0.0
  %1606 = vmatpush.msra.mxu0 0.0
  %1607 = vmatpush.msra.mxu0 %v1308
  %1608 = vmatpush.msra.mxu0 %v1307
  %1609 = vmatpush.msra.mxu0 %v1306
  %1610 = vmatpush.msra.mxu0 %v1305
  %1611 = vmatpush.msra.mxu0 %v1304
  %1612 = vmatpush.msra.mxu0 %v1303
  %1613 = vmatmul.f32.gmra.mxu0 %v342
  %v1614 = vpop.f32.mrf.mxu0
  %v1615 = vadd.f32 %v1513, %v1614
  %1616 = vdwg.mxu0
  %v1617 = vmul.f32 %v1556, %v1615
  %v1618 = vadd.f32 %v1516, %v1617
  %v1619 = vtanh.pop %v1618
  %v1620 = vsub.f32 0.0, %v1619
  %v1621 = vmul.f32 %v1596, %v1620
  %v1622 = vadd.f32 %v1619, %v1621
  %1623 = vst.msk [vmem:[#allocation2] sm:$0x3] %vm450, %v1622
  %1624 = vst.msk [vmem:[%s452] sm:$0x3] %vm450, %v1622
  %v1625 = vsel %vm179, %v1371, %v1375
  %v1626 = vsel %vm179, %v1436, %v1440
  %v1627 = vsel %vm179, %v1501, %v1505
  %v1629 = vsel %vm78, %v1622, 0
  %1631 = vmatpush.msra.mxu0 0.0
  %1632 = vmatpush.msra.mxu0 0.0
  %1633 = vmatpush.msra.mxu0 0.0
  %1634 = vmatpush.msra.mxu0 0.0
  %1635 = vmatpush.msra.mxu0 0.0
  %1636 = vmatpush.msra.mxu0 0.0
  %1637 = vmatpush.msra.mxu0 0.0
  %1638 = vmatpush.msra.mxu0 0.0
  %1639 = vmatpush.msra.mxu0 0.0
  %1640 = vmatpush.msra.mxu0 0.0
  %1641 = vmatpush.msra.mxu0 %v1296
  %1642 = vmatpush.msra.mxu0 %v1295
  %1643 = vmatpush.msra.mxu0 %v1294
  %1644 = vmatpush.msra.mxu0 %v1293
  %1645 = vmatpush.msra.mxu0 %v1292
  %1646 = vmatpush.msra.mxu0 %v1291
  %1647 = vmatmul.f32.gmra.mxu0 %v1629
  %v1648 = vpop.f32.mrf.mxu0
  %v1649 = vadd.f32 0.0, %v1648
  %1650 = vdwg.mxu0
  %v1651 = vadd.f32 %v1625, %v1649
  %v1652 = vxor.u32 %v1651, 2147483648
  %v1653 = vmul.f32 %v1652, 1.442695
  %v1654 = vpow.pop %v1653
  %v1655 = vadd.f32 %v1654, 1.0
  %v1656 = vrcp.pop %v1655
  %v1657 = vmul.f32 %v1655, %v1656
  %v1658 = vsub.f32 1.0, %v1657
  %v1659 = vmul.f32 %v1656, %v1658
  %v1660 = vadd.f32 %v1656, %v1659
  %vm1661 = vweird.f32 %v1655
  %vm1662 = vweird.f32 %v1656
  %vm1663 = vmor %vm1661, %vm1662
  %v1664 = vsel %vm1663, %v1656, %v1660
  %v1665 = vand.u32 2147483647, %v1655
  %vm1666 = vcmp.eq.f32.partialorder %v1665, 8.507059e+37
  %v1667 = vand.u32 %v1655, 2147483648
  %v1668 = vor.u32 1.1754944e-38, %v1667
  %v1669 = vsel %vm1666, %v1668, %v1664
  %v1670 = vmul.f32 1.0, %v1669
  %1671 = vmatpush.msra.mxu0 0.0
  %1672 = vmatpush.msra.mxu0 0.0
  %1673 = vmatpush.msra.mxu0 0.0
  %1674 = vmatpush.msra.mxu0 0.0
  %1675 = vmatpush.msra.mxu0 0.0
  %1676 = vmatpush.msra.mxu0 0.0
  %1677 = vmatpush.msra.mxu0 0.0
  %1678 = vmatpush.msra.mxu0 0.0
  %1679 = vmatpush.msra.mxu0 0.0
  %1680 = vmatpush.msra.mxu0 0.0
  %1681 = vmatpush.msra.mxu0 %v1302
  %1682 = vmatpush.msra.mxu0 %v1301
  %1683 = vmatpush.msra.mxu0 %v1300
  %1684 = vmatpush.msra.mxu0 %v1299
  %1685 = vmatpush.msra.mxu0 %v1298
  %1686 = vmatpush.msra.mxu0 %v1297
  %1687 = vmatmul.f32.gmra.mxu0 %v1629
  %v1688 = vpop.f32.mrf.mxu0
  %v1689 = vadd.f32 0.0, %v1688
  %1690 = vdwg.mxu0
  %v1691 = vadd.f32 %v1626, %v1689
  %v1692 = vxor.u32 %v1691, 2147483648
  %v1693 = vmul.f32 %v1692, 1.442695
  %v1694 = vpow.pop %v1693
  %v1695 = vadd.f32 %v1694, 1.0
  %v1696 = vrcp.pop %v1695
  %v1697 = vmul.f32 %v1695, %v1696
  %v1698 = vsub.f32 1.0, %v1697
  %v1699 = vmul.f32 %v1696, %v1698
  %v1700 = vadd.f32 %v1696, %v1699
  %vm1701 = vweird.f32 %v1695
  %vm1702 = vweird.f32 %v1696
  %vm1703 = vmor %vm1701, %vm1702
  %v1704 = vsel %vm1703, %v1696, %v1700
  %v1705 = vand.u32 2147483647, %v1695
  %vm1706 = vcmp.eq.f32.partialorder %v1705, 8.507059e+37
  %v1707 = vand.u32 %v1695, 2147483648
  %v1708 = vor.u32 1.1754944e-38, %v1707
  %v1709 = vsel %vm1706, %v1708, %v1704
  %v1710 = vmul.f32 1.0, %v1709
  %1711 = vmatpush.msra.mxu0 0.0
  %1712 = vmatpush.msra.mxu0 0.0
  %1713 = vmatpush.msra.mxu0 0.0
  %1714 = vmatpush.msra.mxu0 0.0
  %1715 = vmatpush.msra.mxu0 0.0
  %1716 = vmatpush.msra.mxu0 0.0
  %1717 = vmatpush.msra.mxu0 0.0
  %1718 = vmatpush.msra.mxu0 0.0
  %1719 = vmatpush.msra.mxu0 0.0
  %1720 = vmatpush.msra.mxu0 0.0
  %1721 = vmatpush.msra.mxu0 %v1308
  %1722 = vmatpush.msra.mxu0 %v1307
  %1723 = vmatpush.msra.mxu0 %v1306
  %1724 = vmatpush.msra.mxu0 %v1305
  %1725 = vmatpush.msra.mxu0 %v1304
  %1726 = vmatpush.msra.mxu0 %v1303
  %1727 = vmatmul.f32.gmra.mxu0 %v1629
  %v1728 = vpop.f32.mrf.mxu0
  %v1729 = vadd.f32 %v1513, %v1728
  %1730 = vdwg.mxu0
  %v1731 = vmul.f32 %v1670, %v1729
  %v1732 = vadd.f32 %v1627, %v1731
  %v1733 = vtanh.pop %v1732
  %v1734 = vsub.f32 %v1622, %v1733
  %v1735 = vmul.f32 %v1710, %v1734
  %v1736 = vadd.f32 %v1733, %v1735
  %1737 = vst.msk [vmem:[%s566] sm:$0x3] %vm450, %v1736
  %1738 = vst.msk [vmem:[%s568] sm:$0x3] %vm450, %v1736
  %v1739 = vsel %vm179, %v1372, %v1374
  %v1740 = vsel %vm179, %v1437, %v1439
  %v1741 = vsel %vm179, %v1502, %v1504
  %v1743 = vsel %vm78, %v1736, 0
  %1745 = vmatpush.msra.mxu0 0.0
  %1746 = vmatpush.msra.mxu0 0.0
  %1747 = vmatpush.msra.mxu0 0.0
  %1748 = vmatpush.msra.mxu0 0.0
  %1749 = vmatpush.msra.mxu0 0.0
  %1750 = vmatpush.msra.mxu0 0.0
  %1751 = vmatpush.msra.mxu0 0.0
  %1752 = vmatpush.msra.mxu0 0.0
  %1753 = vmatpush.msra.mxu0 0.0
  %1754 = vmatpush.msra.mxu0 0.0
  %1755 = vmatpush.msra.mxu0 %v1296
  %1756 = vmatpush.msra.mxu0 %v1295
  %1757 = vmatpush.msra.mxu0 %v1294
  %1758 = vmatpush.msra.mxu0 %v1293
  %1759 = vmatpush.msra.mxu0 %v1292
  %1760 = vmatpush.msra.mxu0 %v1291
  %1761 = vmatmul.f32.gmra.mxu0 %v1743
  %v1762 = vpop.f32.mrf.mxu0
  %v1763 = vadd.f32 0.0, %v1762
  %1764 = vdwg.mxu0
  %v1765 = vadd.f32 %v1739, %v1763
  %v1766 = vxor.u32 %v1765, 2147483648
  %v1767 = vmul.f32 %v1766, 1.442695
  %v1768 = vpow.pop %v1767
  %v1769 = vadd.f32 %v1768, 1.0
  %v1770 = vrcp.pop %v1769
  %v1771 = vmul.f32 %v1769, %v1770
  %v1772 = vsub.f32 1.0, %v1771
  %v1773 = vmul.f32 %v1770, %v1772
  %v1774 = vadd.f32 %v1770, %v1773
  %vm1775 = vweird.f32 %v1769
  %vm1776 = vweird.f32 %v1770
  %vm1777 = vmor %vm1775, %vm1776
  %v1778 = vsel %vm1777, %v1770, %v1774
  %v1779 = vand.u32 2147483647, %v1769
  %vm1780 = vcmp.eq.f32.partialorder %v1779, 8.507059e+37
  %v1781 = vand.u32 %v1769, 2147483648
  %v1782 = vor.u32 1.1754944e-38, %v1781
  %v1783 = vsel %vm1780, %v1782, %v1778
  %v1784 = vmul.f32 1.0, %v1783
  %1785 = vmatpush.msra.mxu0 0.0
  %1786 = vmatpush.msra.mxu0 0.0
  %1787 = vmatpush.msra.mxu0 0.0
  %1788 = vmatpush.msra.mxu0 0.0
  %1789 = vmatpush.msra.mxu0 0.0
  %1790 = vmatpush.msra.mxu0 0.0
  %1791 = vmatpush.msra.mxu0 0.0
  %1792 = vmatpush.msra.mxu0 0.0
  %1793 = vmatpush.msra.mxu0 0.0
  %1794 = vmatpush.msra.mxu0 0.0
  %1795 = vmatpush.msra.mxu0 %v1302
  %1796 = vmatpush.msra.mxu0 %v1301
  %1797 = vmatpush.msra.mxu0 %v1300
  %1798 = vmatpush.msra.mxu0 %v1299
  %1799 = vmatpush.msra.mxu0 %v1298
  %1800 = vmatpush.msra.mxu0 %v1297
  %1801 = vmatmul.f32.gmra.mxu0 %v1743
  %v1802 = vpop.f32.mrf.mxu0
  %v1803 = vadd.f32 0.0, %v1802
  %1804 = vdwg.mxu0
  %v1805 = vadd.f32 %v1740, %v1803
  %v1806 = vxor.u32 %v1805, 2147483648
  %v1807 = vmul.f32 %v1806, 1.442695
  %v1808 = vpow.pop %v1807
  %v1809 = vadd.f32 %v1808, 1.0
  %v1810 = vrcp.pop %v1809
  %v1811 = vmul.f32 %v1809, %v1810
  %v1812 = vsub.f32 1.0, %v1811
  %v1813 = vmul.f32 %v1810, %v1812
  %v1814 = vadd.f32 %v1810, %v1813
  %vm1815 = vweird.f32 %v1809
  %vm1816 = vweird.f32 %v1810
  %vm1817 = vmor %vm1815, %vm1816
  %v1818 = vsel %vm1817, %v1810, %v1814
  %v1819 = vand.u32 2147483647, %v1809
  %vm1820 = vcmp.eq.f32.partialorder %v1819, 8.507059e+37
  %v1821 = vand.u32 %v1809, 2147483648
  %v1822 = vor.u32 1.1754944e-38, %v1821
  %v1823 = vsel %vm1820, %v1822, %v1818
  %v1824 = vmul.f32 1.0, %v1823
  %1825 = vmatpush.msra.mxu0 0.0
  %1826 = vmatpush.msra.mxu0 0.0
  %1827 = vmatpush.msra.mxu0 0.0
  %1828 = vmatpush.msra.mxu0 0.0
  %1829 = vmatpush.msra.mxu0 0.0
  %1830 = vmatpush.msra.mxu0 0.0
  %1831 = vmatpush.msra.mxu0 0.0
  %1832 = vmatpush.msra.mxu0 0.0
  %1833 = vmatpush.msra.mxu0 0.0
  %1834 = vmatpush.msra.mxu0 0.0
  %1835 = vmatpush.msra.mxu0 %v1308
  %1836 = vmatpush.msra.mxu0 %v1307
  %1837 = vmatpush.msra.mxu0 %v1306
  %1838 = vmatpush.msra.mxu0 %v1305
  %1839 = vmatpush.msra.mxu0 %v1304
  %1840 = vmatpush.msra.mxu0 %v1303
  %1841 = vmatmul.f32.gmra.mxu0 %v1743
  %v1842 = vpop.f32.mrf.mxu0
  %v1843 = vadd.f32 %v1513, %v1842
  %1844 = vdwg.mxu0
  %v1845 = vmul.f32 %v1784, %v1843
  %v1846 = vadd.f32 %v1741, %v1845
  %v1847 = vtanh.pop %v1846
  %v1848 = vsub.f32 %v1736, %v1847
  %v1849 = vmul.f32 %v1824, %v1848
  %v1850 = vadd.f32 %v1847, %v1849
  %1851 = vst.msk [vmem:[%s682] sm:$0x3] %vm450, %v1850
  %1852 = vst.msk [vmem:[%s684] sm:$0x3] %vm450, %v1850
  %v1853 = vsel %vm179, %v1373, %v1367
  %v1854 = vsel %vm179, %v1438, %v1432
  %v1855 = vsel %vm179, %v1503, %v1497
  %v1857 = vsel %vm78, %v1850, 0
  %1859 = vmatpush.msra.mxu0 0.0
  %1860 = vmatpush.msra.mxu0 0.0
  %1861 = vmatpush.msra.mxu0 0.0
  %1862 = vmatpush.msra.mxu0 0.0
  %1863 = vmatpush.msra.mxu0 0.0
  %1864 = vmatpush.msra.mxu0 0.0
  %1865 = vmatpush.msra.mxu0 0.0
  %1866 = vmatpush.msra.mxu0 0.0
  %1867 = vmatpush.msra.mxu0 0.0
  %1868 = vmatpush.msra.mxu0 0.0
  %1869 = vmatpush.msra.mxu0 %v1296
  %1870 = vmatpush.msra.mxu0 %v1295
  %1871 = vmatpush.msra.mxu0 %v1294
  %1872 = vmatpush.msra.mxu0 %v1293
  %1873 = vmatpush.msra.mxu0 %v1292
  %1874 = vmatpush.msra.mxu0 %v1291
  %1875 = vmatmul.f32.gmra.mxu0 %v1857
  %v1876 = vpop.f32.mrf.mxu0
  %v1877 = vadd.f32 0.0, %v1876
  %1878 = vdwg.mxu0
  %v1879 = vadd.f32 %v1853, %v1877
  %v1880 = vxor.u32 %v1879, 2147483648
  %v1881 = vmul.f32 %v1880, 1.442695
  %v1882 = vpow.pop %v1881
  %v1883 = vadd.f32 %v1882, 1.0
  %v1884 = vrcp.pop %v1883
  %v1885 = vmul.f32 %v1883, %v1884
  %v1886 = vsub.f32 1.0, %v1885
  %v1887 = vmul.f32 %v1884, %v1886
  %v1888 = vadd.f32 %v1884, %v1887
  %vm1889 = vweird.f32 %v1883
  %vm1890 = vweird.f32 %v1884
  %vm1891 = vmor %vm1889, %vm1890
  %v1892 = vsel %vm1891, %v1884, %v1888
  %v1893 = vand.u32 2147483647, %v1883
  %vm1894 = vcmp.eq.f32.partialorder %v1893, 8.507059e+37
  %v1895 = vand.u32 %v1883, 2147483648
  %v1896 = vor.u32 1.1754944e-38, %v1895
  %v1897 = vsel %vm1894, %v1896, %v1892
  %v1898 = vmul.f32 1.0, %v1897
  %1899 = vmatpush.msra.mxu0 0.0
  %1900 = vmatpush.msra.mxu0 0.0
  %1901 = vmatpush.msra.mxu0 0.0
  %1902 = vmatpush.msra.mxu0 0.0
  %1903 = vmatpush.msra.mxu0 0.0
  %1904 = vmatpush.msra.mxu0 0.0
  %1905 = vmatpush.msra.mxu0 0.0
  %1906 = vmatpush.msra.mxu0 0.0
  %1907 = vmatpush.msra.mxu0 0.0
  %1908 = vmatpush.msra.mxu0 0.0
  %1909 = vmatpush.msra.mxu0 %v1302
  %1910 = vmatpush.msra.mxu0 %v1301
  %1911 = vmatpush.msra.mxu0 %v1300
  %1912 = vmatpush.msra.mxu0 %v1299
  %1913 = vmatpush.msra.mxu0 %v1298
  %1914 = vmatpush.msra.mxu0 %v1297
  %1915 = vmatmul.f32.gmra.mxu0 %v1857
  %v1916 = vpop.f32.mrf.mxu0
  %v1917 = vadd.f32 0.0, %v1916
  %1918 = vdwg.mxu0
  %v1919 = vadd.f32 %v1854, %v1917
  %v1920 = vxor.u32 %v1919, 2147483648
  %v1921 = vmul.f32 %v1920, 1.442695
  %v1922 = vpow.pop %v1921
  %v1923 = vadd.f32 %v1922, 1.0
  %v1924 = vrcp.pop %v1923
  %v1925 = vmul.f32 %v1923, %v1924
  %v1926 = vsub.f32 1.0, %v1925
  %v1927 = vmul.f32 %v1924, %v1926
  %v1928 = vadd.f32 %v1924, %v1927
  %vm1929 = vweird.f32 %v1923
  %vm1930 = vweird.f32 %v1924
  %vm1931 = vmor %vm1929, %vm1930
  %v1932 = vsel %vm1931, %v1924, %v1928
  %v1933 = vand.u32 2147483647, %v1923
  %vm1934 = vcmp.eq.f32.partialorder %v1933, 8.507059e+37
  %v1935 = vand.u32 %v1923, 2147483648
  %v1936 = vor.u32 1.1754944e-38, %v1935
  %v1937 = vsel %vm1934, %v1936, %v1932
  %v1938 = vmul.f32 1.0, %v1937
  %1939 = vmatpush.msra.mxu0 0.0
  %1940 = vmatpush.msra.mxu0 0.0
  %1941 = vmatpush.msra.mxu0 0.0
  %1942 = vmatpush.msra.mxu0 0.0
  %1943 = vmatpush.msra.mxu0 0.0
  %1944 = vmatpush.msra.mxu0 0.0
  %1945 = vmatpush.msra.mxu0 0.0
  %1946 = vmatpush.msra.mxu0 0.0
  %1947 = vmatpush.msra.mxu0 0.0
  %1948 = vmatpush.msra.mxu0 0.0
  %1949 = vmatpush.msra.mxu0 %v1308
  %1950 = vmatpush.msra.mxu0 %v1307
  %1951 = vmatpush.msra.mxu0 %v1306
  %1952 = vmatpush.msra.mxu0 %v1305
  %1953 = vmatpush.msra.mxu0 %v1304
  %1954 = vmatpush.msra.mxu0 %v1303
  %1955 = vmatmul.f32.gmra.mxu0 %v1857
  %v1956 = vpop.f32.mrf.mxu0
  %v1957 = vadd.f32 %v1513, %v1956
  %1958 = vdwg.mxu0
  %v1959 = vmul.f32 %v1898, %v1957
  %v1960 = vadd.f32 %v1855, %v1959
  %v1961 = vtanh.pop %v1960
  %v1962 = vsub.f32 %v1850, %v1961
  %v1963 = vmul.f32 %v1938, %v1962
  %v1964 = vadd.f32 %v1961, %v1963
  %1965 = vst.msk [vmem:[%s798] sm:$0x3] %vm450, %v1964
  %1966 = vst.msk [vmem:[%s800] sm:$0x3] %vm450, %v1964
  %v1967 = vsel %vm179, %v1367, %v1373
  %v1968 = vsel %vm179, %v1432, %v1438
  %v1969 = vsel %vm179, %v1497, %v1503
  %v1971 = vsel %vm78, %v1964, 0
  %1973 = vmatpush.msra.mxu0 0.0
  %1974 = vmatpush.msra.mxu0 0.0
  %1975 = vmatpush.msra.mxu0 0.0
  %1976 = vmatpush.msra.mxu0 0.0
  %1977 = vmatpush.msra.mxu0 0.0
  %1978 = vmatpush.msra.mxu0 0.0
  %1979 = vmatpush.msra.mxu0 0.0
  %1980 = vmatpush.msra.mxu0 0.0
  %1981 = vmatpush.msra.mxu0 0.0
  %1982 = vmatpush.msra.mxu0 0.0
  %1983 = vmatpush.msra.mxu0 %v1296
  %1984 = vmatpush.msra.mxu0 %v1295
  %1985 = vmatpush.msra.mxu0 %v1294
  %1986 = vmatpush.msra.mxu0 %v1293
  %1987 = vmatpush.msra.mxu0 %v1292
  %1988 = vmatpush.msra.mxu0 %v1291
  %1989 = vmatmul.f32.gmra.mxu0 %v1971
  %v1990 = vpop.f32.mrf.mxu0
  %v1991 = vadd.f32 0.0, %v1990
  %1992 = vdwg.mxu0
  %v1993 = vadd.f32 %v1967, %v1991
  %v1994 = vxor.u32 %v1993, 2147483648
  %v1995 = vmul.f32 %v1994, 1.442695
  %v1996 = vpow.pop %v1995
  %v1997 = vadd.f32 %v1996, 1.0
  %v1998 = vrcp.pop %v1997
  %v1999 = vmul.f32 %v1997, %v1998
  %v2000 = vsub.f32 1.0, %v1999
  %v2001 = vmul.f32 %v1998, %v2000
  %v2002 = vadd.f32 %v1998, %v2001
  %vm2003 = vweird.f32 %v1997
  %vm2004 = vweird.f32 %v1998
  %vm2005 = vmor %vm2003, %vm2004
  %v2006 = vsel %vm2005, %v1998, %v2002
  %v2007 = vand.u32 2147483647, %v1997
  %vm2008 = vcmp.eq.f32.partialorder %v2007, 8.507059e+37
  %v2009 = vand.u32 %v1997, 2147483648
  %v2010 = vor.u32 1.1754944e-38, %v2009
  %v2011 = vsel %vm2008, %v2010, %v2006
  %v2012 = vmul.f32 1.0, %v2011
  %2013 = vmatpush.msra.mxu0 0.0
  %2014 = vmatpush.msra.mxu0 0.0
  %2015 = vmatpush.msra.mxu0 0.0
  %2016 = vmatpush.msra.mxu0 0.0
  %2017 = vmatpush.msra.mxu0 0.0
  %2018 = vmatpush.msra.mxu0 0.0
  %2019 = vmatpush.msra.mxu0 0.0
  %2020 = vmatpush.msra.mxu0 0.0
  %2021 = vmatpush.msra.mxu0 0.0
  %2022 = vmatpush.msra.mxu0 0.0
  %2023 = vmatpush.msra.mxu0 %v1302
  %2024 = vmatpush.msra.mxu0 %v1301
  %2025 = vmatpush.msra.mxu0 %v1300
  %2026 = vmatpush.msra.mxu0 %v1299
  %2027 = vmatpush.msra.mxu0 %v1298
  %2028 = vmatpush.msra.mxu0 %v1297
  %2029 = vmatmul.f32.gmra.mxu0 %v1971
  %v2030 = vpop.f32.mrf.mxu0
  %v2031 = vadd.f32 0.0, %v2030
  %2032 = vdwg.mxu0
  %v2033 = vadd.f32 %v1968, %v2031
  %v2034 = vxor.u32 %v2033, 2147483648
  %v2035 = vmul.f32 %v2034, 1.442695
  %v2036 = vpow.pop %v2035
  %v2037 = vadd.f32 %v2036, 1.0
  %v2038 = vrcp.pop %v2037
  %v2039 = vmul.f32 %v2037, %v2038
  %v2040 = vsub.f32 1.0, %v2039
  %v2041 = vmul.f32 %v2038, %v2040
  %v2042 = vadd.f32 %v2038, %v2041
  %vm2043 = vweird.f32 %v2037
  %vm2044 = vweird.f32 %v2038
  %vm2045 = vmor %vm2043, %vm2044
  %v2046 = vsel %vm2045, %v2038, %v2042
  %v2047 = vand.u32 2147483647, %v2037
  %vm2048 = vcmp.eq.f32.partialorder %v2047, 8.507059e+37
  %v2049 = vand.u32 %v2037, 2147483648
  %v2050 = vor.u32 1.1754944e-38, %v2049
  %v2051 = vsel %vm2048, %v2050, %v2046
  %v2052 = vmul.f32 1.0, %v2051
  %2053 = vmatpush.msra.mxu0 0.0
  %2054 = vmatpush.msra.mxu0 0.0
  %2055 = vmatpush.msra.mxu0 0.0
  %2056 = vmatpush.msra.mxu0 0.0
  %2057 = vmatpush.msra.mxu0 0.0
  %2058 = vmatpush.msra.mxu0 0.0
  %2059 = vmatpush.msra.mxu0 0.0
  %2060 = vmatpush.msra.mxu0 0.0
  %2061 = vmatpush.msra.mxu0 0.0
  %2062 = vmatpush.msra.mxu0 0.0
  %2063 = vmatpush.msra.mxu0 %v1308
  %2064 = vmatpush.msra.mxu0 %v1307
  %2065 = vmatpush.msra.mxu0 %v1306
  %2066 = vmatpush.msra.mxu0 %v1305
  %2067 = vmatpush.msra.mxu0 %v1304
  %2068 = vmatpush.msra.mxu0 %v1303
  %2069 = vmatmul.f32.gmra.mxu0 %v1971
  %v2070 = vpop.f32.mrf.mxu0
  %v2071 = vadd.f32 %v1513, %v2070
  %2072 = vdwg.mxu0
  %v2073 = vmul.f32 %v2012, %v2071
  %v2074 = vadd.f32 %v1969, %v2073
  %v2075 = vtanh.pop %v2074
  %v2076 = vsub.f32 %v1964, %v2075
  %v2077 = vmul.f32 %v2052, %v2076
  %v2078 = vadd.f32 %v2075, %v2077
  %2079 = vst.msk [vmem:[%s914] sm:$0x3] %vm450, %v2078
  %2080 = vst.msk [vmem:[%s916] sm:$0x3] %vm450, %v2078
  %v2081 = vsel %vm179, %v1374, %v1372
  %v2082 = vsel %vm179, %v1439, %v1437
  %v2083 = vsel %vm179, %v1504, %v1502
  %v2085 = vsel %vm78, %v2078, 0
  %2087 = vmatpush.msra.mxu0 0.0
  %2088 = vmatpush.msra.mxu0 0.0
  %2089 = vmatpush.msra.mxu0 0.0
  %2090 = vmatpush.msra.mxu0 0.0
  %2091 = vmatpush.msra.mxu0 0.0
  %2092 = vmatpush.msra.mxu0 0.0
  %2093 = vmatpush.msra.mxu0 0.0
  %2094 = vmatpush.msra.mxu0 0.0
  %2095 = vmatpush.msra.mxu0 0.0
  %2096 = vmatpush.msra.mxu0 0.0
  %2097 = vmatpush.msra.mxu0 %v1296
  %2098 = vmatpush.msra.mxu0 %v1295
  %2099 = vmatpush.msra.mxu0 %v1294
  %2100 = vmatpush.msra.mxu0 %v1293
  %2101 = vmatpush.msra.mxu0 %v1292
  %2102 = vmatpush.msra.mxu0 %v1291
  %2103 = vmatmul.f32.gmra.mxu0 %v2085
  %v2104 = vpop.f32.mrf.mxu0
  %v2105 = vadd.f32 0.0, %v2104
  %2106 = vdwg.mxu0
  %v2107 = vadd.f32 %v2081, %v2105
  %v2108 = vxor.u32 %v2107, 2147483648
  %v2109 = vmul.f32 %v2108, 1.442695
  %v2110 = vpow.pop %v2109
  %v2111 = vadd.f32 %v2110, 1.0
  %v2112 = vrcp.pop %v2111
  %v2113 = vmul.f32 %v2111, %v2112
  %v2114 = vsub.f32 1.0, %v2113
  %v2115 = vmul.f32 %v2112, %v2114
  %v2116 = vadd.f32 %v2112, %v2115
  %vm2117 = vweird.f32 %v2111
  %vm2118 = vweird.f32 %v2112
  %vm2119 = vmor %vm2117, %vm2118
  %v2120 = vsel %vm2119, %v2112, %v2116
  %v2121 = vand.u32 2147483647, %v2111
  %vm2122 = vcmp.eq.f32.partialorder %v2121, 8.507059e+37
  %v2123 = vand.u32 %v2111, 2147483648
  %v2124 = vor.u32 1.1754944e-38, %v2123
  %v2125 = vsel %vm2122, %v2124, %v2120
  %v2126 = vmul.f32 1.0, %v2125
  %2127 = vmatpush.msra.mxu0 0.0
  %2128 = vmatpush.msra.mxu0 0.0
  %2129 = vmatpush.msra.mxu0 0.0
  %2130 = vmatpush.msra.mxu0 0.0
  %2131 = vmatpush.msra.mxu0 0.0
  %2132 = vmatpush.msra.mxu0 0.0
  %2133 = vmatpush.msra.mxu0 0.0
  %2134 = vmatpush.msra.mxu0 0.0
  %2135 = vmatpush.msra.mxu0 0.0
  %2136 = vmatpush.msra.mxu0 0.0
  %2137 = vmatpush.msra.mxu0 %v1302
  %2138 = vmatpush.msra.mxu0 %v1301
  %2139 = vmatpush.msra.mxu0 %v1300
  %2140 = vmatpush.msra.mxu0 %v1299
  %2141 = vmatpush.msra.mxu0 %v1298
  %2142 = vmatpush.msra.mxu0 %v1297
  %2143 = vmatmul.f32.gmra.mxu0 %v2085
  %v2144 = vpop.f32.mrf.mxu0
  %v2145 = vadd.f32 0.0, %v2144
  %2146 = vdwg.mxu0
  %v2147 = vadd.f32 %v2082, %v2145
  %v2148 = vxor.u32 %v2147, 2147483648
  %v2149 = vmul.f32 %v2148, 1.442695
  %v2150 = vpow.pop %v2149
  %v2151 = vadd.f32 %v2150, 1.0
  %v2152 = vrcp.pop %v2151
  %v2153 = vmul.f32 %v2151, %v2152
  %v2154 = vsub.f32 1.0, %v2153
  %v2155 = vmul.f32 %v2152, %v2154
  %v2156 = vadd.f32 %v2152, %v2155
  %vm2157 = vweird.f32 %v2151
  %vm2158 = vweird.f32 %v2152
  %vm2159 = vmor %vm2157, %vm2158
  %v2160 = vsel %vm2159, %v2152, %v2156
  %v2161 = vand.u32 2147483647, %v2151
  %vm2162 = vcmp.eq.f32.partialorder %v2161, 8.507059e+37
  %v2163 = vand.u32 %v2151, 2147483648
  %v2164 = vor.u32 1.1754944e-38, %v2163
  %v2165 = vsel %vm2162, %v2164, %v2160
  %v2166 = vmul.f32 1.0, %v2165
  %2167 = vmatpush.msra.mxu0 0.0
  %2168 = vmatpush.msra.mxu0 0.0
  %2169 = vmatpush.msra.mxu0 0.0
  %2170 = vmatpush.msra.mxu0 0.0
  %2171 = vmatpush.msra.mxu0 0.0
  %2172 = vmatpush.msra.mxu0 0.0
  %2173 = vmatpush.msra.mxu0 0.0
  %2174 = vmatpush.msra.mxu0 0.0
  %2175 = vmatpush.msra.mxu0 0.0
  %2176 = vmatpush.msra.mxu0 0.0
  %2177 = vmatpush.msra.mxu0 %v1308
  %2178 = vmatpush.msra.mxu0 %v1307
  %2179 = vmatpush.msra.mxu0 %v1306
  %2180 = vmatpush.msra.mxu0 %v1305
  %2181 = vmatpush.msra.mxu0 %v1304
  %2182 = vmatpush.msra.mxu0 %v1303
  %2183 = vmatmul.f32.gmra.mxu0 %v2085
  %v2184 = vpop.f32.mrf.mxu0
  %v2185 = vadd.f32 %v1513, %v2184
  %2186 = vdwg.mxu0
  %v2187 = vmul.f32 %v2126, %v2185
  %v2188 = vadd.f32 %v2083, %v2187
  %v2189 = vtanh.pop %v2188
  %v2190 = vsub.f32 %v2078, %v2189
  %v2191 = vmul.f32 %v2166, %v2190
  %v2192 = vadd.f32 %v2189, %v2191
  %2193 = vst.msk [vmem:[%s1030] sm:$0x3] %vm450, %v2192
  %2194 = vst.msk [vmem:[%s1032] sm:$0x3] %vm450, %v2192
  %v2195 = vsel %vm179, %v1375, %v1371
  %v2196 = vsel %vm179, %v1440, %v1436
  %v2197 = vsel %vm179, %v1505, %v1501
  %v2199 = vsel %vm78, %v2192, 0
  %2201 = vmatpush.msra.mxu0 0.0
  %2202 = vmatpush.msra.mxu0 0.0
  %2203 = vmatpush.msra.mxu0 0.0
  %2204 = vmatpush.msra.mxu0 0.0
  %2205 = vmatpush.msra.mxu0 0.0
  %2206 = vmatpush.msra.mxu0 0.0
  %2207 = vmatpush.msra.mxu0 0.0
  %2208 = vmatpush.msra.mxu0 0.0
  %2209 = vmatpush.msra.mxu0 0.0
  %2210 = vmatpush.msra.mxu0 0.0
  %2211 = vmatpush.msra.mxu0 %v1296
  %2212 = vmatpush.msra.mxu0 %v1295
  %2213 = vmatpush.msra.mxu0 %v1294
  %2214 = vmatpush.msra.mxu0 %v1293
  %2215 = vmatpush.msra.mxu0 %v1292
  %2216 = vmatpush.msra.mxu0 %v1291
  %2217 = vmatmul.f32.gmra.mxu0 %v2199
  %v2218 = vpop.f32.mrf.mxu0
  %v2219 = vadd.f32 0.0, %v2218
  %2220 = vdwg.mxu0
  %v2221 = vadd.f32 %v2195, %v2219
  %v2222 = vxor.u32 %v2221, 2147483648
  %v2223 = vmul.f32 %v2222, 1.442695
  %v2224 = vpow.pop %v2223
  %v2225 = vadd.f32 %v2224, 1.0
  %v2226 = vrcp.pop %v2225
  %v2227 = vmul.f32 %v2225, %v2226
  %v2228 = vsub.f32 1.0, %v2227
  %v2229 = vmul.f32 %v2226, %v2228
  %v2230 = vadd.f32 %v2226, %v2229
  %vm2231 = vweird.f32 %v2225
  %vm2232 = vweird.f32 %v2226
  %vm2233 = vmor %vm2231, %vm2232
  %v2234 = vsel %vm2233, %v2226, %v2230
  %v2235 = vand.u32 2147483647, %v2225
  %vm2236 = vcmp.eq.f32.partialorder %v2235, 8.507059e+37
  %v2237 = vand.u32 %v2225, 2147483648
  %v2238 = vor.u32 1.1754944e-38, %v2237
  %v2239 = vsel %vm2236, %v2238, %v2234
  %v2240 = vmul.f32 1.0, %v2239
  %2241 = vmatpush.msra.mxu0 0.0
  %2242 = vmatpush.msra.mxu0 0.0
  %2243 = vmatpush.msra.mxu0 0.0
  %2244 = vmatpush.msra.mxu0 0.0
  %2245 = vmatpush.msra.mxu0 0.0
  %2246 = vmatpush.msra.mxu0 0.0
  %2247 = vmatpush.msra.mxu0 0.0
  %2248 = vmatpush.msra.mxu0 0.0
  %2249 = vmatpush.msra.mxu0 0.0
  %2250 = vmatpush.msra.mxu0 0.0
  %2251 = vmatpush.msra.mxu0 %v1302
  %2252 = vmatpush.msra.mxu0 %v1301
  %2253 = vmatpush.msra.mxu0 %v1300
  %2254 = vmatpush.msra.mxu0 %v1299
  %2255 = vmatpush.msra.mxu0 %v1298
  %2256 = vmatpush.msra.mxu0 %v1297
  %2257 = vmatmul.f32.gmra.mxu0 %v2199
  %v2258 = vpop.f32.mrf.mxu0
  %v2259 = vadd.f32 0.0, %v2258
  %2260 = vdwg.mxu0
  %v2261 = vadd.f32 %v2196, %v2259
  %v2262 = vxor.u32 %v2261, 2147483648
  %v2263 = vmul.f32 %v2262, 1.442695
  %v2264 = vpow.pop %v2263
  %v2265 = vadd.f32 %v2264, 1.0
  %v2266 = vrcp.pop %v2265
  %v2267 = vmul.f32 %v2265, %v2266
  %v2268 = vsub.f32 1.0, %v2267
  %v2269 = vmul.f32 %v2266, %v2268
  %v2270 = vadd.f32 %v2266, %v2269
  %vm2271 = vweird.f32 %v2265
  %vm2272 = vweird.f32 %v2266
  %vm2273 = vmor %vm2271, %vm2272
  %v2274 = vsel %vm2273, %v2266, %v2270
  %v2275 = vand.u32 2147483647, %v2265
  %vm2276 = vcmp.eq.f32.partialorder %v2275, 8.507059e+37
  %v2277 = vand.u32 %v2265, 2147483648
  %v2278 = vor.u32 1.1754944e-38, %v2277
  %v2279 = vsel %vm2276, %v2278, %v2274
  %v2280 = vmul.f32 1.0, %v2279
  %2281 = vmatpush.msra.mxu0 0.0
  %2282 = vmatpush.msra.mxu0 0.0
  %2283 = vmatpush.msra.mxu0 0.0
  %2284 = vmatpush.msra.mxu0 0.0
  %2285 = vmatpush.msra.mxu0 0.0
  %2286 = vmatpush.msra.mxu0 0.0
  %2287 = vmatpush.msra.mxu0 0.0
  %2288 = vmatpush.msra.mxu0 0.0
  %2289 = vmatpush.msra.mxu0 0.0
  %2290 = vmatpush.msra.mxu0 0.0
  %2291 = vmatpush.msra.mxu0 %v1308
  %2292 = vmatpush.msra.mxu0 %v1307
  %2293 = vmatpush.msra.mxu0 %v1306
  %2294 = vmatpush.msra.mxu0 %v1305
  %2295 = vmatpush.msra.mxu0 %v1304
  %2296 = vmatpush.msra.mxu0 %v1303
  %2297 = vmatmul.f32.gmra.mxu0 %v2199
  %v2298 = vpop.f32.mrf.mxu0
  %v2299 = vadd.f32 %v1513, %v2298
  %2300 = vdwg.mxu0
  %v2301 = vmul.f32 %v2240, %v2299
  %v2302 = vadd.f32 %v2197, %v2301
  %v2303 = vtanh.pop %v2302
  %v2304 = vsub.f32 %v2192, %v2303
  %v2305 = vmul.f32 %v2280, %v2304
  %v2306 = vadd.f32 %v2303, %v2305
  %2307 = vst.msk [vmem:[%s1146] sm:$0x3] %vm450, %v2306
  %2308 = vst.msk [vmem:[%s1148] sm:$0x3] %vm450, %v2306
  %v2309 = vsel %vm179, %v1376, %v1364
  %v2310 = vsel %vm179, %v1441, %v1429
  %v2311 = vsel %vm179, %v1506, %v1494
  %v2313 = vsel %vm78, %v2306, 0
  %2315 = vmatpush.msra.mxu0 0.0
  %2316 = vmatpush.msra.mxu0 0.0
  %2317 = vmatpush.msra.mxu0 0.0
  %2318 = vmatpush.msra.mxu0 0.0
  %2319 = vmatpush.msra.mxu0 0.0
  %2320 = vmatpush.msra.mxu0 0.0
  %2321 = vmatpush.msra.mxu0 0.0
  %2322 = vmatpush.msra.mxu0 0.0
  %2323 = vmatpush.msra.mxu0 0.0
  %2324 = vmatpush.msra.mxu0 0.0
  %2325 = vmatpush.msra.mxu0 %v1296
  %2326 = vmatpush.msra.mxu0 %v1295
  %2327 = vmatpush.msra.mxu0 %v1294
  %2328 = vmatpush.msra.mxu0 %v1293
  %2329 = vmatpush.msra.mxu0 %v1292
  %2330 = vmatpush.msra.mxu0 %v1291
  %2331 = vmatmul.f32.gmra.mxu0 %v2313
  %v2332 = vpop.f32.mrf.mxu0
  %v2333 = vadd.f32 0.0, %v2332
  %2334 = vdwg.mxu0
  %v2335 = vadd.f32 %v2309, %v2333
  %v2336 = vxor.u32 %v2335, 2147483648
  %v2337 = vmul.f32 %v2336, 1.442695
  %v2338 = vpow.pop %v2337
  %v2339 = vadd.f32 %v2338, 1.0
  %v2340 = vrcp.pop %v2339
  %v2341 = vmul.f32 %v2339, %v2340
  %v2342 = vsub.f32 1.0, %v2341
  %v2343 = vmul.f32 %v2340, %v2342
  %v2344 = vadd.f32 %v2340, %v2343
  %vm2345 = vweird.f32 %v2339
  %vm2346 = vweird.f32 %v2340
  %vm2347 = vmor %vm2345, %vm2346
  %v2348 = vsel %vm2347, %v2340, %v2344
  %v2349 = vand.u32 2147483647, %v2339
  %vm2350 = vcmp.eq.f32.partialorder %v2349, 8.507059e+37
  %v2351 = vand.u32 %v2339, 2147483648
  %v2352 = vor.u32 1.1754944e-38, %v2351
  %v2353 = vsel %vm2350, %v2352, %v2348
  %v2354 = vmul.f32 1.0, %v2353
  %2355 = vmatpush.msra.mxu0 0.0
  %2356 = vmatpush.msra.mxu0 0.0
  %2357 = vmatpush.msra.mxu0 0.0
  %2358 = vmatpush.msra.mxu0 0.0
  %2359 = vmatpush.msra.mxu0 0.0
  %2360 = vmatpush.msra.mxu0 0.0
  %2361 = vmatpush.msra.mxu0 0.0
  %2362 = vmatpush.msra.mxu0 0.0
  %2363 = vmatpush.msra.mxu0 0.0
  %2364 = vmatpush.msra.mxu0 0.0
  %2365 = vmatpush.msra.mxu0 %v1302
  %2366 = vmatpush.msra.mxu0 %v1301
  %2367 = vmatpush.msra.mxu0 %v1300
  %2368 = vmatpush.msra.mxu0 %v1299
  %2369 = vmatpush.msra.mxu0 %v1298
  %2370 = vmatpush.msra.mxu0 %v1297
  %2371 = vmatmul.f32.gmra.mxu0 %v2313
  %v2372 = vpop.f32.mrf.mxu0
  %v2373 = vadd.f32 0.0, %v2372
  %2374 = vdwg.mxu0
  %v2375 = vadd.f32 %v2310, %v2373
  %v2376 = vxor.u32 %v2375, 2147483648
  %v2377 = vmul.f32 %v2376, 1.442695
  %v2378 = vpow.pop %v2377
  %v2379 = vadd.f32 %v2378, 1.0
  %v2380 = vrcp.pop %v2379
  %v2381 = vmul.f32 %v2379, %v2380
  %v2382 = vsub.f32 1.0, %v2381
  %v2383 = vmul.f32 %v2380, %v2382
  %v2384 = vadd.f32 %v2380, %v2383
  %vm2385 = vweird.f32 %v2379
  %vm2386 = vweird.f32 %v2380
  %vm2387 = vmor %vm2385, %vm2386
  %v2388 = vsel %vm2387, %v2380, %v2384
  %v2389 = vand.u32 2147483647, %v2379
  %vm2390 = vcmp.eq.f32.partialorder %v2389, 8.507059e+37
  %v2391 = vand.u32 %v2379, 2147483648
  %v2392 = vor.u32 1.1754944e-38, %v2391
  %v2393 = vsel %vm2390, %v2392, %v2388
  %v2394 = vmul.f32 1.0, %v2393
  %2395 = vmatpush.msra.mxu0 0.0
  %2396 = vmatpush.msra.mxu0 0.0
  %2397 = vmatpush.msra.mxu0 0.0
  %2398 = vmatpush.msra.mxu0 0.0
  %2399 = vmatpush.msra.mxu0 0.0
  %2400 = vmatpush.msra.mxu0 0.0
  %2401 = vmatpush.msra.mxu0 0.0
  %2402 = vmatpush.msra.mxu0 0.0
  %2403 = vmatpush.msra.mxu0 0.0
  %2404 = vmatpush.msra.mxu0 0.0
  %2405 = vmatpush.msra.mxu0 %v1308
  %2406 = vmatpush.msra.mxu0 %v1307
  %2407 = vmatpush.msra.mxu0 %v1306
  %2408 = vmatpush.msra.mxu0 %v1305
  %2409 = vmatpush.msra.mxu0 %v1304
  %2410 = vmatpush.msra.mxu0 %v1303
  %2411 = vmatmul.f32.gmra.mxu0 %v2313
  %v2412 = vpop.f32.mrf.mxu0
  %v2413 = vadd.f32 %v1513, %v2412
  %2414 = vdwg.mxu0
  %v2415 = vmul.f32 %v2354, %v2413
  %v2416 = vadd.f32 %v2311, %v2415
  %v2417 = vtanh.pop %v2416
  %v2418 = vsub.f32 %v2306, %v2417
  %v2419 = vmul.f32 %v2394, %v2418
  %v2420 = vadd.f32 %v2417, %v2419
  %2421 = vst.msk [vmem:[%s1262] sm:$0x3] %vm450, %v2420
  %2422 = vst.msk [vmem:[#allocation3] sm:$0x3] %vm450, %v2420
  %v2423 = vld [vmem:[#allocation2] sm:$0x3]
  %v2424 = vld [vmem:[#allocation2 + $0x2] sm:$0x3]
  %v2425 = vld [vmem:[#allocation2 + $0x4] sm:$0x3]
  %v2426 = vld [vmem:[#allocation2 + $0x6] sm:$0x3]
  %v2427 = vld [vmem:[#allocation2 + $0x8] sm:$0x3]
  %v2428 = vld [vmem:[#allocation2 + $0xa] sm:$0x3]
  %v2429 = vld [vmem:[#allocation2 + $0xc] sm:$0x3]
  %v2430 = vld [vmem:[#allocation2 + $0xe] sm:$0x3]
  %v2431 = vld [vmem:[#allocation3] sm:$0x3]
  %v2432 = vld [vmem:[#allocation3 + $0x2] sm:$0x3]
  %v2433 = vld [vmem:[#allocation3 + $0x4] sm:$0x3]
  %v2434 = vld [vmem:[#allocation3 + $0x6] sm:$0x3]
  %v2435 = vld [vmem:[#allocation3 + $0x8] sm:$0x3]
  %v2436 = vld [vmem:[#allocation3 + $0xa] sm:$0x3]
  %v2437 = vld [vmem:[#allocation3 + $0xc] sm:$0x3]
  %v2438 = vld [vmem:[#allocation3 + $0xe] sm:$0x3]
  %v2439 = vsel %vm1282, %v2423, %v2431
  %v2440 = vsel %vm1282, %v2424, %v2432
  %v2441 = vsel %vm1282, %v2425, %v2433
  %v2442 = vsel %vm1282, %v2426, %v2434
  %v2443 = vsel %vm1282, %v2427, %v2435
  %v2444 = vsel %vm1282, %v2428, %v2436
  %v2445 = vsel %vm1282, %v2429, %v2437
  %v2446 = vsel %vm1282, %v2430, %v2438
  %v2447 = vld [vmem:[%s3 + $0x360] sm:$0xff]
  %v2448 = vld [vmem:[%s3 + $0x368] sm:$0xff]
  %v2449 = vld [vmem:[%s3 + $0x370] sm:$0xff]
  %v2450 = vld [vmem:[%s3 + $0x378] sm:$0xff]
  %v2451 = vld [vmem:[%s3 + $0x380] sm:$0xff]
  %v2452 = vld [vmem:[%s3 + $0x388] sm:$0xff]
  %v2453 = vld [vmem:[%s3 + $0x390] sm:$0xff]
  %v2454 = vld [vmem:[%s3 + $0x398] sm:$0xff]
  %v2455 = vld [vmem:[%s3 + $0x3a0] sm:$0xff]
  %v2456 = vld [vmem:[%s3 + $0x3a8] sm:$0xff]
  %v2457 = vld [vmem:[%s3 + $0x3b0] sm:$0xff]
  %v2458 = vld [vmem:[%s3 + $0x3b8] sm:$0xff]
  %v2459 = vld [vmem:[%s3 + $0x3c0] sm:$0xff]
  %v2460 = vld [vmem:[%s3 + $0x3c8] sm:$0xff]
  %v2461 = vld [vmem:[%s3 + $0x3d0] sm:$0xff]
  %v2462 = vld [vmem:[%s3 + $0x3d8] sm:$0xff]
  %v2463 = vld [vmem:[%s3 + $0x3e0] sm:$0xff]
  %v2464 = vld [vmem:[%s3 + $0x3e8] sm:$0xff]
  %v2465 = vld [vmem:[%s3 + $0x3f0] sm:$0xf]
  %v2466 = vld [vmem:[%s3 + $0x2d0] sm:$0xff]
  %v2467 = vld [vmem:[%s3 + $0x2d8] sm:$0xff]
  %v2468 = vld [vmem:[%s3 + $0x2e0] sm:$0xff]
  %v2469 = vld [vmem:[%s3 + $0x2e8] sm:$0xff]
  %v2470 = vld [vmem:[%s3 + $0x2f0] sm:$0xff]
  %v2471 = vld [vmem:[%s3 + $0x2f8] sm:$0xff]
  %v2472 = vperm.slane %v2465, 0
  %2481 = vst [vmem:[#allocation1] ss:$4 sm:$0xff] %v2439
  %s2482 = scalar_lea.vmem [#allocation1], 1
  %2483 = vst [vmem:[%s2482] ss:$4 sm:$0xff] %v2440
  %s2484 = scalar_lea.vmem [#allocation1], 2
  %2485 = vst [vmem:[%s2484] ss:$4 sm:$0xff] %v2441
  %s2486 = scalar_lea.vmem [#allocation1], 3
  %2487 = vst [vmem:[%s2486] ss:$4 sm:$0xff] %v2442
  %s2488 = scalar_lea.vmem [#allocation1], 32
  %2489 = vst [vmem:[%s2488] ss:$4 sm:$0xff] %v2443
  %s2490 = scalar_lea.vmem [#allocation1], 33
  %2491 = vst [vmem:[%s2490] ss:$4 sm:$0xff] %v2444
  %s2492 = scalar_lea.vmem [#allocation1], 34
  %2493 = vst [vmem:[%s2492] ss:$4 sm:$0xff] %v2445
  %s2494 = scalar_lea.vmem [#allocation1], 35
  %2495 = vst [vmem:[%s2494] ss:$4 sm:$0xff] %v2446
  %v2496 = vld.sshfl [vmem:[#allocation1] sm:$0xff pattern:$0x73625140]
  %v2497 = vld.sshfl [vmem:[#allocation1 + $0x20] sm:$0xff pattern:$0x73625140]
  %v2498 = vsel %vm78, %v2496, 0
  %v2500 = vsel %vm78, %v2497, 0
  %2502 = vmatpush.msra.mxu0 0.0
  %2503 = vmatpush.msra.mxu0 0.0
  %2504 = vmatpush.msra.mxu0 0.0
  %2505 = vmatpush.msra.mxu0 0.0
  %2506 = vmatpush.msra.mxu0 0.0
  %2507 = vmatpush.msra.mxu0 0.0
  %2508 = vmatpush.msra.mxu0 0.0
  %2509 = vmatpush.msra.mxu0 0.0
  %2510 = vmatpush.msra.mxu0 0.0
  %2511 = vmatpush.msra.mxu0 0.0
  %2512 = vmatpush.msra.mxu0 %v2471
  %2513 = vmatpush.msra.mxu0 %v2470
  %2514 = vmatpush.msra.mxu0 %v2469
  %2515 = vmatpush.msra.mxu0 %v2468
  %2516 = vmatpush.msra.mxu0 %v2467
  %2517 = vmatpush.msra.mxu0 %v2466
  %2518 = vmatmul.f32.gmra.mxu0 %v2498
  %v2519 = vpop.f32.mrf.mxu0
  %v2520 = vadd.f32 %v2472, %v2519
  %2521 = vmatmul.f32.gmra.mxu0 %v2500
  %v2522 = vpop.f32.mrf.mxu0
  %v2523 = vadd.f32 %v2472, %v2522
  %2524 = vdwg.mxu0
  %v2527 = vrot.slane %v2520, 2
  %v2528 = vrot.slane %v2520, 4
  %v2529 = vrot.slane %v2520, 6
  %v2530 = vrot.slane %v2523, 2
  %v2531 = vrot.slane %v2523, 4
  %v2532 = vrot.slane %v2523, 6
  %v2539 = vld [vmem:[%s3 + $0x300] sm:$0xff]
  %v2540 = vld [vmem:[%s3 + $0x308] sm:$0xff]
  %v2541 = vld [vmem:[%s3 + $0x310] sm:$0xff]
  %v2542 = vld [vmem:[%s3 + $0x318] sm:$0xff]
  %v2543 = vld [vmem:[%s3 + $0x320] sm:$0xff]
  %v2544 = vld [vmem:[%s3 + $0x328] sm:$0xff]
  %v2545 = vperm.slane %v2465, 1
  %2546 = vst [vmem:[#allocation1] ss:$4 sm:$0xff] %v2439
  %s2547 = scalar_lea.vmem [#allocation1], 1
  %2548 = vst [vmem:[%s2547] ss:$4 sm:$0xff] %v2440
  %s2549 = scalar_lea.vmem [#allocation1], 2
  %2550 = vst [vmem:[%s2549] ss:$4 sm:$0xff] %v2441
  %s2551 = scalar_lea.vmem [#allocation1], 3
  %2552 = vst [vmem:[%s2551] ss:$4 sm:$0xff] %v2442
  %s2553 = scalar_lea.vmem [#allocation1], 32
  %2554 = vst [vmem:[%s2553] ss:$4 sm:$0xff] %v2443
  %s2555 = scalar_lea.vmem [#allocation1], 33
  %2556 = vst [vmem:[%s2555] ss:$4 sm:$0xff] %v2444
  %s2557 = scalar_lea.vmem [#allocation1], 34
  %2558 = vst [vmem:[%s2557] ss:$4 sm:$0xff] %v2445
  %s2559 = scalar_lea.vmem [#allocation1], 35
  %2560 = vst [vmem:[%s2559] ss:$4 sm:$0xff] %v2446
  %v2561 = vld.sshfl [vmem:[#allocation1] sm:$0xff pattern:$0x73625140]
  %v2562 = vld.sshfl [vmem:[#allocation1 + $0x20] sm:$0xff pattern:$0x73625140]
  %v2563 = vsel %vm78, %v2561, 0
  %v2565 = vsel %vm78, %v2562, 0
  %2567 = vmatpush.msra.mxu0 0.0
  %2568 = vmatpush.msra.mxu0 0.0
  %2569 = vmatpush.msra.mxu0 0.0
  %2570 = vmatpush.msra.mxu0 0.0
  %2571 = vmatpush.msra.mxu0 0.0
  %2572 = vmatpush.msra.mxu0 0.0
  %2573 = vmatpush.msra.mxu0 0.0
  %2574 = vmatpush.msra.mxu0 0.0
  %2575 = vmatpush.msra.mxu0 0.0
  %2576 = vmatpush.msra.mxu0 0.0
  %2577 = vmatpush.msra.mxu0 %v2544
  %2578 = vmatpush.msra.mxu0 %v2543
  %2579 = vmatpush.msra.mxu0 %v2542
  %2580 = vmatpush.msra.mxu0 %v2541
  %2581 = vmatpush.msra.mxu0 %v2540
  %2582 = vmatpush.msra.mxu0 %v2539
  %2583 = vmatmul.f32.gmra.mxu0 %v2563
  %v2584 = vpop.f32.mrf.mxu0
  %v2585 = vadd.f32 %v2545, %v2584
  %2586 = vmatmul.f32.gmra.mxu0 %v2565
  %v2587 = vpop.f32.mrf.mxu0
  %v2588 = vadd.f32 %v2545, %v2587
  %2589 = vdwg.mxu0
  %v2592 = vrot.slane %v2585, 2
  %v2593 = vrot.slane %v2585, 4
  %v2594 = vrot.slane %v2585, 6
  %v2595 = vrot.slane %v2588, 2
  %v2596 = vrot.slane %v2588, 4
  %v2597 = vrot.slane %v2588, 6
  %v2604 = vld [vmem:[%s3 + $0x330] sm:$0xff]
  %v2605 = vld [vmem:[%s3 + $0x338] sm:$0xff]
  %v2606 = vld [vmem:[%s3 + $0x340] sm:$0xff]
  %v2607 = vld [vmem:[%s3 + $0x348] sm:$0xff]
  %v2608 = vld [vmem:[%s3 + $0x350] sm:$0xff]
  %v2609 = vld [vmem:[%s3 + $0x358] sm:$0xff]
  %v2610 = vperm.slane %v2465, 2
  %2611 = vst [vmem:[#allocation1] ss:$4 sm:$0xff] %v2439
  %s2612 = scalar_lea.vmem [#allocation1], 1
  %2613 = vst [vmem:[%s2612] ss:$4 sm:$0xff] %v2440
  %s2614 = scalar_lea.vmem [#allocation1], 2
  %2615 = vst [vmem:[%s2614] ss:$4 sm:$0xff] %v2441
  %s2616 = scalar_lea.vmem [#allocation1], 3
  %2617 = vst [vmem:[%s2616] ss:$4 sm:$0xff] %v2442
  %s2618 = scalar_lea.vmem [#allocation1], 32
  %2619 = vst [vmem:[%s2618] ss:$4 sm:$0xff] %v2443
  %s2620 = scalar_lea.vmem [#allocation1], 33
  %2621 = vst [vmem:[%s2620] ss:$4 sm:$0xff] %v2444
  %s2622 = scalar_lea.vmem [#allocation1], 34
  %2623 = vst [vmem:[%s2622] ss:$4 sm:$0xff] %v2445
  %s2624 = scalar_lea.vmem [#allocation1], 35
  %2625 = vst [vmem:[%s2624] ss:$4 sm:$0xff] %v2446
  %v2626 = vld.sshfl [vmem:[#allocation1] sm:$0xff pattern:$0x73625140]
  %v2627 = vld.sshfl [vmem:[#allocation1 + $0x20] sm:$0xff pattern:$0x73625140]
  %v2628 = vsel %vm78, %v2626, 0
  %v2630 = vsel %vm78, %v2627, 0
  %2632 = vmatpush.msra.mxu0 0.0
  %2633 = vmatpush.msra.mxu0 0.0
  %2634 = vmatpush.msra.mxu0 0.0
  %2635 = vmatpush.msra.mxu0 0.0
  %2636 = vmatpush.msra.mxu0 0.0
  %2637 = vmatpush.msra.mxu0 0.0
  %2638 = vmatpush.msra.mxu0 0.0
  %2639 = vmatpush.msra.mxu0 0.0
  %2640 = vmatpush.msra.mxu0 0.0
  %2641 = vmatpush.msra.mxu0 0.0
  %2642 = vmatpush.msra.mxu0 %v2609
  %2643 = vmatpush.msra.mxu0 %v2608
  %2644 = vmatpush.msra.mxu0 %v2607
  %2645 = vmatpush.msra.mxu0 %v2606
  %2646 = vmatpush.msra.mxu0 %v2605
  %2647 = vmatpush.msra.mxu0 %v2604
  %2648 = vmatmul.f32.gmra.mxu0 %v2628
  %v2649 = vpop.f32.mrf.mxu0
  %v2650 = vadd.f32 %v2610, %v2649
  %2651 = vmatmul.f32.gmra.mxu0 %v2630
  %v2652 = vpop.f32.mrf.mxu0
  %v2653 = vadd.f32 %v2610, %v2652
  %2654 = vdwg.mxu0
  %v2657 = vrot.slane %v2650, 2
  %v2658 = vrot.slane %v2650, 4
  %v2659 = vrot.slane %v2650, 6
  %v2660 = vrot.slane %v2653, 2
  %v2661 = vrot.slane %v2653, 4
  %v2662 = vrot.slane %v2653, 6
  %v2669 = vperm.slane %v2465, 3
  %v2670 = vsel %vm179, %v2520, %v2532
  %v2671 = vsel %vm179, %v2585, %v2597
  %v2672 = vsel %vm179, %v2650, %v2662
  %2673 = vmatpush.msra.mxu0 0.0
  %2674 = vmatpush.msra.mxu0 0.0
  %2675 = vmatpush.msra.mxu0 0.0
  %2676 = vmatpush.msra.mxu0 0.0
  %2677 = vmatpush.msra.mxu0 0.0
  %2678 = vmatpush.msra.mxu0 0.0
  %2679 = vmatpush.msra.mxu0 0.0
  %2680 = vmatpush.msra.mxu0 0.0
  %2681 = vmatpush.msra.mxu0 0.0
  %2682 = vmatpush.msra.mxu0 0.0
  %2683 = vmatpush.msra.mxu0 %v2452
  %2684 = vmatpush.msra.mxu0 %v2451
  %2685 = vmatpush.msra.mxu0 %v2450
  %2686 = vmatpush.msra.mxu0 %v2449
  %2687 = vmatpush.msra.mxu0 %v2448
  %2688 = vmatpush.msra.mxu0 %v2447
  %2689 = vmatmul.f32.gmra.mxu0 %v342
  %v2690 = vpop.f32.mrf.mxu0
  %v2691 = vadd.f32 0.0, %v2690
  %2692 = vdwg.mxu0
  %v2693 = vadd.f32 %v2670, %v2691
  %v2694 = vxor.u32 %v2693, 2147483648
  %v2695 = vmul.f32 %v2694, 1.442695
  %v2696 = vpow.pop %v2695
  %v2697 = vadd.f32 %v2696, 1.0
  %v2698 = vrcp.pop %v2697
  %v2699 = vmul.f32 %v2697, %v2698
  %v2700 = vsub.f32 1.0, %v2699
  %v2701 = vmul.f32 %v2698, %v2700
  %v2702 = vadd.f32 %v2698, %v2701
  %vm2703 = vweird.f32 %v2697
  %vm2704 = vweird.f32 %v2698
  %vm2705 = vmor %vm2703, %vm2704
  %v2706 = vsel %vm2705, %v2698, %v2702
  %v2707 = vand.u32 2147483647, %v2697
  %vm2708 = vcmp.eq.f32.partialorder %v2707, 8.507059e+37
  %v2709 = vand.u32 %v2697, 2147483648
  %v2710 = vor.u32 1.1754944e-38, %v2709
  %v2711 = vsel %vm2708, %v2710, %v2706
  %v2712 = vmul.f32 1.0, %v2711
  %2713 = vmatpush.msra.mxu0 0.0
  %2714 = vmatpush.msra.mxu0 0.0
  %2715 = vmatpush.msra.mxu0 0.0
  %2716 = vmatpush.msra.mxu0 0.0
  %2717 = vmatpush.msra.mxu0 0.0
  %2718 = vmatpush.msra.mxu0 0.0
  %2719 = vmatpush.msra.mxu0 0.0
  %2720 = vmatpush.msra.mxu0 0.0
  %2721 = vmatpush.msra.mxu0 0.0
  %2722 = vmatpush.msra.mxu0 0.0
  %2723 = vmatpush.msra.mxu0 %v2458
  %2724 = vmatpush.msra.mxu0 %v2457
  %2725 = vmatpush.msra.mxu0 %v2456
  %2726 = vmatpush.msra.mxu0 %v2455
  %2727 = vmatpush.msra.mxu0 %v2454
  %2728 = vmatpush.msra.mxu0 %v2453
  %2729 = vmatmul.f32.gmra.mxu0 %v342
  %v2730 = vpop.f32.mrf.mxu0
  %v2731 = vadd.f32 0.0, %v2730
  %2732 = vdwg.mxu0
  %v2733 = vadd.f32 %v2671, %v2731
  %v2734 = vxor.u32 %v2733, 2147483648
  %v2735 = vmul.f32 %v2734, 1.442695
  %v2736 = vpow.pop %v2735
  %v2737 = vadd.f32 %v2736, 1.0
  %v2738 = vrcp.pop %v2737
  %v2739 = vmul.f32 %v2737, %v2738
  %v2740 = vsub.f32 1.0, %v2739
  %v2741 = vmul.f32 %v2738, %v2740
  %v2742 = vadd.f32 %v2738, %v2741
  %vm2743 = vweird.f32 %v2737
  %vm2744 = vweird.f32 %v2738
  %vm2745 = vmor %vm2743, %vm2744
  %v2746 = vsel %vm2745, %v2738, %v2742
  %v2747 = vand.u32 2147483647, %v2737
  %vm2748 = vcmp.eq.f32.partialorder %v2747, 8.507059e+37
  %v2749 = vand.u32 %v2737, 2147483648
  %v2750 = vor.u32 1.1754944e-38, %v2749
  %v2751 = vsel %vm2748, %v2750, %v2746
  %v2752 = vmul.f32 1.0, %v2751
  %2753 = vmatpush.msra.mxu0 0.0
  %2754 = vmatpush.msra.mxu0 0.0
  %2755 = vmatpush.msra.mxu0 0.0
  %2756 = vmatpush.msra.mxu0 0.0
  %2757 = vmatpush.msra.mxu0 0.0
  %2758 = vmatpush.msra.mxu0 0.0
  %2759 = vmatpush.msra.mxu0 0.0
  %2760 = vmatpush.msra.mxu0 0.0
  %2761 = vmatpush.msra.mxu0 0.0
  %2762 = vmatpush.msra.mxu0 0.0
  %2763 = vmatpush.msra.mxu0 %v2464
  %2764 = vmatpush.msra.mxu0 %v2463
  %2765 = vmatpush.msra.mxu0 %v2462
  %2766 = vmatpush.msra.mxu0 %v2461
  %2767 = vmatpush.msra.mxu0 %v2460
  %2768 = vmatpush.msra.mxu0 %v2459
  %2769 = vmatmul.f32.gmra.mxu0 %v342
  %v2770 = vpop.f32.mrf.mxu0
  %v2771 = vadd.f32 %v2669, %v2770
  %2772 = vdwg.mxu0
  %v2773 = vmul.f32 %v2712, %v2771
  %v2774 = vadd.f32 %v2672, %v2773
  %v2775 = vtanh.pop %v2774
  %v2776 = vsub.f32 0.0, %v2775
  %v2777 = vmul.f32 %v2752, %v2776
  %v2778 = vadd.f32 %v2775, %v2777
  %2779 = vst.msk [vmem:[#allocation2] sm:$0x3] %vm450, %v2778
  %2780 = vst.msk [vmem:[%s452] sm:$0x3] %vm450, %v2778
  %v2781 = vsel %vm179, %v2527, %v2531
  %v2782 = vsel %vm179, %v2592, %v2596
  %v2783 = vsel %vm179, %v2657, %v2661
  %v2785 = vsel %vm78, %v2778, 0
  %2787 = vmatpush.msra.mxu0 0.0
  %2788 = vmatpush.msra.mxu0 0.0
  %2789 = vmatpush.msra.mxu0 0.0
  %2790 = vmatpush.msra.mxu0 0.0
  %2791 = vmatpush.msra.mxu0 0.0
  %2792 = vmatpush.msra.mxu0 0.0
  %2793 = vmatpush.msra.mxu0 0.0
  %2794 = vmatpush.msra.mxu0 0.0
  %2795 = vmatpush.msra.mxu0 0.0
  %2796 = vmatpush.msra.mxu0 0.0
  %2797 = vmatpush.msra.mxu0 %v2452
  %2798 = vmatpush.msra.mxu0 %v2451
  %2799 = vmatpush.msra.mxu0 %v2450
  %2800 = vmatpush.msra.mxu0 %v2449
  %2801 = vmatpush.msra.mxu0 %v2448
  %2802 = vmatpush.msra.mxu0 %v2447
  %2803 = vmatmul.f32.gmra.mxu0 %v2785
  %v2804 = vpop.f32.mrf.mxu0
  %v2805 = vadd.f32 0.0, %v2804
  %2806 = vdwg.mxu0
  %v2807 = vadd.f32 %v2781, %v2805
  %v2808 = vxor.u32 %v2807, 2147483648
  %v2809 = vmul.f32 %v2808, 1.442695
  %v2810 = vpow.pop %v2809
  %v2811 = vadd.f32 %v2810, 1.0
  %v2812 = vrcp.pop %v2811
  %v2813 = vmul.f32 %v2811, %v2812
  %v2814 = vsub.f32 1.0, %v2813
  %v2815 = vmul.f32 %v2812, %v2814
  %v2816 = vadd.f32 %v2812, %v2815
  %vm2817 = vweird.f32 %v2811
  %vm2818 = vweird.f32 %v2812
  %vm2819 = vmor %vm2817, %vm2818
  %v2820 = vsel %vm2819, %v2812, %v2816
  %v2821 = vand.u32 2147483647, %v2811
  %vm2822 = vcmp.eq.f32.partialorder %v2821, 8.507059e+37
  %v2823 = vand.u32 %v2811, 2147483648
  %v2824 = vor.u32 1.1754944e-38, %v2823
  %v2825 = vsel %vm2822, %v2824, %v2820
  %v2826 = vmul.f32 1.0, %v2825
  %2827 = vmatpush.msra.mxu0 0.0
  %2828 = vmatpush.msra.mxu0 0.0
  %2829 = vmatpush.msra.mxu0 0.0
  %2830 = vmatpush.msra.mxu0 0.0
  %2831 = vmatpush.msra.mxu0 0.0
  %2832 = vmatpush.msra.mxu0 0.0
  %2833 = vmatpush.msra.mxu0 0.0
  %2834 = vmatpush.msra.mxu0 0.0
  %2835 = vmatpush.msra.mxu0 0.0
  %2836 = vmatpush.msra.mxu0 0.0
  %2837 = vmatpush.msra.mxu0 %v2458
  %2838 = vmatpush.msra.mxu0 %v2457
  %2839 = vmatpush.msra.mxu0 %v2456
  %2840 = vmatpush.msra.mxu0 %v2455
  %2841 = vmatpush.msra.mxu0 %v2454
  %2842 = vmatpush.msra.mxu0 %v2453
  %2843 = vmatmul.f32.gmra.mxu0 %v2785
  %v2844 = vpop.f32.mrf.mxu0
  %v2845 = vadd.f32 0.0, %v2844
  %2846 = vdwg.mxu0
  %v2847 = vadd.f32 %v2782, %v2845
  %v2848 = vxor.u32 %v2847, 2147483648
  %v2849 = vmul.f32 %v2848, 1.442695
  %v2850 = vpow.pop %v2849
  %v2851 = vadd.f32 %v2850, 1.0
  %v2852 = vrcp.pop %v2851
  %v2853 = vmul.f32 %v2851, %v2852
  %v2854 = vsub.f32 1.0, %v2853
  %v2855 = vmul.f32 %v2852, %v2854
  %v2856 = vadd.f32 %v2852, %v2855
  %vm2857 = vweird.f32 %v2851
  %vm2858 = vweird.f32 %v2852
  %vm2859 = vmor %vm2857, %vm2858
  %v2860 = vsel %vm2859, %v2852, %v2856
  %v2861 = vand.u32 2147483647, %v2851
  %vm2862 = vcmp.eq.f32.partialorder %v2861, 8.507059e+37
  %v2863 = vand.u32 %v2851, 2147483648
  %v2864 = vor.u32 1.1754944e-38, %v2863
  %v2865 = vsel %vm2862, %v2864, %v2860
  %v2866 = vmul.f32 1.0, %v2865
  %2867 = vmatpush.msra.mxu0 0.0
  %2868 = vmatpush.msra.mxu0 0.0
  %2869 = vmatpush.msra.mxu0 0.0
  %2870 = vmatpush.msra.mxu0 0.0
  %2871 = vmatpush.msra.mxu0 0.0
  %2872 = vmatpush.msra.mxu0 0.0
  %2873 = vmatpush.msra.mxu0 0.0
  %2874 = vmatpush.msra.mxu0 0.0
  %2875 = vmatpush.msra.mxu0 0.0
  %2876 = vmatpush.msra.mxu0 0.0
  %2877 = vmatpush.msra.mxu0 %v2464
  %2878 = vmatpush.msra.mxu0 %v2463
  %2879 = vmatpush.msra.mxu0 %v2462
  %2880 = vmatpush.msra.mxu0 %v2461
  %2881 = vmatpush.msra.mxu0 %v2460
  %2882 = vmatpush.msra.mxu0 %v2459
  %2883 = vmatmul.f32.gmra.mxu0 %v2785
  %v2884 = vpop.f32.mrf.mxu0
  %v2885 = vadd.f32 %v2669, %v2884
  %2886 = vdwg.mxu0
  %v2887 = vmul.f32 %v2826, %v2885
  %v2888 = vadd.f32 %v2783, %v2887
  %v2889 = vtanh.pop %v2888
  %v2890 = vsub.f32 %v2778, %v2889
  %v2891 = vmul.f32 %v2866, %v2890
  %v2892 = vadd.f32 %v2889, %v2891
  %2893 = vst.msk [vmem:[%s566] sm:$0x3] %vm450, %v2892
  %2894 = vst.msk [vmem:[%s568] sm:$0x3] %vm450, %v2892
  %v2895 = vsel %vm179, %v2528, %v2530
  %v2896 = vsel %vm179, %v2593, %v2595
  %v2897 = vsel %vm179, %v2658, %v2660
  %v2899 = vsel %vm78, %v2892, 0
  %2901 = vmatpush.msra.mxu0 0.0
  %2902 = vmatpush.msra.mxu0 0.0
  %2903 = vmatpush.msra.mxu0 0.0
  %2904 = vmatpush.msra.mxu0 0.0
  %2905 = vmatpush.msra.mxu0 0.0
  %2906 = vmatpush.msra.mxu0 0.0
  %2907 = vmatpush.msra.mxu0 0.0
  %2908 = vmatpush.msra.mxu0 0.0
  %2909 = vmatpush.msra.mxu0 0.0
  %2910 = vmatpush.msra.mxu0 0.0
  %2911 = vmatpush.msra.mxu0 %v2452
  %2912 = vmatpush.msra.mxu0 %v2451
  %2913 = vmatpush.msra.mxu0 %v2450
  %2914 = vmatpush.msra.mxu0 %v2449
  %2915 = vmatpush.msra.mxu0 %v2448
  %2916 = vmatpush.msra.mxu0 %v2447
  %2917 = vmatmul.f32.gmra.mxu0 %v2899
  %v2918 = vpop.f32.mrf.mxu0
  %v2919 = vadd.f32 0.0, %v2918
  %2920 = vdwg.mxu0
  %v2921 = vadd.f32 %v2895, %v2919
  %v2922 = vxor.u32 %v2921, 2147483648
  %v2923 = vmul.f32 %v2922, 1.442695
  %v2924 = vpow.pop %v2923
  %v2925 = vadd.f32 %v2924, 1.0
  %v2926 = vrcp.pop %v2925
  %v2927 = vmul.f32 %v2925, %v2926
  %v2928 = vsub.f32 1.0, %v2927
  %v2929 = vmul.f32 %v2926, %v2928
  %v2930 = vadd.f32 %v2926, %v2929
  %vm2931 = vweird.f32 %v2925
  %vm2932 = vweird.f32 %v2926
  %vm2933 = vmor %vm2931, %vm2932
  %v2934 = vsel %vm2933, %v2926, %v2930
  %v2935 = vand.u32 2147483647, %v2925
  %vm2936 = vcmp.eq.f32.partialorder %v2935, 8.507059e+37
  %v2937 = vand.u32 %v2925, 2147483648
  %v2938 = vor.u32 1.1754944e-38, %v2937
  %v2939 = vsel %vm2936, %v2938, %v2934
  %v2940 = vmul.f32 1.0, %v2939
  %2941 = vmatpush.msra.mxu0 0.0
  %2942 = vmatpush.msra.mxu0 0.0
  %2943 = vmatpush.msra.mxu0 0.0
  %2944 = vmatpush.msra.mxu0 0.0
  %2945 = vmatpush.msra.mxu0 0.0
  %2946 = vmatpush.msra.mxu0 0.0
  %2947 = vmatpush.msra.mxu0 0.0
  %2948 = vmatpush.msra.mxu0 0.0
  %2949 = vmatpush.msra.mxu0 0.0
  %2950 = vmatpush.msra.mxu0 0.0
  %2951 = vmatpush.msra.mxu0 %v2458
  %2952 = vmatpush.msra.mxu0 %v2457
  %2953 = vmatpush.msra.mxu0 %v2456
  %2954 = vmatpush.msra.mxu0 %v2455
  %2955 = vmatpush.msra.mxu0 %v2454
  %2956 = vmatpush.msra.mxu0 %v2453
  %2957 = vmatmul.f32.gmra.mxu0 %v2899
  %v2958 = vpop.f32.mrf.mxu0
  %v2959 = vadd.f32 0.0, %v2958
  %2960 = vdwg.mxu0
  %v2961 = vadd.f32 %v2896, %v2959
  %v2962 = vxor.u32 %v2961, 2147483648
  %v2963 = vmul.f32 %v2962, 1.442695
  %v2964 = vpow.pop %v2963
  %v2965 = vadd.f32 %v2964, 1.0
  %v2966 = vrcp.pop %v2965
  %v2967 = vmul.f32 %v2965, %v2966
  %v2968 = vsub.f32 1.0, %v2967
  %v2969 = vmul.f32 %v2966, %v2968
  %v2970 = vadd.f32 %v2966, %v2969
  %vm2971 = vweird.f32 %v2965
  %vm2972 = vweird.f32 %v2966
  %vm2973 = vmor %vm2971, %vm2972
  %v2974 = vsel %vm2973, %v2966, %v2970
  %v2975 = vand.u32 2147483647, %v2965
  %vm2976 = vcmp.eq.f32.partialorder %v2975, 8.507059e+37
  %v2977 = vand.u32 %v2965, 2147483648
  %v2978 = vor.u32 1.1754944e-38, %v2977
  %v2979 = vsel %vm2976, %v2978, %v2974
  %v2980 = vmul.f32 1.0, %v2979
  %2981 = vmatpush.msra.mxu0 0.0
  %2982 = vmatpush.msra.mxu0 0.0
  %2983 = vmatpush.msra.mxu0 0.0
  %2984 = vmatpush.msra.mxu0 0.0
  %2985 = vmatpush.msra.mxu0 0.0
  %2986 = vmatpush.msra.mxu0 0.0
  %2987 = vmatpush.msra.mxu0 0.0
  %2988 = vmatpush.msra.mxu0 0.0
  %2989 = vmatpush.msra.mxu0 0.0
  %2990 = vmatpush.msra.mxu0 0.0
  %2991 = vmatpush.msra.mxu0 %v2464
  %2992 = vmatpush.msra.mxu0 %v2463
  %2993 = vmatpush.msra.mxu0 %v2462
  %2994 = vmatpush.msra.mxu0 %v2461
  %2995 = vmatpush.msra.mxu0 %v2460
  %2996 = vmatpush.msra.mxu0 %v2459
  %2997 = vmatmul.f32.gmra.mxu0 %v2899
  %v2998 = vpop.f32.mrf.mxu0
  %v2999 = vadd.f32 %v2669, %v2998
  %3000 = vdwg.mxu0
  %v3001 = vmul.f32 %v2940, %v2999
  %v3002 = vadd.f32 %v2897, %v3001
  %v3003 = vtanh.pop %v3002
  %v3004 = vsub.f32 %v2892, %v3003
  %v3005 = vmul.f32 %v2980, %v3004
  %v3006 = vadd.f32 %v3003, %v3005
  %3007 = vst.msk [vmem:[%s682] sm:$0x3] %vm450, %v3006
  %3008 = vst.msk [vmem:[%s684] sm:$0x3] %vm450, %v3006
  %v3009 = vsel %vm179, %v2529, %v2523
  %v3010 = vsel %vm179, %v2594, %v2588
  %v3011 = vsel %vm179, %v2659, %v2653
  %v3013 = vsel %vm78, %v3006, 0
  %3015 = vmatpush.msra.mxu0 0.0
  %3016 = vmatpush.msra.mxu0 0.0
  %3017 = vmatpush.msra.mxu0 0.0
  %3018 = vmatpush.msra.mxu0 0.0
  %3019 = vmatpush.msra.mxu0 0.0
  %3020 = vmatpush.msra.mxu0 0.0
  %3021 = vmatpush.msra.mxu0 0.0
  %3022 = vmatpush.msra.mxu0 0.0
  %3023 = vmatpush.msra.mxu0 0.0
  %3024 = vmatpush.msra.mxu0 0.0
  %3025 = vmatpush.msra.mxu0 %v2452
  %3026 = vmatpush.msra.mxu0 %v2451
  %3027 = vmatpush.msra.mxu0 %v2450
  %3028 = vmatpush.msra.mxu0 %v2449
  %3029 = vmatpush.msra.mxu0 %v2448
  %3030 = vmatpush.msra.mxu0 %v2447
  %3031 = vmatmul.f32.gmra.mxu0 %v3013
  %v3032 = vpop.f32.mrf.mxu0
  %v3033 = vadd.f32 0.0, %v3032
  %3034 = vdwg.mxu0
  %v3035 = vadd.f32 %v3009, %v3033
  %v3036 = vxor.u32 %v3035, 2147483648
  %v3037 = vmul.f32 %v3036, 1.442695
  %v3038 = vpow.pop %v3037
  %v3039 = vadd.f32 %v3038, 1.0
  %v3040 = vrcp.pop %v3039
  %v3041 = vmul.f32 %v3039, %v3040
  %v3042 = vsub.f32 1.0, %v3041
  %v3043 = vmul.f32 %v3040, %v3042
  %v3044 = vadd.f32 %v3040, %v3043
  %vm3045 = vweird.f32 %v3039
  %vm3046 = vweird.f32 %v3040
  %vm3047 = vmor %vm3045, %vm3046
  %v3048 = vsel %vm3047, %v3040, %v3044
  %v3049 = vand.u32 2147483647, %v3039
  %vm3050 = vcmp.eq.f32.partialorder %v3049, 8.507059e+37
  %v3051 = vand.u32 %v3039, 2147483648
  %v3052 = vor.u32 1.1754944e-38, %v3051
  %v3053 = vsel %vm3050, %v3052, %v3048
  %v3054 = vmul.f32 1.0, %v3053
  %3055 = vmatpush.msra.mxu0 0.0
  %3056 = vmatpush.msra.mxu0 0.0
  %3057 = vmatpush.msra.mxu0 0.0
  %3058 = vmatpush.msra.mxu0 0.0
  %3059 = vmatpush.msra.mxu0 0.0
  %3060 = vmatpush.msra.mxu0 0.0
  %3061 = vmatpush.msra.mxu0 0.0
  %3062 = vmatpush.msra.mxu0 0.0
  %3063 = vmatpush.msra.mxu0 0.0
  %3064 = vmatpush.msra.mxu0 0.0
  %3065 = vmatpush.msra.mxu0 %v2458
  %3066 = vmatpush.msra.mxu0 %v2457
  %3067 = vmatpush.msra.mxu0 %v2456
  %3068 = vmatpush.msra.mxu0 %v2455
  %3069 = vmatpush.msra.mxu0 %v2454
  %3070 = vmatpush.msra.mxu0 %v2453
  %3071 = vmatmul.f32.gmra.mxu0 %v3013
  %v3072 = vpop.f32.mrf.mxu0
  %v3073 = vadd.f32 0.0, %v3072
  %3074 = vdwg.mxu0
  %v3075 = vadd.f32 %v3010, %v3073
  %v3076 = vxor.u32 %v3075, 2147483648
  %v3077 = vmul.f32 %v3076, 1.442695
  %v3078 = vpow.pop %v3077
  %v3079 = vadd.f32 %v3078, 1.0
  %v3080 = vrcp.pop %v3079
  %v3081 = vmul.f32 %v3079, %v3080
  %v3082 = vsub.f32 1.0, %v3081
  %v3083 = vmul.f32 %v3080, %v3082
  %v3084 = vadd.f32 %v3080, %v3083
  %vm3085 = vweird.f32 %v3079
  %vm3086 = vweird.f32 %v3080
  %vm3087 = vmor %vm3085, %vm3086
  %v3088 = vsel %vm3087, %v3080, %v3084
  %v3089 = vand.u32 2147483647, %v3079
  %vm3090 = vcmp.eq.f32.partialorder %v3089, 8.507059e+37
  %v3091 = vand.u32 %v3079, 2147483648
  %v3092 = vor.u32 1.1754944e-38, %v3091
  %v3093 = vsel %vm3090, %v3092, %v3088
  %v3094 = vmul.f32 1.0, %v3093
  %3095 = vmatpush.msra.mxu0 0.0
  %3096 = vmatpush.msra.mxu0 0.0
  %3097 = vmatpush.msra.mxu0 0.0
  %3098 = vmatpush.msra.mxu0 0.0
  %3099 = vmatpush.msra.mxu0 0.0
  %3100 = vmatpush.msra.mxu0 0.0
  %3101 = vmatpush.msra.mxu0 0.0
  %3102 = vmatpush.msra.mxu0 0.0
  %3103 = vmatpush.msra.mxu0 0.0
  %3104 = vmatpush.msra.mxu0 0.0
  %3105 = vmatpush.msra.mxu0 %v2464
  %3106 = vmatpush.msra.mxu0 %v2463
  %3107 = vmatpush.msra.mxu0 %v2462
  %3108 = vmatpush.msra.mxu0 %v2461
  %3109 = vmatpush.msra.mxu0 %v2460
  %3110 = vmatpush.msra.mxu0 %v2459
  %3111 = vmatmul.f32.gmra.mxu0 %v3013
  %v3112 = vpop.f32.mrf.mxu0
  %v3113 = vadd.f32 %v2669, %v3112
  %3114 = vdwg.mxu0
  %v3115 = vmul.f32 %v3054, %v3113
  %v3116 = vadd.f32 %v3011, %v3115
  %v3117 = vtanh.pop %v3116
  %v3118 = vsub.f32 %v3006, %v3117
  %v3119 = vmul.f32 %v3094, %v3118
  %v3120 = vadd.f32 %v3117, %v3119
  %3121 = vst.msk [vmem:[%s798] sm:$0x3] %vm450, %v3120
  %3122 = vst.msk [vmem:[%s800] sm:$0x3] %vm450, %v3120
  %v3123 = vsel %vm179, %v2523, %v2529
  %v3124 = vsel %vm179, %v2588, %v2594
  %v3125 = vsel %vm179, %v2653, %v2659
  %v3127 = vsel %vm78, %v3120, 0
  %3129 = vmatpush.msra.mxu0 0.0
  %3130 = vmatpush.msra.mxu0 0.0
  %3131 = vmatpush.msra.mxu0 0.0
  %3132 = vmatpush.msra.mxu0 0.0
  %3133 = vmatpush.msra.mxu0 0.0
  %3134 = vmatpush.msra.mxu0 0.0
  %3135 = vmatpush.msra.mxu0 0.0
  %3136 = vmatpush.msra.mxu0 0.0
  %3137 = vmatpush.msra.mxu0 0.0
  %3138 = vmatpush.msra.mxu0 0.0
  %3139 = vmatpush.msra.mxu0 %v2452
  %3140 = vmatpush.msra.mxu0 %v2451
  %3141 = vmatpush.msra.mxu0 %v2450
  %3142 = vmatpush.msra.mxu0 %v2449
  %3143 = vmatpush.msra.mxu0 %v2448
  %3144 = vmatpush.msra.mxu0 %v2447
  %3145 = vmatmul.f32.gmra.mxu0 %v3127
  %v3146 = vpop.f32.mrf.mxu0
  %v3147 = vadd.f32 0.0, %v3146
  %3148 = vdwg.mxu0
  %v3149 = vadd.f32 %v3123, %v3147
  %v3150 = vxor.u32 %v3149, 2147483648
  %v3151 = vmul.f32 %v3150, 1.442695
  %v3152 = vpow.pop %v3151
  %v3153 = vadd.f32 %v3152, 1.0
  %v3154 = vrcp.pop %v3153
  %v3155 = vmul.f32 %v3153, %v3154
  %v3156 = vsub.f32 1.0, %v3155
  %v3157 = vmul.f32 %v3154, %v3156
  %v3158 = vadd.f32 %v3154, %v3157
  %vm3159 = vweird.f32 %v3153
  %vm3160 = vweird.f32 %v3154
  %vm3161 = vmor %vm3159, %vm3160
  %v3162 = vsel %vm3161, %v3154, %v3158
  %v3163 = vand.u32 2147483647, %v3153
  %vm3164 = vcmp.eq.f32.partialorder %v3163, 8.507059e+37
  %v3165 = vand.u32 %v3153, 2147483648
  %v3166 = vor.u32 1.1754944e-38, %v3165
  %v3167 = vsel %vm3164, %v3166, %v3162
  %v3168 = vmul.f32 1.0, %v3167
  %3169 = vmatpush.msra.mxu0 0.0
  %3170 = vmatpush.msra.mxu0 0.0
  %3171 = vmatpush.msra.mxu0 0.0
  %3172 = vmatpush.msra.mxu0 0.0
  %3173 = vmatpush.msra.mxu0 0.0
  %3174 = vmatpush.msra.mxu0 0.0
  %3175 = vmatpush.msra.mxu0 0.0
  %3176 = vmatpush.msra.mxu0 0.0
  %3177 = vmatpush.msra.mxu0 0.0
  %3178 = vmatpush.msra.mxu0 0.0
  %3179 = vmatpush.msra.mxu0 %v2458
  %3180 = vmatpush.msra.mxu0 %v2457
  %3181 = vmatpush.msra.mxu0 %v2456
  %3182 = vmatpush.msra.mxu0 %v2455
  %3183 = vmatpush.msra.mxu0 %v2454
  %3184 = vmatpush.msra.mxu0 %v2453
  %3185 = vmatmul.f32.gmra.mxu0 %v3127
  %v3186 = vpop.f32.mrf.mxu0
  %v3187 = vadd.f32 0.0, %v3186
  %3188 = vdwg.mxu0
  %v3189 = vadd.f32 %v3124, %v3187
  %v3190 = vxor.u32 %v3189, 2147483648
  %v3191 = vmul.f32 %v3190, 1.442695
  %v3192 = vpow.pop %v3191
  %v3193 = vadd.f32 %v3192, 1.0
  %v3194 = vrcp.pop %v3193
  %v3195 = vmul.f32 %v3193, %v3194
  %v3196 = vsub.f32 1.0, %v3195
  %v3197 = vmul.f32 %v3194, %v3196
  %v3198 = vadd.f32 %v3194, %v3197
  %vm3199 = vweird.f32 %v3193
  %vm3200 = vweird.f32 %v3194
  %vm3201 = vmor %vm3199, %vm3200
  %v3202 = vsel %vm3201, %v3194, %v3198
  %v3203 = vand.u32 2147483647, %v3193
  %vm3204 = vcmp.eq.f32.partialorder %v3203, 8.507059e+37
  %v3205 = vand.u32 %v3193, 2147483648
  %v3206 = vor.u32 1.1754944e-38, %v3205
  %v3207 = vsel %vm3204, %v3206, %v3202
  %v3208 = vmul.f32 1.0, %v3207
  %3209 = vmatpush.msra.mxu0 0.0
  %3210 = vmatpush.msra.mxu0 0.0
  %3211 = vmatpush.msra.mxu0 0.0
  %3212 = vmatpush.msra.mxu0 0.0
  %3213 = vmatpush.msra.mxu0 0.0
  %3214 = vmatpush.msra.mxu0 0.0
  %3215 = vmatpush.msra.mxu0 0.0
  %3216 = vmatpush.msra.mxu0 0.0
  %3217 = vmatpush.msra.mxu0 0.0
  %3218 = vmatpush.msra.mxu0 0.0
  %3219 = vmatpush.msra.mxu0 %v2464
  %3220 = vmatpush.msra.mxu0 %v2463
  %3221 = vmatpush.msra.mxu0 %v2462
  %3222 = vmatpush.msra.mxu0 %v2461
  %3223 = vmatpush.msra.mxu0 %v2460
  %3224 = vmatpush.msra.mxu0 %v2459
  %3225 = vmatmul.f32.gmra.mxu0 %v3127
  %v3226 = vpop.f32.mrf.mxu0
  %v3227 = vadd.f32 %v2669, %v3226
  %3228 = vdwg.mxu0
  %v3229 = vmul.f32 %v3168, %v3227
  %v3230 = vadd.f32 %v3125, %v3229
  %v3231 = vtanh.pop %v3230
  %v3232 = vsub.f32 %v3120, %v3231
  %v3233 = vmul.f32 %v3208, %v3232
  %v3234 = vadd.f32 %v3231, %v3233
  %3235 = vst.msk [vmem:[%s914] sm:$0x3] %vm450, %v3234
  %3236 = vst.msk [vmem:[%s916] sm:$0x3] %vm450, %v3234
  %v3237 = vsel %vm179, %v2530, %v2528
  %v3238 = vsel %vm179, %v2595, %v2593
  %v3239 = vsel %vm179, %v2660, %v2658
  %v3241 = vsel %vm78, %v3234, 0
  %3243 = vmatpush.msra.mxu0 0.0
  %3244 = vmatpush.msra.mxu0 0.0
  %3245 = vmatpush.msra.mxu0 0.0
  %3246 = vmatpush.msra.mxu0 0.0
  %3247 = vmatpush.msra.mxu0 0.0
  %3248 = vmatpush.msra.mxu0 0.0
  %3249 = vmatpush.msra.mxu0 0.0
  %3250 = vmatpush.msra.mxu0 0.0
  %3251 = vmatpush.msra.mxu0 0.0
  %3252 = vmatpush.msra.mxu0 0.0
  %3253 = vmatpush.msra.mxu0 %v2452
  %3254 = vmatpush.msra.mxu0 %v2451
  %3255 = vmatpush.msra.mxu0 %v2450
  %3256 = vmatpush.msra.mxu0 %v2449
  %3257 = vmatpush.msra.mxu0 %v2448
  %3258 = vmatpush.msra.mxu0 %v2447
  %3259 = vmatmul.f32.gmra.mxu0 %v3241
  %v3260 = vpop.f32.mrf.mxu0
  %v3261 = vadd.f32 0.0, %v3260
  %3262 = vdwg.mxu0
  %v3263 = vadd.f32 %v3237, %v3261
  %v3264 = vxor.u32 %v3263, 2147483648
  %v3265 = vmul.f32 %v3264, 1.442695
  %v3266 = vpow.pop %v3265
  %v3267 = vadd.f32 %v3266, 1.0
  %v3268 = vrcp.pop %v3267
  %v3269 = vmul.f32 %v3267, %v3268
  %v3270 = vsub.f32 1.0, %v3269
  %v3271 = vmul.f32 %v3268, %v3270
  %v3272 = vadd.f32 %v3268, %v3271
  %vm3273 = vweird.f32 %v3267
  %vm3274 = vweird.f32 %v3268
  %vm3275 = vmor %vm3273, %vm3274
  %v3276 = vsel %vm3275, %v3268, %v3272
  %v3277 = vand.u32 2147483647, %v3267
  %vm3278 = vcmp.eq.f32.partialorder %v3277, 8.507059e+37
  %v3279 = vand.u32 %v3267, 2147483648
  %v3280 = vor.u32 1.1754944e-38, %v3279
  %v3281 = vsel %vm3278, %v3280, %v3276
  %v3282 = vmul.f32 1.0, %v3281
  %3283 = vmatpush.msra.mxu0 0.0
  %3284 = vmatpush.msra.mxu0 0.0
  %3285 = vmatpush.msra.mxu0 0.0
  %3286 = vmatpush.msra.mxu0 0.0
  %3287 = vmatpush.msra.mxu0 0.0
  %3288 = vmatpush.msra.mxu0 0.0
  %3289 = vmatpush.msra.mxu0 0.0
  %3290 = vmatpush.msra.mxu0 0.0
  %3291 = vmatpush.msra.mxu0 0.0
  %3292 = vmatpush.msra.mxu0 0.0
  %3293 = vmatpush.msra.mxu0 %v2458
  %3294 = vmatpush.msra.mxu0 %v2457
  %3295 = vmatpush.msra.mxu0 %v2456
  %3296 = vmatpush.msra.mxu0 %v2455
  %3297 = vmatpush.msra.mxu0 %v2454
  %3298 = vmatpush.msra.mxu0 %v2453
  %3299 = vmatmul.f32.gmra.mxu0 %v3241
  %v3300 = vpop.f32.mrf.mxu0
  %v3301 = vadd.f32 0.0, %v3300
  %3302 = vdwg.mxu0
  %v3303 = vadd.f32 %v3238, %v3301
  %v3304 = vxor.u32 %v3303, 2147483648
  %v3305 = vmul.f32 %v3304, 1.442695
  %v3306 = vpow.pop %v3305
  %v3307 = vadd.f32 %v3306, 1.0
  %v3308 = vrcp.pop %v3307
  %v3309 = vmul.f32 %v3307, %v3308
  %v3310 = vsub.f32 1.0, %v3309
  %v3311 = vmul.f32 %v3308, %v3310
  %v3312 = vadd.f32 %v3308, %v3311
  %vm3313 = vweird.f32 %v3307
  %vm3314 = vweird.f32 %v3308
  %vm3315 = vmor %vm3313, %vm3314
  %v3316 = vsel %vm3315, %v3308, %v3312
  %v3317 = vand.u32 2147483647, %v3307
  %vm3318 = vcmp.eq.f32.partialorder %v3317, 8.507059e+37
  %v3319 = vand.u32 %v3307, 2147483648
  %v3320 = vor.u32 1.1754944e-38, %v3319
  %v3321 = vsel %vm3318, %v3320, %v3316
  %v3322 = vmul.f32 1.0, %v3321
  %3323 = vmatpush.msra.mxu0 0.0
  %3324 = vmatpush.msra.mxu0 0.0
  %3325 = vmatpush.msra.mxu0 0.0
  %3326 = vmatpush.msra.mxu0 0.0
  %3327 = vmatpush.msra.mxu0 0.0
  %3328 = vmatpush.msra.mxu0 0.0
  %3329 = vmatpush.msra.mxu0 0.0
  %3330 = vmatpush.msra.mxu0 0.0
  %3331 = vmatpush.msra.mxu0 0.0
  %3332 = vmatpush.msra.mxu0 0.0
  %3333 = vmatpush.msra.mxu0 %v2464
  %3334 = vmatpush.msra.mxu0 %v2463
  %3335 = vmatpush.msra.mxu0 %v2462
  %3336 = vmatpush.msra.mxu0 %v2461
  %3337 = vmatpush.msra.mxu0 %v2460
  %3338 = vmatpush.msra.mxu0 %v2459
  %3339 = vmatmul.f32.gmra.mxu0 %v3241
  %v3340 = vpop.f32.mrf.mxu0
  %v3341 = vadd.f32 %v2669, %v3340
  %3342 = vdwg.mxu0
  %v3343 = vmul.f32 %v3282, %v3341
  %v3344 = vadd.f32 %v3239, %v3343
  %v3345 = vtanh.pop %v3344
  %v3346 = vsub.f32 %v3234, %v3345
  %v3347 = vmul.f32 %v3322, %v3346
  %v3348 = vadd.f32 %v3345, %v3347
  %3349 = vst.msk [vmem:[%s1030] sm:$0x3] %vm450, %v3348
  %3350 = vst.msk [vmem:[%s1032] sm:$0x3] %vm450, %v3348
  %v3351 = vsel %vm179, %v2531, %v2527
  %v3352 = vsel %vm179, %v2596, %v2592
  %v3353 = vsel %vm179, %v2661, %v2657
  %v3355 = vsel %vm78, %v3348, 0
  %3357 = vmatpush.msra.mxu0 0.0
  %3358 = vmatpush.msra.mxu0 0.0
  %3359 = vmatpush.msra.mxu0 0.0
  %3360 = vmatpush.msra.mxu0 0.0
  %3361 = vmatpush.msra.mxu0 0.0
  %3362 = vmatpush.msra.mxu0 0.0
  %3363 = vmatpush.msra.mxu0 0.0
  %3364 = vmatpush.msra.mxu0 0.0
  %3365 = vmatpush.msra.mxu0 0.0
  %3366 = vmatpush.msra.mxu0 0.0
  %3367 = vmatpush.msra.mxu0 %v2452
  %3368 = vmatpush.msra.mxu0 %v2451
  %3369 = vmatpush.msra.mxu0 %v2450
  %3370 = vmatpush.msra.mxu0 %v2449
  %3371 = vmatpush.msra.mxu0 %v2448
  %3372 = vmatpush.msra.mxu0 %v2447
  %3373 = vmatmul.f32.gmra.mxu0 %v3355
  %v3374 = vpop.f32.mrf.mxu0
  %v3375 = vadd.f32 0.0, %v3374
  %3376 = vdwg.mxu0
  %v3377 = vadd.f32 %v3351, %v3375
  %v3378 = vxor.u32 %v3377, 2147483648
  %v3379 = vmul.f32 %v3378, 1.442695
  %v3380 = vpow.pop %v3379
  %v3381 = vadd.f32 %v3380, 1.0
  %v3382 = vrcp.pop %v3381
  %v3383 = vmul.f32 %v3381, %v3382
  %v3384 = vsub.f32 1.0, %v3383
  %v3385 = vmul.f32 %v3382, %v3384
  %v3386 = vadd.f32 %v3382, %v3385
  %vm3387 = vweird.f32 %v3381
  %vm3388 = vweird.f32 %v3382
  %vm3389 = vmor %vm3387, %vm3388
  %v3390 = vsel %vm3389, %v3382, %v3386
  %v3391 = vand.u32 2147483647, %v3381
  %vm3392 = vcmp.eq.f32.partialorder %v3391, 8.507059e+37
  %v3393 = vand.u32 %v3381, 2147483648
  %v3394 = vor.u32 1.1754944e-38, %v3393
  %v3395 = vsel %vm3392, %v3394, %v3390
  %v3396 = vmul.f32 1.0, %v3395
  %3397 = vmatpush.msra.mxu0 0.0
  %3398 = vmatpush.msra.mxu0 0.0
  %3399 = vmatpush.msra.mxu0 0.0
  %3400 = vmatpush.msra.mxu0 0.0
  %3401 = vmatpush.msra.mxu0 0.0
  %3402 = vmatpush.msra.mxu0 0.0
  %3403 = vmatpush.msra.mxu0 0.0
  %3404 = vmatpush.msra.mxu0 0.0
  %3405 = vmatpush.msra.mxu0 0.0
  %3406 = vmatpush.msra.mxu0 0.0
  %3407 = vmatpush.msra.mxu0 %v2458
  %3408 = vmatpush.msra.mxu0 %v2457
  %3409 = vmatpush.msra.mxu0 %v2456
  %3410 = vmatpush.msra.mxu0 %v2455
  %3411 = vmatpush.msra.mxu0 %v2454
  %3412 = vmatpush.msra.mxu0 %v2453
  %3413 = vmatmul.f32.gmra.mxu0 %v3355
  %v3414 = vpop.f32.mrf.mxu0
  %v3415 = vadd.f32 0.0, %v3414
  %3416 = vdwg.mxu0
  %v3417 = vadd.f32 %v3352, %v3415
  %v3418 = vxor.u32 %v3417, 2147483648
  %v3419 = vmul.f32 %v3418, 1.442695
  %v3420 = vpow.pop %v3419
  %v3421 = vadd.f32 %v3420, 1.0
  %v3422 = vrcp.pop %v3421
  %v3423 = vmul.f32 %v3421, %v3422
  %v3424 = vsub.f32 1.0, %v3423
  %v3425 = vmul.f32 %v3422, %v3424
  %v3426 = vadd.f32 %v3422, %v3425
  %vm3427 = vweird.f32 %v3421
  %vm3428 = vweird.f32 %v3422
  %vm3429 = vmor %vm3427, %vm3428
  %v3430 = vsel %vm3429, %v3422, %v3426
  %v3431 = vand.u32 2147483647, %v3421
  %vm3432 = vcmp.eq.f32.partialorder %v3431, 8.507059e+37
  %v3433 = vand.u32 %v3421, 2147483648
  %v3434 = vor.u32 1.1754944e-38, %v3433
  %v3435 = vsel %vm3432, %v3434, %v3430
  %v3436 = vmul.f32 1.0, %v3435
  %3437 = vmatpush.msra.mxu0 0.0
  %3438 = vmatpush.msra.mxu0 0.0
  %3439 = vmatpush.msra.mxu0 0.0
  %3440 = vmatpush.msra.mxu0 0.0
  %3441 = vmatpush.msra.mxu0 0.0
  %3442 = vmatpush.msra.mxu0 0.0
  %3443 = vmatpush.msra.mxu0 0.0
  %3444 = vmatpush.msra.mxu0 0.0
  %3445 = vmatpush.msra.mxu0 0.0
  %3446 = vmatpush.msra.mxu0 0.0
  %3447 = vmatpush.msra.mxu0 %v2464
  %3448 = vmatpush.msra.mxu0 %v2463
  %3449 = vmatpush.msra.mxu0 %v2462
  %3450 = vmatpush.msra.mxu0 %v2461
  %3451 = vmatpush.msra.mxu0 %v2460
  %3452 = vmatpush.msra.mxu0 %v2459
  %3453 = vmatmul.f32.gmra.mxu0 %v3355
  %v3454 = vpop.f32.mrf.mxu0
  %v3455 = vadd.f32 %v2669, %v3454
  %3456 = vdwg.mxu0
  %v3457 = vmul.f32 %v3396, %v3455
  %v3458 = vadd.f32 %v3353, %v3457
  %v3459 = vtanh.pop %v3458
  %v3460 = vsub.f32 %v3348, %v3459
  %v3461 = vmul.f32 %v3436, %v3460
  %v3462 = vadd.f32 %v3459, %v3461
  %3463 = vst.msk [vmem:[%s1146] sm:$0x3] %vm450, %v3462
  %3464 = vst.msk [vmem:[%s1148] sm:$0x3] %vm450, %v3462
  %v3465 = vsel %vm179, %v2532, %v2520
  %v3466 = vsel %vm179, %v2597, %v2585
  %v3467 = vsel %vm179, %v2662, %v2650
  %v3469 = vsel %vm78, %v3462, 0
  %3471 = vmatpush.msra.mxu0 0.0
  %3472 = vmatpush.msra.mxu0 0.0
  %3473 = vmatpush.msra.mxu0 0.0
  %3474 = vmatpush.msra.mxu0 0.0
  %3475 = vmatpush.msra.mxu0 0.0
  %3476 = vmatpush.msra.mxu0 0.0
  %3477 = vmatpush.msra.mxu0 0.0
  %3478 = vmatpush.msra.mxu0 0.0
  %3479 = vmatpush.msra.mxu0 0.0
  %3480 = vmatpush.msra.mxu0 0.0
  %3481 = vmatpush.msra.mxu0 %v2452
  %3482 = vmatpush.msra.mxu0 %v2451
  %3483 = vmatpush.msra.mxu0 %v2450
  %3484 = vmatpush.msra.mxu0 %v2449
  %3485 = vmatpush.msra.mxu0 %v2448
  %3486 = vmatpush.msra.mxu0 %v2447
  %3487 = vmatmul.f32.gmra.mxu0 %v3469
  %v3488 = vpop.f32.mrf.mxu0
  %v3489 = vadd.f32 0.0, %v3488
  %3490 = vdwg.mxu0
  %v3491 = vadd.f32 %v3465, %v3489
  %v3492 = vxor.u32 %v3491, 2147483648
  %v3493 = vmul.f32 %v3492, 1.442695
  %v3494 = vpow.pop %v3493
  %v3495 = vadd.f32 %v3494, 1.0
  %v3496 = vrcp.pop %v3495
  %v3497 = vmul.f32 %v3495, %v3496
  %v3498 = vsub.f32 1.0, %v3497
  %v3499 = vmul.f32 %v3496, %v3498
  %v3500 = vadd.f32 %v3496, %v3499
  %vm3501 = vweird.f32 %v3495
  %vm3502 = vweird.f32 %v3496
  %vm3503 = vmor %vm3501, %vm3502
  %v3504 = vsel %vm3503, %v3496, %v3500
  %v3505 = vand.u32 2147483647, %v3495
  %vm3506 = vcmp.eq.f32.partialorder %v3505, 8.507059e+37
  %v3507 = vand.u32 %v3495, 2147483648
  %v3508 = vor.u32 1.1754944e-38, %v3507
  %v3509 = vsel %vm3506, %v3508, %v3504
  %v3510 = vmul.f32 1.0, %v3509
  %3511 = vmatpush.msra.mxu0 0.0
  %3512 = vmatpush.msra.mxu0 0.0
  %3513 = vmatpush.msra.mxu0 0.0
  %3514 = vmatpush.msra.mxu0 0.0
  %3515 = vmatpush.msra.mxu0 0.0
  %3516 = vmatpush.msra.mxu0 0.0
  %3517 = vmatpush.msra.mxu0 0.0
  %3518 = vmatpush.msra.mxu0 0.0
  %3519 = vmatpush.msra.mxu0 0.0
  %3520 = vmatpush.msra.mxu0 0.0
  %3521 = vmatpush.msra.mxu0 %v2458
  %3522 = vmatpush.msra.mxu0 %v2457
  %3523 = vmatpush.msra.mxu0 %v2456
  %3524 = vmatpush.msra.mxu0 %v2455
  %3525 = vmatpush.msra.mxu0 %v2454
  %3526 = vmatpush.msra.mxu0 %v2453
  %3527 = vmatmul.f32.gmra.mxu0 %v3469
  %v3528 = vpop.f32.mrf.mxu0
  %v3529 = vadd.f32 0.0, %v3528
  %3530 = vdwg.mxu0
  %v3531 = vadd.f32 %v3466, %v3529
  %v3532 = vxor.u32 %v3531, 2147483648
  %v3533 = vmul.f32 %v3532, 1.442695
  %v3534 = vpow.pop %v3533
  %v3535 = vadd.f32 %v3534, 1.0
  %v3536 = vrcp.pop %v3535
  %v3537 = vmul.f32 %v3535, %v3536
  %v3538 = vsub.f32 1.0, %v3537
  %v3539 = vmul.f32 %v3536, %v3538
  %v3540 = vadd.f32 %v3536, %v3539
  %vm3541 = vweird.f32 %v3535
  %vm3542 = vweird.f32 %v3536
  %vm3543 = vmor %vm3541, %vm3542
  %v3544 = vsel %vm3543, %v3536, %v3540
  %v3545 = vand.u32 2147483647, %v3535
  %vm3546 = vcmp.eq.f32.partialorder %v3545, 8.507059e+37
  %v3547 = vand.u32 %v3535, 2147483648
  %v3548 = vor.u32 1.1754944e-38, %v3547
  %v3549 = vsel %vm3546, %v3548, %v3544
  %v3550 = vmul.f32 1.0, %v3549
  %3551 = vmatpush.msra.mxu0 0.0
  %3552 = vmatpush.msra.mxu0 0.0
  %3553 = vmatpush.msra.mxu0 0.0
  %3554 = vmatpush.msra.mxu0 0.0
  %3555 = vmatpush.msra.mxu0 0.0
  %3556 = vmatpush.msra.mxu0 0.0
  %3557 = vmatpush.msra.mxu0 0.0
  %3558 = vmatpush.msra.mxu0 0.0
  %3559 = vmatpush.msra.mxu0 0.0
  %3560 = vmatpush.msra.mxu0 0.0
  %3561 = vmatpush.msra.mxu0 %v2464
  %3562 = vmatpush.msra.mxu0 %v2463
  %3563 = vmatpush.msra.mxu0 %v2462
  %3564 = vmatpush.msra.mxu0 %v2461
  %3565 = vmatpush.msra.mxu0 %v2460
  %3566 = vmatpush.msra.mxu0 %v2459
  %3567 = vmatmul.f32.gmra.mxu0 %v3469
  %v3568 = vpop.f32.mrf.mxu0
  %v3569 = vadd.f32 %v2669, %v3568
  %3570 = vdwg.mxu0
  %v3571 = vmul.f32 %v3510, %v3569
  %v3572 = vadd.f32 %v3467, %v3571
  %v3573 = vtanh.pop %v3572
  %v3574 = vsub.f32 %v3462, %v3573
  %v3575 = vmul.f32 %v3550, %v3574
  %v3576 = vadd.f32 %v3573, %v3575
  %3577 = vst.msk [vmem:[%s1262] sm:$0x3] %vm450, %v3576
  %3578 = vst.msk [vmem:[#allocation3] sm:$0x3] %vm450, %v3576
  %v3579 = vld [vmem:[#allocation2] sm:$0x3]
  %v3580 = vld [vmem:[#allocation2 + $0x2] sm:$0x3]
  %v3581 = vld [vmem:[#allocation2 + $0x4] sm:$0x3]
  %v3582 = vld [vmem:[#allocation2 + $0x6] sm:$0x3]
  %v3583 = vld [vmem:[#allocation2 + $0x8] sm:$0x3]
  %v3584 = vld [vmem:[#allocation2 + $0xa] sm:$0x3]
  %v3585 = vld [vmem:[#allocation2 + $0xc] sm:$0x3]
  %v3586 = vld [vmem:[#allocation2 + $0xe] sm:$0x3]
  %v3587 = vld [vmem:[#allocation3] sm:$0x3]
  %v3588 = vld [vmem:[#allocation3 + $0x2] sm:$0x3]
  %v3589 = vld [vmem:[#allocation3 + $0x4] sm:$0x3]
  %v3590 = vld [vmem:[#allocation3 + $0x6] sm:$0x3]
  %v3591 = vld [vmem:[#allocation3 + $0x8] sm:$0x3]
  %v3592 = vld [vmem:[#allocation3 + $0xa] sm:$0x3]
  %v3593 = vld [vmem:[#allocation3 + $0xc] sm:$0x3]
  %v3594 = vld [vmem:[#allocation3 + $0xe] sm:$0x3]
  %v3595 = vsel %vm1282, %v3579, %v3587
  %v3596 = vsel %vm1282, %v3580, %v3588
  %v3597 = vsel %vm1282, %v3581, %v3589
  %v3598 = vsel %vm1282, %v3582, %v3590
  %v3599 = vsel %vm1282, %v3583, %v3591
  %v3600 = vsel %vm1282, %v3584, %v3592
  %v3601 = vsel %vm1282, %v3585, %v3593
  %v3602 = vsel %vm1282, %v3586, %v3594
  %v3603 = vld [vmem:[%s3 + $0x3f8] sm:$0xff]
  %v3604 = vld [vmem:[%s3 + $0x400] sm:$0xff]
  %v3605 = vld [vmem:[%s3 + $0x408] sm:$0xff]
  %v3606 = vld [vmem:[%s3 + $0x410] sm:$0xff]
  %v3607 = vld [vmem:[%s3 + $0x418] sm:$0xff]
  %v3608 = vld [vmem:[%s3 + $0x420] sm:$0xff]
  %v3609 = vld [vmem:[%s3 + $0x428] sm:$0x1]
  %v3610 = vperm.slane %v3609, 0
  %3619 = vst [vmem:[#allocation1] ss:$4 sm:$0xff] %v3595
  %s3620 = scalar_lea.vmem [#allocation1], 1
  %3621 = vst [vmem:[%s3620] ss:$4 sm:$0xff] %v3596
  %s3622 = scalar_lea.vmem [#allocation1], 2
  %3623 = vst [vmem:[%s3622] ss:$4 sm:$0xff] %v3597
  %s3624 = scalar_lea.vmem [#allocation1], 3
  %3625 = vst [vmem:[%s3624] ss:$4 sm:$0xff] %v3598
  %s3626 = scalar_lea.vmem [#allocation1], 32
  %3627 = vst [vmem:[%s3626] ss:$4 sm:$0xff] %v3599
  %s3628 = scalar_lea.vmem [#allocation1], 33
  %3629 = vst [vmem:[%s3628] ss:$4 sm:$0xff] %v3600
  %s3630 = scalar_lea.vmem [#allocation1], 34
  %3631 = vst [vmem:[%s3630] ss:$4 sm:$0xff] %v3601
  %s3632 = scalar_lea.vmem [#allocation1], 35
  %3633 = vst [vmem:[%s3632] ss:$4 sm:$0xff] %v3602
  %v3634 = vld.sshfl [vmem:[#allocation1] sm:$0xff pattern:$0x73625140]
  %v3635 = vld.sshfl [vmem:[#allocation1 + $0x20] sm:$0xff pattern:$0x73625140]
  %v3636 = vsel %vm78, %v3634, 0
  %v3638 = vsel %vm78, %v3635, 0
  %3640 = vmatpush.msra.mxu0 0.0
  %3641 = vmatpush.msra.mxu0 0.0
  %3642 = vmatpush.msra.mxu0 0.0
  %3643 = vmatpush.msra.mxu0 0.0
  %3644 = vmatpush.msra.mxu0 0.0
  %3645 = vmatpush.msra.mxu0 0.0
  %3646 = vmatpush.msra.mxu0 0.0
  %3647 = vmatpush.msra.mxu0 0.0
  %3648 = vmatpush.msra.mxu0 0.0
  %3649 = vmatpush.msra.mxu0 0.0
  %3650 = vmatpush.msra.mxu0 %v3608
  %3651 = vmatpush.msra.mxu0 %v3607
  %3652 = vmatpush.msra.mxu0 %v3606
  %3653 = vmatpush.msra.mxu0 %v3605
  %3654 = vmatpush.msra.mxu0 %v3604
  %3655 = vmatpush.msra.mxu0 %v3603
  %3656 = vmatmul.f32.gmra.mxu0 %v3636
  %v3657 = vpop.f32.mrf.mxu0
  %v3658 = vadd.f32 %v3610, %v3657
  %3659 = vmatmul.f32.gmra.mxu0 %v3638
  %v3660 = vpop.f32.mrf.mxu0
  %v3661 = vadd.f32 %v3610, %v3660
  %3662 = vdwg.mxu0
  %v3663 = vadd.f32 %v3658, 1e-05
  %v3664 = vadd.f32 %v3661, 1e-05
  %vm3665 = vcmask 23552
  %3666 = vst.msk [vmem:[%s4] sm:$0xff] %vm3665, %v3663
  %3667 = vst.msk [vmem:[%s4 + $0x8] sm:$0xff] %vm3665, %v3664
  %v3668 = vld [vmem:[%s1] sm:$0xff]
  %v3669 = vld [vmem:[%s1 + $0x8] sm:$0xff]
  %v3670 = vld [vmem:[%s2] sm:$0x1]
  %vm3671 = vcmp.ne.s32.totalorder %v3668, 4294967295
  %vm3672 = vcmp.ne.s32.totalorder %v3669, 4294967295
  %v3673 = vsel %vm3671, 1, 0
  %v3674 = vsel %vm3672, 1, 0
  %v3675 = vcvt.s32.f32 %v3673
  %v3676 = vcvt.s32.f32 %v3674
  %v3677 = vsel %vm3671, %v3668, 0
  %v3678 = vsel %vm3672, %v3669, 0
  %3679 = vset.pattern.permute.xlu0 0
  %3680 = vperm.xlu0 %3679, %v3677
  %v3681 = vpop.permute.xlu0 %3680
  %3682 = vset.pattern.permute.xlu0 0
  %3683 = vperm.xlu0 %3682, %v3678
  %v3684 = vpop.permute.xlu0 %3683
  %vm3685 = vcmp.eq.s32.totalorder %v178, %v3681
  %vm3686 = vcmp.eq.s32.totalorder %v178, %v3684
  %v3687 = vsel %vm3685, 1, 0
  %v3688 = vsel %vm3686, 1, 0
  %v3689 = vcvt.s32.f32 %v3687
  %v3690 = vcvt.s32.f32 %v3688
  %v3691 = vsel %vm3665, %v3663, -inf
  %3692 = vmax.xlane.f32.xlu0 %v3691
  %v3693 = vpop.xlane.xlu0 %3692
  %v3694 = vsel %vm3665, %v3664, -inf
  %3695 = vmax.xlane.f32.xlu0 %v3694
  %v3696 = vpop.xlane.xlu0 %3695
  %v3697 = vsub.f32 %v3663, %v3693
  %v3698 = vsub.f32 %v3664, %v3696
  %v3699 = vmul.f32 %v3697, 1.442695
  %v3700 = vpow.pop %v3699
  %v3701 = vmul.f32 %v3698, 1.442695
  %v3702 = vpow.pop %v3701
  %v3703 = vsel %vm3665, %v3700, 0.0
  %3704 = vadd.xlane.f32.xlu0 %v3703
  %v3705 = vpop.xlane.xlu0 %3704
  %v3706 = vsel %vm3665, %v3702, 0.0
  %3707 = vadd.xlane.f32.xlu0 %v3706
  %v3708 = vpop.xlane.xlu0 %3707
  %v3709 = vlog2.pop %v3705
  %v3710 = vmul.f32 %v3709, 0.6931472
  %v3711 = vlog2.pop %v3708
  %v3712 = vmul.f32 %v3711, 0.6931472
  %v3713 = vsub.f32 %v3697, %v3710
  %v3714 = vsub.f32 %v3698, %v3712
  %v3715 = vrcp.pop %v3705
  %v3716 = vmul.f32 %v3705, %v3715
  %v3717 = vsub.f32 1.0, %v3716
  %v3718 = vmul.f32 %v3715, %v3717
  %v3719 = vadd.f32 %v3715, %v3718
  %vm3720 = vweird.f32 %v3705
  %vm3721 = vweird.f32 %v3715
  %vm3722 = vmor %vm3720, %vm3721
  %v3723 = vsel %vm3722, %v3715, %v3719
  %v3724 = vand.u32 2147483647, %v3705
  %vm3725 = vcmp.eq.f32.partialorder %v3724, 8.507059e+37
  %v3726 = vand.u32 %v3705, 2147483648
  %v3727 = vor.u32 1.1754944e-38, %v3726
  %v3728 = vsel %vm3725, %v3727, %v3723
  %v3729 = vmul.f32 %v3700, %v3728
  %v3730 = vrcp.pop %v3708
  %v3731 = vmul.f32 %v3708, %v3730
  %v3732 = vsub.f32 1.0, %v3731
  %v3733 = vmul.f32 %v3730, %v3732
  %v3734 = vadd.f32 %v3730, %v3733
  %vm3735 = vweird.f32 %v3708
  %vm3736 = vweird.f32 %v3730
  %vm3737 = vmor %vm3735, %vm3736
  %v3738 = vsel %vm3737, %v3730, %v3734
  %v3739 = vand.u32 2147483647, %v3708
  %vm3740 = vcmp.eq.f32.partialorder %v3739, 8.507059e+37
  %v3741 = vand.u32 %v3708, 2147483648
  %v3742 = vor.u32 1.1754944e-38, %v3741
  %v3743 = vsel %vm3740, %v3742, %v3738
  %v3744 = vmul.f32 %v3702, %v3743
  %v3745 = vmul.f32 %v3689, %v3713
  %v3746 = vmul.f32 %v3690, %v3714
  %v3747 = vsel %vm3665, %v3745, 0.0
  %3748 = vadd.xlane.f32.xlu0 %v3747
  %v3749 = vpop.xlane.xlu0 %3748
  %v3750 = vsel %vm3665, %v3746, 0.0
  %3751 = vadd.xlane.f32.xlu0 %v3750
  %v3752 = vpop.xlane.xlu0 %3751
  %v3753 = vsub.f32 0.0, %v3749
  %v3754 = vsub.f32 0.0, %v3752
  %v3756 = vperm.slane %v3670, 0
  %v3758 = vmul.f32 %v3689, %v3756
  %v3759 = vmul.f32 %v3690, %v3756
  %v3760 = vsel %vm3665, %v3758, 0.0
  %3761 = vadd.xlane.f32.xlu0 %v3760
  %v3762 = vpop.xlane.xlu0 %3761
  %v3763 = vsel %vm3665, %v3759, 0.0
  %3764 = vadd.xlane.f32.xlu0 %v3763
  %v3765 = vpop.xlane.xlu0 %3764
  %v3766 = vmul.f32 %v3675, %v3762
  %v3767 = vmul.f32 %v3676, %v3765
  %v3768 = vmul.f32 %v3766, %v3753
  %v3769 = vmul.f32 %v3767, %v3754
  %vm3770 = vcmask 7168
  %v3771 = vsel %vm3770, %v3768, 0.0
  %v3772 = vsel %vm3770, %v3769, 0.0
  %v3773 = vadd.f32 %v3771, %v3772
  %v3774 = vrot.slane %v3773, 4
  %v3775 = vadd.f32 %v3773, %v3774
  %v3776 = vrot.slane %v3775, 2
  %v3777 = vadd.f32 %v3775, %v3776
  %v3778 = vrot.slane %v3777, 1
  %v3779 = vadd.f32 %v3777, %v3778
  %v3780 = vsel %vm3770, %v3766, 0.0
  %v3781 = vsel %vm3770, %v3767, 0.0
  %v3782 = vadd.f32 %v3780, %v3781
  %v3783 = vrot.slane %v3782, 4
  %v3784 = vadd.f32 %v3782, %v3783
  %v3785 = vrot.slane %v3784, 2
  %v3786 = vadd.f32 %v3784, %v3785
  %v3787 = vrot.slane %v3786, 1
  %v3788 = vadd.f32 %v3786, %v3787
  %v3789 = vmax.f32 %v3788, 1e-12
  %v3790 = vrcp.pop %v3789
  %v3791 = vmul.f32 %v3789, %v3790
  %v3792 = vsub.f32 1.0, %v3791
  %v3793 = vmul.f32 %v3790, %v3792
  %v3794 = vadd.f32 %v3790, %v3793
  %vm3795 = vweird.f32 %v3789
  %vm3796 = vweird.f32 %v3790
  %vm3797 = vmor %vm3795, %vm3796
  %v3798 = vsel %vm3797, %v3790, %v3794
  %v3799 = vand.u32 2147483647, %v3789
  %vm3800 = vcmp.eq.f32.partialorder %v3799, 8.507059e+37
  %v3801 = vand.u32 %v3789, 2147483648
  %v3802 = vor.u32 1.1754944e-38, %v3801
  %v3803 = vsel %vm3800, %v3802, %v3798
  %v3804 = vmul.f32 %v3779, %v3803
  %3806 = vset.pattern.permute.xlu0 0
  %3807 = vperm.xlu0 %3806, %v3675
  %v3808 = vpop.permute.xlu0 %3807
  %3811 = vset.pattern.permute.xlu0 0
  %3812 = vperm.xlu0 %3811, %v3676
  %v3813 = vpop.permute.xlu0 %3812
  %v3815 = vmul.f32 %v3729, %v3808
  %v3816 = vmul.f32 %v3744, %v3813
  %v3817 = vmul.f32 %v3689, %v3808
  %v3818 = vmul.f32 %v3690, %v3813
  %v3819 = vmul.f32 %v3815, %v3817
  %v3820 = vmul.f32 %v3816, %v3818
  %v3821 = vsel %vm3665, %v3819, 0.0
  %v3822 = vsel %vm3665, %v3820, 0.0
  %v3823 = vadd.f32 %v3821, %v3822
  %v3824 = vrot.slane %v3823, 4
  %v3825 = vadd.f32 %v3823, %v3824
  %v3826 = vrot.slane %v3825, 2
  %v3827 = vadd.f32 %v3825, %v3826
  %v3828 = vrot.slane %v3827, 1
  %v3829 = vadd.f32 %v3827, %v3828
  %v3830 = vsel %vm3665, %v3815, 0.0
  %v3831 = vsel %vm3665, %v3816, 0.0
  %v3832 = vadd.f32 %v3830, %v3831
  %v3833 = vrot.slane %v3832, 4
  %v3834 = vadd.f32 %v3832, %v3833
  %v3835 = vrot.slane %v3834, 2
  %v3836 = vadd.f32 %v3834, %v3835
  %v3837 = vrot.slane %v3836, 1
  %v3838 = vadd.f32 %v3836, %v3837
  %v3839 = vsel %vm3665, %v3817, 0.0
  %v3840 = vsel %vm3665, %v3818, 0.0
  %v3841 = vadd.f32 %v3839, %v3840
  %v3842 = vrot.slane %v3841, 4
  %v3843 = vadd.f32 %v3841, %v3842
  %v3844 = vrot.slane %v3843, 2
  %v3845 = vadd.f32 %v3843, %v3844
  %v3846 = vrot.slane %v3845, 1
  %v3847 = vadd.f32 %v3845, %v3846
  %v3848 = vadd.f32 %v3838, %v3847
  %v3849 = vmul.f32 %v3829, 2.0
  %v3850 = vadd.f32 %v3849, 1e-06
  %v3851 = vadd.f32 %v3848, 1e-06
  %v3852 = vrcp.pop %v3851
  %v3853 = vmul.f32 %v3851, %v3852
  %v3854 = vsub.f32 1.0, %v3853
  %v3855 = vmul.f32 %v3852, %v3854
  %v3856 = vadd.f32 %v3852, %v3855
  %vm3857 = vweird.f32 %v3851
  %vm3858 = vweird.f32 %v3852
  %vm3859 = vmor %vm3857, %vm3858
  %v3860 = vsel %vm3859, %v3852, %v3856
  %v3861 = vand.u32 2147483647, %v3851
  %vm3862 = vcmp.eq.f32.partialorder %v3861, 8.507059e+37
  %v3863 = vand.u32 %v3851, 2147483648
  %v3864 = vor.u32 1.1754944e-38, %v3863
  %v3865 = vsel %vm3862, %v3864, %v3860
  %v3866 = vmul.f32 %v3850, %v3865
  %v3867 = vsel %vm3665, %v3866, 0.0
  %3868 = vadd.xlane.f32.xlu0 %v3867
  %v3869 = vpop.xlane.xlu0 %3868
  %v3870 = vrcp.pop 3.0
  %v3871 = vmul.f32 3.0, %v3870
  %v3872 = vsub.f32 1.0, %v3871
  %v3873 = vmul.f32 %v3870, %v3872
  %v3874 = vadd.f32 %v3870, %v3873
  %vm3875 = vweird.f32 %v3870
  %v3876 = vsel %vm3875, %v3870, %v3874
  %v3877 = vmul.f32 %v3869, %v3876
  %v3878 = vsub.f32 1.0, %v3877
  %v3879 = vadd.f32 %v3804, %v3878
  %vm3880 = vcmp.eq.s32.totalorder %v178, 0
  %3882 = vset.pattern.permute.xlu0 0
  %3883 = vperm.xlu0 %3882, %v3879
  %v3884 = vpop.permute.xlu0 %3883
  %v3886 = vsel %vm3880, %v3884, 0.0
  %vm3887 = vcmp.eq.s32.totalorder %v178, 1
  %3889 = vset.pattern.permute.xlu0 0
  %3890 = vperm.xlu0 %3889, %v3804
  %v3891 = vpop.permute.xlu0 %3890
  %v3893 = vsel %vm3887, %v3891, 0.0
  %v3894 = vadd.f32 %v3886, %v3893
  %vm3895 = vcmp.eq.s32.totalorder %v178, 2
  %v3896 = vsel %vm3895, %v3878, 0.0
  %v3897 = vadd.f32 %v3894, %v3896
  %vm3898 = vcmask 24576
  %3899 = vst.msk [vmem:[%s5] sm:$0x1] %vm3898, %v3897
  // Predicated region
  $region18: #{model_1_forward.1} parent=0 // pred_check
    _
  $region19: #{model_1_forward.1} parent=0 // pred_check_branch
    %3901 = sbr.rel (0) target = $region21
  $region20: #{model_1_forward.1} parent=0 // pred_region
    _
  $region21: #{model_1_forward.1} parent=0 // pred_fallthru
    _
  // Predicated region
  $region22: #{model_1_forward.1} parent=0 // pred_check
    _
  $region23: #{model_1_forward.1} parent=0 // pred_check_branch
    %3903 = sbr.rel (0) target = $region25
  $region24: #{model_1_forward.1} parent=0 // pred_region
    _
  $region25: #{model_1_forward.1} parent=0 // pred_fallthru
    _
  // Predicated region
  $region26: #{model_1_forward.1} parent=0 // pred_check
    _
  $region27: #{model_1_forward.1} parent=0 // pred_check_branch
    %3905 = sbr.rel (0) target = $region29
  $region28: #{model_1_forward.1} parent=0 // pred_region
    _
  $region29: #{model_1_forward.1} parent=0 // pred_fallthru
    _
  // Predicated region
  $region30: #{model_1_forward.1} parent=0 // pred_check
    _
  $region31: #{model_1_forward.1} parent=0 // pred_check_branch
    %3907 = sbr.rel (0) target = $region33
  $region32: #{model_1_forward.1} parent=0 // pred_region
    _
  $region33: #{model_1_forward.1} parent=0 // pred_fallthru
    _

</llo_original>
